<compile_context>
chip_gen: v7x
topology: tpu7x:2x2x1
jax: 0.10.0
libtpu: 0.0.40
codegen_flags: <defaults>
</compile_context>

<pallas_src>
import math

import numpy as np

import jax
import jax.numpy as jnp
from jax.experimental import pallas as pl
from jax.experimental.pallas import tpu as pltpu

# ---------------------------------------------------------------------------
# Static geometry (28x28 input, 3x3 valid convs, 2x2/2 pool)
# ---------------------------------------------------------------------------
IMG = 28                # input spatial size
C1, C2 = 32, 64         # conv channel counts
XPAD = 800              # padded flat input length  (needs >= 735 + 58 = 793)
Y1W = 736               # conv1 output columns      (needs >= 671 + 58 + 1)
Y2W = 672               # conv2 output columns      (needs >= 667 + 1)
MHW = 640               # vertical-pair max columns
MHS = 639               # 2x2-window max columns    (max pool anchor = 638)
POOLED = 144            # 12*12 pooled positions per channel
FLAT = C2 * POOLED      # 9216
NCLASS = 10
FC_HID = 128


# ---------------------------------------------------------------------------
# Fused conv1 + relu + conv2 + relu + maxpool kernel  (grid over batch)
# ---------------------------------------------------------------------------
def _fused_conv_kernel(xf_ref, w1_ref, b1_ref, w2_ref, b2_ref, sel_ref, out_ref):
    xf = xf_ref[0]                       # (1, XPAD) f32, flat padded 28x28 image
    w1 = w1_ref[...]                     # (32, 9)  f32
    b1 = b1_ref[...]                     # (32, 1)  f32
    b2 = b2_ref[...]                     # (64, 1)  f32

    # ---- conv1 (1->32): 9 shifted VPU FMAs in CHW-flat layout --------------
    acc1 = jnp.zeros((C1, Y1W), jnp.float32)
    for dy in range(3):
        for dx in range(3):
            t = dy * 3 + dx
            off = dy * IMG + dx
            acc1 = acc1 + xf[:, off:off + Y1W] * w1[:, t:t + 1]
    y1 = jnp.maximum(acc1 + b1, 0.0)     # (32, Y1W), y1[c, h*28+w]

    # ---- conv2 (32->64): 9 shifted MXU dots, bf16 in / f32 acc -------------
    acc2 = jnp.zeros((C2, Y2W), jnp.float32)
    for dy in range(3):
        for dx in range(3):
            t = dy * 3 + dx
            off = dy * IMG + dx
            acc2 = acc2 + jnp.dot(
                w2_ref[t],                                   # (64, 32) bf16
                y1[:, off:off + Y2W].astype(jnp.bfloat16),   # (32, Y2W) bf16
                preferred_element_type=jnp.float32)
    y2 = jnp.maximum(acc2 + b2, 0.0)     # (64, Y2W), y2[co, h*28+w]

    # ---- fused 2x2/stride-2 max pool ---------------------------------------
    m_h = jnp.maximum(y2[:, 0:MHW], y2[:, IMG:IMG + MHW])    # vertical pairs
    m_hw = jnp.maximum(m_h[:, 0:MHS], m_h[:, 1:1 + MHS])     # full 2x2 windows
    # select the stride-2 anchors via a 0/1 matrix on the MXU (exact pick)
    pooled = jnp.dot(m_hw.astype(jnp.bfloat16), sel_ref[...],
                     preferred_element_type=jnp.float32)     # (64, 144)
    # (64, 144) row-major == torch.flatten over (C, H, W) for this sample
    out_ref[0] = pooled.astype(jnp.bfloat16)


def fused_conv(xf, prep):
    n = xf.shape[0]
    return pl.pallas_call(
        _fused_conv_kernel,
        out_shape=jax.ShapeDtypeStruct((n, C2, POOLED), jnp.bfloat16),
        grid_spec=pltpu.PrefetchScalarGridSpec(
            num_scalar_prefetch=0,
            grid=(n,),
            in_specs=[
                pl.BlockSpec((1, 1, XPAD), lambda b: (b, 0, 0)),     # per-sample image
                pl.BlockSpec((C1, 9), lambda b: (0, 0)),             # conv1 weights (resident)
                pl.BlockSpec((C1, 1), lambda b: (0, 0)),
                pl.BlockSpec((9, C2, C1), lambda b: (0, 0, 0)),      # conv2 taps (resident)
                pl.BlockSpec((C2, 1), lambda b: (0, 0)),
                pl.BlockSpec((MHS, POOLED), lambda b: (0, 0)),       # pool selection matrix
            ],
            out_specs=pl.BlockSpec((1, C2, POOLED), lambda b: (b, 0, 0)),
        ),
        compiler_params=pltpu.CompilerParams(
            dimension_semantics=("parallel",),
            vmem_limit_bytes=32 * 1024 * 1024,
        ),
    )(xf, prep["w1"], prep["b1"], prep["w2"], prep["b2"], prep["sel"])


# ---------------------------------------------------------------------------
# Fused MLP head: fc1 + relu (+dropout2 identity) + fc2 + log_softmax
# ---------------------------------------------------------------------------
def _mlp_head_kernel(x_ref, w1_ref, b1_ref, w2_ref, b2_ref, o_ref):
    h = jnp.dot(x_ref[...], w1_ref[...], preferred_element_type=jnp.float32)
    h = jnp.maximum(h + b1_ref[...], 0.0)
    logits = jnp.dot(h.astype(jnp.bfloat16), w2_ref[...],
                     preferred_element_type=jnp.float32)
    logits = logits + b2_ref[...]
    m = jnp.max(logits, axis=1, keepdims=True)
    lse = m + jnp.log(jnp.sum(jnp.exp(logits - m), axis=1, keepdims=True))
    o_ref[...] = logits - lse


def mlp_head(x, prep):
    n = x.shape[0]
    # Row tile: divides n; at the demo batch (n=2) it is the whole batch.
    bm = math.gcd(n, 256)
    return pl.pallas_call(
        _mlp_head_kernel,
        out_shape=jax.ShapeDtypeStruct((n, NCLASS), jnp.float32),
        grid_spec=pltpu.PrefetchScalarGridSpec(
            num_scalar_prefetch=0,
            grid=(n // bm,),
            in_specs=[
                pl.BlockSpec((bm, FLAT), lambda i: (i, 0)),
                pl.BlockSpec((FLAT, FC_HID), lambda i: (0, 0)),   # fc1 weight resident
                pl.BlockSpec((1, FC_HID), lambda i: (0, 0)),
                pl.BlockSpec((FC_HID, NCLASS), lambda i: (0, 0)),  # fc2 weight resident
                pl.BlockSpec((1, NCLASS), lambda i: (0, 0)),
            ],
            out_specs=pl.BlockSpec((bm, NCLASS), lambda i: (i, 0)),
        ),
        compiler_params=pltpu.CompilerParams(
            dimension_semantics=("parallel",),
            vmem_limit_bytes=32 * 1024 * 1024,
        ),
    )(x, prep["fc1_w"], prep["fc1_b"], prep["fc2_w"], prep["fc2_b"])


# ---------------------------------------------------------------------------
# One-time parameter preparation (outside the jitted forward)
# ---------------------------------------------------------------------------
def prepare_params(params):
    # 0/1 matrix selecting the 144 stride-2 pool anchors from the flat window-max.
    sel = np.zeros((MHS, POOLED), np.float32)
    for i in range(12):
        for j in range(12):
            sel[(2 * i) * IMG + 2 * j, i * 12 + j] = 1.0
    return {
        # conv1: (32,1,3,3) -> (32, 9) [c, dy*3+dx], kept f32 for the VPU FMAs
        "w1": params["w1"].reshape(C1, 9).astype(jnp.float32),
        "b1": params["b1"].reshape(C1, 1).astype(jnp.float32),
        # conv2: (64,32,3,3) -> (9, 64, 32) [tap, cout, cin], bf16 for the MXU
        "w2": jnp.transpose(params["w2"], (2, 3, 0, 1))
                 .reshape(9, C2, C1).astype(jnp.bfloat16),
        "b2": params["b2"].reshape(C2, 1).astype(jnp.float32),
        "sel": jnp.asarray(sel, dtype=jnp.bfloat16),
        # fc weights pre-transposed + cast once (no per-forward .T / cast)
        "fc1_w": params["fc1_w"].T.astype(jnp.bfloat16),   # (9216, 128)
        "fc1_b": params["fc1_b"].reshape(1, FC_HID).astype(jnp.float32),
        "fc2_w": params["fc2_w"].T.astype(jnp.bfloat16),   # (128, 10)
        "fc2_b": params["fc2_b"].reshape(1, NCLASS).astype(jnp.float32),
    }


# ---------------------------------------------------------------------------
# Full forward pass (2 pallas_calls total)
# ---------------------------------------------------------------------------
@jax.jit
def cnn_forward(x_nchw, prep):
    n = x_nchw.shape[0]
    # flatten each 28x28 image and pad to XPAD so every conv tap is a contiguous slice
    xf = jnp.pad(x_nchw.reshape(n, 1, IMG * IMG).astype(jnp.float32),
                 ((0, 0), (0, 0), (0, XPAD - IMG * IMG)))
    conv_out = fused_conv(xf, prep)          # (n, 64, 144) bf16, torch CHW order
    flat = conv_out.reshape(n, FLAT)         # free reshape == torch.flatten(x, 1)
    return mlp_head(flat, prep)              # (n, 10) f32 log-probs
    # dropout1 / dropout2 are identity in eval mode (no-op here).


# ---------------------------------------------------------------------------
# Pure-JAX f32 reference (for correctness check)
# ---------------------------------------------------------------------------
def reference_forward(x_nchw, params):
    hi = jax.lax.Precision.HIGHEST
    dn = ("NCHW", "OIHW", "NCHW")
    y = jax.lax.conv_general_dilated(x_nchw, params["w1"], (1, 1), "VALID",
                                     dimension_numbers=dn, precision=hi)
    y = jax.nn.relu(y + params["b1"].reshape(1, -1, 1, 1))
    y = jax.lax.conv_general_dilated(y, params["w2"], (1, 1), "VALID",
                                     dimension_numbers=dn, precision=hi)
    y = jax.nn.relu(y + params["b2"].reshape(1, -1, 1, 1))
    y = jax.lax.reduce_window(y, -jnp.inf, jax.lax.max,
                              (1, 1, 2, 2), (1, 1, 2, 2), "VALID")
    y = y.reshape(y.shape[0], -1)
    y = jax.nn.relu(jnp.dot(y, params["fc1_w"].T, precision=hi) + params["fc1_b"])
    y = jnp.dot(y, params["fc2_w"].T, precision=hi) + params["fc2_b"]
    return jax.nn.log_softmax(y, axis=1)


def init_params(key):
    ks = jax.random.split(key, 8)

    def u(k, shape, fan_in):
        bound = 1.0 / jnp.sqrt(fan_in)
        return jax.random.uniform(k, shape, jnp.float32, -bound, bound)

    return {
        "w1": u(ks[0], (32, 1, 3, 3), 1 * 9),
        "b1": u(ks[1], (32,), 1 * 9),
        "w2": u(ks[2], (64, 32, 3, 3), 32 * 9),
        "b2": u(ks[3], (64,), 32 * 9),
        "fc1_w": u(ks[4], (128, 9216), 9216),
        "fc1_b": u(ks[5], (128,), 9216),
        "fc2_w": u(ks[6], (10, 128), 128),
        "fc2_b": u(ks[7], (10,), 128),
    }


if __name__ == "__main__":
    key = jax.random.PRNGKey(0)
    kx, kp = jax.random.split(key)
    x = jax.random.normal(kx, (2, 1, 28, 28), dtype=jnp.float32)  # batch=2, MNIST-sized
    params = init_params(kp)
    prep = prepare_params(params)

    out = jax.block_until_ready(cnn_forward(x, prep))
    assert out.shape == (2, 10), out.shape

    ref = jax.block_until_ready(reference_forward(x, params))
    # bf16 matmul inputs with f32 accumulation -> slightly looser tolerance than f32.
    max_err = float(jnp.max(jnp.abs(out - ref)))
    assert jnp.allclose(out, ref, atol=2e-2, rtol=2e-2), max_err

    print("KERNEL_OK")
</pallas_src>

<mosaic_0001>
module attributes {stable_mosaic.version = 11 : i64} {
  func.func @_fused_conv_kernel(%arg0: i32, %arg1: memref<1x1x800xf32, #tpu.memory_space<vmem>>, %arg2: memref<32x9xf32, #tpu.memory_space<vmem>>, %arg3: memref<32x1xf32, #tpu.memory_space<vmem>>, %arg4: memref<9x64x32xbf16, #tpu.memory_space<vmem>>, %arg5: memref<64x1xf32, #tpu.memory_space<vmem>>, %arg6: memref<639x144xbf16, #tpu.memory_space<vmem>>, %arg7: memref<1x64x144xbf16, #tpu.memory_space<vmem>>) attributes {dimension_semantics = [#tpu.dimension_semantics<parallel>], iteration_bounds = array<i64: 2>, scalar_prefetch = 0 : i64, scratch_operands = 0 : i64, tpu.core_type = #tpu.core_type<tc>, window_params = [{transform_indices = @transform_0, window_bounds = array<i64: 1, 1, 800>}, {pipeline_mode = #tpu.pipeline_mode<synchronous>, transform_indices = @transform_1, window_bounds = array<i64: 32, 9>}, {pipeline_mode = #tpu.pipeline_mode<synchronous>, transform_indices = @transform_2, window_bounds = array<i64: 32, 1>}, {pipeline_mode = #tpu.pipeline_mode<synchronous>, transform_indices = @transform_3, window_bounds = array<i64: 9, 64, 32>}, {pipeline_mode = #tpu.pipeline_mode<synchronous>, transform_indices = @transform_4, window_bounds = array<i64: 64, 1>}, {pipeline_mode = #tpu.pipeline_mode<synchronous>, transform_indices = @transform_5, window_bounds = array<i64: 639, 144>}, {transform_indices = @transform_6, window_bounds = array<i64: 1, 64, 144>}]} {
    %c0 = arith.constant 0 : index
    %c0_0 = arith.constant 0 : index
    %c0_1 = arith.constant 0 : index
    %0 = vector.load %arg1[%c0, %c0_0, %c0_1] : memref<1x1x800xf32, #tpu.memory_space<vmem>>, vector<1x1x800xf32>
    %1 = vector.shape_cast %0 : vector<1x1x800xf32> to vector<1x800xf32>
    %c0_2 = arith.constant 0 : index
    %c0_3 = arith.constant 0 : index
    %2 = vector.load %arg2[%c0_2, %c0_3] : memref<32x9xf32, #tpu.memory_space<vmem>>, vector<32x9xf32>
    %c0_4 = arith.constant 0 : index
    %c0_5 = arith.constant 0 : index
    %3 = vector.load %arg3[%c0_4, %c0_5] : memref<32x1xf32, #tpu.memory_space<vmem>>, vector<32x1xf32>
    %c0_6 = arith.constant 0 : index
    %c0_7 = arith.constant 0 : index
    %4 = vector.load %arg5[%c0_6, %c0_7] : memref<64x1xf32, #tpu.memory_space<vmem>>, vector<64x1xf32>
    %cst = arith.constant 0.000000e+00 : f32
    %5 = vector.broadcast %cst : f32 to vector<32x736xf32>
    %6 = vector.extract_strided_slice %1 {offsets = [0, 0], sizes = [1, 736], strides = [1, 1]} : vector<1x800xf32> to vector<1x736xf32>
    %7 = vector.extract_strided_slice %2 {offsets = [0, 0], sizes = [32, 1], strides = [1, 1]} : vector<32x9xf32> to vector<32x1xf32>
    %8 = vector.broadcast %6 : vector<1x736xf32> to vector<32x736xf32>
    %9 = vector.broadcast %7 : vector<32x1xf32> to vector<32x736xf32>
    %10 = arith.mulf %8, %9 : vector<32x736xf32>
    %11 = arith.addf %5, %10 : vector<32x736xf32>
    %12 = vector.extract_strided_slice %1 {offsets = [0, 1], sizes = [1, 736], strides = [1, 1]} : vector<1x800xf32> to vector<1x736xf32>
    %13 = vector.extract_strided_slice %2 {offsets = [0, 1], sizes = [32, 1], strides = [1, 1]} : vector<32x9xf32> to vector<32x1xf32>
    %14 = vector.broadcast %12 : vector<1x736xf32> to vector<32x736xf32>
    %15 = vector.broadcast %13 : vector<32x1xf32> to vector<32x736xf32>
    %16 = arith.mulf %14, %15 : vector<32x736xf32>
    %17 = arith.addf %11, %16 : vector<32x736xf32>
    %18 = vector.extract_strided_slice %1 {offsets = [0, 2], sizes = [1, 736], strides = [1, 1]} : vector<1x800xf32> to vector<1x736xf32>
    %19 = vector.extract_strided_slice %2 {offsets = [0, 2], sizes = [32, 1], strides = [1, 1]} : vector<32x9xf32> to vector<32x1xf32>
    %20 = vector.broadcast %18 : vector<1x736xf32> to vector<32x736xf32>
    %21 = vector.broadcast %19 : vector<32x1xf32> to vector<32x736xf32>
    %22 = arith.mulf %20, %21 : vector<32x736xf32>
    %23 = arith.addf %17, %22 : vector<32x736xf32>
    %24 = vector.extract_strided_slice %1 {offsets = [0, 28], sizes = [1, 736], strides = [1, 1]} : vector<1x800xf32> to vector<1x736xf32>
    %25 = vector.extract_strided_slice %2 {offsets = [0, 3], sizes = [32, 1], strides = [1, 1]} : vector<32x9xf32> to vector<32x1xf32>
    %26 = vector.broadcast %24 : vector<1x736xf32> to vector<32x736xf32>
    %27 = vector.broadcast %25 : vector<32x1xf32> to vector<32x736xf32>
    %28 = arith.mulf %26, %27 : vector<32x736xf32>
    %29 = arith.addf %23, %28 : vector<32x736xf32>
    %30 = vector.extract_strided_slice %1 {offsets = [0, 29], sizes = [1, 736], strides = [1, 1]} : vector<1x800xf32> to vector<1x736xf32>
    %31 = vector.extract_strided_slice %2 {offsets = [0, 4], sizes = [32, 1], strides = [1, 1]} : vector<32x9xf32> to vector<32x1xf32>
    %32 = vector.broadcast %30 : vector<1x736xf32> to vector<32x736xf32>
    %33 = vector.broadcast %31 : vector<32x1xf32> to vector<32x736xf32>
    %34 = arith.mulf %32, %33 : vector<32x736xf32>
    %35 = arith.addf %29, %34 : vector<32x736xf32>
    %36 = vector.extract_strided_slice %1 {offsets = [0, 30], sizes = [1, 736], strides = [1, 1]} : vector<1x800xf32> to vector<1x736xf32>
    %37 = vector.extract_strided_slice %2 {offsets = [0, 5], sizes = [32, 1], strides = [1, 1]} : vector<32x9xf32> to vector<32x1xf32>
    %38 = vector.broadcast %36 : vector<1x736xf32> to vector<32x736xf32>
    %39 = vector.broadcast %37 : vector<32x1xf32> to vector<32x736xf32>
    %40 = arith.mulf %38, %39 : vector<32x736xf32>
    %41 = arith.addf %35, %40 : vector<32x736xf32>
    %42 = vector.extract_strided_slice %1 {offsets = [0, 56], sizes = [1, 736], strides = [1, 1]} : vector<1x800xf32> to vector<1x736xf32>
    %43 = vector.extract_strided_slice %2 {offsets = [0, 6], sizes = [32, 1], strides = [1, 1]} : vector<32x9xf32> to vector<32x1xf32>
    %44 = vector.broadcast %42 : vector<1x736xf32> to vector<32x736xf32>
    %45 = vector.broadcast %43 : vector<32x1xf32> to vector<32x736xf32>
    %46 = arith.mulf %44, %45 : vector<32x736xf32>
    %47 = arith.addf %41, %46 : vector<32x736xf32>
    %48 = vector.extract_strided_slice %1 {offsets = [0, 57], sizes = [1, 736], strides = [1, 1]} : vector<1x800xf32> to vector<1x736xf32>
    %49 = vector.extract_strided_slice %2 {offsets = [0, 7], sizes = [32, 1], strides = [1, 1]} : vector<32x9xf32> to vector<32x1xf32>
    %50 = vector.broadcast %48 : vector<1x736xf32> to vector<32x736xf32>
    %51 = vector.broadcast %49 : vector<32x1xf32> to vector<32x736xf32>
    %52 = arith.mulf %50, %51 : vector<32x736xf32>
    %53 = arith.addf %47, %52 : vector<32x736xf32>
    %54 = vector.extract_strided_slice %1 {offsets = [0, 58], sizes = [1, 736], strides = [1, 1]} : vector<1x800xf32> to vector<1x736xf32>
    %55 = vector.extract_strided_slice %2 {offsets = [0, 8], sizes = [32, 1], strides = [1, 1]} : vector<32x9xf32> to vector<32x1xf32>
    %56 = vector.broadcast %54 : vector<1x736xf32> to vector<32x736xf32>
    %57 = vector.broadcast %55 : vector<32x1xf32> to vector<32x736xf32>
    %58 = arith.mulf %56, %57 : vector<32x736xf32>
    %59 = arith.addf %53, %58 : vector<32x736xf32>
    %60 = vector.broadcast %3 : vector<32x1xf32> to vector<32x736xf32>
    %61 = arith.addf %59, %60 : vector<32x736xf32>
    %cst_8 = arith.constant 0.000000e+00 : f32
    %62 = vector.broadcast %cst_8 : f32 to vector<32x736xf32>
    %63 = arith.maximumf %61, %62 : vector<32x736xf32>
    %cst_9 = arith.constant 0.000000e+00 : f32
    %64 = vector.broadcast %cst_9 : f32 to vector<64x672xf32>
    %c0_10 = arith.constant 0 : index
    %c0_11 = arith.constant 0 : index
    %c0_12 = arith.constant 0 : index
    %65 = vector.load %arg4[%c0_10, %c0_11, %c0_12] : memref<9x64x32xbf16, #tpu.memory_space<vmem>>, vector<1x64x32xbf16>
    %66 = vector.shape_cast %65 : vector<1x64x32xbf16> to vector<64x32xbf16>
    %67 = vector.extract_strided_slice %63 {offsets = [0, 0], sizes = [32, 672], strides = [1, 1]} : vector<32x736xf32> to vector<32x672xf32>
    %68 = arith.truncf %67 : vector<32x672xf32> to vector<32x672xbf16>
    %cst_13 = arith.constant dense<0.000000e+00> : vector<64x672xf32>
    %69 = tpu.matmul %66, %68, %cst_13 {dimension_numbers = #tpu.dot_dimension_numbers<[1], [0], [0], [1], [0, 0, 1, 1], [], []>} : vector<64x32xbf16>, vector<32x672xbf16>, vector<64x672xf32> -> vector<64x672xf32>
    %70 = arith.addf %64, %69 : vector<64x672xf32>
    %c1 = arith.constant 1 : index
    %c0_14 = arith.constant 0 : index
    %c0_15 = arith.constant 0 : index
    %71 = vector.load %arg4[%c1, %c0_14, %c0_15] : memref<9x64x32xbf16, #tpu.memory_space<vmem>>, vector<1x64x32xbf16>
    %72 = vector.shape_cast %71 : vector<1x64x32xbf16> to vector<64x32xbf16>
    %73 = vector.extract_strided_slice %63 {offsets = [0, 1], sizes = [32, 672], strides = [1, 1]} : vector<32x736xf32> to vector<32x672xf32>
    %74 = arith.truncf %73 : vector<32x672xf32> to vector<32x672xbf16>
    %cst_16 = arith.constant dense<0.000000e+00> : vector<64x672xf32>
    %75 = tpu.matmul %72, %74, %cst_16 {dimension_numbers = #tpu.dot_dimension_numbers<[1], [0], [0], [1], [0, 0, 1, 1], [], []>} : vector<64x32xbf16>, vector<32x672xbf16>, vector<64x672xf32> -> vector<64x672xf32>
    %76 = arith.addf %70, %75 : vector<64x672xf32>
    %c2 = arith.constant 2 : index
    %c0_17 = arith.constant 0 : index
    %c0_18 = arith.constant 0 : index
    %77 = vector.load %arg4[%c2, %c0_17, %c0_18] : memref<9x64x32xbf16, #tpu.memory_space<vmem>>, vector<1x64x32xbf16>
    %78 = vector.shape_cast %77 : vector<1x64x32xbf16> to vector<64x32xbf16>
    %79 = vector.extract_strided_slice %63 {offsets = [0, 2], sizes = [32, 672], strides = [1, 1]} : vector<32x736xf32> to vector<32x672xf32>
    %80 = arith.truncf %79 : vector<32x672xf32> to vector<32x672xbf16>
    %cst_19 = arith.constant dense<0.000000e+00> : vector<64x672xf32>
    %81 = tpu.matmul %78, %80, %cst_19 {dimension_numbers = #tpu.dot_dimension_numbers<[1], [0], [0], [1], [0, 0, 1, 1], [], []>} : vector<64x32xbf16>, vector<32x672xbf16>, vector<64x672xf32> -> vector<64x672xf32>
    %82 = arith.addf %76, %81 : vector<64x672xf32>
    %c3 = arith.constant 3 : index
    %c0_20 = arith.constant 0 : index
    %c0_21 = arith.constant 0 : index
    %83 = vector.load %arg4[%c3, %c0_20, %c0_21] : memref<9x64x32xbf16, #tpu.memory_space<vmem>>, vector<1x64x32xbf16>
    %84 = vector.shape_cast %83 : vector<1x64x32xbf16> to vector<64x32xbf16>
    %85 = vector.extract_strided_slice %63 {offsets = [0, 28], sizes = [32, 672], strides = [1, 1]} : vector<32x736xf32> to vector<32x672xf32>
    %86 = arith.truncf %85 : vector<32x672xf32> to vector<32x672xbf16>
    %cst_22 = arith.constant dense<0.000000e+00> : vector<64x672xf32>
    %87 = tpu.matmul %84, %86, %cst_22 {dimension_numbers = #tpu.dot_dimension_numbers<[1], [0], [0], [1], [0, 0, 1, 1], [], []>} : vector<64x32xbf16>, vector<32x672xbf16>, vector<64x672xf32> -> vector<64x672xf32>
    %88 = arith.addf %82, %87 : vector<64x672xf32>
    %c4 = arith.constant 4 : index
    %c0_23 = arith.constant 0 : index
    %c0_24 = arith.constant 0 : index
    %89 = vector.load %arg4[%c4, %c0_23, %c0_24] : memref<9x64x32xbf16, #tpu.memory_space<vmem>>, vector<1x64x32xbf16>
    %90 = vector.shape_cast %89 : vector<1x64x32xbf16> to vector<64x32xbf16>
    %91 = vector.extract_strided_slice %63 {offsets = [0, 29], sizes = [32, 672], strides = [1, 1]} : vector<32x736xf32> to vector<32x672xf32>
    %92 = arith.truncf %91 : vector<32x672xf32> to vector<32x672xbf16>
    %cst_25 = arith.constant dense<0.000000e+00> : vector<64x672xf32>
    %93 = tpu.matmul %90, %92, %cst_25 {dimension_numbers = #tpu.dot_dimension_numbers<[1], [0], [0], [1], [0, 0, 1, 1], [], []>} : vector<64x32xbf16>, vector<32x672xbf16>, vector<64x672xf32> -> vector<64x672xf32>
    %94 = arith.addf %88, %93 : vector<64x672xf32>
    %c5 = arith.constant 5 : index
    %c0_26 = arith.constant 0 : index
    %c0_27 = arith.constant 0 : index
    %95 = vector.load %arg4[%c5, %c0_26, %c0_27] : memref<9x64x32xbf16, #tpu.memory_space<vmem>>, vector<1x64x32xbf16>
    %96 = vector.shape_cast %95 : vector<1x64x32xbf16> to vector<64x32xbf16>
    %97 = vector.extract_strided_slice %63 {offsets = [0, 30], sizes = [32, 672], strides = [1, 1]} : vector<32x736xf32> to vector<32x672xf32>
    %98 = arith.truncf %97 : vector<32x672xf32> to vector<32x672xbf16>
    %cst_28 = arith.constant dense<0.000000e+00> : vector<64x672xf32>
    %99 = tpu.matmul %96, %98, %cst_28 {dimension_numbers = #tpu.dot_dimension_numbers<[1], [0], [0], [1], [0, 0, 1, 1], [], []>} : vector<64x32xbf16>, vector<32x672xbf16>, vector<64x672xf32> -> vector<64x672xf32>
    %100 = arith.addf %94, %99 : vector<64x672xf32>
    %c6 = arith.constant 6 : index
    %c0_29 = arith.constant 0 : index
    %c0_30 = arith.constant 0 : index
    %101 = vector.load %arg4[%c6, %c0_29, %c0_30] : memref<9x64x32xbf16, #tpu.memory_space<vmem>>, vector<1x64x32xbf16>
    %102 = vector.shape_cast %101 : vector<1x64x32xbf16> to vector<64x32xbf16>
    %103 = vector.extract_strided_slice %63 {offsets = [0, 56], sizes = [32, 672], strides = [1, 1]} : vector<32x736xf32> to vector<32x672xf32>
    %104 = arith.truncf %103 : vector<32x672xf32> to vector<32x672xbf16>
    %cst_31 = arith.constant dense<0.000000e+00> : vector<64x672xf32>
    %105 = tpu.matmul %102, %104, %cst_31 {dimension_numbers = #tpu.dot_dimension_numbers<[1], [0], [0], [1], [0, 0, 1, 1], [], []>} : vector<64x32xbf16>, vector<32x672xbf16>, vector<64x672xf32> -> vector<64x672xf32>
    %106 = arith.addf %100, %105 : vector<64x672xf32>
    %c7 = arith.constant 7 : index
    %c0_32 = arith.constant 0 : index
    %c0_33 = arith.constant 0 : index
    %107 = vector.load %arg4[%c7, %c0_32, %c0_33] : memref<9x64x32xbf16, #tpu.memory_space<vmem>>, vector<1x64x32xbf16>
    %108 = vector.shape_cast %107 : vector<1x64x32xbf16> to vector<64x32xbf16>
    %109 = vector.extract_strided_slice %63 {offsets = [0, 57], sizes = [32, 672], strides = [1, 1]} : vector<32x736xf32> to vector<32x672xf32>
    %110 = arith.truncf %109 : vector<32x672xf32> to vector<32x672xbf16>
    %cst_34 = arith.constant dense<0.000000e+00> : vector<64x672xf32>
    %111 = tpu.matmul %108, %110, %cst_34 {dimension_numbers = #tpu.dot_dimension_numbers<[1], [0], [0], [1], [0, 0, 1, 1], [], []>} : vector<64x32xbf16>, vector<32x672xbf16>, vector<64x672xf32> -> vector<64x672xf32>
    %112 = arith.addf %106, %111 : vector<64x672xf32>
    %c8 = arith.constant 8 : index
    %c0_35 = arith.constant 0 : index
    %c0_36 = arith.constant 0 : index
    %113 = vector.load %arg4[%c8, %c0_35, %c0_36] : memref<9x64x32xbf16, #tpu.memory_space<vmem>>, vector<1x64x32xbf16>
    %114 = vector.shape_cast %113 : vector<1x64x32xbf16> to vector<64x32xbf16>
    %115 = vector.extract_strided_slice %63 {offsets = [0, 58], sizes = [32, 672], strides = [1, 1]} : vector<32x736xf32> to vector<32x672xf32>
    %116 = arith.truncf %115 : vector<32x672xf32> to vector<32x672xbf16>
    %cst_37 = arith.constant dense<0.000000e+00> : vector<64x672xf32>
    %117 = tpu.matmul %114, %116, %cst_37 {dimension_numbers = #tpu.dot_dimension_numbers<[1], [0], [0], [1], [0, 0, 1, 1], [], []>} : vector<64x32xbf16>, vector<32x672xbf16>, vector<64x672xf32> -> vector<64x672xf32>
    %118 = arith.addf %112, %117 : vector<64x672xf32>
    %119 = vector.broadcast %4 : vector<64x1xf32> to vector<64x672xf32>
    %120 = arith.addf %118, %119 : vector<64x672xf32>
    %cst_38 = arith.constant 0.000000e+00 : f32
    %121 = vector.broadcast %cst_38 : f32 to vector<64x672xf32>
    %122 = arith.maximumf %120, %121 : vector<64x672xf32>
    %123 = vector.extract_strided_slice %122 {offsets = [0, 0], sizes = [64, 640], strides = [1, 1]} : vector<64x672xf32> to vector<64x640xf32>
    %124 = vector.extract_strided_slice %122 {offsets = [0, 28], sizes = [64, 640], strides = [1, 1]} : vector<64x672xf32> to vector<64x640xf32>
    %125 = arith.maximumf %123, %124 : vector<64x640xf32>
    %126 = vector.extract_strided_slice %125 {offsets = [0, 0], sizes = [64, 639], strides = [1, 1]} : vector<64x640xf32> to vector<64x639xf32>
    %127 = vector.extract_strided_slice %125 {offsets = [0, 1], sizes = [64, 639], strides = [1, 1]} : vector<64x640xf32> to vector<64x639xf32>
    %128 = arith.maximumf %126, %127 : vector<64x639xf32>
    %129 = arith.truncf %128 : vector<64x639xf32> to vector<64x639xbf16>
    %c0_39 = arith.constant 0 : index
    %c0_40 = arith.constant 0 : index
    %130 = vector.load %arg6[%c0_39, %c0_40] : memref<639x144xbf16, #tpu.memory_space<vmem>>, vector<639x144xbf16>
    %cst_41 = arith.constant dense<0.000000e+00> : vector<64x144xf32>
    %131 = tpu.matmul %129, %130, %cst_41 {dimension_numbers = #tpu.dot_dimension_numbers<[1], [0], [0], [1], [0, 0, 1, 1], [], []>} : vector<64x639xbf16>, vector<639x144xbf16>, vector<64x144xf32> -> vector<64x144xf32>
    %132 = arith.truncf %131 : vector<64x144xf32> to vector<64x144xbf16>
    %c0_42 = arith.constant 0 : index
    %c0_43 = arith.constant 0 : index
    %c0_44 = arith.constant 0 : index
    %133 = vector.load %arg7[%c0_42, %c0_43, %c0_44] : memref<1x64x144xbf16, #tpu.memory_space<vmem>>, vector<1x64x144xbf16>
    %134 = vector.shape_cast %133 : vector<1x64x144xbf16> to vector<64x144xbf16>
    %135 = vector.shape_cast %132 : vector<64x144xbf16> to vector<1x64x144xbf16>
    tpu.vector_store %arg7[%c0_42, %c0_43, %c0_44], %135 {strides = array<i32>} : memref<1x64x144xbf16, #tpu.memory_space<vmem>>, vector<1x64x144xbf16>,
    return
  }
  func.func @transform_0(%arg0: i32) -> (i32, i32, i32) {
    %c0_i32 = arith.constant 0 : i32
    %c0_i32_0 = arith.constant 0 : i32
    %c0_i32_1 = arith.constant 0 : i32
    return %arg0, %c0_i32, %c0_i32_0 : i32, i32, i32
  }
  func.func @transform_1(%arg0: i32) -> (i32, i32) {
    %c0_i32 = arith.constant 0 : i32
    %c0_i32_0 = arith.constant 0 : i32
    %c0_i32_1 = arith.constant 0 : i32
    return %c0_i32, %c0_i32_0 : i32, i32
  }
  func.func @transform_2(%arg0: i32) -> (i32, i32) {
    %c0_i32 = arith.constant 0 : i32
    %c0_i32_0 = arith.constant 0 : i32
    %c0_i32_1 = arith.constant 0 : i32
    return %c0_i32, %c0_i32_0 : i32, i32
  }
  func.func @transform_3(%arg0: i32) -> (i32, i32, i32) {
    %c0_i32 = arith.constant 0 : i32
    %c0_i32_0 = arith.constant 0 : i32
    %c0_i32_1 = arith.constant 0 : i32
    %c0_i32_2 = arith.constant 0 : i32
    return %c0_i32, %c0_i32_0, %c0_i32_1 : i32, i32, i32
  }
  func.func @transform_4(%arg0: i32) -> (i32, i32) {
    %c0_i32 = arith.constant 0 : i32
    %c0_i32_0 = arith.constant 0 : i32
    %c0_i32_1 = arith.constant 0 : i32
    return %c0_i32, %c0_i32_0 : i32, i32
  }
  func.func @transform_5(%arg0: i32) -> (i32, i32) {
    %c0_i32 = arith.constant 0 : i32
    %c0_i32_0 = arith.constant 0 : i32
    %c0_i32_1 = arith.constant 0 : i32
    return %c0_i32, %c0_i32_0 : i32, i32
  }
  func.func @transform_6(%arg0: i32) -> (i32, i32, i32) {
    %c0_i32 = arith.constant 0 : i32
    %c0_i32_0 = arith.constant 0 : i32
    %c0_i32_1 = arith.constant 0 : i32
    return %arg0, %c0_i32, %c0_i32_0 : i32, i32, i32
  }
}

module attributes {stable_mosaic.version = 11 : i64} {
  func.func @_mlp_head_kernel(%arg0: i32, %arg1: memref<2x9216xbf16, #tpu.memory_space<vmem>>, %arg2: memref<9216x128xbf16, #tpu.memory_space<vmem>>, %arg3: memref<1x128xf32, #tpu.memory_space<vmem>>, %arg4: memref<128x10xbf16, #tpu.memory_space<vmem>>, %arg5: memref<1x10xf32, #tpu.memory_space<vmem>>, %arg6: memref<2x10xf32, #tpu.memory_space<vmem>>) attributes {dimension_semantics = [#tpu.dimension_semantics<parallel>], iteration_bounds = array<i64: 1>, scalar_prefetch = 0 : i64, scratch_operands = 0 : i64, tpu.core_type = #tpu.core_type<tc>, window_params = [{transform_indices = @transform_0, window_bounds = array<i64: 2, 9216>}, {pipeline_mode = #tpu.pipeline_mode<synchronous>, transform_indices = @transform_1, window_bounds = array<i64: 9216, 128>}, {pipeline_mode = #tpu.pipeline_mode<synchronous>, transform_indices = @transform_2, window_bounds = array<i64: 1, 128>}, {pipeline_mode = #tpu.pipeline_mode<synchronous>, transform_indices = @transform_3, window_bounds = array<i64: 128, 10>}, {pipeline_mode = #tpu.pipeline_mode<synchronous>, transform_indices = @transform_4, window_bounds = array<i64: 1, 10>}, {transform_indices = @transform_5, window_bounds = array<i64: 2, 10>}]} {
    %c0 = arith.constant 0 : index
    %c0_0 = arith.constant 0 : index
    %0 = vector.load %arg1[%c0, %c0_0] : memref<2x9216xbf16, #tpu.memory_space<vmem>>, vector<2x9216xbf16>
    %c0_1 = arith.constant 0 : index
    %c0_2 = arith.constant 0 : index
    %1 = vector.load %arg2[%c0_1, %c0_2] : memref<9216x128xbf16, #tpu.memory_space<vmem>>, vector<9216x128xbf16>
    %cst = arith.constant dense<0.000000e+00> : vector<2x128xf32>
    %2 = tpu.matmul %0, %1, %cst {dimension_numbers = #tpu.dot_dimension_numbers<[1], [0], [0], [1], [0, 0, 1, 1], [], []>} : vector<2x9216xbf16>, vector<9216x128xbf16>, vector<2x128xf32> -> vector<2x128xf32>
    %c0_3 = arith.constant 0 : index
    %c0_4 = arith.constant 0 : index
    %3 = vector.load %arg3[%c0_3, %c0_4] : memref<1x128xf32, #tpu.memory_space<vmem>>, vector<1x128xf32>
    %4 = vector.broadcast %3 : vector<1x128xf32> to vector<2x128xf32>
    %5 = arith.addf %2, %4 : vector<2x128xf32>
    %cst_5 = arith.constant 0.000000e+00 : f32
    %6 = vector.broadcast %cst_5 : f32 to vector<2x128xf32>
    %7 = arith.maximumf %5, %6 : vector<2x128xf32>
    %8 = arith.truncf %7 : vector<2x128xf32> to vector<2x128xbf16>
    %c0_6 = arith.constant 0 : index
    %c0_7 = arith.constant 0 : index
    %9 = vector.load %arg4[%c0_6, %c0_7] : memref<128x10xbf16, #tpu.memory_space<vmem>>, vector<128x10xbf16>
    %cst_8 = arith.constant dense<0.000000e+00> : vector<2x10xf32>
    %10 = tpu.matmul %8, %9, %cst_8 {dimension_numbers = #tpu.dot_dimension_numbers<[1], [0], [0], [1], [0, 0, 1, 1], [], []>} : vector<2x128xbf16>, vector<128x10xbf16>, vector<2x10xf32> -> vector<2x10xf32>
    %c0_9 = arith.constant 0 : index
    %c0_10 = arith.constant 0 : index
    %11 = vector.load %arg5[%c0_9, %c0_10] : memref<1x10xf32, #tpu.memory_space<vmem>>, vector<1x10xf32>
    %12 = vector.broadcast %11 : vector<1x10xf32> to vector<2x10xf32>
    %13 = arith.addf %10, %12 : vector<2x10xf32>
    %cst_11 = arith.constant dense<0xFF800000> : vector<2xf32>
    %14 = vector.multi_reduction <maximumf>, %13, %cst_11 [1] : vector<2x10xf32> to vector<2xf32>
    %15 = vector.shape_cast %14 : vector<2xf32> to vector<2x1xf32>
    %16 = vector.broadcast %15 : vector<2x1xf32> to vector<2x10xf32>
    %17 = arith.subf %13, %16 : vector<2x10xf32>
    %18 = math.exp %17 : vector<2x10xf32>
    %cst_12 = arith.constant dense<0.000000e+00> : vector<2xf32>
    %19 = vector.multi_reduction <add>, %18, %cst_12 [1] : vector<2x10xf32> to vector<2xf32>
    %20 = vector.shape_cast %19 : vector<2xf32> to vector<2x1xf32>
    %21 = math.log %20 : vector<2x1xf32>
    %22 = arith.addf %15, %21 : vector<2x1xf32>
    %23 = vector.broadcast %22 : vector<2x1xf32> to vector<2x10xf32>
    %24 = arith.subf %13, %23 : vector<2x10xf32>
    %c0_13 = arith.constant 0 : index
    %c0_14 = arith.constant 0 : index
    %25 = vector.load %arg6[%c0_13, %c0_14] : memref<2x10xf32, #tpu.memory_space<vmem>>, vector<2x10xf32>
    tpu.vector_store %arg6[%c0_13, %c0_14], %24 {strides = array<i32>} : memref<2x10xf32, #tpu.memory_space<vmem>>, vector<2x10xf32>,
    return
  }
  func.func @transform_0(%arg0: i32) -> (i32, i32) {
    %c0_i32 = arith.constant 0 : i32
    %c0_i32_0 = arith.constant 0 : i32
    return %arg0, %c0_i32 : i32, i32
  }
  func.func @transform_1(%arg0: i32) -> (i32, i32) {
    %c0_i32 = arith.constant 0 : i32
    %c0_i32_0 = arith.constant 0 : i32
    %c0_i32_1 = arith.constant 0 : i32
    return %c0_i32, %c0_i32_0 : i32, i32
  }
  func.func @transform_2(%arg0: i32) -> (i32, i32) {
    %c0_i32 = arith.constant 0 : i32
    %c0_i32_0 = arith.constant 0 : i32
    %c0_i32_1 = arith.constant 0 : i32
    return %c0_i32, %c0_i32_0 : i32, i32
  }
  func.func @transform_3(%arg0: i32) -> (i32, i32) {
    %c0_i32 = arith.constant 0 : i32
    %c0_i32_0 = arith.constant 0 : i32
    %c0_i32_1 = arith.constant 0 : i32
    return %c0_i32, %c0_i32_0 : i32, i32
  }
  func.func @transform_4(%arg0: i32) -> (i32, i32) {
    %c0_i32 = arith.constant 0 : i32
    %c0_i32_0 = arith.constant 0 : i32
    %c0_i32_1 = arith.constant 0 : i32
    return %c0_i32, %c0_i32_0 : i32, i32
  }
  func.func @transform_5(%arg0: i32) -> (i32, i32) {
    %c0_i32 = arith.constant 0 : i32
    %c0_i32_0 = arith.constant 0 : i32
    return %arg0, %c0_i32 : i32, i32
  }
}

</mosaic_0001>

<llo_original>
// kernel: cnn_forward.2
$region0: #{cnn_forward.2}
  #allocation0 [shape = 'u32[]', space=smem, size = 0x4, offset = 0x4, fixed_abs, tag = 'smem constant byte address 0x4 - core index']
  #allocation1 [shape = 'u32[144,128]{1,0:T(1,128)}', space=vmem, size = 0x12000, scoped, tag = 'internal scratch']
  %s0 = inlined_call_operand.vmem [shape: f32[2,1,800], index: 0, kind: input, shape index: {}]
  %s1 = inlined_call_operand.vmem [shape: f32[32,9], index: 1, kind: input, shape index: {}]
  %s2 = inlined_call_operand.vmem [shape: f32[32,1], index: 2, kind: input, shape index: {}]
  %s3 = inlined_call_operand.vmem [shape: bf16[9,64,32], index: 3, kind: input, shape index: {}]
  %s4 = inlined_call_operand.vmem [shape: f32[64,1], index: 4, kind: input, shape index: {}]
  %s5 = inlined_call_operand.vmem [shape: bf16[639,144], index: 5, kind: input, shape index: {}]
  %s6 = inlined_call_operand.vmem [shape: bf16[2,64,144], index: 6, kind: output, shape index: {}]
  %s7 = sld [smem:[#allocation0]]
  $region57: #{cnn_forward.2} parent=0
    _
  %s9 = ssub.s32 1, %s7
  %s10 = scalar_select 0, %s9, %s7
  loop: start=0, step=1, limit=4
  $region2: #{cnn_forward.2} parent=0 // loop_pre_header
    _
  $region3: #{cnn_forward.2} parent=0 // loop_header
    %s12 = sphi 0, %s16
    %p13 = scmp.ge.s32.totalorder %s12, 4
    %s22 = sphi 0, %s24
    %s25 = sphi 0, %s22
    %s26 = sphi 0, %s25
    %s42 = sphi 0, %s26
    %s46 = sphi 0, %s46
    %s48 = sphi 0, %s46
    %s49 = sphi 0, %s48
    %s63 = sphi 0, %s49
    %s67 = sphi 0, %s67
    %s69 = sphi 0, %s67
    %s70 = sphi 0, %s69
    %s84 = sphi 0, %s70
    %s88 = sphi 0, %s88
    %s90 = sphi 0, %s88
    %s91 = sphi 0, %s90
    %s105 = sphi 0, %s91
    %s109 = sphi 0, %s109
    %s111 = sphi 0, %s109
    %s112 = sphi 0, %s111
    %s126 = sphi 0, %s112
    %s130 = sphi 0, %s130
    %s132 = sphi 0, %s130
    %s133 = sphi 0, %s132
    %s147 = sphi 0, %s133
    %s153 = sphi 0, %s155
    %s156 = sphi 0, %s153
    %s157 = sphi 0, %s156
    %s173 = sphi 0, %s157
  $region4: #{cnn_forward.2} parent=0 // loop_header_branch
    %15 = sbr.rel (%p13) target = $region8
  $region5: #{cnn_forward.2} parent=0 // loop_body
    %s17 = ssub.s32 %s12, 1
    %s18 = ssub.s32 %s12, 2
    %s19 = sadd.s32 %s12, 1
    %s20 = ssub.s32 %s12, %s19
    %p21 = scmp.eq.s32.totalorder %s20, 0
    %s23 = sadd.s32 %s22, 1
    %s24 = scalar_select %p21, %s22, %s23
    %p27 = pneg %p21
    %p28 = scmp.eq.s32.totalorder %s12, 1
    %p29 = por %p27, %p28
    %p30 = scmp.ne.s32.totalorder %s22, %s25
    %p31 = scmp.eq.s32.totalorder %s12, 0
    %p32 = por %p30, %p31
    %p33 = scmp.ne.s32.totalorder %s22, %s25
    %p34 = scmp.eq.s32.totalorder %s17, 1
    %p35 = por %p33, %p34
    %p36 = scmp.ne.s32.totalorder %s25, %s26
    %p37 = scmp.eq.s32.totalorder %s17, 0
    %p38 = por %p36, %p37
    %p39 = scmp.ne.s32.totalorder %s25, %s26
    %p40 = scmp.eq.s32.totalorder %s18, 1
    %p41 = por %p39, %p40
    %p43 = scmp.ne.s32.totalorder %s26, %s42
    %p44 = scmp.eq.s32.totalorder %s18, 0
    %p45 = por %p43, %p44
    %s47 = sadd.s32 %s46, 1
    %p50 = scmp.eq.s32.totalorder %s12, 1
    %p51 = scmp.ne.s32.totalorder %s46, %s48
    %p52 = scmp.eq.s32.totalorder %s12, 0
    %p53 = por %p51, %p52
    %p54 = scmp.ne.s32.totalorder %s46, %s48
    %p55 = scmp.eq.s32.totalorder %s17, 1
    %p56 = por %p54, %p55
    %p57 = scmp.ne.s32.totalorder %s48, %s49
    %p58 = scmp.eq.s32.totalorder %s17, 0
    %p59 = por %p57, %p58
    %p60 = scmp.ne.s32.totalorder %s48, %s49
    %p61 = scmp.eq.s32.totalorder %s18, 1
    %p62 = por %p60, %p61
    %p64 = scmp.ne.s32.totalorder %s49, %s63
    %p65 = scmp.eq.s32.totalorder %s18, 0
    %p66 = por %p64, %p65
    %s68 = sadd.s32 %s67, 1
    %p71 = scmp.eq.s32.totalorder %s12, 1
    %p72 = scmp.ne.s32.totalorder %s67, %s69
    %p73 = scmp.eq.s32.totalorder %s12, 0
    %p74 = por %p72, %p73
    %p75 = scmp.ne.s32.totalorder %s67, %s69
    %p76 = scmp.eq.s32.totalorder %s17, 1
    %p77 = por %p75, %p76
    %p78 = scmp.ne.s32.totalorder %s69, %s70
    %p79 = scmp.eq.s32.totalorder %s17, 0
    %p80 = por %p78, %p79
    %p81 = scmp.ne.s32.totalorder %s69, %s70
    %p82 = scmp.eq.s32.totalorder %s18, 1
    %p83 = por %p81, %p82
    %p85 = scmp.ne.s32.totalorder %s70, %s84
    %p86 = scmp.eq.s32.totalorder %s18, 0
    %p87 = por %p85, %p86
    %s89 = sadd.s32 %s88, 1
    %p92 = scmp.eq.s32.totalorder %s12, 1
    %p93 = scmp.ne.s32.totalorder %s88, %s90
    %p94 = scmp.eq.s32.totalorder %s12, 0
    %p95 = por %p93, %p94
    %p96 = scmp.ne.s32.totalorder %s88, %s90
    %p97 = scmp.eq.s32.totalorder %s17, 1
    %p98 = por %p96, %p97
    %p99 = scmp.ne.s32.totalorder %s90, %s91
    %p100 = scmp.eq.s32.totalorder %s17, 0
    %p101 = por %p99, %p100
    %p102 = scmp.ne.s32.totalorder %s90, %s91
    %p103 = scmp.eq.s32.totalorder %s18, 1
    %p104 = por %p102, %p103
    %p106 = scmp.ne.s32.totalorder %s91, %s105
    %p107 = scmp.eq.s32.totalorder %s18, 0
    %p108 = por %p106, %p107
    %s110 = sadd.s32 %s109, 1
    %p113 = scmp.eq.s32.totalorder %s12, 1
    %p114 = scmp.ne.s32.totalorder %s109, %s111
    %p115 = scmp.eq.s32.totalorder %s12, 0
    %p116 = por %p114, %p115
    %p117 = scmp.ne.s32.totalorder %s109, %s111
    %p118 = scmp.eq.s32.totalorder %s17, 1
    %p119 = por %p117, %p118
    %p120 = scmp.ne.s32.totalorder %s111, %s112
    %p121 = scmp.eq.s32.totalorder %s17, 0
    %p122 = por %p120, %p121
    %p123 = scmp.ne.s32.totalorder %s111, %s112
    %p124 = scmp.eq.s32.totalorder %s18, 1
    %p125 = por %p123, %p124
    %p127 = scmp.ne.s32.totalorder %s112, %s126
    %p128 = scmp.eq.s32.totalorder %s18, 0
    %p129 = por %p127, %p128
    %s131 = sadd.s32 %s130, 1
    %p134 = scmp.eq.s32.totalorder %s12, 1
    %p135 = scmp.ne.s32.totalorder %s130, %s132
    %p136 = scmp.eq.s32.totalorder %s12, 0
    %p137 = por %p135, %p136
    %p138 = scmp.ne.s32.totalorder %s130, %s132
    %p139 = scmp.eq.s32.totalorder %s17, 1
    %p140 = por %p138, %p139
    %p141 = scmp.ne.s32.totalorder %s132, %s133
    %p142 = scmp.eq.s32.totalorder %s17, 0
    %p143 = por %p141, %p142
    %p144 = scmp.ne.s32.totalorder %s132, %s133
    %p145 = scmp.eq.s32.totalorder %s18, 1
    %p146 = por %p144, %p145
    %p148 = scmp.ne.s32.totalorder %s133, %s147
    %p149 = scmp.eq.s32.totalorder %s18, 0
    %p150 = por %p148, %p149
    %s151 = ssub.s32 %s12, %s19
    %p152 = scmp.eq.s32.totalorder %s151, 0
    %s154 = sadd.s32 %s153, 1
    %s155 = scalar_select %p152, %s153, %s154
    %p158 = pneg %p152
    %p159 = scmp.eq.s32.totalorder %s12, 1
    %p160 = por %p158, %p159
    %p161 = scmp.ne.s32.totalorder %s153, %s156
    %p162 = scmp.eq.s32.totalorder %s12, 0
    %p163 = por %p161, %p162
    %p164 = scmp.ne.s32.totalorder %s153, %s156
    %p165 = scmp.eq.s32.totalorder %s17, 1
    %p166 = por %p164, %p165
    %p167 = scmp.ne.s32.totalorder %s156, %s157
    %p168 = scmp.eq.s32.totalorder %s17, 0
    %p169 = por %p167, %p168
    %p170 = scmp.ne.s32.totalorder %s156, %s157
    %p171 = scmp.eq.s32.totalorder %s18, 1
    %p172 = por %p170, %p171
    %p174 = scmp.ne.s32.totalorder %s157, %s173
    %p175 = scmp.eq.s32.totalorder %s18, 0
    %p176 = por %p174, %p175
    %p177 = scmp.le.s32.totalorder 1, %s12
    %p178 = scmp.lt.s32.totalorder %s12, 3
    %p179 = pnand %p177, %p178
    %p180 = pneg %p179
    // Predicated region
    $region9: #{cnn_forward.2} parent=5 // pred_check
      _
    $region10: #{cnn_forward.2} parent=5 // pred_check_branch
      %182 = sbr.rel (%p179) target = $region12
    $region11: #{cnn_forward.2} parent=5 // pred_region
      %s183 = ssub.s32 %s12, 1
      // Predicated region
      $region13: #{cnn_forward.2} parent=11 // pred_check
        %p184 = pneg %p59
      $region14: #{cnn_forward.2} parent=11 // pred_check_branch
        %186 = sbr.rel (%p184) target = $region16
      $region15: #{cnn_forward.2} parent=11 // pred_region
        _
      $region16: #{cnn_forward.2} parent=11 // pred_fallthru
        _
      // Predicated region
      $region17: #{cnn_forward.2} parent=11 // pred_check
        %p187 = pneg %p80
      $region18: #{cnn_forward.2} parent=11 // pred_check_branch
        %189 = sbr.rel (%p187) target = $region20
      $region19: #{cnn_forward.2} parent=11 // pred_region
        _
      $region20: #{cnn_forward.2} parent=11 // pred_fallthru
        _
      // Predicated region
      $region21: #{cnn_forward.2} parent=11 // pred_check
        %p190 = pneg %p101
      $region22: #{cnn_forward.2} parent=11 // pred_check_branch
        %192 = sbr.rel (%p190) target = $region24
      $region23: #{cnn_forward.2} parent=11 // pred_region
        _
      $region24: #{cnn_forward.2} parent=11 // pred_fallthru
        _
      // Predicated region
      $region25: #{cnn_forward.2} parent=11 // pred_check
        %p193 = pneg %p122
      $region26: #{cnn_forward.2} parent=11 // pred_check_branch
        %195 = sbr.rel (%p193) target = $region28
      $region27: #{cnn_forward.2} parent=11 // pred_region
        _
      $region28: #{cnn_forward.2} parent=11 // pred_fallthru
        _
      // Predicated region
      $region29: #{cnn_forward.2} parent=11 // pred_check
        %p196 = pneg %p143
      $region30: #{cnn_forward.2} parent=11 // pred_check_branch
        %198 = sbr.rel (%p196) target = $region32
      $region31: #{cnn_forward.2} parent=11 // pred_region
        _
      $region32: #{cnn_forward.2} parent=11 // pred_fallthru
        _
    $region12: #{cnn_forward.2} parent=5 // pred_fallthru
      _
    %p199 = scmp.lt.s32.totalorder %s12, 2
    // Predicated region
    $region33: #{cnn_forward.2} parent=5 // pred_check
      %p200 = pneg %p199
    $region34: #{cnn_forward.2} parent=5 // pred_check_branch
      %202 = sbr.rel (%p200) target = $region36
    $region35: #{cnn_forward.2} parent=5 // pred_region
      // Predicated region
      $region37: #{cnn_forward.2} parent=35 // pred_check
        %p203 = pneg %p32
      $region38: #{cnn_forward.2} parent=35 // pred_check_branch
        %205 = sbr.rel (%p203) target = $region40
      $region39: #{cnn_forward.2} parent=35 // pred_region
        %p206 = scmp.lt.s32.totalorder %s12, 1
        %s207 = scalar_select %p206, %s12, 1
        %s208 = smul.addr %s207, 7
        %s209 = scalar_lea.vmem %s0, %s208
      $region40: #{cnn_forward.2} parent=35 // pred_fallthru
        _
    $region36: #{cnn_forward.2} parent=5 // pred_fallthru
      _
    %p210 = scmp.le.s32.totalorder 1, %s12
    %p211 = scmp.lt.s32.totalorder %s12, 3
    %p212 = pnand %p210, %p211
    %p213 = pneg %p212
    // Predicated region
    $region41: #{cnn_forward.2} parent=5 // pred_check
      _
    $region42: #{cnn_forward.2} parent=5 // pred_check_branch
      %215 = sbr.rel (%p212) target = $region44
    $region43: #{cnn_forward.2} parent=5 // pred_region
      %s216 = ssub.s32 %s12, 1
      %p217 = scmp.lt.s32.totalorder %s17, 1
      %s218 = scalar_select %p217, %s17, 1
      %s219 = smul.addr %s218, 7
      %s220 = scalar_lea.vmem %s0, %s219
      %p221 = pneg %p38
      %p222 = pneg %p35
      %p223 = pneg %p59
      %p224 = pneg %p56
      %p225 = pneg %p80
      %p226 = pneg %p77
      %p227 = pneg %p101
      %p228 = pneg %p98
      %p229 = pneg %p122
      %p230 = pneg %p119
      %p231 = pneg %p143
      %p232 = pneg %p140
      %p233 = pneg %p169
      %p234 = pneg %p166
      %p235 = scmp.lt.s32.totalorder %s17, 1
      %s236 = scalar_select %p235, %s17, 1
      %s237 = smul.addr %s236, 16
      %s238 = smul.addr %s237, 4
      %s239 = scalar_lea.vmem %s6, %s238
      %p240 = scmp.lt.s32.totalorder %s17, 1
      %s241 = scalar_select %p240, %s17, 1
      %s242 = smul.addr %s241, 7
      %s243 = scalar_lea.vmem %s0, %s242
      %p244 = scmp.lt.s32.totalorder %s17, 1
      %s245 = scalar_select %p244, %s17, 1
      %s246 = smul.addr %s245, 16
      %s247 = smul.addr %s246, 4
      %s248 = scalar_lea.vmem %s6, %s247
      %v250 = vld [vmem:[%s243] sm:$0x7f]
      %v251 = vld [vmem:[%s1] sm:$0xff]
      %v252 = vld [vmem:[%s1 + $0x8] sm:$0xff]
      %v253 = vld [vmem:[%s1 + $0x10] sm:$0xff]
      %v254 = vld [vmem:[%s1 + $0x18] sm:$0xff]
      %v255 = vld [vmem:[%s2] sm:$0xff]
      %v256 = vld [vmem:[%s2 + $0x8] sm:$0xff]
      %v257 = vld [vmem:[%s2 + $0x10] sm:$0xff]
      %v258 = vld [vmem:[%s2 + $0x18] sm:$0xff]
      %v259 = vld [vmem:[%s4] sm:$0xff]
      %v260 = vld [vmem:[%s4 + $0x8] sm:$0xff]
      %v261 = vld [vmem:[%s4 + $0x10] sm:$0xff]
      %v262 = vld [vmem:[%s4 + $0x18] sm:$0xff]
      %v263 = vld [vmem:[%s4 + $0x20] sm:$0xff]
      %v264 = vld [vmem:[%s4 + $0x28] sm:$0xff]
      %v265 = vld [vmem:[%s4 + $0x30] sm:$0xff]
      %v266 = vld [vmem:[%s4 + $0x38] sm:$0xff]
      %v268 = vlaneseq
      %v269 = vshrl.u32 %v268, 7
      %v270 = vsub.s32 0, %v269
      %v271 = vrot.slane %v250, %v270
      %v272 = vlaneseq
      %v273 = vshrl.u32 %v272, 7
      %v274 = vsub.s32 1, %v273
      %v275 = vrot.slane %v250, %v274
      %v276 = vlaneseq
      %v277 = vshrl.u32 %v276, 7
      %v278 = vsub.s32 2, %v277
      %v279 = vrot.slane %v250, %v278
      %v280 = vlaneseq
      %v281 = vshrl.u32 %v280, 7
      %v282 = vsub.s32 3, %v281
      %v283 = vrot.slane %v250, %v282
      %v284 = vlaneseq
      %v285 = vshrl.u32 %v284, 7
      %v286 = vsub.s32 4, %v285
      %v287 = vrot.slane %v250, %v286
      %v288 = vlaneseq
      %v289 = vshrl.u32 %v288, 7
      %v290 = vsub.s32 5, %v289
      %v291 = vrot.slane %v250, %v290
      %299 = vset.pattern.permute.xlu0 0
      %300 = vperm.xlu0 %299, %v251
      %v301 = vpop.permute.xlu0 %300
      %304 = vset.pattern.permute.xlu0 0
      %305 = vperm.xlu0 %304, %v252
      %v306 = vpop.permute.xlu0 %305
      %309 = vset.pattern.permute.xlu0 0
      %310 = vperm.xlu0 %309, %v253
      %v311 = vpop.permute.xlu0 %310
      %314 = vset.pattern.permute.xlu0 0
      %315 = vperm.xlu0 %314, %v254
      %v316 = vpop.permute.xlu0 %315
      %v318 = vmul.f32 %v271, %v301
      %v319 = vmul.f32 %v275, %v301
      %v320 = vmul.f32 %v279, %v301
      %v321 = vmul.f32 %v283, %v301
      %v322 = vmul.f32 %v287, %v301
      %v323 = vmul.f32 %v291, %v301
      %v324 = vmul.f32 %v271, %v306
      %v325 = vmul.f32 %v275, %v306
      %v326 = vmul.f32 %v279, %v306
      %v327 = vmul.f32 %v283, %v306
      %v328 = vmul.f32 %v287, %v306
      %v329 = vmul.f32 %v291, %v306
      %v330 = vmul.f32 %v271, %v311
      %v331 = vmul.f32 %v275, %v311
      %v332 = vmul.f32 %v279, %v311
      %v333 = vmul.f32 %v283, %v311
      %v334 = vmul.f32 %v287, %v311
      %v335 = vmul.f32 %v291, %v311
      %v336 = vmul.f32 %v271, %v316
      %v337 = vmul.f32 %v275, %v316
      %v338 = vmul.f32 %v279, %v316
      %v339 = vmul.f32 %v283, %v316
      %v340 = vmul.f32 %v287, %v316
      %v341 = vmul.f32 %v291, %v316
      %v342 = vadd.f32 %v318, 0.0
      %v343 = vadd.f32 %v319, 0.0
      %v344 = vadd.f32 %v320, 0.0
      %v345 = vadd.f32 %v321, 0.0
      %v346 = vadd.f32 %v322, 0.0
      %v347 = vadd.f32 %v323, 0.0
      %v348 = vadd.f32 %v324, 0.0
      %v349 = vadd.f32 %v325, 0.0
      %v350 = vadd.f32 %v326, 0.0
      %v351 = vadd.f32 %v327, 0.0
      %v352 = vadd.f32 %v328, 0.0
      %v353 = vadd.f32 %v329, 0.0
      %v354 = vadd.f32 %v330, 0.0
      %v355 = vadd.f32 %v331, 0.0
      %v356 = vadd.f32 %v332, 0.0
      %v357 = vadd.f32 %v333, 0.0
      %v358 = vadd.f32 %v334, 0.0
      %v359 = vadd.f32 %v335, 0.0
      %v360 = vadd.f32 %v336, 0.0
      %v361 = vadd.f32 %v337, 0.0
      %v362 = vadd.f32 %v338, 0.0
      %v363 = vadd.f32 %v339, 0.0
      %v364 = vadd.f32 %v340, 0.0
      %v365 = vadd.f32 %v341, 0.0
      %366 = vset.pattern.permute.xlu0 1
      %367 = vperm.xlu0 %366, %v251
      %v368 = vpop.permute.xlu0 %367
      %370 = vset.pattern.permute.xlu0 1
      %371 = vperm.xlu0 %370, %v252
      %v372 = vpop.permute.xlu0 %371
      %374 = vset.pattern.permute.xlu0 1
      %375 = vperm.xlu0 %374, %v253
      %v376 = vpop.permute.xlu0 %375
      %378 = vset.pattern.permute.xlu0 1
      %379 = vperm.xlu0 %378, %v254
      %v380 = vpop.permute.xlu0 %379
      %v382 = vmul.f32 %v271, %v368
      %v383 = vmul.f32 %v275, %v368
      %v384 = vmul.f32 %v279, %v368
      %v385 = vmul.f32 %v283, %v368
      %v386 = vmul.f32 %v287, %v368
      %v387 = vmul.f32 %v291, %v368
      %v388 = vmul.f32 %v271, %v372
      %v389 = vmul.f32 %v275, %v372
      %v390 = vmul.f32 %v279, %v372
      %v391 = vmul.f32 %v283, %v372
      %v392 = vmul.f32 %v287, %v372
      %v393 = vmul.f32 %v291, %v372
      %v394 = vmul.f32 %v271, %v376
      %v395 = vmul.f32 %v275, %v376
      %v396 = vmul.f32 %v279, %v376
      %v397 = vmul.f32 %v283, %v376
      %v398 = vmul.f32 %v287, %v376
      %v399 = vmul.f32 %v291, %v376
      %v400 = vmul.f32 %v271, %v380
      %v401 = vmul.f32 %v275, %v380
      %v402 = vmul.f32 %v279, %v380
      %v403 = vmul.f32 %v283, %v380
      %v404 = vmul.f32 %v287, %v380
      %v405 = vmul.f32 %v291, %v380
      %430 = vrot.lane.b32.xlu0 %v382, 127
      %v431 = vpop.permute.xlu0 %430
      %432 = vrot.lane.b32.xlu0 %v383, 127
      %v433 = vpop.permute.xlu0 %432
      %434 = vrot.lane.b32.xlu0 %v384, 127
      %v435 = vpop.permute.xlu0 %434
      %436 = vrot.lane.b32.xlu0 %v385, 127
      %v437 = vpop.permute.xlu0 %436
      %438 = vrot.lane.b32.xlu0 %v386, 127
      %v439 = vpop.permute.xlu0 %438
      %440 = vrot.lane.b32.xlu0 %v387, 127
      %v441 = vpop.permute.xlu0 %440
      %442 = vrot.lane.b32.xlu0 %v388, 127
      %v443 = vpop.permute.xlu0 %442
      %444 = vrot.lane.b32.xlu0 %v389, 127
      %v445 = vpop.permute.xlu0 %444
      %446 = vrot.lane.b32.xlu0 %v390, 127
      %v447 = vpop.permute.xlu0 %446
      %448 = vrot.lane.b32.xlu0 %v391, 127
      %v449 = vpop.permute.xlu0 %448
      %450 = vrot.lane.b32.xlu0 %v392, 127
      %v451 = vpop.permute.xlu0 %450
      %452 = vrot.lane.b32.xlu0 %v393, 127
      %v453 = vpop.permute.xlu0 %452
      %454 = vrot.lane.b32.xlu0 %v394, 127
      %v455 = vpop.permute.xlu0 %454
      %456 = vrot.lane.b32.xlu0 %v395, 127
      %v457 = vpop.permute.xlu0 %456
      %458 = vrot.lane.b32.xlu0 %v396, 127
      %v459 = vpop.permute.xlu0 %458
      %460 = vrot.lane.b32.xlu0 %v397, 127
      %v461 = vpop.permute.xlu0 %460
      %462 = vrot.lane.b32.xlu0 %v398, 127
      %v463 = vpop.permute.xlu0 %462
      %464 = vrot.lane.b32.xlu0 %v399, 127
      %v465 = vpop.permute.xlu0 %464
      %466 = vrot.lane.b32.xlu0 %v400, 127
      %v467 = vpop.permute.xlu0 %466
      %468 = vrot.lane.b32.xlu0 %v401, 127
      %v469 = vpop.permute.xlu0 %468
      %470 = vrot.lane.b32.xlu0 %v402, 127
      %v471 = vpop.permute.xlu0 %470
      %472 = vrot.lane.b32.xlu0 %v403, 127
      %v473 = vpop.permute.xlu0 %472
      %474 = vrot.lane.b32.xlu0 %v404, 127
      %v475 = vpop.permute.xlu0 %474
      %476 = vrot.lane.b32.xlu0 %v405, 127
      %v477 = vpop.permute.xlu0 %476
      %vm478 = vcmask 1039360
      %v479 = vsel %vm478, %v431, %v433
      %v480 = vsel %vm478, %v433, %v435
      %v481 = vsel %vm478, %v435, %v437
      %v482 = vsel %vm478, %v437, %v439
      %v483 = vsel %vm478, %v439, %v441
      %v484 = vsel %vm478, %v443, %v445
      %v485 = vsel %vm478, %v445, %v447
      %v486 = vsel %vm478, %v447, %v449
      %v487 = vsel %vm478, %v449, %v451
      %v488 = vsel %vm478, %v451, %v453
      %v489 = vsel %vm478, %v455, %v457
      %v490 = vsel %vm478, %v457, %v459
      %v491 = vsel %vm478, %v459, %v461
      %v492 = vsel %vm478, %v461, %v463
      %v493 = vsel %vm478, %v463, %v465
      %v494 = vsel %vm478, %v467, %v469
      %v495 = vsel %vm478, %v469, %v471
      %v496 = vsel %vm478, %v471, %v473
      %v497 = vsel %vm478, %v473, %v475
      %v498 = vsel %vm478, %v475, %v477
      %v523 = vadd.f32 %v342, %v479
      %v524 = vadd.f32 %v343, %v480
      %v525 = vadd.f32 %v344, %v481
      %v526 = vadd.f32 %v345, %v482
      %v527 = vadd.f32 %v346, %v483
      %v528 = vadd.f32 %v347, %v441
      %v529 = vadd.f32 %v348, %v484
      %v530 = vadd.f32 %v349, %v485
      %v531 = vadd.f32 %v350, %v486
      %v532 = vadd.f32 %v351, %v487
      %v533 = vadd.f32 %v352, %v488
      %v534 = vadd.f32 %v353, %v453
      %v535 = vadd.f32 %v354, %v489
      %v536 = vadd.f32 %v355, %v490
      %v537 = vadd.f32 %v356, %v491
      %v538 = vadd.f32 %v357, %v492
      %v539 = vadd.f32 %v358, %v493
      %v540 = vadd.f32 %v359, %v465
      %v541 = vadd.f32 %v360, %v494
      %v542 = vadd.f32 %v361, %v495
      %v543 = vadd.f32 %v362, %v496
      %v544 = vadd.f32 %v363, %v497
      %v545 = vadd.f32 %v364, %v498
      %v546 = vadd.f32 %v365, %v477
      %547 = vset.pattern.permute.xlu0 2
      %548 = vperm.xlu0 %547, %v251
      %v549 = vpop.permute.xlu0 %548
      %551 = vset.pattern.permute.xlu0 2
      %552 = vperm.xlu0 %551, %v252
      %v553 = vpop.permute.xlu0 %552
      %555 = vset.pattern.permute.xlu0 2
      %556 = vperm.xlu0 %555, %v253
      %v557 = vpop.permute.xlu0 %556
      %559 = vset.pattern.permute.xlu0 2
      %560 = vperm.xlu0 %559, %v254
      %v561 = vpop.permute.xlu0 %560
      %v563 = vmul.f32 %v271, %v549
      %v564 = vmul.f32 %v275, %v549
      %v565 = vmul.f32 %v279, %v549
      %v566 = vmul.f32 %v283, %v549
      %v567 = vmul.f32 %v287, %v549
      %v568 = vmul.f32 %v291, %v549
      %v569 = vmul.f32 %v271, %v553
      %v570 = vmul.f32 %v275, %v553
      %v571 = vmul.f32 %v279, %v553
      %v572 = vmul.f32 %v283, %v553
      %v573 = vmul.f32 %v287, %v553
      %v574 = vmul.f32 %v291, %v553
      %v575 = vmul.f32 %v271, %v557
      %v576 = vmul.f32 %v275, %v557
      %v577 = vmul.f32 %v279, %v557
      %v578 = vmul.f32 %v283, %v557
      %v579 = vmul.f32 %v287, %v557
      %v580 = vmul.f32 %v291, %v557
      %v581 = vmul.f32 %v271, %v561
      %v582 = vmul.f32 %v275, %v561
      %v583 = vmul.f32 %v279, %v561
      %v584 = vmul.f32 %v283, %v561
      %v585 = vmul.f32 %v287, %v561
      %v586 = vmul.f32 %v291, %v561
      %611 = vrot.lane.b32.xlu0 %v563, 126
      %v612 = vpop.permute.xlu0 %611
      %613 = vrot.lane.b32.xlu0 %v564, 126
      %v614 = vpop.permute.xlu0 %613
      %615 = vrot.lane.b32.xlu0 %v565, 126
      %v616 = vpop.permute.xlu0 %615
      %617 = vrot.lane.b32.xlu0 %v566, 126
      %v618 = vpop.permute.xlu0 %617
      %619 = vrot.lane.b32.xlu0 %v567, 126
      %v620 = vpop.permute.xlu0 %619
      %621 = vrot.lane.b32.xlu0 %v568, 126
      %v622 = vpop.permute.xlu0 %621
      %623 = vrot.lane.b32.xlu0 %v569, 126
      %v624 = vpop.permute.xlu0 %623
      %625 = vrot.lane.b32.xlu0 %v570, 126
      %v626 = vpop.permute.xlu0 %625
      %627 = vrot.lane.b32.xlu0 %v571, 126
      %v628 = vpop.permute.xlu0 %627
      %629 = vrot.lane.b32.xlu0 %v572, 126
      %v630 = vpop.permute.xlu0 %629
      %631 = vrot.lane.b32.xlu0 %v573, 126
      %v632 = vpop.permute.xlu0 %631
      %633 = vrot.lane.b32.xlu0 %v574, 126
      %v634 = vpop.permute.xlu0 %633
      %635 = vrot.lane.b32.xlu0 %v575, 126
      %v636 = vpop.permute.xlu0 %635
      %637 = vrot.lane.b32.xlu0 %v576, 126
      %v638 = vpop.permute.xlu0 %637
      %639 = vrot.lane.b32.xlu0 %v577, 126
      %v640 = vpop.permute.xlu0 %639
      %641 = vrot.lane.b32.xlu0 %v578, 126
      %v642 = vpop.permute.xlu0 %641
      %643 = vrot.lane.b32.xlu0 %v579, 126
      %v644 = vpop.permute.xlu0 %643
      %645 = vrot.lane.b32.xlu0 %v580, 126
      %v646 = vpop.permute.xlu0 %645
      %647 = vrot.lane.b32.xlu0 %v581, 126
      %v648 = vpop.permute.xlu0 %647
      %649 = vrot.lane.b32.xlu0 %v582, 126
      %v650 = vpop.permute.xlu0 %649
      %651 = vrot.lane.b32.xlu0 %v583, 126
      %v652 = vpop.permute.xlu0 %651
      %653 = vrot.lane.b32.xlu0 %v584, 126
      %v654 = vpop.permute.xlu0 %653
      %655 = vrot.lane.b32.xlu0 %v585, 126
      %v656 = vpop.permute.xlu0 %655
      %657 = vrot.lane.b32.xlu0 %v586, 126
      %v658 = vpop.permute.xlu0 %657
      %vm659 = vcmask 1031168
      %v660 = vsel %vm659, %v612, %v614
      %v661 = vsel %vm659, %v614, %v616
      %v662 = vsel %vm659, %v616, %v618
      %v663 = vsel %vm659, %v618, %v620
      %v664 = vsel %vm659, %v620, %v622
      %v665 = vsel %vm659, %v624, %v626
      %v666 = vsel %vm659, %v626, %v628
      %v667 = vsel %vm659, %v628, %v630
      %v668 = vsel %vm659, %v630, %v632
      %v669 = vsel %vm659, %v632, %v634
      %v670 = vsel %vm659, %v636, %v638
      %v671 = vsel %vm659, %v638, %v640
      %v672 = vsel %vm659, %v640, %v642
      %v673 = vsel %vm659, %v642, %v644
      %v674 = vsel %vm659, %v644, %v646
      %v675 = vsel %vm659, %v648, %v650
      %v676 = vsel %vm659, %v650, %v652
      %v677 = vsel %vm659, %v652, %v654
      %v678 = vsel %vm659, %v654, %v656
      %v679 = vsel %vm659, %v656, %v658
      %v704 = vadd.f32 %v523, %v660
      %v705 = vadd.f32 %v524, %v661
      %v706 = vadd.f32 %v525, %v662
      %v707 = vadd.f32 %v526, %v663
      %v708 = vadd.f32 %v527, %v664
      %v709 = vadd.f32 %v528, %v622
      %v710 = vadd.f32 %v529, %v665
      %v711 = vadd.f32 %v530, %v666
      %v712 = vadd.f32 %v531, %v667
      %v713 = vadd.f32 %v532, %v668
      %v714 = vadd.f32 %v533, %v669
      %v715 = vadd.f32 %v534, %v634
      %v716 = vadd.f32 %v535, %v670
      %v717 = vadd.f32 %v536, %v671
      %v718 = vadd.f32 %v537, %v672
      %v719 = vadd.f32 %v538, %v673
      %v720 = vadd.f32 %v539, %v674
      %v721 = vadd.f32 %v540, %v646
      %v722 = vadd.f32 %v541, %v675
      %v723 = vadd.f32 %v542, %v676
      %v724 = vadd.f32 %v543, %v677
      %v725 = vadd.f32 %v544, %v678
      %v726 = vadd.f32 %v545, %v679
      %v727 = vadd.f32 %v546, %v658
      %728 = vset.pattern.permute.xlu0 3
      %729 = vperm.xlu0 %728, %v251
      %v730 = vpop.permute.xlu0 %729
      %732 = vset.pattern.permute.xlu0 3
      %733 = vperm.xlu0 %732, %v252
      %v734 = vpop.permute.xlu0 %733
      %736 = vset.pattern.permute.xlu0 3
      %737 = vperm.xlu0 %736, %v253
      %v738 = vpop.permute.xlu0 %737
      %740 = vset.pattern.permute.xlu0 3
      %741 = vperm.xlu0 %740, %v254
      %v742 = vpop.permute.xlu0 %741
      %v744 = vmul.f32 %v271, %v730
      %v745 = vmul.f32 %v275, %v730
      %v746 = vmul.f32 %v279, %v730
      %v747 = vmul.f32 %v283, %v730
      %v748 = vmul.f32 %v287, %v730
      %v749 = vmul.f32 %v291, %v730
      %v750 = vmul.f32 %v271, %v734
      %v751 = vmul.f32 %v275, %v734
      %v752 = vmul.f32 %v279, %v734
      %v753 = vmul.f32 %v283, %v734
      %v754 = vmul.f32 %v287, %v734
      %v755 = vmul.f32 %v291, %v734
      %v756 = vmul.f32 %v271, %v738
      %v757 = vmul.f32 %v275, %v738
      %v758 = vmul.f32 %v279, %v738
      %v759 = vmul.f32 %v283, %v738
      %v760 = vmul.f32 %v287, %v738
      %v761 = vmul.f32 %v291, %v738
      %v762 = vmul.f32 %v271, %v742
      %v763 = vmul.f32 %v275, %v742
      %v764 = vmul.f32 %v279, %v742
      %v765 = vmul.f32 %v283, %v742
      %v766 = vmul.f32 %v287, %v742
      %v767 = vmul.f32 %v291, %v742
      %792 = vrot.lane.b32.xlu0 %v744, 100
      %v793 = vpop.permute.xlu0 %792
      %794 = vrot.lane.b32.xlu0 %v745, 100
      %v795 = vpop.permute.xlu0 %794
      %796 = vrot.lane.b32.xlu0 %v746, 100
      %v797 = vpop.permute.xlu0 %796
      %798 = vrot.lane.b32.xlu0 %v747, 100
      %v799 = vpop.permute.xlu0 %798
      %800 = vrot.lane.b32.xlu0 %v748, 100
      %v801 = vpop.permute.xlu0 %800
      %802 = vrot.lane.b32.xlu0 %v749, 100
      %v803 = vpop.permute.xlu0 %802
      %804 = vrot.lane.b32.xlu0 %v750, 100
      %v805 = vpop.permute.xlu0 %804
      %806 = vrot.lane.b32.xlu0 %v751, 100
      %v807 = vpop.permute.xlu0 %806
      %808 = vrot.lane.b32.xlu0 %v752, 100
      %v809 = vpop.permute.xlu0 %808
      %810 = vrot.lane.b32.xlu0 %v753, 100
      %v811 = vpop.permute.xlu0 %810
      %812 = vrot.lane.b32.xlu0 %v754, 100
      %v813 = vpop.permute.xlu0 %812
      %814 = vrot.lane.b32.xlu0 %v755, 100
      %v815 = vpop.permute.xlu0 %814
      %816 = vrot.lane.b32.xlu0 %v756, 100
      %v817 = vpop.permute.xlu0 %816
      %818 = vrot.lane.b32.xlu0 %v757, 100
      %v819 = vpop.permute.xlu0 %818
      %820 = vrot.lane.b32.xlu0 %v758, 100
      %v821 = vpop.permute.xlu0 %820
      %822 = vrot.lane.b32.xlu0 %v759, 100
      %v823 = vpop.permute.xlu0 %822
      %824 = vrot.lane.b32.xlu0 %v760, 100
      %v825 = vpop.permute.xlu0 %824
      %826 = vrot.lane.b32.xlu0 %v761, 100
      %v827 = vpop.permute.xlu0 %826
      %828 = vrot.lane.b32.xlu0 %v762, 100
      %v829 = vpop.permute.xlu0 %828
      %830 = vrot.lane.b32.xlu0 %v763, 100
      %v831 = vpop.permute.xlu0 %830
      %832 = vrot.lane.b32.xlu0 %v764, 100
      %v833 = vpop.permute.xlu0 %832
      %834 = vrot.lane.b32.xlu0 %v765, 100
      %v835 = vpop.permute.xlu0 %834
      %836 = vrot.lane.b32.xlu0 %v766, 100
      %v837 = vpop.permute.xlu0 %836
      %838 = vrot.lane.b32.xlu0 %v767, 100
      %v839 = vpop.permute.xlu0 %838
      %vm840 = vcmask 818176
      %v841 = vsel %vm840, %v793, %v795
      %v842 = vsel %vm840, %v795, %v797
      %v843 = vsel %vm840, %v797, %v799
      %v844 = vsel %vm840, %v799, %v801
      %v845 = vsel %vm840, %v801, %v803
      %v846 = vsel %vm840, %v805, %v807
      %v847 = vsel %vm840, %v807, %v809
      %v848 = vsel %vm840, %v809, %v811
      %v849 = vsel %vm840, %v811, %v813
      %v850 = vsel %vm840, %v813, %v815
      %v851 = vsel %vm840, %v817, %v819
      %v852 = vsel %vm840, %v819, %v821
      %v853 = vsel %vm840, %v821, %v823
      %v854 = vsel %vm840, %v823, %v825
      %v855 = vsel %vm840, %v825, %v827
      %v856 = vsel %vm840, %v829, %v831
      %v857 = vsel %vm840, %v831, %v833
      %v858 = vsel %vm840, %v833, %v835
      %v859 = vsel %vm840, %v835, %v837
      %v860 = vsel %vm840, %v837, %v839
      %v885 = vadd.f32 %v704, %v841
      %v886 = vadd.f32 %v705, %v842
      %v887 = vadd.f32 %v706, %v843
      %v888 = vadd.f32 %v707, %v844
      %v889 = vadd.f32 %v708, %v845
      %v890 = vadd.f32 %v709, %v803
      %v891 = vadd.f32 %v710, %v846
      %v892 = vadd.f32 %v711, %v847
      %v893 = vadd.f32 %v712, %v848
      %v894 = vadd.f32 %v713, %v849
      %v895 = vadd.f32 %v714, %v850
      %v896 = vadd.f32 %v715, %v815
      %v897 = vadd.f32 %v716, %v851
      %v898 = vadd.f32 %v717, %v852
      %v899 = vadd.f32 %v718, %v853
      %v900 = vadd.f32 %v719, %v854
      %v901 = vadd.f32 %v720, %v855
      %v902 = vadd.f32 %v721, %v827
      %v903 = vadd.f32 %v722, %v856
      %v904 = vadd.f32 %v723, %v857
      %v905 = vadd.f32 %v724, %v858
      %v906 = vadd.f32 %v725, %v859
      %v907 = vadd.f32 %v726, %v860
      %v908 = vadd.f32 %v727, %v839
      %909 = vset.pattern.permute.xlu0 4
      %910 = vperm.xlu0 %909, %v251
      %v911 = vpop.permute.xlu0 %910
      %913 = vset.pattern.permute.xlu0 4
      %914 = vperm.xlu0 %913, %v252
      %v915 = vpop.permute.xlu0 %914
      %917 = vset.pattern.permute.xlu0 4
      %918 = vperm.xlu0 %917, %v253
      %v919 = vpop.permute.xlu0 %918
      %921 = vset.pattern.permute.xlu0 4
      %922 = vperm.xlu0 %921, %v254
      %v923 = vpop.permute.xlu0 %922
      %v925 = vmul.f32 %v271, %v911
      %v926 = vmul.f32 %v275, %v911
      %v927 = vmul.f32 %v279, %v911
      %v928 = vmul.f32 %v283, %v911
      %v929 = vmul.f32 %v287, %v911
      %v930 = vmul.f32 %v291, %v911
      %v931 = vmul.f32 %v271, %v915
      %v932 = vmul.f32 %v275, %v915
      %v933 = vmul.f32 %v279, %v915
      %v934 = vmul.f32 %v283, %v915
      %v935 = vmul.f32 %v287, %v915
      %v936 = vmul.f32 %v291, %v915
      %v937 = vmul.f32 %v271, %v919
      %v938 = vmul.f32 %v275, %v919
      %v939 = vmul.f32 %v279, %v919
      %v940 = vmul.f32 %v283, %v919
      %v941 = vmul.f32 %v287, %v919
      %v942 = vmul.f32 %v291, %v919
      %v943 = vmul.f32 %v271, %v923
      %v944 = vmul.f32 %v275, %v923
      %v945 = vmul.f32 %v279, %v923
      %v946 = vmul.f32 %v283, %v923
      %v947 = vmul.f32 %v287, %v923
      %v948 = vmul.f32 %v291, %v923
      %973 = vrot.lane.b32.xlu0 %v925, 99
      %v974 = vpop.permute.xlu0 %973
      %975 = vrot.lane.b32.xlu0 %v926, 99
      %v976 = vpop.permute.xlu0 %975
      %977 = vrot.lane.b32.xlu0 %v927, 99
      %v978 = vpop.permute.xlu0 %977
      %979 = vrot.lane.b32.xlu0 %v928, 99
      %v980 = vpop.permute.xlu0 %979
      %981 = vrot.lane.b32.xlu0 %v929, 99
      %v982 = vpop.permute.xlu0 %981
      %983 = vrot.lane.b32.xlu0 %v930, 99
      %v984 = vpop.permute.xlu0 %983
      %985 = vrot.lane.b32.xlu0 %v931, 99
      %v986 = vpop.permute.xlu0 %985
      %987 = vrot.lane.b32.xlu0 %v932, 99
      %v988 = vpop.permute.xlu0 %987
      %989 = vrot.lane.b32.xlu0 %v933, 99
      %v990 = vpop.permute.xlu0 %989
      %991 = vrot.lane.b32.xlu0 %v934, 99
      %v992 = vpop.permute.xlu0 %991
      %993 = vrot.lane.b32.xlu0 %v935, 99
      %v994 = vpop.permute.xlu0 %993
      %995 = vrot.lane.b32.xlu0 %v936, 99
      %v996 = vpop.permute.xlu0 %995
      %997 = vrot.lane.b32.xlu0 %v937, 99
      %v998 = vpop.permute.xlu0 %997
      %999 = vrot.lane.b32.xlu0 %v938, 99
      %v1000 = vpop.permute.xlu0 %999
      %1001 = vrot.lane.b32.xlu0 %v939, 99
      %v1002 = vpop.permute.xlu0 %1001
      %1003 = vrot.lane.b32.xlu0 %v940, 99
      %v1004 = vpop.permute.xlu0 %1003
      %1005 = vrot.lane.b32.xlu0 %v941, 99
      %v1006 = vpop.permute.xlu0 %1005
      %1007 = vrot.lane.b32.xlu0 %v942, 99
      %v1008 = vpop.permute.xlu0 %1007
      %1009 = vrot.lane.b32.xlu0 %v943, 99
      %v1010 = vpop.permute.xlu0 %1009
      %1011 = vrot.lane.b32.xlu0 %v944, 99
      %v1012 = vpop.permute.xlu0 %1011
      %1013 = vrot.lane.b32.xlu0 %v945, 99
      %v1014 = vpop.permute.xlu0 %1013
      %1015 = vrot.lane.b32.xlu0 %v946, 99
      %v1016 = vpop.permute.xlu0 %1015
      %1017 = vrot.lane.b32.xlu0 %v947, 99
      %v1018 = vpop.permute.xlu0 %1017
      %1019 = vrot.lane.b32.xlu0 %v948, 99
      %v1020 = vpop.permute.xlu0 %1019
      %vm1021 = vcmask 809984
      %v1022 = vsel %vm1021, %v974, %v976
      %v1023 = vsel %vm1021, %v976, %v978
      %v1024 = vsel %vm1021, %v978, %v980
      %v1025 = vsel %vm1021, %v980, %v982
      %v1026 = vsel %vm1021, %v982, %v984
      %v1027 = vsel %vm1021, %v986, %v988
      %v1028 = vsel %vm1021, %v988, %v990
      %v1029 = vsel %vm1021, %v990, %v992
      %v1030 = vsel %vm1021, %v992, %v994
      %v1031 = vsel %vm1021, %v994, %v996
      %v1032 = vsel %vm1021, %v998, %v1000
      %v1033 = vsel %vm1021, %v1000, %v1002
      %v1034 = vsel %vm1021, %v1002, %v1004
      %v1035 = vsel %vm1021, %v1004, %v1006
      %v1036 = vsel %vm1021, %v1006, %v1008
      %v1037 = vsel %vm1021, %v1010, %v1012
      %v1038 = vsel %vm1021, %v1012, %v1014
      %v1039 = vsel %vm1021, %v1014, %v1016
      %v1040 = vsel %vm1021, %v1016, %v1018
      %v1041 = vsel %vm1021, %v1018, %v1020
      %v1066 = vadd.f32 %v885, %v1022
      %v1067 = vadd.f32 %v886, %v1023
      %v1068 = vadd.f32 %v887, %v1024
      %v1069 = vadd.f32 %v888, %v1025
      %v1070 = vadd.f32 %v889, %v1026
      %v1071 = vadd.f32 %v890, %v984
      %v1072 = vadd.f32 %v891, %v1027
      %v1073 = vadd.f32 %v892, %v1028
      %v1074 = vadd.f32 %v893, %v1029
      %v1075 = vadd.f32 %v894, %v1030
      %v1076 = vadd.f32 %v895, %v1031
      %v1077 = vadd.f32 %v896, %v996
      %v1078 = vadd.f32 %v897, %v1032
      %v1079 = vadd.f32 %v898, %v1033
      %v1080 = vadd.f32 %v899, %v1034
      %v1081 = vadd.f32 %v900, %v1035
      %v1082 = vadd.f32 %v901, %v1036
      %v1083 = vadd.f32 %v902, %v1008
      %v1084 = vadd.f32 %v903, %v1037
      %v1085 = vadd.f32 %v904, %v1038
      %v1086 = vadd.f32 %v905, %v1039
      %v1087 = vadd.f32 %v906, %v1040
      %v1088 = vadd.f32 %v907, %v1041
      %v1089 = vadd.f32 %v908, %v1020
      %1090 = vset.pattern.permute.xlu0 5
      %1091 = vperm.xlu0 %1090, %v251
      %v1092 = vpop.permute.xlu0 %1091
      %1094 = vset.pattern.permute.xlu0 5
      %1095 = vperm.xlu0 %1094, %v252
      %v1096 = vpop.permute.xlu0 %1095
      %1098 = vset.pattern.permute.xlu0 5
      %1099 = vperm.xlu0 %1098, %v253
      %v1100 = vpop.permute.xlu0 %1099
      %1102 = vset.pattern.permute.xlu0 5
      %1103 = vperm.xlu0 %1102, %v254
      %v1104 = vpop.permute.xlu0 %1103
      %v1106 = vmul.f32 %v271, %v1092
      %v1107 = vmul.f32 %v275, %v1092
      %v1108 = vmul.f32 %v279, %v1092
      %v1109 = vmul.f32 %v283, %v1092
      %v1110 = vmul.f32 %v287, %v1092
      %v1111 = vmul.f32 %v291, %v1092
      %v1112 = vmul.f32 %v271, %v1096
      %v1113 = vmul.f32 %v275, %v1096
      %v1114 = vmul.f32 %v279, %v1096
      %v1115 = vmul.f32 %v283, %v1096
      %v1116 = vmul.f32 %v287, %v1096
      %v1117 = vmul.f32 %v291, %v1096
      %v1118 = vmul.f32 %v271, %v1100
      %v1119 = vmul.f32 %v275, %v1100
      %v1120 = vmul.f32 %v279, %v1100
      %v1121 = vmul.f32 %v283, %v1100
      %v1122 = vmul.f32 %v287, %v1100
      %v1123 = vmul.f32 %v291, %v1100
      %v1124 = vmul.f32 %v271, %v1104
      %v1125 = vmul.f32 %v275, %v1104
      %v1126 = vmul.f32 %v279, %v1104
      %v1127 = vmul.f32 %v283, %v1104
      %v1128 = vmul.f32 %v287, %v1104
      %v1129 = vmul.f32 %v291, %v1104
      %1154 = vrot.lane.b32.xlu0 %v1106, 98
      %v1155 = vpop.permute.xlu0 %1154
      %1156 = vrot.lane.b32.xlu0 %v1107, 98
      %v1157 = vpop.permute.xlu0 %1156
      %1158 = vrot.lane.b32.xlu0 %v1108, 98
      %v1159 = vpop.permute.xlu0 %1158
      %1160 = vrot.lane.b32.xlu0 %v1109, 98
      %v1161 = vpop.permute.xlu0 %1160
      %1162 = vrot.lane.b32.xlu0 %v1110, 98
      %v1163 = vpop.permute.xlu0 %1162
      %1164 = vrot.lane.b32.xlu0 %v1111, 98
      %v1165 = vpop.permute.xlu0 %1164
      %1166 = vrot.lane.b32.xlu0 %v1112, 98
      %v1167 = vpop.permute.xlu0 %1166
      %1168 = vrot.lane.b32.xlu0 %v1113, 98
      %v1169 = vpop.permute.xlu0 %1168
      %1170 = vrot.lane.b32.xlu0 %v1114, 98
      %v1171 = vpop.permute.xlu0 %1170
      %1172 = vrot.lane.b32.xlu0 %v1115, 98
      %v1173 = vpop.permute.xlu0 %1172
      %1174 = vrot.lane.b32.xlu0 %v1116, 98
      %v1175 = vpop.permute.xlu0 %1174
      %1176 = vrot.lane.b32.xlu0 %v1117, 98
      %v1177 = vpop.permute.xlu0 %1176
      %1178 = vrot.lane.b32.xlu0 %v1118, 98
      %v1179 = vpop.permute.xlu0 %1178
      %1180 = vrot.lane.b32.xlu0 %v1119, 98
      %v1181 = vpop.permute.xlu0 %1180
      %1182 = vrot.lane.b32.xlu0 %v1120, 98
      %v1183 = vpop.permute.xlu0 %1182
      %1184 = vrot.lane.b32.xlu0 %v1121, 98
      %v1185 = vpop.permute.xlu0 %1184
      %1186 = vrot.lane.b32.xlu0 %v1122, 98
      %v1187 = vpop.permute.xlu0 %1186
      %1188 = vrot.lane.b32.xlu0 %v1123, 98
      %v1189 = vpop.permute.xlu0 %1188
      %1190 = vrot.lane.b32.xlu0 %v1124, 98
      %v1191 = vpop.permute.xlu0 %1190
      %1192 = vrot.lane.b32.xlu0 %v1125, 98
      %v1193 = vpop.permute.xlu0 %1192
      %1194 = vrot.lane.b32.xlu0 %v1126, 98
      %v1195 = vpop.permute.xlu0 %1194
      %1196 = vrot.lane.b32.xlu0 %v1127, 98
      %v1197 = vpop.permute.xlu0 %1196
      %1198 = vrot.lane.b32.xlu0 %v1128, 98
      %v1199 = vpop.permute.xlu0 %1198
      %1200 = vrot.lane.b32.xlu0 %v1129, 98
      %v1201 = vpop.permute.xlu0 %1200
      %vm1202 = vcmask 801792
      %v1203 = vsel %vm1202, %v1155, %v1157
      %v1204 = vsel %vm1202, %v1157, %v1159
      %v1205 = vsel %vm1202, %v1159, %v1161
      %v1206 = vsel %vm1202, %v1161, %v1163
      %v1207 = vsel %vm1202, %v1163, %v1165
      %v1208 = vsel %vm1202, %v1167, %v1169
      %v1209 = vsel %vm1202, %v1169, %v1171
      %v1210 = vsel %vm1202, %v1171, %v1173
      %v1211 = vsel %vm1202, %v1173, %v1175
      %v1212 = vsel %vm1202, %v1175, %v1177
      %v1213 = vsel %vm1202, %v1179, %v1181
      %v1214 = vsel %vm1202, %v1181, %v1183
      %v1215 = vsel %vm1202, %v1183, %v1185
      %v1216 = vsel %vm1202, %v1185, %v1187
      %v1217 = vsel %vm1202, %v1187, %v1189
      %v1218 = vsel %vm1202, %v1191, %v1193
      %v1219 = vsel %vm1202, %v1193, %v1195
      %v1220 = vsel %vm1202, %v1195, %v1197
      %v1221 = vsel %vm1202, %v1197, %v1199
      %v1222 = vsel %vm1202, %v1199, %v1201
      %v1247 = vadd.f32 %v1066, %v1203
      %v1248 = vadd.f32 %v1067, %v1204
      %v1249 = vadd.f32 %v1068, %v1205
      %v1250 = vadd.f32 %v1069, %v1206
      %v1251 = vadd.f32 %v1070, %v1207
      %v1252 = vadd.f32 %v1071, %v1165
      %v1253 = vadd.f32 %v1072, %v1208
      %v1254 = vadd.f32 %v1073, %v1209
      %v1255 = vadd.f32 %v1074, %v1210
      %v1256 = vadd.f32 %v1075, %v1211
      %v1257 = vadd.f32 %v1076, %v1212
      %v1258 = vadd.f32 %v1077, %v1177
      %v1259 = vadd.f32 %v1078, %v1213
      %v1260 = vadd.f32 %v1079, %v1214
      %v1261 = vadd.f32 %v1080, %v1215
      %v1262 = vadd.f32 %v1081, %v1216
      %v1263 = vadd.f32 %v1082, %v1217
      %v1264 = vadd.f32 %v1083, %v1189
      %v1265 = vadd.f32 %v1084, %v1218
      %v1266 = vadd.f32 %v1085, %v1219
      %v1267 = vadd.f32 %v1086, %v1220
      %v1268 = vadd.f32 %v1087, %v1221
      %v1269 = vadd.f32 %v1088, %v1222
      %v1270 = vadd.f32 %v1089, %v1201
      %v1271 = vlaneseq
      %v1272 = vshrl.u32 %v1271, 7
      %v1273 = vsub.s32 6, %v1272
      %v1274 = vrot.slane %v250, %v1273
      %1276 = vset.pattern.permute.xlu0 6
      %1277 = vperm.xlu0 %1276, %v251
      %v1278 = vpop.permute.xlu0 %1277
      %1280 = vset.pattern.permute.xlu0 6
      %1281 = vperm.xlu0 %1280, %v252
      %v1282 = vpop.permute.xlu0 %1281
      %1284 = vset.pattern.permute.xlu0 6
      %1285 = vperm.xlu0 %1284, %v253
      %v1286 = vpop.permute.xlu0 %1285
      %1288 = vset.pattern.permute.xlu0 6
      %1289 = vperm.xlu0 %1288, %v254
      %v1290 = vpop.permute.xlu0 %1289
      %v1292 = vmul.f32 %v271, %v1278
      %v1293 = vmul.f32 %v275, %v1278
      %v1294 = vmul.f32 %v279, %v1278
      %v1295 = vmul.f32 %v283, %v1278
      %v1296 = vmul.f32 %v287, %v1278
      %v1297 = vmul.f32 %v291, %v1278
      %v1298 = vmul.f32 %v1274, %v1278
      %v1299 = vmul.f32 %v271, %v1282
      %v1300 = vmul.f32 %v275, %v1282
      %v1301 = vmul.f32 %v279, %v1282
      %v1302 = vmul.f32 %v283, %v1282
      %v1303 = vmul.f32 %v287, %v1282
      %v1304 = vmul.f32 %v291, %v1282
      %v1305 = vmul.f32 %v1274, %v1282
      %v1306 = vmul.f32 %v271, %v1286
      %v1307 = vmul.f32 %v275, %v1286
      %v1308 = vmul.f32 %v279, %v1286
      %v1309 = vmul.f32 %v283, %v1286
      %v1310 = vmul.f32 %v287, %v1286
      %v1311 = vmul.f32 %v291, %v1286
      %v1312 = vmul.f32 %v1274, %v1286
      %v1313 = vmul.f32 %v271, %v1290
      %v1314 = vmul.f32 %v275, %v1290
      %v1315 = vmul.f32 %v279, %v1290
      %v1316 = vmul.f32 %v283, %v1290
      %v1317 = vmul.f32 %v287, %v1290
      %v1318 = vmul.f32 %v291, %v1290
      %v1319 = vmul.f32 %v1274, %v1290
      %1348 = vrot.lane.b32.xlu0 %v1292, 72
      %v1349 = vpop.permute.xlu0 %1348
      %1350 = vrot.lane.b32.xlu0 %v1293, 72
      %v1351 = vpop.permute.xlu0 %1350
      %1352 = vrot.lane.b32.xlu0 %v1294, 72
      %v1353 = vpop.permute.xlu0 %1352
      %1354 = vrot.lane.b32.xlu0 %v1295, 72
      %v1355 = vpop.permute.xlu0 %1354
      %1356 = vrot.lane.b32.xlu0 %v1296, 72
      %v1357 = vpop.permute.xlu0 %1356
      %1358 = vrot.lane.b32.xlu0 %v1297, 72
      %v1359 = vpop.permute.xlu0 %1358
      %1360 = vrot.lane.b32.xlu0 %v1298, 72
      %v1361 = vpop.permute.xlu0 %1360
      %1362 = vrot.lane.b32.xlu0 %v1299, 72
      %v1363 = vpop.permute.xlu0 %1362
      %1364 = vrot.lane.b32.xlu0 %v1300, 72
      %v1365 = vpop.permute.xlu0 %1364
      %1366 = vrot.lane.b32.xlu0 %v1301, 72
      %v1367 = vpop.permute.xlu0 %1366
      %1368 = vrot.lane.b32.xlu0 %v1302, 72
      %v1369 = vpop.permute.xlu0 %1368
      %1370 = vrot.lane.b32.xlu0 %v1303, 72
      %v1371 = vpop.permute.xlu0 %1370
      %1372 = vrot.lane.b32.xlu0 %v1304, 72
      %v1373 = vpop.permute.xlu0 %1372
      %1374 = vrot.lane.b32.xlu0 %v1305, 72
      %v1375 = vpop.permute.xlu0 %1374
      %1376 = vrot.lane.b32.xlu0 %v1306, 72
      %v1377 = vpop.permute.xlu0 %1376
      %1378 = vrot.lane.b32.xlu0 %v1307, 72
      %v1379 = vpop.permute.xlu0 %1378
      %1380 = vrot.lane.b32.xlu0 %v1308, 72
      %v1381 = vpop.permute.xlu0 %1380
      %1382 = vrot.lane.b32.xlu0 %v1309, 72
      %v1383 = vpop.permute.xlu0 %1382
      %1384 = vrot.lane.b32.xlu0 %v1310, 72
      %v1385 = vpop.permute.xlu0 %1384
      %1386 = vrot.lane.b32.xlu0 %v1311, 72
      %v1387 = vpop.permute.xlu0 %1386
      %1388 = vrot.lane.b32.xlu0 %v1312, 72
      %v1389 = vpop.permute.xlu0 %1388
      %1390 = vrot.lane.b32.xlu0 %v1313, 72
      %v1391 = vpop.permute.xlu0 %1390
      %1392 = vrot.lane.b32.xlu0 %v1314, 72
      %v1393 = vpop.permute.xlu0 %1392
      %1394 = vrot.lane.b32.xlu0 %v1315, 72
      %v1395 = vpop.permute.xlu0 %1394
      %1396 = vrot.lane.b32.xlu0 %v1316, 72
      %v1397 = vpop.permute.xlu0 %1396
      %1398 = vrot.lane.b32.xlu0 %v1317, 72
      %v1399 = vpop.permute.xlu0 %1398
      %1400 = vrot.lane.b32.xlu0 %v1318, 72
      %v1401 = vpop.permute.xlu0 %1400
      %1402 = vrot.lane.b32.xlu0 %v1319, 72
      %v1403 = vpop.permute.xlu0 %1402
      %vm1404 = vcmask 588800
      %v1405 = vsel %vm1404, %v1349, %v1351
      %v1406 = vsel %vm1404, %v1351, %v1353
      %v1407 = vsel %vm1404, %v1353, %v1355
      %v1408 = vsel %vm1404, %v1355, %v1357
      %v1409 = vsel %vm1404, %v1357, %v1359
      %v1410 = vsel %vm1404, %v1359, %v1361
      %v1411 = vsel %vm1404, %v1363, %v1365
      %v1412 = vsel %vm1404, %v1365, %v1367
      %v1413 = vsel %vm1404, %v1367, %v1369
      %v1414 = vsel %vm1404, %v1369, %v1371
      %v1415 = vsel %vm1404, %v1371, %v1373
      %v1416 = vsel %vm1404, %v1373, %v1375
      %v1417 = vsel %vm1404, %v1377, %v1379
      %v1418 = vsel %vm1404, %v1379, %v1381
      %v1419 = vsel %vm1404, %v1381, %v1383
      %v1420 = vsel %vm1404, %v1383, %v1385
      %v1421 = vsel %vm1404, %v1385, %v1387
      %v1422 = vsel %vm1404, %v1387, %v1389
      %v1423 = vsel %vm1404, %v1391, %v1393
      %v1424 = vsel %vm1404, %v1393, %v1395
      %v1425 = vsel %vm1404, %v1395, %v1397
      %v1426 = vsel %vm1404, %v1397, %v1399
      %v1427 = vsel %vm1404, %v1399, %v1401
      %v1428 = vsel %vm1404, %v1401, %v1403
      %v1453 = vadd.f32 %v1247, %v1405
      %v1454 = vadd.f32 %v1248, %v1406
      %v1455 = vadd.f32 %v1249, %v1407
      %v1456 = vadd.f32 %v1250, %v1408
      %v1457 = vadd.f32 %v1251, %v1409
      %v1458 = vadd.f32 %v1252, %v1410
      %v1459 = vadd.f32 %v1253, %v1411
      %v1460 = vadd.f32 %v1254, %v1412
      %v1461 = vadd.f32 %v1255, %v1413
      %v1462 = vadd.f32 %v1256, %v1414
      %v1463 = vadd.f32 %v1257, %v1415
      %v1464 = vadd.f32 %v1258, %v1416
      %v1465 = vadd.f32 %v1259, %v1417
      %v1466 = vadd.f32 %v1260, %v1418
      %v1467 = vadd.f32 %v1261, %v1419
      %v1468 = vadd.f32 %v1262, %v1420
      %v1469 = vadd.f32 %v1263, %v1421
      %v1470 = vadd.f32 %v1264, %v1422
      %v1471 = vadd.f32 %v1265, %v1423
      %v1472 = vadd.f32 %v1266, %v1424
      %v1473 = vadd.f32 %v1267, %v1425
      %v1474 = vadd.f32 %v1268, %v1426
      %v1475 = vadd.f32 %v1269, %v1427
      %v1476 = vadd.f32 %v1270, %v1428
      %1477 = vset.pattern.permute.xlu0 7
      %1478 = vperm.xlu0 %1477, %v251
      %v1479 = vpop.permute.xlu0 %1478
      %1481 = vset.pattern.permute.xlu0 7
      %1482 = vperm.xlu0 %1481, %v252
      %v1483 = vpop.permute.xlu0 %1482
      %1485 = vset.pattern.permute.xlu0 7
      %1486 = vperm.xlu0 %1485, %v253
      %v1487 = vpop.permute.xlu0 %1486
      %1489 = vset.pattern.permute.xlu0 7
      %1490 = vperm.xlu0 %1489, %v254
      %v1491 = vpop.permute.xlu0 %1490
      %v1493 = vmul.f32 %v271, %v1479
      %v1494 = vmul.f32 %v275, %v1479
      %v1495 = vmul.f32 %v279, %v1479
      %v1496 = vmul.f32 %v283, %v1479
      %v1497 = vmul.f32 %v287, %v1479
      %v1498 = vmul.f32 %v291, %v1479
      %v1499 = vmul.f32 %v1274, %v1479
      %v1500 = vmul.f32 %v271, %v1483
      %v1501 = vmul.f32 %v275, %v1483
      %v1502 = vmul.f32 %v279, %v1483
      %v1503 = vmul.f32 %v283, %v1483
      %v1504 = vmul.f32 %v287, %v1483
      %v1505 = vmul.f32 %v291, %v1483
      %v1506 = vmul.f32 %v1274, %v1483
      %v1507 = vmul.f32 %v271, %v1487
      %v1508 = vmul.f32 %v275, %v1487
      %v1509 = vmul.f32 %v279, %v1487
      %v1510 = vmul.f32 %v283, %v1487
      %v1511 = vmul.f32 %v287, %v1487
      %v1512 = vmul.f32 %v291, %v1487
      %v1513 = vmul.f32 %v1274, %v1487
      %v1514 = vmul.f32 %v271, %v1491
      %v1515 = vmul.f32 %v275, %v1491
      %v1516 = vmul.f32 %v279, %v1491
      %v1517 = vmul.f32 %v283, %v1491
      %v1518 = vmul.f32 %v287, %v1491
      %v1519 = vmul.f32 %v291, %v1491
      %v1520 = vmul.f32 %v1274, %v1491
      %1549 = vrot.lane.b32.xlu0 %v1493, 71
      %v1550 = vpop.permute.xlu0 %1549
      %1551 = vrot.lane.b32.xlu0 %v1494, 71
      %v1552 = vpop.permute.xlu0 %1551
      %1553 = vrot.lane.b32.xlu0 %v1495, 71
      %v1554 = vpop.permute.xlu0 %1553
      %1555 = vrot.lane.b32.xlu0 %v1496, 71
      %v1556 = vpop.permute.xlu0 %1555
      %1557 = vrot.lane.b32.xlu0 %v1497, 71
      %v1558 = vpop.permute.xlu0 %1557
      %1559 = vrot.lane.b32.xlu0 %v1498, 71
      %v1560 = vpop.permute.xlu0 %1559
      %1561 = vrot.lane.b32.xlu0 %v1499, 71
      %v1562 = vpop.permute.xlu0 %1561
      %1563 = vrot.lane.b32.xlu0 %v1500, 71
      %v1564 = vpop.permute.xlu0 %1563
      %1565 = vrot.lane.b32.xlu0 %v1501, 71
      %v1566 = vpop.permute.xlu0 %1565
      %1567 = vrot.lane.b32.xlu0 %v1502, 71
      %v1568 = vpop.permute.xlu0 %1567
      %1569 = vrot.lane.b32.xlu0 %v1503, 71
      %v1570 = vpop.permute.xlu0 %1569
      %1571 = vrot.lane.b32.xlu0 %v1504, 71
      %v1572 = vpop.permute.xlu0 %1571
      %1573 = vrot.lane.b32.xlu0 %v1505, 71
      %v1574 = vpop.permute.xlu0 %1573
      %1575 = vrot.lane.b32.xlu0 %v1506, 71
      %v1576 = vpop.permute.xlu0 %1575
      %1577 = vrot.lane.b32.xlu0 %v1507, 71
      %v1578 = vpop.permute.xlu0 %1577
      %1579 = vrot.lane.b32.xlu0 %v1508, 71
      %v1580 = vpop.permute.xlu0 %1579
      %1581 = vrot.lane.b32.xlu0 %v1509, 71
      %v1582 = vpop.permute.xlu0 %1581
      %1583 = vrot.lane.b32.xlu0 %v1510, 71
      %v1584 = vpop.permute.xlu0 %1583
      %1585 = vrot.lane.b32.xlu0 %v1511, 71
      %v1586 = vpop.permute.xlu0 %1585
      %1587 = vrot.lane.b32.xlu0 %v1512, 71
      %v1588 = vpop.permute.xlu0 %1587
      %1589 = vrot.lane.b32.xlu0 %v1513, 71
      %v1590 = vpop.permute.xlu0 %1589
      %1591 = vrot.lane.b32.xlu0 %v1514, 71
      %v1592 = vpop.permute.xlu0 %1591
      %1593 = vrot.lane.b32.xlu0 %v1515, 71
      %v1594 = vpop.permute.xlu0 %1593
      %1595 = vrot.lane.b32.xlu0 %v1516, 71
      %v1596 = vpop.permute.xlu0 %1595
      %1597 = vrot.lane.b32.xlu0 %v1517, 71
      %v1598 = vpop.permute.xlu0 %1597
      %1599 = vrot.lane.b32.xlu0 %v1518, 71
      %v1600 = vpop.permute.xlu0 %1599
      %1601 = vrot.lane.b32.xlu0 %v1519, 71
      %v1602 = vpop.permute.xlu0 %1601
      %1603 = vrot.lane.b32.xlu0 %v1520, 71
      %v1604 = vpop.permute.xlu0 %1603
      %vm1605 = vcmask 580608
      %v1606 = vsel %vm1605, %v1550, %v1552
      %v1607 = vsel %vm1605, %v1552, %v1554
      %v1608 = vsel %vm1605, %v1554, %v1556
      %v1609 = vsel %vm1605, %v1556, %v1558
      %v1610 = vsel %vm1605, %v1558, %v1560
      %v1611 = vsel %vm1605, %v1560, %v1562
      %v1612 = vsel %vm1605, %v1564, %v1566
      %v1613 = vsel %vm1605, %v1566, %v1568
      %v1614 = vsel %vm1605, %v1568, %v1570
      %v1615 = vsel %vm1605, %v1570, %v1572
      %v1616 = vsel %vm1605, %v1572, %v1574
      %v1617 = vsel %vm1605, %v1574, %v1576
      %v1618 = vsel %vm1605, %v1578, %v1580
      %v1619 = vsel %vm1605, %v1580, %v1582
      %v1620 = vsel %vm1605, %v1582, %v1584
      %v1621 = vsel %vm1605, %v1584, %v1586
      %v1622 = vsel %vm1605, %v1586, %v1588
      %v1623 = vsel %vm1605, %v1588, %v1590
      %v1624 = vsel %vm1605, %v1592, %v1594
      %v1625 = vsel %vm1605, %v1594, %v1596
      %v1626 = vsel %vm1605, %v1596, %v1598
      %v1627 = vsel %vm1605, %v1598, %v1600
      %v1628 = vsel %vm1605, %v1600, %v1602
      %v1629 = vsel %vm1605, %v1602, %v1604
      %v1654 = vadd.f32 %v1453, %v1606
      %v1655 = vadd.f32 %v1454, %v1607
      %v1656 = vadd.f32 %v1455, %v1608
      %v1657 = vadd.f32 %v1456, %v1609
      %v1658 = vadd.f32 %v1457, %v1610
      %v1659 = vadd.f32 %v1458, %v1611
      %v1660 = vadd.f32 %v1459, %v1612
      %v1661 = vadd.f32 %v1460, %v1613
      %v1662 = vadd.f32 %v1461, %v1614
      %v1663 = vadd.f32 %v1462, %v1615
      %v1664 = vadd.f32 %v1463, %v1616
      %v1665 = vadd.f32 %v1464, %v1617
      %v1666 = vadd.f32 %v1465, %v1618
      %v1667 = vadd.f32 %v1466, %v1619
      %v1668 = vadd.f32 %v1467, %v1620
      %v1669 = vadd.f32 %v1468, %v1621
      %v1670 = vadd.f32 %v1469, %v1622
      %v1671 = vadd.f32 %v1470, %v1623
      %v1672 = vadd.f32 %v1471, %v1624
      %v1673 = vadd.f32 %v1472, %v1625
      %v1674 = vadd.f32 %v1473, %v1626
      %v1675 = vadd.f32 %v1474, %v1627
      %v1676 = vadd.f32 %v1475, %v1628
      %v1677 = vadd.f32 %v1476, %v1629
      %1678 = vset.pattern.permute.xlu0 8
      %1679 = vperm.xlu0 %1678, %v251
      %v1680 = vpop.permute.xlu0 %1679
      %1682 = vset.pattern.permute.xlu0 8
      %1683 = vperm.xlu0 %1682, %v252
      %v1684 = vpop.permute.xlu0 %1683
      %1686 = vset.pattern.permute.xlu0 8
      %1687 = vperm.xlu0 %1686, %v253
      %v1688 = vpop.permute.xlu0 %1687
      %1690 = vset.pattern.permute.xlu0 8
      %1691 = vperm.xlu0 %1690, %v254
      %v1692 = vpop.permute.xlu0 %1691
      %v1694 = vmul.f32 %v271, %v1680
      %v1695 = vmul.f32 %v275, %v1680
      %v1696 = vmul.f32 %v279, %v1680
      %v1697 = vmul.f32 %v283, %v1680
      %v1698 = vmul.f32 %v287, %v1680
      %v1699 = vmul.f32 %v291, %v1680
      %v1700 = vmul.f32 %v1274, %v1680
      %v1701 = vmul.f32 %v271, %v1684
      %v1702 = vmul.f32 %v275, %v1684
      %v1703 = vmul.f32 %v279, %v1684
      %v1704 = vmul.f32 %v283, %v1684
      %v1705 = vmul.f32 %v287, %v1684
      %v1706 = vmul.f32 %v291, %v1684
      %v1707 = vmul.f32 %v1274, %v1684
      %v1708 = vmul.f32 %v271, %v1688
      %v1709 = vmul.f32 %v275, %v1688
      %v1710 = vmul.f32 %v279, %v1688
      %v1711 = vmul.f32 %v283, %v1688
      %v1712 = vmul.f32 %v287, %v1688
      %v1713 = vmul.f32 %v291, %v1688
      %v1714 = vmul.f32 %v1274, %v1688
      %v1715 = vmul.f32 %v271, %v1692
      %v1716 = vmul.f32 %v275, %v1692
      %v1717 = vmul.f32 %v279, %v1692
      %v1718 = vmul.f32 %v283, %v1692
      %v1719 = vmul.f32 %v287, %v1692
      %v1720 = vmul.f32 %v291, %v1692
      %v1721 = vmul.f32 %v1274, %v1692
      %1750 = vrot.lane.b32.xlu0 %v1694, 70
      %v1751 = vpop.permute.xlu0 %1750
      %1752 = vrot.lane.b32.xlu0 %v1695, 70
      %v1753 = vpop.permute.xlu0 %1752
      %1754 = vrot.lane.b32.xlu0 %v1696, 70
      %v1755 = vpop.permute.xlu0 %1754
      %1756 = vrot.lane.b32.xlu0 %v1697, 70
      %v1757 = vpop.permute.xlu0 %1756
      %1758 = vrot.lane.b32.xlu0 %v1698, 70
      %v1759 = vpop.permute.xlu0 %1758
      %1760 = vrot.lane.b32.xlu0 %v1699, 70
      %v1761 = vpop.permute.xlu0 %1760
      %1762 = vrot.lane.b32.xlu0 %v1700, 70
      %v1763 = vpop.permute.xlu0 %1762
      %1764 = vrot.lane.b32.xlu0 %v1701, 70
      %v1765 = vpop.permute.xlu0 %1764
      %1766 = vrot.lane.b32.xlu0 %v1702, 70
      %v1767 = vpop.permute.xlu0 %1766
      %1768 = vrot.lane.b32.xlu0 %v1703, 70
      %v1769 = vpop.permute.xlu0 %1768
      %1770 = vrot.lane.b32.xlu0 %v1704, 70
      %v1771 = vpop.permute.xlu0 %1770
      %1772 = vrot.lane.b32.xlu0 %v1705, 70
      %v1773 = vpop.permute.xlu0 %1772
      %1774 = vrot.lane.b32.xlu0 %v1706, 70
      %v1775 = vpop.permute.xlu0 %1774
      %1776 = vrot.lane.b32.xlu0 %v1707, 70
      %v1777 = vpop.permute.xlu0 %1776
      %1778 = vrot.lane.b32.xlu0 %v1708, 70
      %v1779 = vpop.permute.xlu0 %1778
      %1780 = vrot.lane.b32.xlu0 %v1709, 70
      %v1781 = vpop.permute.xlu0 %1780
      %1782 = vrot.lane.b32.xlu0 %v1710, 70
      %v1783 = vpop.permute.xlu0 %1782
      %1784 = vrot.lane.b32.xlu0 %v1711, 70
      %v1785 = vpop.permute.xlu0 %1784
      %1786 = vrot.lane.b32.xlu0 %v1712, 70
      %v1787 = vpop.permute.xlu0 %1786
      %1788 = vrot.lane.b32.xlu0 %v1713, 70
      %v1789 = vpop.permute.xlu0 %1788
      %1790 = vrot.lane.b32.xlu0 %v1714, 70
      %v1791 = vpop.permute.xlu0 %1790
      %1792 = vrot.lane.b32.xlu0 %v1715, 70
      %v1793 = vpop.permute.xlu0 %1792
      %1794 = vrot.lane.b32.xlu0 %v1716, 70
      %v1795 = vpop.permute.xlu0 %1794
      %1796 = vrot.lane.b32.xlu0 %v1717, 70
      %v1797 = vpop.permute.xlu0 %1796
      %1798 = vrot.lane.b32.xlu0 %v1718, 70
      %v1799 = vpop.permute.xlu0 %1798
      %1800 = vrot.lane.b32.xlu0 %v1719, 70
      %v1801 = vpop.permute.xlu0 %1800
      %1802 = vrot.lane.b32.xlu0 %v1720, 70
      %v1803 = vpop.permute.xlu0 %1802
      %1804 = vrot.lane.b32.xlu0 %v1721, 70
      %v1805 = vpop.permute.xlu0 %1804
      %vm1806 = vcmask 572416
      %v1807 = vsel %vm1806, %v1751, %v1753
      %v1808 = vsel %vm1806, %v1753, %v1755
      %v1809 = vsel %vm1806, %v1755, %v1757
      %v1810 = vsel %vm1806, %v1757, %v1759
      %v1811 = vsel %vm1806, %v1759, %v1761
      %v1812 = vsel %vm1806, %v1761, %v1763
      %v1813 = vsel %vm1806, %v1765, %v1767
      %v1814 = vsel %vm1806, %v1767, %v1769
      %v1815 = vsel %vm1806, %v1769, %v1771
      %v1816 = vsel %vm1806, %v1771, %v1773
      %v1817 = vsel %vm1806, %v1773, %v1775
      %v1818 = vsel %vm1806, %v1775, %v1777
      %v1819 = vsel %vm1806, %v1779, %v1781
      %v1820 = vsel %vm1806, %v1781, %v1783
      %v1821 = vsel %vm1806, %v1783, %v1785
      %v1822 = vsel %vm1806, %v1785, %v1787
      %v1823 = vsel %vm1806, %v1787, %v1789
      %v1824 = vsel %vm1806, %v1789, %v1791
      %v1825 = vsel %vm1806, %v1793, %v1795
      %v1826 = vsel %vm1806, %v1795, %v1797
      %v1827 = vsel %vm1806, %v1797, %v1799
      %v1828 = vsel %vm1806, %v1799, %v1801
      %v1829 = vsel %vm1806, %v1801, %v1803
      %v1830 = vsel %vm1806, %v1803, %v1805
      %v1855 = vadd.f32 %v1654, %v1807
      %v1856 = vadd.f32 %v1655, %v1808
      %v1857 = vadd.f32 %v1656, %v1809
      %v1858 = vadd.f32 %v1657, %v1810
      %v1859 = vadd.f32 %v1658, %v1811
      %v1860 = vadd.f32 %v1659, %v1812
      %v1861 = vadd.f32 %v1660, %v1813
      %v1862 = vadd.f32 %v1661, %v1814
      %v1863 = vadd.f32 %v1662, %v1815
      %v1864 = vadd.f32 %v1663, %v1816
      %v1865 = vadd.f32 %v1664, %v1817
      %v1866 = vadd.f32 %v1665, %v1818
      %v1867 = vadd.f32 %v1666, %v1819
      %v1868 = vadd.f32 %v1667, %v1820
      %v1869 = vadd.f32 %v1668, %v1821
      %v1870 = vadd.f32 %v1669, %v1822
      %v1871 = vadd.f32 %v1670, %v1823
      %v1872 = vadd.f32 %v1671, %v1824
      %v1873 = vadd.f32 %v1672, %v1825
      %v1874 = vadd.f32 %v1673, %v1826
      %v1875 = vadd.f32 %v1674, %v1827
      %v1876 = vadd.f32 %v1675, %v1828
      %v1877 = vadd.f32 %v1676, %v1829
      %v1878 = vadd.f32 %v1677, %v1830
      %1880 = vset.pattern.permute.xlu0 0
      %1881 = vperm.xlu0 %1880, %v255
      %v1882 = vpop.permute.xlu0 %1881
      %1885 = vset.pattern.permute.xlu0 0
      %1886 = vperm.xlu0 %1885, %v256
      %v1887 = vpop.permute.xlu0 %1886
      %1890 = vset.pattern.permute.xlu0 0
      %1891 = vperm.xlu0 %1890, %v257
      %v1892 = vpop.permute.xlu0 %1891
      %1895 = vset.pattern.permute.xlu0 0
      %1896 = vperm.xlu0 %1895, %v258
      %v1897 = vpop.permute.xlu0 %1896
      %v1899 = vadd.f32 %v1855, %v1882
      %v1900 = vadd.f32 %v1856, %v1882
      %v1901 = vadd.f32 %v1857, %v1882
      %v1902 = vadd.f32 %v1858, %v1882
      %v1903 = vadd.f32 %v1859, %v1882
      %v1904 = vadd.f32 %v1860, %v1882
      %v1905 = vadd.f32 %v1861, %v1887
      %v1906 = vadd.f32 %v1862, %v1887
      %v1907 = vadd.f32 %v1863, %v1887
      %v1908 = vadd.f32 %v1864, %v1887
      %v1909 = vadd.f32 %v1865, %v1887
      %v1910 = vadd.f32 %v1866, %v1887
      %v1911 = vadd.f32 %v1867, %v1892
      %v1912 = vadd.f32 %v1868, %v1892
      %v1913 = vadd.f32 %v1869, %v1892
      %v1914 = vadd.f32 %v1870, %v1892
      %v1915 = vadd.f32 %v1871, %v1892
      %v1916 = vadd.f32 %v1872, %v1892
      %v1917 = vadd.f32 %v1873, %v1897
      %v1918 = vadd.f32 %v1874, %v1897
      %v1919 = vadd.f32 %v1875, %v1897
      %v1920 = vadd.f32 %v1876, %v1897
      %v1921 = vadd.f32 %v1877, %v1897
      %v1922 = vadd.f32 %v1878, %v1897
      %v1923 = vmax.f32 %v1899, 0.0
      %v1924 = vmax.f32 %v1900, 0.0
      %v1925 = vmax.f32 %v1901, 0.0
      %v1926 = vmax.f32 %v1902, 0.0
      %v1927 = vmax.f32 %v1903, 0.0
      %v1928 = vmax.f32 %v1904, 0.0
      %v1929 = vmax.f32 %v1905, 0.0
      %v1930 = vmax.f32 %v1906, 0.0
      %v1931 = vmax.f32 %v1907, 0.0
      %v1932 = vmax.f32 %v1908, 0.0
      %v1933 = vmax.f32 %v1909, 0.0
      %v1934 = vmax.f32 %v1910, 0.0
      %v1935 = vmax.f32 %v1911, 0.0
      %v1936 = vmax.f32 %v1912, 0.0
      %v1937 = vmax.f32 %v1913, 0.0
      %v1938 = vmax.f32 %v1914, 0.0
      %v1939 = vmax.f32 %v1915, 0.0
      %v1940 = vmax.f32 %v1916, 0.0
      %v1941 = vmax.f32 %v1917, 0.0
      %v1942 = vmax.f32 %v1918, 0.0
      %v1943 = vmax.f32 %v1919, 0.0
      %v1944 = vmax.f32 %v1920, 0.0
      %v1945 = vmax.f32 %v1921, 0.0
      %v1946 = vmax.f32 %v1922, 0.0
      %v1947 = vld [vmem:[%s3] sm:$0xf]
      %v1948 = vld [vmem:[%s3 + $0x4] sm:$0xf]
      %v1949 = vld [vmem:[%s3 + $0x8] sm:$0xf]
      %v1950 = vld [vmem:[%s3 + $0xc] sm:$0xf]
      %v1951 = vld [vmem:[%s3 + $0x10] sm:$0xf]
      %v1952 = vld [vmem:[%s3 + $0x14] sm:$0xf]
      %v1953 = vld [vmem:[%s3 + $0x18] sm:$0xf]
      %v1954 = vld [vmem:[%s3 + $0x1c] sm:$0xf]
      %v1955 = vpack.c.bf16 %v1929, %v1923
      %v1956 = vpack.c.bf16 %v1930, %v1924
      %v1957 = vpack.c.bf16 %v1931, %v1925
      %v1958 = vpack.c.bf16 %v1932, %v1926
      %v1959 = vpack.c.bf16 %v1933, %v1927
      %v1960 = vpack.c.bf16 %v1934, %v1928
      %v1961 = vpack.c.bf16 %v1941, %v1935
      %v1962 = vpack.c.bf16 %v1942, %v1936
      %v1963 = vpack.c.bf16 %v1943, %v1937
      %v1964 = vpack.c.bf16 %v1944, %v1938
      %v1965 = vpack.c.bf16 %v1945, %v1939
      %v1966 = vpack.c.bf16 %v1946, %v1940
      %s1967 = scalar_lea.vmem %s3, 32
      %v1968 = vld [vmem:[%s1967] sm:$0xf]
      %v1969 = vld [vmem:[%s1967 + $0x4] sm:$0xf]
      %v1970 = vld [vmem:[%s1967 + $0x8] sm:$0xf]
      %v1971 = vld [vmem:[%s1967 + $0xc] sm:$0xf]
      %v1972 = vld [vmem:[%s1967 + $0x10] sm:$0xf]
      %v1973 = vld [vmem:[%s1967 + $0x14] sm:$0xf]
      %v1974 = vld [vmem:[%s1967 + $0x18] sm:$0xf]
      %v1975 = vld [vmem:[%s1967 + $0x1c] sm:$0xf]
      %v1984 = vunpack.c.l.b16 %v1968
      %v1985 = vunpack.c.l.b16 %v1969
      %v1986 = vunpack.c.l.b16 %v1970
      %v1987 = vunpack.c.l.b16 %v1971
      %v1988 = vunpack.c.l.b16 %v1972
      %v1989 = vunpack.c.l.b16 %v1973
      %v1990 = vunpack.c.l.b16 %v1974
      %v1991 = vunpack.c.l.b16 %v1975
      %v1992 = vpack.c.b16 %v1985, %v1984
      %v1993 = vpack.c.b16 %v1987, %v1986
      %v1994 = vpack.c.b16 %v1989, %v1988
      %v1995 = vpack.c.b16 %v1991, %v1990
      %2008 = vrot.lane.b32.xlu0 %v1955, 127
      %v2009 = vpop.permute.xlu0 %2008
      %2010 = vrot.lane.b32.xlu0 %v1956, 127
      %v2011 = vpop.permute.xlu0 %2010
      %2012 = vrot.lane.b32.xlu0 %v1957, 127
      %v2013 = vpop.permute.xlu0 %2012
      %2014 = vrot.lane.b32.xlu0 %v1958, 127
      %v2015 = vpop.permute.xlu0 %2014
      %2016 = vrot.lane.b32.xlu0 %v1959, 127
      %v2017 = vpop.permute.xlu0 %2016
      %2018 = vrot.lane.b32.xlu0 %v1960, 127
      %v2019 = vpop.permute.xlu0 %2018
      %2020 = vrot.lane.b32.xlu0 %v1961, 127
      %v2021 = vpop.permute.xlu0 %2020
      %2022 = vrot.lane.b32.xlu0 %v1962, 127
      %v2023 = vpop.permute.xlu0 %2022
      %2024 = vrot.lane.b32.xlu0 %v1963, 127
      %v2025 = vpop.permute.xlu0 %2024
      %2026 = vrot.lane.b32.xlu0 %v1964, 127
      %v2027 = vpop.permute.xlu0 %2026
      %2028 = vrot.lane.b32.xlu0 %v1965, 127
      %v2029 = vpop.permute.xlu0 %2028
      %2030 = vrot.lane.b32.xlu0 %v1966, 127
      %v2031 = vpop.permute.xlu0 %2030
      %vm2032 = vcmask 1039360
      %v2033 = vsel %vm2032, %v2009, %v2011
      %v2034 = vsel %vm2032, %v2011, %v2013
      %v2035 = vsel %vm2032, %v2013, %v2015
      %v2036 = vsel %vm2032, %v2015, %v2017
      %v2037 = vsel %vm2032, %v2017, %v2019
      %v2038 = vsel %vm2032, %v2021, %v2023
      %v2039 = vsel %vm2032, %v2023, %v2025
      %v2040 = vsel %vm2032, %v2025, %v2027
      %v2041 = vsel %vm2032, %v2027, %v2029
      %v2042 = vsel %vm2032, %v2029, %v2031
      %vm2055 = vcmask 261120
      %v2057 = vsel %vm2055, %v1992, 0
      %v2060 = vsel %vm2055, %v1993, 0
      %v2063 = vsel %vm2055, %v1994, 0
      %v2066 = vsel %vm2055, %v1995, 0
      %2068 = vmatprep.subr.bf16.mxu0 %v2034
      %2069 = vmatpush1.bf16.msra.mxu0 %v2033
      %2070 = vmatprep.subr.bf16.mxu0 %v2039
      %2071 = vmatpush1.bf16.msra.mxu0 %v2038
      %2072 = vmatprep.subr.bf16.mxu0 0
      %2073 = vmatpush1.bf16.msra.mxu0 0
      %2074 = vmatprep.subr.bf16.mxu0 0
      %2075 = vmatpush1.bf16.msra.mxu0 0
      %2076 = vmatprep.subr.bf16.mxu0 0
      %2077 = vmatpush1.bf16.msra.mxu0 0
      %2078 = vmatprep.subr.bf16.mxu0 0
      %2079 = vmatpush1.bf16.msra.mxu0 0
      %2080 = vmatprep.subr.bf16.mxu0 0
      %2081 = vmatpush1.bf16.msra.mxu0 0
      %2082 = vmatprep.subr.bf16.mxu0 0
      %2083 = vmatpush1.bf16.msra.mxu0 0
      %2084 = vmatprep.subr.bf16.mxu0 0
      %2085 = vmatpush1.bf16.msra.mxu0 0
      %2086 = vmatprep.subr.bf16.mxu0 0
      %2087 = vmatpush1.bf16.msra.mxu0 0
      %2088 = vmatprep.subr.bf16.mxu0 0
      %2089 = vmatpush1.bf16.msra.mxu0 0
      %2090 = vmatprep.subr.bf16.mxu0 0
      %2091 = vmatpush1.bf16.msra.mxu0 0
      %2092 = vmatprep.subr.bf16.mxu0 0
      %2093 = vmatpush1.bf16.msra.mxu0 0
      %2094 = vmatprep.subr.bf16.mxu0 0
      %2095 = vmatpush1.bf16.msra.mxu0 0
      %2096 = vmatprep.subr.bf16.mxu0 0
      %2097 = vmatpush1.bf16.msra.mxu0 0
      %2098 = vmatprep.subr.bf16.mxu0 0
      %2099 = vmatpush1.bf16.msra.mxu0 0
      %2100 = vmatprep.mubr.bf16.mxu0 0
      %2101 = vmatmul.mubr.bf16.gmra.mrb[0].mxu0 %v2057
      %v2102 = vpop.f32.mrb[0].mxu0
      %v2103 = vadd.f32 0.0, %v2102
      %v2104 = vpop.f32.mrb[0].mxu0
      %v2105 = vadd.f32 0.0, %v2104
      %v2106 = vpop.f32.mrb[0].mxu0
      %v2107 = vadd.f32 0.0, %v2106
      %v2108 = vpop.f32.mrb[0].mxu0
      %v2109 = vadd.f32 0.0, %v2108
      %2110 = vmatprep.mubr.bf16.mxu0 0
      %2111 = vmatmul.mubr.bf16.gmra.mrb[0].mxu0 %v2060
      %v2112 = vpop.f32.mrb[0].mxu0
      %v2113 = vadd.f32 0.0, %v2112
      %v2114 = vpop.f32.mrb[0].mxu0
      %v2115 = vadd.f32 0.0, %v2114
      %v2116 = vpop.f32.mrb[0].mxu0
      %v2117 = vadd.f32 0.0, %v2116
      %v2118 = vpop.f32.mrb[0].mxu0
      %v2119 = vadd.f32 0.0, %v2118
      %2120 = vmatprep.mubr.bf16.mxu0 0
      %2121 = vmatmul.mubr.bf16.gmra.mrb[0].mxu0 %v2063
      %v2122 = vpop.f32.mrb[0].mxu0
      %v2123 = vadd.f32 0.0, %v2122
      %v2124 = vpop.f32.mrb[0].mxu0
      %v2125 = vadd.f32 0.0, %v2124
      %v2126 = vpop.f32.mrb[0].mxu0
      %v2127 = vadd.f32 0.0, %v2126
      %v2128 = vpop.f32.mrb[0].mxu0
      %v2129 = vadd.f32 0.0, %v2128
      %2130 = vmatprep.mubr.bf16.mxu0 0
      %2131 = vmatmul.mubr.bf16.gmra.mrb[0].mxu0 %v2066
      %v2132 = vpop.f32.mrb[0].mxu0
      %v2133 = vadd.f32 0.0, %v2132
      %v2134 = vpop.f32.mrb[0].mxu0
      %v2135 = vadd.f32 0.0, %v2134
      %v2136 = vpop.f32.mrb[0].mxu0
      %v2137 = vadd.f32 0.0, %v2136
      %v2138 = vpop.f32.mrb[0].mxu0
      %v2139 = vadd.f32 0.0, %v2138
      %2140 = vdwg.mxu0
      %2141 = vmatprep.subr.bf16.mxu0 %v2036
      %2142 = vmatpush1.bf16.msra.mxu0 %v2035
      %2143 = vmatprep.subr.bf16.mxu0 %v2041
      %2144 = vmatpush1.bf16.msra.mxu0 %v2040
      %2145 = vmatprep.subr.bf16.mxu0 0
      %2146 = vmatpush1.bf16.msra.mxu0 0
      %2147 = vmatprep.subr.bf16.mxu0 0
      %2148 = vmatpush1.bf16.msra.mxu0 0
      %2149 = vmatprep.subr.bf16.mxu0 0
      %2150 = vmatpush1.bf16.msra.mxu0 0
      %2151 = vmatprep.subr.bf16.mxu0 0
      %2152 = vmatpush1.bf16.msra.mxu0 0
      %2153 = vmatprep.subr.bf16.mxu0 0
      %2154 = vmatpush1.bf16.msra.mxu0 0
      %2155 = vmatprep.subr.bf16.mxu0 0
      %2156 = vmatpush1.bf16.msra.mxu0 0
      %2157 = vmatprep.subr.bf16.mxu0 0
      %2158 = vmatpush1.bf16.msra.mxu0 0
      %2159 = vmatprep.subr.bf16.mxu0 0
      %2160 = vmatpush1.bf16.msra.mxu0 0
      %2161 = vmatprep.subr.bf16.mxu0 0
      %2162 = vmatpush1.bf16.msra.mxu0 0
      %2163 = vmatprep.subr.bf16.mxu0 0
      %2164 = vmatpush1.bf16.msra.mxu0 0
      %2165 = vmatprep.subr.bf16.mxu0 0
      %2166 = vmatpush1.bf16.msra.mxu0 0
      %2167 = vmatprep.subr.bf16.mxu0 0
      %2168 = vmatpush1.bf16.msra.mxu0 0
      %2169 = vmatprep.subr.bf16.mxu0 0
      %2170 = vmatpush1.bf16.msra.mxu0 0
      %2171 = vmatprep.subr.bf16.mxu0 0
      %2172 = vmatpush1.bf16.msra.mxu0 0
      %2173 = vmatprep.mubr.bf16.mxu0 0
      %2174 = vmatmul.mubr.bf16.gmra.mrb[0].mxu0 %v2057
      %v2175 = vpop.f32.mrb[0].mxu0
      %v2176 = vadd.f32 0.0, %v2175
      %v2177 = vpop.f32.mrb[0].mxu0
      %v2178 = vadd.f32 0.0, %v2177
      %v2179 = vpop.f32.mrb[0].mxu0
      %v2180 = vadd.f32 0.0, %v2179
      %v2181 = vpop.f32.mrb[0].mxu0
      %v2182 = vadd.f32 0.0, %v2181
      %2183 = vmatprep.mubr.bf16.mxu0 0
      %2184 = vmatmul.mubr.bf16.gmra.mrb[0].mxu0 %v2060
      %v2185 = vpop.f32.mrb[0].mxu0
      %v2186 = vadd.f32 0.0, %v2185
      %v2187 = vpop.f32.mrb[0].mxu0
      %v2188 = vadd.f32 0.0, %v2187
      %v2189 = vpop.f32.mrb[0].mxu0
      %v2190 = vadd.f32 0.0, %v2189
      %v2191 = vpop.f32.mrb[0].mxu0
      %v2192 = vadd.f32 0.0, %v2191
      %2193 = vmatprep.mubr.bf16.mxu0 0
      %2194 = vmatmul.mubr.bf16.gmra.mrb[0].mxu0 %v2063
      %v2195 = vpop.f32.mrb[0].mxu0
      %v2196 = vadd.f32 0.0, %v2195
      %v2197 = vpop.f32.mrb[0].mxu0
      %v2198 = vadd.f32 0.0, %v2197
      %v2199 = vpop.f32.mrb[0].mxu0
      %v2200 = vadd.f32 0.0, %v2199
      %v2201 = vpop.f32.mrb[0].mxu0
      %v2202 = vadd.f32 0.0, %v2201
      %2203 = vmatprep.mubr.bf16.mxu0 0
      %2204 = vmatmul.mubr.bf16.gmra.mrb[0].mxu0 %v2066
      %v2205 = vpop.f32.mrb[0].mxu0
      %v2206 = vadd.f32 0.0, %v2205
      %v2207 = vpop.f32.mrb[0].mxu0
      %v2208 = vadd.f32 0.0, %v2207
      %v2209 = vpop.f32.mrb[0].mxu0
      %v2210 = vadd.f32 0.0, %v2209
      %v2211 = vpop.f32.mrb[0].mxu0
      %v2212 = vadd.f32 0.0, %v2211
      %2213 = vdwg.mxu0
      %2214 = vmatprep.subr.bf16.mxu0 %v2019
      %2215 = vmatpush1.bf16.msra.mxu0 %v2037
      %2216 = vmatprep.subr.bf16.mxu0 %v2031
      %2217 = vmatpush1.bf16.msra.mxu0 %v2042
      %2218 = vmatprep.subr.bf16.mxu0 0
      %2219 = vmatpush1.bf16.msra.mxu0 0
      %2220 = vmatprep.subr.bf16.mxu0 0
      %2221 = vmatpush1.bf16.msra.mxu0 0
      %2222 = vmatprep.subr.bf16.mxu0 0
      %2223 = vmatpush1.bf16.msra.mxu0 0
      %2224 = vmatprep.subr.bf16.mxu0 0
      %2225 = vmatpush1.bf16.msra.mxu0 0
      %2226 = vmatprep.subr.bf16.mxu0 0
      %2227 = vmatpush1.bf16.msra.mxu0 0
      %2228 = vmatprep.subr.bf16.mxu0 0
      %2229 = vmatpush1.bf16.msra.mxu0 0
      %2230 = vmatprep.subr.bf16.mxu0 0
      %2231 = vmatpush1.bf16.msra.mxu0 0
      %2232 = vmatprep.subr.bf16.mxu0 0
      %2233 = vmatpush1.bf16.msra.mxu0 0
      %2234 = vmatprep.subr.bf16.mxu0 0
      %2235 = vmatpush1.bf16.msra.mxu0 0
      %2236 = vmatprep.subr.bf16.mxu0 0
      %2237 = vmatpush1.bf16.msra.mxu0 0
      %2238 = vmatprep.subr.bf16.mxu0 0
      %2239 = vmatpush1.bf16.msra.mxu0 0
      %2240 = vmatprep.subr.bf16.mxu0 0
      %2241 = vmatpush1.bf16.msra.mxu0 0
      %2242 = vmatprep.subr.bf16.mxu0 0
      %2243 = vmatpush1.bf16.msra.mxu0 0
      %2244 = vmatprep.subr.bf16.mxu0 0
      %2245 = vmatpush1.bf16.msra.mxu0 0
      %2246 = vmatprep.mubr.bf16.mxu0 0
      %2247 = vmatmul.mubr.bf16.gmra.mrb[0].mxu0 %v2057
      %v2248 = vpop.f32.mrb[0].mxu0
      %v2249 = vadd.f32 0.0, %v2248
      %v2250 = vpop.f32.mrb[0].mxu0
      %v2251 = vadd.f32 0.0, %v2250
      %v2252 = vpop.f32.mrb[0].mxu0
      %v2253 = vadd.f32 0.0, %v2252
      %v2254 = vpop.f32.mrb[0].mxu0
      %v2255 = vadd.f32 0.0, %v2254
      %2256 = vmatprep.mubr.bf16.mxu0 0
      %2257 = vmatmul.mubr.bf16.gmra.mrb[0].mxu0 %v2060
      %v2258 = vpop.f32.mrb[0].mxu0
      %v2259 = vadd.f32 0.0, %v2258
      %v2260 = vpop.f32.mrb[0].mxu0
      %v2261 = vadd.f32 0.0, %v2260
      %v2262 = vpop.f32.mrb[0].mxu0
      %v2263 = vadd.f32 0.0, %v2262
      %v2264 = vpop.f32.mrb[0].mxu0
      %v2265 = vadd.f32 0.0, %v2264
      %2266 = vmatprep.mubr.bf16.mxu0 0
      %2267 = vmatmul.mubr.bf16.gmra.mrb[0].mxu0 %v2063
      %v2268 = vpop.f32.mrb[0].mxu0
      %v2269 = vadd.f32 0.0, %v2268
      %v2270 = vpop.f32.mrb[0].mxu0
      %v2271 = vadd.f32 0.0, %v2270
      %v2272 = vpop.f32.mrb[0].mxu0
      %v2273 = vadd.f32 0.0, %v2272
      %v2274 = vpop.f32.mrb[0].mxu0
      %v2275 = vadd.f32 0.0, %v2274
      %2276 = vmatprep.mubr.bf16.mxu0 0
      %2277 = vmatmul.mubr.bf16.gmra.mrb[0].mxu0 %v2066
      %v2278 = vpop.f32.mrb[0].mxu0
      %v2279 = vadd.f32 0.0, %v2278
      %v2280 = vpop.f32.mrb[0].mxu0
      %v2281 = vadd.f32 0.0, %v2280
      %v2282 = vpop.f32.mrb[0].mxu0
      %v2283 = vadd.f32 0.0, %v2282
      %v2284 = vpop.f32.mrb[0].mxu0
      %v2285 = vadd.f32 0.0, %v2284
      %2286 = vdwg.mxu0
      %v2295 = vunpack.c.l.b16 %v1947
      %v2296 = vunpack.c.l.b16 %v1948
      %v2297 = vunpack.c.l.b16 %v1949
      %v2298 = vunpack.c.l.b16 %v1950
      %v2299 = vunpack.c.l.b16 %v1951
      %v2300 = vunpack.c.l.b16 %v1952
      %v2301 = vunpack.c.l.b16 %v1953
      %v2302 = vunpack.c.l.b16 %v1954
      %v2303 = vpack.c.b16 %v2296, %v2295
      %v2304 = vpack.c.b16 %v2298, %v2297
      %v2305 = vpack.c.b16 %v2300, %v2299
      %v2306 = vpack.c.b16 %v2302, %v2301
      %v2308 = vsel %vm2055, %v2303, 0
      %v2311 = vsel %vm2055, %v2304, 0
      %v2314 = vsel %vm2055, %v2305, 0
      %v2317 = vsel %vm2055, %v2306, 0
      %2319 = vmatprep.subr.bf16.mxu0 %v1956
      %2320 = vmatpush1.bf16.msra.mxu0 %v1955
      %2321 = vmatprep.subr.bf16.mxu0 %v1962
      %2322 = vmatpush1.bf16.msra.mxu0 %v1961
      %2323 = vmatprep.subr.bf16.mxu0 0
      %2324 = vmatpush1.bf16.msra.mxu0 0
      %2325 = vmatprep.subr.bf16.mxu0 0
      %2326 = vmatpush1.bf16.msra.mxu0 0
      %2327 = vmatprep.subr.bf16.mxu0 0
      %2328 = vmatpush1.bf16.msra.mxu0 0
      %2329 = vmatprep.subr.bf16.mxu0 0
      %2330 = vmatpush1.bf16.msra.mxu0 0
      %2331 = vmatprep.subr.bf16.mxu0 0
      %2332 = vmatpush1.bf16.msra.mxu0 0
      %2333 = vmatprep.subr.bf16.mxu0 0
      %2334 = vmatpush1.bf16.msra.mxu0 0
      %2335 = vmatprep.subr.bf16.mxu0 0
      %2336 = vmatpush1.bf16.msra.mxu0 0
      %2337 = vmatprep.subr.bf16.mxu0 0
      %2338 = vmatpush1.bf16.msra.mxu0 0
      %2339 = vmatprep.subr.bf16.mxu0 0
      %2340 = vmatpush1.bf16.msra.mxu0 0
      %2341 = vmatprep.subr.bf16.mxu0 0
      %2342 = vmatpush1.bf16.msra.mxu0 0
      %2343 = vmatprep.subr.bf16.mxu0 0
      %2344 = vmatpush1.bf16.msra.mxu0 0
      %2345 = vmatprep.subr.bf16.mxu0 0
      %2346 = vmatpush1.bf16.msra.mxu0 0
      %2347 = vmatprep.subr.bf16.mxu0 0
      %2348 = vmatpush1.bf16.msra.mxu0 0
      %2349 = vmatprep.subr.bf16.mxu0 0
      %2350 = vmatpush1.bf16.msra.mxu0 0
      %2351 = vmatprep.mubr.bf16.mxu0 0
      %2352 = vmatmul.mubr.bf16.gmra.mrb[0].mxu0 %v2308
      %v2353 = vpop.f32.mrb[0].mxu0
      %v2354 = vadd.f32 %v2103, %v2353
      %v2355 = vpop.f32.mrb[0].mxu0
      %v2356 = vadd.f32 %v2105, %v2355
      %v2357 = vpop.f32.mrb[0].mxu0
      %v2358 = vadd.f32 %v2107, %v2357
      %v2359 = vpop.f32.mrb[0].mxu0
      %v2360 = vadd.f32 %v2109, %v2359
      %2361 = vmatprep.mubr.bf16.mxu0 0
      %2362 = vmatmul.mubr.bf16.gmra.mrb[0].mxu0 %v2311
      %v2363 = vpop.f32.mrb[0].mxu0
      %v2364 = vadd.f32 %v2113, %v2363
      %v2365 = vpop.f32.mrb[0].mxu0
      %v2366 = vadd.f32 %v2115, %v2365
      %v2367 = vpop.f32.mrb[0].mxu0
      %v2368 = vadd.f32 %v2117, %v2367
      %v2369 = vpop.f32.mrb[0].mxu0
      %v2370 = vadd.f32 %v2119, %v2369
      %2371 = vmatprep.mubr.bf16.mxu0 0
      %2372 = vmatmul.mubr.bf16.gmra.mrb[0].mxu0 %v2314
      %v2373 = vpop.f32.mrb[0].mxu0
      %v2374 = vadd.f32 %v2123, %v2373
      %v2375 = vpop.f32.mrb[0].mxu0
      %v2376 = vadd.f32 %v2125, %v2375
      %v2377 = vpop.f32.mrb[0].mxu0
      %v2378 = vadd.f32 %v2127, %v2377
      %v2379 = vpop.f32.mrb[0].mxu0
      %v2380 = vadd.f32 %v2129, %v2379
      %2381 = vmatprep.mubr.bf16.mxu0 0
      %2382 = vmatmul.mubr.bf16.gmra.mrb[0].mxu0 %v2317
      %v2383 = vpop.f32.mrb[0].mxu0
      %v2384 = vadd.f32 %v2133, %v2383
      %v2385 = vpop.f32.mrb[0].mxu0
      %v2386 = vadd.f32 %v2135, %v2385
      %v2387 = vpop.f32.mrb[0].mxu0
      %v2388 = vadd.f32 %v2137, %v2387
      %v2389 = vpop.f32.mrb[0].mxu0
      %v2390 = vadd.f32 %v2139, %v2389
      %2391 = vdwg.mxu0
      %2392 = vmatprep.subr.bf16.mxu0 %v1958
      %2393 = vmatpush1.bf16.msra.mxu0 %v1957
      %2394 = vmatprep.subr.bf16.mxu0 %v1964
      %2395 = vmatpush1.bf16.msra.mxu0 %v1963
      %2396 = vmatprep.subr.bf16.mxu0 0
      %2397 = vmatpush1.bf16.msra.mxu0 0
      %2398 = vmatprep.subr.bf16.mxu0 0
      %2399 = vmatpush1.bf16.msra.mxu0 0
      %2400 = vmatprep.subr.bf16.mxu0 0
      %2401 = vmatpush1.bf16.msra.mxu0 0
      %2402 = vmatprep.subr.bf16.mxu0 0
      %2403 = vmatpush1.bf16.msra.mxu0 0
      %2404 = vmatprep.subr.bf16.mxu0 0
      %2405 = vmatpush1.bf16.msra.mxu0 0
      %2406 = vmatprep.subr.bf16.mxu0 0
      %2407 = vmatpush1.bf16.msra.mxu0 0
      %2408 = vmatprep.subr.bf16.mxu0 0
      %2409 = vmatpush1.bf16.msra.mxu0 0
      %2410 = vmatprep.subr.bf16.mxu0 0
      %2411 = vmatpush1.bf16.msra.mxu0 0
      %2412 = vmatprep.subr.bf16.mxu0 0
      %2413 = vmatpush1.bf16.msra.mxu0 0
      %2414 = vmatprep.subr.bf16.mxu0 0
      %2415 = vmatpush1.bf16.msra.mxu0 0
      %2416 = vmatprep.subr.bf16.mxu0 0
      %2417 = vmatpush1.bf16.msra.mxu0 0
      %2418 = vmatprep.subr.bf16.mxu0 0
      %2419 = vmatpush1.bf16.msra.mxu0 0
      %2420 = vmatprep.subr.bf16.mxu0 0
      %2421 = vmatpush1.bf16.msra.mxu0 0
      %2422 = vmatprep.subr.bf16.mxu0 0
      %2423 = vmatpush1.bf16.msra.mxu0 0
      %2424 = vmatprep.mubr.bf16.mxu0 0
      %2425 = vmatmul.mubr.bf16.gmra.mrb[0].mxu0 %v2308
      %v2426 = vpop.f32.mrb[0].mxu0
      %v2427 = vadd.f32 %v2176, %v2426
      %v2428 = vpop.f32.mrb[0].mxu0
      %v2429 = vadd.f32 %v2178, %v2428
      %v2430 = vpop.f32.mrb[0].mxu0
      %v2431 = vadd.f32 %v2180, %v2430
      %v2432 = vpop.f32.mrb[0].mxu0
      %v2433 = vadd.f32 %v2182, %v2432
      %2434 = vmatprep.mubr.bf16.mxu0 0
      %2435 = vmatmul.mubr.bf16.gmra.mrb[0].mxu0 %v2311
      %v2436 = vpop.f32.mrb[0].mxu0
      %v2437 = vadd.f32 %v2186, %v2436
      %v2438 = vpop.f32.mrb[0].mxu0
      %v2439 = vadd.f32 %v2188, %v2438
      %v2440 = vpop.f32.mrb[0].mxu0
      %v2441 = vadd.f32 %v2190, %v2440
      %v2442 = vpop.f32.mrb[0].mxu0
      %v2443 = vadd.f32 %v2192, %v2442
      %2444 = vmatprep.mubr.bf16.mxu0 0
      %2445 = vmatmul.mubr.bf16.gmra.mrb[0].mxu0 %v2314
      %v2446 = vpop.f32.mrb[0].mxu0
      %v2447 = vadd.f32 %v2196, %v2446
      %v2448 = vpop.f32.mrb[0].mxu0
      %v2449 = vadd.f32 %v2198, %v2448
      %v2450 = vpop.f32.mrb[0].mxu0
      %v2451 = vadd.f32 %v2200, %v2450
      %v2452 = vpop.f32.mrb[0].mxu0
      %v2453 = vadd.f32 %v2202, %v2452
      %2454 = vmatprep.mubr.bf16.mxu0 0
      %2455 = vmatmul.mubr.bf16.gmra.mrb[0].mxu0 %v2317
      %v2456 = vpop.f32.mrb[0].mxu0
      %v2457 = vadd.f32 %v2206, %v2456
      %v2458 = vpop.f32.mrb[0].mxu0
      %v2459 = vadd.f32 %v2208, %v2458
      %v2460 = vpop.f32.mrb[0].mxu0
      %v2461 = vadd.f32 %v2210, %v2460
      %v2462 = vpop.f32.mrb[0].mxu0
      %v2463 = vadd.f32 %v2212, %v2462
      %2464 = vdwg.mxu0
      %2465 = vmatprep.subr.bf16.mxu0 %v1960
      %2466 = vmatpush1.bf16.msra.mxu0 %v1959
      %2467 = vmatprep.subr.bf16.mxu0 %v1966
      %2468 = vmatpush1.bf16.msra.mxu0 %v1965
      %2469 = vmatprep.subr.bf16.mxu0 0
      %2470 = vmatpush1.bf16.msra.mxu0 0
      %2471 = vmatprep.subr.bf16.mxu0 0
      %2472 = vmatpush1.bf16.msra.mxu0 0
      %2473 = vmatprep.subr.bf16.mxu0 0
      %2474 = vmatpush1.bf16.msra.mxu0 0
      %2475 = vmatprep.subr.bf16.mxu0 0
      %2476 = vmatpush1.bf16.msra.mxu0 0
      %2477 = vmatprep.subr.bf16.mxu0 0
      %2478 = vmatpush1.bf16.msra.mxu0 0
      %2479 = vmatprep.subr.bf16.mxu0 0
      %2480 = vmatpush1.bf16.msra.mxu0 0
      %2481 = vmatprep.subr.bf16.mxu0 0
      %2482 = vmatpush1.bf16.msra.mxu0 0
      %2483 = vmatprep.subr.bf16.mxu0 0
      %2484 = vmatpush1.bf16.msra.mxu0 0
      %2485 = vmatprep.subr.bf16.mxu0 0
      %2486 = vmatpush1.bf16.msra.mxu0 0
      %2487 = vmatprep.subr.bf16.mxu0 0
      %2488 = vmatpush1.bf16.msra.mxu0 0
      %2489 = vmatprep.subr.bf16.mxu0 0
      %2490 = vmatpush1.bf16.msra.mxu0 0
      %2491 = vmatprep.subr.bf16.mxu0 0
      %2492 = vmatpush1.bf16.msra.mxu0 0
      %2493 = vmatprep.subr.bf16.mxu0 0
      %2494 = vmatpush1.bf16.msra.mxu0 0
      %2495 = vmatprep.subr.bf16.mxu0 0
      %2496 = vmatpush1.bf16.msra.mxu0 0
      %2497 = vmatprep.mubr.bf16.mxu0 0
      %2498 = vmatmul.mubr.bf16.gmra.mrb[0].mxu0 %v2308
      %v2499 = vpop.f32.mrb[0].mxu0
      %v2500 = vadd.f32 %v2249, %v2499
      %v2501 = vpop.f32.mrb[0].mxu0
      %v2502 = vadd.f32 %v2251, %v2501
      %v2503 = vpop.f32.mrb[0].mxu0
      %v2504 = vadd.f32 %v2253, %v2503
      %v2505 = vpop.f32.mrb[0].mxu0
      %v2506 = vadd.f32 %v2255, %v2505
      %2507 = vmatprep.mubr.bf16.mxu0 0
      %2508 = vmatmul.mubr.bf16.gmra.mrb[0].mxu0 %v2311
      %v2509 = vpop.f32.mrb[0].mxu0
      %v2510 = vadd.f32 %v2259, %v2509
      %v2511 = vpop.f32.mrb[0].mxu0
      %v2512 = vadd.f32 %v2261, %v2511
      %v2513 = vpop.f32.mrb[0].mxu0
      %v2514 = vadd.f32 %v2263, %v2513
      %v2515 = vpop.f32.mrb[0].mxu0
      %v2516 = vadd.f32 %v2265, %v2515
      %2517 = vmatprep.mubr.bf16.mxu0 0
      %2518 = vmatmul.mubr.bf16.gmra.mrb[0].mxu0 %v2314
      %v2519 = vpop.f32.mrb[0].mxu0
      %v2520 = vadd.f32 %v2269, %v2519
      %v2521 = vpop.f32.mrb[0].mxu0
      %v2522 = vadd.f32 %v2271, %v2521
      %v2523 = vpop.f32.mrb[0].mxu0
      %v2524 = vadd.f32 %v2273, %v2523
      %v2525 = vpop.f32.mrb[0].mxu0
      %v2526 = vadd.f32 %v2275, %v2525
      %2527 = vmatprep.mubr.bf16.mxu0 0
      %2528 = vmatmul.mubr.bf16.gmra.mrb[0].mxu0 %v2317
      %v2529 = vpop.f32.mrb[0].mxu0
      %v2530 = vadd.f32 %v2279, %v2529
      %v2531 = vpop.f32.mrb[0].mxu0
      %v2532 = vadd.f32 %v2281, %v2531
      %v2533 = vpop.f32.mrb[0].mxu0
      %v2534 = vadd.f32 %v2283, %v2533
      %v2535 = vpop.f32.mrb[0].mxu0
      %v2536 = vadd.f32 %v2285, %v2535
      %2537 = vdwg.mxu0
      %s2538 = scalar_lea.vmem %s3, 64
      %v2539 = vld [vmem:[%s2538] sm:$0xf]
      %v2540 = vld [vmem:[%s2538 + $0x4] sm:$0xf]
      %v2541 = vld [vmem:[%s2538 + $0x8] sm:$0xf]
      %v2542 = vld [vmem:[%s2538 + $0xc] sm:$0xf]
      %v2543 = vld [vmem:[%s2538 + $0x10] sm:$0xf]
      %v2544 = vld [vmem:[%s2538 + $0x14] sm:$0xf]
      %v2545 = vld [vmem:[%s2538 + $0x18] sm:$0xf]
      %v2546 = vld [vmem:[%s2538 + $0x1c] sm:$0xf]
      %v2555 = vunpack.c.l.b16 %v2539
      %v2556 = vunpack.c.l.b16 %v2540
      %v2557 = vunpack.c.l.b16 %v2541
      %v2558 = vunpack.c.l.b16 %v2542
      %v2559 = vunpack.c.l.b16 %v2543
      %v2560 = vunpack.c.l.b16 %v2544
      %v2561 = vunpack.c.l.b16 %v2545
      %v2562 = vunpack.c.l.b16 %v2546
      %v2563 = vpack.c.b16 %v2556, %v2555
      %v2564 = vpack.c.b16 %v2558, %v2557
      %v2565 = vpack.c.b16 %v2560, %v2559
      %v2566 = vpack.c.b16 %v2562, %v2561
      %2567 = vrot.lane.b32.xlu0 %v1955, 126
      %v2568 = vpop.permute.xlu0 %2567
      %2569 = vrot.lane.b32.xlu0 %v1956, 126
      %v2570 = vpop.permute.xlu0 %2569
      %2571 = vrot.lane.b32.xlu0 %v1957, 126
      %v2572 = vpop.permute.xlu0 %2571
      %2573 = vrot.lane.b32.xlu0 %v1958, 126
      %v2574 = vpop.permute.xlu0 %2573
      %2575 = vrot.lane.b32.xlu0 %v1959, 126
      %v2576 = vpop.permute.xlu0 %2575
      %2577 = vrot.lane.b32.xlu0 %v1960, 126
      %v2578 = vpop.permute.xlu0 %2577
      %2579 = vrot.lane.b32.xlu0 %v1961, 126
      %v2580 = vpop.permute.xlu0 %2579
      %2581 = vrot.lane.b32.xlu0 %v1962, 126
      %v2582 = vpop.permute.xlu0 %2581
      %2583 = vrot.lane.b32.xlu0 %v1963, 126
      %v2584 = vpop.permute.xlu0 %2583
      %2585 = vrot.lane.b32.xlu0 %v1964, 126
      %v2586 = vpop.permute.xlu0 %2585
      %2587 = vrot.lane.b32.xlu0 %v1965, 126
      %v2588 = vpop.permute.xlu0 %2587
      %2589 = vrot.lane.b32.xlu0 %v1966, 126
      %v2590 = vpop.permute.xlu0 %2589
      %vm2591 = vcmask 1031168
      %v2592 = vsel %vm2591, %v2568, %v2570
      %v2593 = vsel %vm2591, %v2570, %v2572
      %v2594 = vsel %vm2591, %v2572, %v2574
      %v2595 = vsel %vm2591, %v2574, %v2576
      %v2596 = vsel %vm2591, %v2576, %v2578
      %v2597 = vsel %vm2591, %v2580, %v2582
      %v2598 = vsel %vm2591, %v2582, %v2584
      %v2599 = vsel %vm2591, %v2584, %v2586
      %v2600 = vsel %vm2591, %v2586, %v2588
      %v2601 = vsel %vm2591, %v2588, %v2590
      %v2615 = vsel %vm2055, %v2563, 0
      %v2618 = vsel %vm2055, %v2564, 0
      %v2621 = vsel %vm2055, %v2565, 0
      %v2624 = vsel %vm2055, %v2566, 0
      %2626 = vmatprep.subr.bf16.mxu0 %v2593
      %2627 = vmatpush1.bf16.msra.mxu0 %v2592
      %2628 = vmatprep.subr.bf16.mxu0 %v2598
      %2629 = vmatpush1.bf16.msra.mxu0 %v2597
      %2630 = vmatprep.subr.bf16.mxu0 0
      %2631 = vmatpush1.bf16.msra.mxu0 0
      %2632 = vmatprep.subr.bf16.mxu0 0
      %2633 = vmatpush1.bf16.msra.mxu0 0
      %2634 = vmatprep.subr.bf16.mxu0 0
      %2635 = vmatpush1.bf16.msra.mxu0 0
      %2636 = vmatprep.subr.bf16.mxu0 0
      %2637 = vmatpush1.bf16.msra.mxu0 0
      %2638 = vmatprep.subr.bf16.mxu0 0
      %2639 = vmatpush1.bf16.msra.mxu0 0
      %2640 = vmatprep.subr.bf16.mxu0 0
      %2641 = vmatpush1.bf16.msra.mxu0 0
      %2642 = vmatprep.subr.bf16.mxu0 0
      %2643 = vmatpush1.bf16.msra.mxu0 0
      %2644 = vmatprep.subr.bf16.mxu0 0
      %2645 = vmatpush1.bf16.msra.mxu0 0
      %2646 = vmatprep.subr.bf16.mxu0 0
      %2647 = vmatpush1.bf16.msra.mxu0 0
      %2648 = vmatprep.subr.bf16.mxu0 0
      %2649 = vmatpush1.bf16.msra.mxu0 0
      %2650 = vmatprep.subr.bf16.mxu0 0
      %2651 = vmatpush1.bf16.msra.mxu0 0
      %2652 = vmatprep.subr.bf16.mxu0 0
      %2653 = vmatpush1.bf16.msra.mxu0 0
      %2654 = vmatprep.subr.bf16.mxu0 0
      %2655 = vmatpush1.bf16.msra.mxu0 0
      %2656 = vmatprep.subr.bf16.mxu0 0
      %2657 = vmatpush1.bf16.msra.mxu0 0
      %2658 = vmatprep.mubr.bf16.mxu0 0
      %2659 = vmatmul.mubr.bf16.gmra.mrb[0].mxu0 %v2615
      %v2660 = vpop.f32.mrb[0].mxu0
      %v2661 = vadd.f32 0.0, %v2660
      %v2662 = vpop.f32.mrb[0].mxu0
      %v2663 = vadd.f32 0.0, %v2662
      %v2664 = vpop.f32.mrb[0].mxu0
      %v2665 = vadd.f32 0.0, %v2664
      %v2666 = vpop.f32.mrb[0].mxu0
      %v2667 = vadd.f32 0.0, %v2666
      %2668 = vmatprep.mubr.bf16.mxu0 0
      %2669 = vmatmul.mubr.bf16.gmra.mrb[0].mxu0 %v2618
      %v2670 = vpop.f32.mrb[0].mxu0
      %v2671 = vadd.f32 0.0, %v2670
      %v2672 = vpop.f32.mrb[0].mxu0
      %v2673 = vadd.f32 0.0, %v2672
      %v2674 = vpop.f32.mrb[0].mxu0
      %v2675 = vadd.f32 0.0, %v2674
      %v2676 = vpop.f32.mrb[0].mxu0
      %v2677 = vadd.f32 0.0, %v2676
      %2678 = vmatprep.mubr.bf16.mxu0 0
      %2679 = vmatmul.mubr.bf16.gmra.mrb[0].mxu0 %v2621
      %v2680 = vpop.f32.mrb[0].mxu0
      %v2681 = vadd.f32 0.0, %v2680
      %v2682 = vpop.f32.mrb[0].mxu0
      %v2683 = vadd.f32 0.0, %v2682
      %v2684 = vpop.f32.mrb[0].mxu0
      %v2685 = vadd.f32 0.0, %v2684
      %v2686 = vpop.f32.mrb[0].mxu0
      %v2687 = vadd.f32 0.0, %v2686
      %2688 = vmatprep.mubr.bf16.mxu0 0
      %2689 = vmatmul.mubr.bf16.gmra.mrb[0].mxu0 %v2624
      %v2690 = vpop.f32.mrb[0].mxu0
      %v2691 = vadd.f32 0.0, %v2690
      %v2692 = vpop.f32.mrb[0].mxu0
      %v2693 = vadd.f32 0.0, %v2692
      %v2694 = vpop.f32.mrb[0].mxu0
      %v2695 = vadd.f32 0.0, %v2694
      %v2696 = vpop.f32.mrb[0].mxu0
      %v2697 = vadd.f32 0.0, %v2696
      %2698 = vdwg.mxu0
      %2699 = vmatprep.subr.bf16.mxu0 %v2595
      %2700 = vmatpush1.bf16.msra.mxu0 %v2594
      %2701 = vmatprep.subr.bf16.mxu0 %v2600
      %2702 = vmatpush1.bf16.msra.mxu0 %v2599
      %2703 = vmatprep.subr.bf16.mxu0 0
      %2704 = vmatpush1.bf16.msra.mxu0 0
      %2705 = vmatprep.subr.bf16.mxu0 0
      %2706 = vmatpush1.bf16.msra.mxu0 0
      %2707 = vmatprep.subr.bf16.mxu0 0
      %2708 = vmatpush1.bf16.msra.mxu0 0
      %2709 = vmatprep.subr.bf16.mxu0 0
      %2710 = vmatpush1.bf16.msra.mxu0 0
      %2711 = vmatprep.subr.bf16.mxu0 0
      %2712 = vmatpush1.bf16.msra.mxu0 0
      %2713 = vmatprep.subr.bf16.mxu0 0
      %2714 = vmatpush1.bf16.msra.mxu0 0
      %2715 = vmatprep.subr.bf16.mxu0 0
      %2716 = vmatpush1.bf16.msra.mxu0 0
      %2717 = vmatprep.subr.bf16.mxu0 0
      %2718 = vmatpush1.bf16.msra.mxu0 0
      %2719 = vmatprep.subr.bf16.mxu0 0
      %2720 = vmatpush1.bf16.msra.mxu0 0
      %2721 = vmatprep.subr.bf16.mxu0 0
      %2722 = vmatpush1.bf16.msra.mxu0 0
      %2723 = vmatprep.subr.bf16.mxu0 0
      %2724 = vmatpush1.bf16.msra.mxu0 0
      %2725 = vmatprep.subr.bf16.mxu0 0
      %2726 = vmatpush1.bf16.msra.mxu0 0
      %2727 = vmatprep.subr.bf16.mxu0 0
      %2728 = vmatpush1.bf16.msra.mxu0 0
      %2729 = vmatprep.subr.bf16.mxu0 0
      %2730 = vmatpush1.bf16.msra.mxu0 0
      %2731 = vmatprep.mubr.bf16.mxu0 0
      %2732 = vmatmul.mubr.bf16.gmra.mrb[0].mxu0 %v2615
      %v2733 = vpop.f32.mrb[0].mxu0
      %v2734 = vadd.f32 0.0, %v2733
      %v2735 = vpop.f32.mrb[0].mxu0
      %v2736 = vadd.f32 0.0, %v2735
      %v2737 = vpop.f32.mrb[0].mxu0
      %v2738 = vadd.f32 0.0, %v2737
      %v2739 = vpop.f32.mrb[0].mxu0
      %v2740 = vadd.f32 0.0, %v2739
      %2741 = vmatprep.mubr.bf16.mxu0 0
      %2742 = vmatmul.mubr.bf16.gmra.mrb[0].mxu0 %v2618
      %v2743 = vpop.f32.mrb[0].mxu0
      %v2744 = vadd.f32 0.0, %v2743
      %v2745 = vpop.f32.mrb[0].mxu0
      %v2746 = vadd.f32 0.0, %v2745
      %v2747 = vpop.f32.mrb[0].mxu0
      %v2748 = vadd.f32 0.0, %v2747
      %v2749 = vpop.f32.mrb[0].mxu0
      %v2750 = vadd.f32 0.0, %v2749
      %2751 = vmatprep.mubr.bf16.mxu0 0
      %2752 = vmatmul.mubr.bf16.gmra.mrb[0].mxu0 %v2621
      %v2753 = vpop.f32.mrb[0].mxu0
      %v2754 = vadd.f32 0.0, %v2753
      %v2755 = vpop.f32.mrb[0].mxu0
      %v2756 = vadd.f32 0.0, %v2755
      %v2757 = vpop.f32.mrb[0].mxu0
      %v2758 = vadd.f32 0.0, %v2757
      %v2759 = vpop.f32.mrb[0].mxu0
      %v2760 = vadd.f32 0.0, %v2759
      %2761 = vmatprep.mubr.bf16.mxu0 0
      %2762 = vmatmul.mubr.bf16.gmra.mrb[0].mxu0 %v2624
      %v2763 = vpop.f32.mrb[0].mxu0
      %v2764 = vadd.f32 0.0, %v2763
      %v2765 = vpop.f32.mrb[0].mxu0
      %v2766 = vadd.f32 0.0, %v2765
      %v2767 = vpop.f32.mrb[0].mxu0
      %v2768 = vadd.f32 0.0, %v2767
      %v2769 = vpop.f32.mrb[0].mxu0
      %v2770 = vadd.f32 0.0, %v2769
      %2771 = vdwg.mxu0
      %2772 = vmatprep.subr.bf16.mxu0 %v2578
      %2773 = vmatpush1.bf16.msra.mxu0 %v2596
      %2774 = vmatprep.subr.bf16.mxu0 %v2590
      %2775 = vmatpush1.bf16.msra.mxu0 %v2601
      %2776 = vmatprep.subr.bf16.mxu0 0
      %2777 = vmatpush1.bf16.msra.mxu0 0
      %2778 = vmatprep.subr.bf16.mxu0 0
      %2779 = vmatpush1.bf16.msra.mxu0 0
      %2780 = vmatprep.subr.bf16.mxu0 0
      %2781 = vmatpush1.bf16.msra.mxu0 0
      %2782 = vmatprep.subr.bf16.mxu0 0
      %2783 = vmatpush1.bf16.msra.mxu0 0
      %2784 = vmatprep.subr.bf16.mxu0 0
      %2785 = vmatpush1.bf16.msra.mxu0 0
      %2786 = vmatprep.subr.bf16.mxu0 0
      %2787 = vmatpush1.bf16.msra.mxu0 0
      %2788 = vmatprep.subr.bf16.mxu0 0
      %2789 = vmatpush1.bf16.msra.mxu0 0
      %2790 = vmatprep.subr.bf16.mxu0 0
      %2791 = vmatpush1.bf16.msra.mxu0 0
      %2792 = vmatprep.subr.bf16.mxu0 0
      %2793 = vmatpush1.bf16.msra.mxu0 0
      %2794 = vmatprep.subr.bf16.mxu0 0
      %2795 = vmatpush1.bf16.msra.mxu0 0
      %2796 = vmatprep.subr.bf16.mxu0 0
      %2797 = vmatpush1.bf16.msra.mxu0 0
      %2798 = vmatprep.subr.bf16.mxu0 0
      %2799 = vmatpush1.bf16.msra.mxu0 0
      %2800 = vmatprep.subr.bf16.mxu0 0
      %2801 = vmatpush1.bf16.msra.mxu0 0
      %2802 = vmatprep.subr.bf16.mxu0 0
      %2803 = vmatpush1.bf16.msra.mxu0 0
      %2804 = vmatprep.mubr.bf16.mxu0 0
      %2805 = vmatmul.mubr.bf16.gmra.mrb[0].mxu0 %v2615
      %v2806 = vpop.f32.mrb[0].mxu0
      %v2807 = vadd.f32 0.0, %v2806
      %v2808 = vpop.f32.mrb[0].mxu0
      %v2809 = vadd.f32 0.0, %v2808
      %v2810 = vpop.f32.mrb[0].mxu0
      %v2811 = vadd.f32 0.0, %v2810
      %v2812 = vpop.f32.mrb[0].mxu0
      %v2813 = vadd.f32 0.0, %v2812
      %2814 = vmatprep.mubr.bf16.mxu0 0
      %2815 = vmatmul.mubr.bf16.gmra.mrb[0].mxu0 %v2618
      %v2816 = vpop.f32.mrb[0].mxu0
      %v2817 = vadd.f32 0.0, %v2816
      %v2818 = vpop.f32.mrb[0].mxu0
      %v2819 = vadd.f32 0.0, %v2818
      %v2820 = vpop.f32.mrb[0].mxu0
      %v2821 = vadd.f32 0.0, %v2820
      %v2822 = vpop.f32.mrb[0].mxu0
      %v2823 = vadd.f32 0.0, %v2822
      %2824 = vmatprep.mubr.bf16.mxu0 0
      %2825 = vmatmul.mubr.bf16.gmra.mrb[0].mxu0 %v2621
      %v2826 = vpop.f32.mrb[0].mxu0
      %v2827 = vadd.f32 0.0, %v2826
      %v2828 = vpop.f32.mrb[0].mxu0
      %v2829 = vadd.f32 0.0, %v2828
      %v2830 = vpop.f32.mrb[0].mxu0
      %v2831 = vadd.f32 0.0, %v2830
      %v2832 = vpop.f32.mrb[0].mxu0
      %v2833 = vadd.f32 0.0, %v2832
      %2834 = vmatprep.mubr.bf16.mxu0 0
      %2835 = vmatmul.mubr.bf16.gmra.mrb[0].mxu0 %v2624
      %v2836 = vpop.f32.mrb[0].mxu0
      %v2837 = vadd.f32 0.0, %v2836
      %v2838 = vpop.f32.mrb[0].mxu0
      %v2839 = vadd.f32 0.0, %v2838
      %v2840 = vpop.f32.mrb[0].mxu0
      %v2841 = vadd.f32 0.0, %v2840
      %v2842 = vpop.f32.mrb[0].mxu0
      %v2843 = vadd.f32 0.0, %v2842
      %2844 = vdwg.mxu0
      %v2845 = vadd.f32 %v2354, %v2661
      %v2846 = vadd.f32 %v2356, %v2663
      %v2847 = vadd.f32 %v2427, %v2734
      %v2848 = vadd.f32 %v2429, %v2736
      %v2849 = vadd.f32 %v2500, %v2807
      %v2850 = vadd.f32 %v2502, %v2809
      %v2851 = vadd.f32 %v2358, %v2665
      %v2852 = vadd.f32 %v2360, %v2667
      %v2853 = vadd.f32 %v2431, %v2738
      %v2854 = vadd.f32 %v2433, %v2740
      %v2855 = vadd.f32 %v2504, %v2811
      %v2856 = vadd.f32 %v2506, %v2813
      %v2857 = vadd.f32 %v2364, %v2671
      %v2858 = vadd.f32 %v2366, %v2673
      %v2859 = vadd.f32 %v2437, %v2744
      %v2860 = vadd.f32 %v2439, %v2746
      %v2861 = vadd.f32 %v2510, %v2817
      %v2862 = vadd.f32 %v2512, %v2819
      %v2863 = vadd.f32 %v2368, %v2675
      %v2864 = vadd.f32 %v2370, %v2677
      %v2865 = vadd.f32 %v2441, %v2748
      %v2866 = vadd.f32 %v2443, %v2750
      %v2867 = vadd.f32 %v2514, %v2821
      %v2868 = vadd.f32 %v2516, %v2823
      %v2869 = vadd.f32 %v2374, %v2681
      %v2870 = vadd.f32 %v2376, %v2683
      %v2871 = vadd.f32 %v2447, %v2754
      %v2872 = vadd.f32 %v2449, %v2756
      %v2873 = vadd.f32 %v2520, %v2827
      %v2874 = vadd.f32 %v2522, %v2829
      %v2875 = vadd.f32 %v2378, %v2685
      %v2876 = vadd.f32 %v2380, %v2687
      %v2877 = vadd.f32 %v2451, %v2758
      %v2878 = vadd.f32 %v2453, %v2760
      %v2879 = vadd.f32 %v2524, %v2831
      %v2880 = vadd.f32 %v2526, %v2833
      %v2881 = vadd.f32 %v2384, %v2691
      %v2882 = vadd.f32 %v2386, %v2693
      %v2883 = vadd.f32 %v2457, %v2764
      %v2884 = vadd.f32 %v2459, %v2766
      %v2885 = vadd.f32 %v2530, %v2837
      %v2886 = vadd.f32 %v2532, %v2839
      %v2887 = vadd.f32 %v2388, %v2695
      %v2888 = vadd.f32 %v2390, %v2697
      %v2889 = vadd.f32 %v2461, %v2768
      %v2890 = vadd.f32 %v2463, %v2770
      %v2891 = vadd.f32 %v2534, %v2841
      %v2892 = vadd.f32 %v2536, %v2843
      %s2893 = scalar_lea.vmem %s3, 96
      %v2894 = vld [vmem:[%s2893] sm:$0xf]
      %v2895 = vld [vmem:[%s2893 + $0x4] sm:$0xf]
      %v2896 = vld [vmem:[%s2893 + $0x8] sm:$0xf]
      %v2897 = vld [vmem:[%s2893 + $0xc] sm:$0xf]
      %v2898 = vld [vmem:[%s2893 + $0x10] sm:$0xf]
      %v2899 = vld [vmem:[%s2893 + $0x14] sm:$0xf]
      %v2900 = vld [vmem:[%s2893 + $0x18] sm:$0xf]
      %v2901 = vld [vmem:[%s2893 + $0x1c] sm:$0xf]
      %v2910 = vunpack.c.l.b16 %v2894
      %v2911 = vunpack.c.l.b16 %v2895
      %v2912 = vunpack.c.l.b16 %v2896
      %v2913 = vunpack.c.l.b16 %v2897
      %v2914 = vunpack.c.l.b16 %v2898
      %v2915 = vunpack.c.l.b16 %v2899
      %v2916 = vunpack.c.l.b16 %v2900
      %v2917 = vunpack.c.l.b16 %v2901
      %v2918 = vpack.c.b16 %v2911, %v2910
      %v2919 = vpack.c.b16 %v2913, %v2912
      %v2920 = vpack.c.b16 %v2915, %v2914
      %v2921 = vpack.c.b16 %v2917, %v2916
      %2922 = vrot.lane.b32.xlu0 %v1955, 100
      %v2923 = vpop.permute.xlu0 %2922
      %2924 = vrot.lane.b32.xlu0 %v1956, 100
      %v2925 = vpop.permute.xlu0 %2924
      %2926 = vrot.lane.b32.xlu0 %v1957, 100
      %v2927 = vpop.permute.xlu0 %2926
      %2928 = vrot.lane.b32.xlu0 %v1958, 100
      %v2929 = vpop.permute.xlu0 %2928
      %2930 = vrot.lane.b32.xlu0 %v1959, 100
      %v2931 = vpop.permute.xlu0 %2930
      %2932 = vrot.lane.b32.xlu0 %v1960, 100
      %v2933 = vpop.permute.xlu0 %2932
      %2934 = vrot.lane.b32.xlu0 %v1961, 100
      %v2935 = vpop.permute.xlu0 %2934
      %2936 = vrot.lane.b32.xlu0 %v1962, 100
      %v2937 = vpop.permute.xlu0 %2936
      %2938 = vrot.lane.b32.xlu0 %v1963, 100
      %v2939 = vpop.permute.xlu0 %2938
      %2940 = vrot.lane.b32.xlu0 %v1964, 100
      %v2941 = vpop.permute.xlu0 %2940
      %2942 = vrot.lane.b32.xlu0 %v1965, 100
      %v2943 = vpop.permute.xlu0 %2942
      %2944 = vrot.lane.b32.xlu0 %v1966, 100
      %v2945 = vpop.permute.xlu0 %2944
      %vm2946 = vcmask 818176
      %v2947 = vsel %vm2946, %v2923, %v2925
      %v2948 = vsel %vm2946, %v2925, %v2927
      %v2949 = vsel %vm2946, %v2927, %v2929
      %v2950 = vsel %vm2946, %v2929, %v2931
      %v2951 = vsel %vm2946, %v2931, %v2933
      %v2952 = vsel %vm2946, %v2935, %v2937
      %v2953 = vsel %vm2946, %v2937, %v2939
      %v2954 = vsel %vm2946, %v2939, %v2941
      %v2955 = vsel %vm2946, %v2941, %v2943
      %v2956 = vsel %vm2946, %v2943, %v2945
      %v2970 = vsel %vm2055, %v2918, 0
      %v2973 = vsel %vm2055, %v2919, 0
      %v2976 = vsel %vm2055, %v2920, 0
      %v2979 = vsel %vm2055, %v2921, 0
      %2981 = vmatprep.subr.bf16.mxu0 %v2948
      %2982 = vmatpush1.bf16.msra.mxu0 %v2947
      %2983 = vmatprep.subr.bf16.mxu0 %v2953
      %2984 = vmatpush1.bf16.msra.mxu0 %v2952
      %2985 = vmatprep.subr.bf16.mxu0 0
      %2986 = vmatpush1.bf16.msra.mxu0 0
      %2987 = vmatprep.subr.bf16.mxu0 0
      %2988 = vmatpush1.bf16.msra.mxu0 0
      %2989 = vmatprep.subr.bf16.mxu0 0
      %2990 = vmatpush1.bf16.msra.mxu0 0
      %2991 = vmatprep.subr.bf16.mxu0 0
      %2992 = vmatpush1.bf16.msra.mxu0 0
      %2993 = vmatprep.subr.bf16.mxu0 0
      %2994 = vmatpush1.bf16.msra.mxu0 0
      %2995 = vmatprep.subr.bf16.mxu0 0
      %2996 = vmatpush1.bf16.msra.mxu0 0
      %2997 = vmatprep.subr.bf16.mxu0 0
      %2998 = vmatpush1.bf16.msra.mxu0 0
      %2999 = vmatprep.subr.bf16.mxu0 0
      %3000 = vmatpush1.bf16.msra.mxu0 0
      %3001 = vmatprep.subr.bf16.mxu0 0
      %3002 = vmatpush1.bf16.msra.mxu0 0
      %3003 = vmatprep.subr.bf16.mxu0 0
      %3004 = vmatpush1.bf16.msra.mxu0 0
      %3005 = vmatprep.subr.bf16.mxu0 0
      %3006 = vmatpush1.bf16.msra.mxu0 0
      %3007 = vmatprep.subr.bf16.mxu0 0
      %3008 = vmatpush1.bf16.msra.mxu0 0
      %3009 = vmatprep.subr.bf16.mxu0 0
      %3010 = vmatpush1.bf16.msra.mxu0 0
      %3011 = vmatprep.subr.bf16.mxu0 0
      %3012 = vmatpush1.bf16.msra.mxu0 0
      %3013 = vmatprep.mubr.bf16.mxu0 0
      %3014 = vmatmul.mubr.bf16.gmra.mrb[0].mxu0 %v2970
      %v3015 = vpop.f32.mrb[0].mxu0
      %v3016 = vadd.f32 0.0, %v3015
      %v3017 = vpop.f32.mrb[0].mxu0
      %v3018 = vadd.f32 0.0, %v3017
      %v3019 = vpop.f32.mrb[0].mxu0
      %v3020 = vadd.f32 0.0, %v3019
      %v3021 = vpop.f32.mrb[0].mxu0
      %v3022 = vadd.f32 0.0, %v3021
      %3023 = vmatprep.mubr.bf16.mxu0 0
      %3024 = vmatmul.mubr.bf16.gmra.mrb[0].mxu0 %v2973
      %v3025 = vpop.f32.mrb[0].mxu0
      %v3026 = vadd.f32 0.0, %v3025
      %v3027 = vpop.f32.mrb[0].mxu0
      %v3028 = vadd.f32 0.0, %v3027
      %v3029 = vpop.f32.mrb[0].mxu0
      %v3030 = vadd.f32 0.0, %v3029
      %v3031 = vpop.f32.mrb[0].mxu0
      %v3032 = vadd.f32 0.0, %v3031
      %3033 = vmatprep.mubr.bf16.mxu0 0
      %3034 = vmatmul.mubr.bf16.gmra.mrb[0].mxu0 %v2976
      %v3035 = vpop.f32.mrb[0].mxu0
      %v3036 = vadd.f32 0.0, %v3035
      %v3037 = vpop.f32.mrb[0].mxu0
      %v3038 = vadd.f32 0.0, %v3037
      %v3039 = vpop.f32.mrb[0].mxu0
      %v3040 = vadd.f32 0.0, %v3039
      %v3041 = vpop.f32.mrb[0].mxu0
      %v3042 = vadd.f32 0.0, %v3041
      %3043 = vmatprep.mubr.bf16.mxu0 0
      %3044 = vmatmul.mubr.bf16.gmra.mrb[0].mxu0 %v2979
      %v3045 = vpop.f32.mrb[0].mxu0
      %v3046 = vadd.f32 0.0, %v3045
      %v3047 = vpop.f32.mrb[0].mxu0
      %v3048 = vadd.f32 0.0, %v3047
      %v3049 = vpop.f32.mrb[0].mxu0
      %v3050 = vadd.f32 0.0, %v3049
      %v3051 = vpop.f32.mrb[0].mxu0
      %v3052 = vadd.f32 0.0, %v3051
      %3053 = vdwg.mxu0
      %3054 = vmatprep.subr.bf16.mxu0 %v2950
      %3055 = vmatpush1.bf16.msra.mxu0 %v2949
      %3056 = vmatprep.subr.bf16.mxu0 %v2955
      %3057 = vmatpush1.bf16.msra.mxu0 %v2954
      %3058 = vmatprep.subr.bf16.mxu0 0
      %3059 = vmatpush1.bf16.msra.mxu0 0
      %3060 = vmatprep.subr.bf16.mxu0 0
      %3061 = vmatpush1.bf16.msra.mxu0 0
      %3062 = vmatprep.subr.bf16.mxu0 0
      %3063 = vmatpush1.bf16.msra.mxu0 0
      %3064 = vmatprep.subr.bf16.mxu0 0
      %3065 = vmatpush1.bf16.msra.mxu0 0
      %3066 = vmatprep.subr.bf16.mxu0 0
      %3067 = vmatpush1.bf16.msra.mxu0 0
      %3068 = vmatprep.subr.bf16.mxu0 0
      %3069 = vmatpush1.bf16.msra.mxu0 0
      %3070 = vmatprep.subr.bf16.mxu0 0
      %3071 = vmatpush1.bf16.msra.mxu0 0
      %3072 = vmatprep.subr.bf16.mxu0 0
      %3073 = vmatpush1.bf16.msra.mxu0 0
      %3074 = vmatprep.subr.bf16.mxu0 0
      %3075 = vmatpush1.bf16.msra.mxu0 0
      %3076 = vmatprep.subr.bf16.mxu0 0
      %3077 = vmatpush1.bf16.msra.mxu0 0
      %3078 = vmatprep.subr.bf16.mxu0 0
      %3079 = vmatpush1.bf16.msra.mxu0 0
      %3080 = vmatprep.subr.bf16.mxu0 0
      %3081 = vmatpush1.bf16.msra.mxu0 0
      %3082 = vmatprep.subr.bf16.mxu0 0
      %3083 = vmatpush1.bf16.msra.mxu0 0
      %3084 = vmatprep.subr.bf16.mxu0 0
      %3085 = vmatpush1.bf16.msra.mxu0 0
      %3086 = vmatprep.mubr.bf16.mxu0 0
      %3087 = vmatmul.mubr.bf16.gmra.mrb[0].mxu0 %v2970
      %v3088 = vpop.f32.mrb[0].mxu0
      %v3089 = vadd.f32 0.0, %v3088
      %v3090 = vpop.f32.mrb[0].mxu0
      %v3091 = vadd.f32 0.0, %v3090
      %v3092 = vpop.f32.mrb[0].mxu0
      %v3093 = vadd.f32 0.0, %v3092
      %v3094 = vpop.f32.mrb[0].mxu0
      %v3095 = vadd.f32 0.0, %v3094
      %3096 = vmatprep.mubr.bf16.mxu0 0
      %3097 = vmatmul.mubr.bf16.gmra.mrb[0].mxu0 %v2973
      %v3098 = vpop.f32.mrb[0].mxu0
      %v3099 = vadd.f32 0.0, %v3098
      %v3100 = vpop.f32.mrb[0].mxu0
      %v3101 = vadd.f32 0.0, %v3100
      %v3102 = vpop.f32.mrb[0].mxu0
      %v3103 = vadd.f32 0.0, %v3102
      %v3104 = vpop.f32.mrb[0].mxu0
      %v3105 = vadd.f32 0.0, %v3104
      %3106 = vmatprep.mubr.bf16.mxu0 0
      %3107 = vmatmul.mubr.bf16.gmra.mrb[0].mxu0 %v2976
      %v3108 = vpop.f32.mrb[0].mxu0
      %v3109 = vadd.f32 0.0, %v3108
      %v3110 = vpop.f32.mrb[0].mxu0
      %v3111 = vadd.f32 0.0, %v3110
      %v3112 = vpop.f32.mrb[0].mxu0
      %v3113 = vadd.f32 0.0, %v3112
      %v3114 = vpop.f32.mrb[0].mxu0
      %v3115 = vadd.f32 0.0, %v3114
      %3116 = vmatprep.mubr.bf16.mxu0 0
      %3117 = vmatmul.mubr.bf16.gmra.mrb[0].mxu0 %v2979
      %v3118 = vpop.f32.mrb[0].mxu0
      %v3119 = vadd.f32 0.0, %v3118
      %v3120 = vpop.f32.mrb[0].mxu0
      %v3121 = vadd.f32 0.0, %v3120
      %v3122 = vpop.f32.mrb[0].mxu0
      %v3123 = vadd.f32 0.0, %v3122
      %v3124 = vpop.f32.mrb[0].mxu0
      %v3125 = vadd.f32 0.0, %v3124
      %3126 = vdwg.mxu0
      %3127 = vmatprep.subr.bf16.mxu0 %v2933
      %3128 = vmatpush1.bf16.msra.mxu0 %v2951
      %3129 = vmatprep.subr.bf16.mxu0 %v2945
      %3130 = vmatpush1.bf16.msra.mxu0 %v2956
      %3131 = vmatprep.subr.bf16.mxu0 0
      %3132 = vmatpush1.bf16.msra.mxu0 0
      %3133 = vmatprep.subr.bf16.mxu0 0
      %3134 = vmatpush1.bf16.msra.mxu0 0
      %3135 = vmatprep.subr.bf16.mxu0 0
      %3136 = vmatpush1.bf16.msra.mxu0 0
      %3137 = vmatprep.subr.bf16.mxu0 0
      %3138 = vmatpush1.bf16.msra.mxu0 0
      %3139 = vmatprep.subr.bf16.mxu0 0
      %3140 = vmatpush1.bf16.msra.mxu0 0
      %3141 = vmatprep.subr.bf16.mxu0 0
      %3142 = vmatpush1.bf16.msra.mxu0 0
      %3143 = vmatprep.subr.bf16.mxu0 0
      %3144 = vmatpush1.bf16.msra.mxu0 0
      %3145 = vmatprep.subr.bf16.mxu0 0
      %3146 = vmatpush1.bf16.msra.mxu0 0
      %3147 = vmatprep.subr.bf16.mxu0 0
      %3148 = vmatpush1.bf16.msra.mxu0 0
      %3149 = vmatprep.subr.bf16.mxu0 0
      %3150 = vmatpush1.bf16.msra.mxu0 0
      %3151 = vmatprep.subr.bf16.mxu0 0
      %3152 = vmatpush1.bf16.msra.mxu0 0
      %3153 = vmatprep.subr.bf16.mxu0 0
      %3154 = vmatpush1.bf16.msra.mxu0 0
      %3155 = vmatprep.subr.bf16.mxu0 0
      %3156 = vmatpush1.bf16.msra.mxu0 0
      %3157 = vmatprep.subr.bf16.mxu0 0
      %3158 = vmatpush1.bf16.msra.mxu0 0
      %3159 = vmatprep.mubr.bf16.mxu0 0
      %3160 = vmatmul.mubr.bf16.gmra.mrb[0].mxu0 %v2970
      %v3161 = vpop.f32.mrb[0].mxu0
      %v3162 = vadd.f32 0.0, %v3161
      %v3163 = vpop.f32.mrb[0].mxu0
      %v3164 = vadd.f32 0.0, %v3163
      %v3165 = vpop.f32.mrb[0].mxu0
      %v3166 = vadd.f32 0.0, %v3165
      %v3167 = vpop.f32.mrb[0].mxu0
      %v3168 = vadd.f32 0.0, %v3167
      %3169 = vmatprep.mubr.bf16.mxu0 0
      %3170 = vmatmul.mubr.bf16.gmra.mrb[0].mxu0 %v2973
      %v3171 = vpop.f32.mrb[0].mxu0
      %v3172 = vadd.f32 0.0, %v3171
      %v3173 = vpop.f32.mrb[0].mxu0
      %v3174 = vadd.f32 0.0, %v3173
      %v3175 = vpop.f32.mrb[0].mxu0
      %v3176 = vadd.f32 0.0, %v3175
      %v3177 = vpop.f32.mrb[0].mxu0
      %v3178 = vadd.f32 0.0, %v3177
      %3179 = vmatprep.mubr.bf16.mxu0 0
      %3180 = vmatmul.mubr.bf16.gmra.mrb[0].mxu0 %v2976
      %v3181 = vpop.f32.mrb[0].mxu0
      %v3182 = vadd.f32 0.0, %v3181
      %v3183 = vpop.f32.mrb[0].mxu0
      %v3184 = vadd.f32 0.0, %v3183
      %v3185 = vpop.f32.mrb[0].mxu0
      %v3186 = vadd.f32 0.0, %v3185
      %v3187 = vpop.f32.mrb[0].mxu0
      %v3188 = vadd.f32 0.0, %v3187
      %3189 = vmatprep.mubr.bf16.mxu0 0
      %3190 = vmatmul.mubr.bf16.gmra.mrb[0].mxu0 %v2979
      %v3191 = vpop.f32.mrb[0].mxu0
      %v3192 = vadd.f32 0.0, %v3191
      %v3193 = vpop.f32.mrb[0].mxu0
      %v3194 = vadd.f32 0.0, %v3193
      %v3195 = vpop.f32.mrb[0].mxu0
      %v3196 = vadd.f32 0.0, %v3195
      %v3197 = vpop.f32.mrb[0].mxu0
      %v3198 = vadd.f32 0.0, %v3197
      %3199 = vdwg.mxu0
      %v3200 = vadd.f32 %v2845, %v3016
      %v3201 = vadd.f32 %v2846, %v3018
      %v3202 = vadd.f32 %v2847, %v3089
      %v3203 = vadd.f32 %v2848, %v3091
      %v3204 = vadd.f32 %v2849, %v3162
      %v3205 = vadd.f32 %v2850, %v3164
      %v3206 = vadd.f32 %v2851, %v3020
      %v3207 = vadd.f32 %v2852, %v3022
      %v3208 = vadd.f32 %v2853, %v3093
      %v3209 = vadd.f32 %v2854, %v3095
      %v3210 = vadd.f32 %v2855, %v3166
      %v3211 = vadd.f32 %v2856, %v3168
      %v3212 = vadd.f32 %v2857, %v3026
      %v3213 = vadd.f32 %v2858, %v3028
      %v3214 = vadd.f32 %v2859, %v3099
      %v3215 = vadd.f32 %v2860, %v3101
      %v3216 = vadd.f32 %v2861, %v3172
      %v3217 = vadd.f32 %v2862, %v3174
      %v3218 = vadd.f32 %v2863, %v3030
      %v3219 = vadd.f32 %v2864, %v3032
      %v3220 = vadd.f32 %v2865, %v3103
      %v3221 = vadd.f32 %v2866, %v3105
      %v3222 = vadd.f32 %v2867, %v3176
      %v3223 = vadd.f32 %v2868, %v3178
      %v3224 = vadd.f32 %v2869, %v3036
      %v3225 = vadd.f32 %v2870, %v3038
      %v3226 = vadd.f32 %v2871, %v3109
      %v3227 = vadd.f32 %v2872, %v3111
      %v3228 = vadd.f32 %v2873, %v3182
      %v3229 = vadd.f32 %v2874, %v3184
      %v3230 = vadd.f32 %v2875, %v3040
      %v3231 = vadd.f32 %v2876, %v3042
      %v3232 = vadd.f32 %v2877, %v3113
      %v3233 = vadd.f32 %v2878, %v3115
      %v3234 = vadd.f32 %v2879, %v3186
      %v3235 = vadd.f32 %v2880, %v3188
      %v3236 = vadd.f32 %v2881, %v3046
      %v3237 = vadd.f32 %v2882, %v3048
      %v3238 = vadd.f32 %v2883, %v3119
      %v3239 = vadd.f32 %v2884, %v3121
      %v3240 = vadd.f32 %v2885, %v3192
      %v3241 = vadd.f32 %v2886, %v3194
      %v3242 = vadd.f32 %v2887, %v3050
      %v3243 = vadd.f32 %v2888, %v3052
      %v3244 = vadd.f32 %v2889, %v3123
      %v3245 = vadd.f32 %v2890, %v3125
      %v3246 = vadd.f32 %v2891, %v3196
      %v3247 = vadd.f32 %v2892, %v3198
      %s3248 = scalar_lea.vmem %s3, 128
      %v3249 = vld [vmem:[%s3248] sm:$0xf]
      %v3250 = vld [vmem:[%s3248 + $0x4] sm:$0xf]
      %v3251 = vld [vmem:[%s3248 + $0x8] sm:$0xf]
      %v3252 = vld [vmem:[%s3248 + $0xc] sm:$0xf]
      %v3253 = vld [vmem:[%s3248 + $0x10] sm:$0xf]
      %v3254 = vld [vmem:[%s3248 + $0x14] sm:$0xf]
      %v3255 = vld [vmem:[%s3248 + $0x18] sm:$0xf]
      %v3256 = vld [vmem:[%s3248 + $0x1c] sm:$0xf]
      %v3265 = vunpack.c.l.b16 %v3249
      %v3266 = vunpack.c.l.b16 %v3250
      %v3267 = vunpack.c.l.b16 %v3251
      %v3268 = vunpack.c.l.b16 %v3252
      %v3269 = vunpack.c.l.b16 %v3253
      %v3270 = vunpack.c.l.b16 %v3254
      %v3271 = vunpack.c.l.b16 %v3255
      %v3272 = vunpack.c.l.b16 %v3256
      %v3273 = vpack.c.b16 %v3266, %v3265
      %v3274 = vpack.c.b16 %v3268, %v3267
      %v3275 = vpack.c.b16 %v3270, %v3269
      %v3276 = vpack.c.b16 %v3272, %v3271
      %3277 = vrot.lane.b32.xlu0 %v1955, 99
      %v3278 = vpop.permute.xlu0 %3277
      %3279 = vrot.lane.b32.xlu0 %v1956, 99
      %v3280 = vpop.permute.xlu0 %3279
      %3281 = vrot.lane.b32.xlu0 %v1957, 99
      %v3282 = vpop.permute.xlu0 %3281
      %3283 = vrot.lane.b32.xlu0 %v1958, 99
      %v3284 = vpop.permute.xlu0 %3283
      %3285 = vrot.lane.b32.xlu0 %v1959, 99
      %v3286 = vpop.permute.xlu0 %3285
      %3287 = vrot.lane.b32.xlu0 %v1960, 99
      %v3288 = vpop.permute.xlu0 %3287
      %3289 = vrot.lane.b32.xlu0 %v1961, 99
      %v3290 = vpop.permute.xlu0 %3289
      %3291 = vrot.lane.b32.xlu0 %v1962, 99
      %v3292 = vpop.permute.xlu0 %3291
      %3293 = vrot.lane.b32.xlu0 %v1963, 99
      %v3294 = vpop.permute.xlu0 %3293
      %3295 = vrot.lane.b32.xlu0 %v1964, 99
      %v3296 = vpop.permute.xlu0 %3295
      %3297 = vrot.lane.b32.xlu0 %v1965, 99
      %v3298 = vpop.permute.xlu0 %3297
      %3299 = vrot.lane.b32.xlu0 %v1966, 99
      %v3300 = vpop.permute.xlu0 %3299
      %vm3301 = vcmask 809984
      %v3302 = vsel %vm3301, %v3278, %v3280
      %v3303 = vsel %vm3301, %v3280, %v3282
      %v3304 = vsel %vm3301, %v3282, %v3284
      %v3305 = vsel %vm3301, %v3284, %v3286
      %v3306 = vsel %vm3301, %v3286, %v3288
      %v3307 = vsel %vm3301, %v3290, %v3292
      %v3308 = vsel %vm3301, %v3292, %v3294
      %v3309 = vsel %vm3301, %v3294, %v3296
      %v3310 = vsel %vm3301, %v3296, %v3298
      %v3311 = vsel %vm3301, %v3298, %v3300
      %v3325 = vsel %vm2055, %v3273, 0
      %v3328 = vsel %vm2055, %v3274, 0
      %v3331 = vsel %vm2055, %v3275, 0
      %v3334 = vsel %vm2055, %v3276, 0
      %3336 = vmatprep.subr.bf16.mxu0 %v3303
      %3337 = vmatpush1.bf16.msra.mxu0 %v3302
      %3338 = vmatprep.subr.bf16.mxu0 %v3308
      %3339 = vmatpush1.bf16.msra.mxu0 %v3307
      %3340 = vmatprep.subr.bf16.mxu0 0
      %3341 = vmatpush1.bf16.msra.mxu0 0
      %3342 = vmatprep.subr.bf16.mxu0 0
      %3343 = vmatpush1.bf16.msra.mxu0 0
      %3344 = vmatprep.subr.bf16.mxu0 0
      %3345 = vmatpush1.bf16.msra.mxu0 0
      %3346 = vmatprep.subr.bf16.mxu0 0
      %3347 = vmatpush1.bf16.msra.mxu0 0
      %3348 = vmatprep.subr.bf16.mxu0 0
      %3349 = vmatpush1.bf16.msra.mxu0 0
      %3350 = vmatprep.subr.bf16.mxu0 0
      %3351 = vmatpush1.bf16.msra.mxu0 0
      %3352 = vmatprep.subr.bf16.mxu0 0
      %3353 = vmatpush1.bf16.msra.mxu0 0
      %3354 = vmatprep.subr.bf16.mxu0 0
      %3355 = vmatpush1.bf16.msra.mxu0 0
      %3356 = vmatprep.subr.bf16.mxu0 0
      %3357 = vmatpush1.bf16.msra.mxu0 0
      %3358 = vmatprep.subr.bf16.mxu0 0
      %3359 = vmatpush1.bf16.msra.mxu0 0
      %3360 = vmatprep.subr.bf16.mxu0 0
      %3361 = vmatpush1.bf16.msra.mxu0 0
      %3362 = vmatprep.subr.bf16.mxu0 0
      %3363 = vmatpush1.bf16.msra.mxu0 0
      %3364 = vmatprep.subr.bf16.mxu0 0
      %3365 = vmatpush1.bf16.msra.mxu0 0
      %3366 = vmatprep.subr.bf16.mxu0 0
      %3367 = vmatpush1.bf16.msra.mxu0 0
      %3368 = vmatprep.mubr.bf16.mxu0 0
      %3369 = vmatmul.mubr.bf16.gmra.mrb[0].mxu0 %v3325
      %v3370 = vpop.f32.mrb[0].mxu0
      %v3371 = vadd.f32 0.0, %v3370
      %v3372 = vpop.f32.mrb[0].mxu0
      %v3373 = vadd.f32 0.0, %v3372
      %v3374 = vpop.f32.mrb[0].mxu0
      %v3375 = vadd.f32 0.0, %v3374
      %v3376 = vpop.f32.mrb[0].mxu0
      %v3377 = vadd.f32 0.0, %v3376
      %3378 = vmatprep.mubr.bf16.mxu0 0
      %3379 = vmatmul.mubr.bf16.gmra.mrb[0].mxu0 %v3328
      %v3380 = vpop.f32.mrb[0].mxu0
      %v3381 = vadd.f32 0.0, %v3380
      %v3382 = vpop.f32.mrb[0].mxu0
      %v3383 = vadd.f32 0.0, %v3382
      %v3384 = vpop.f32.mrb[0].mxu0
      %v3385 = vadd.f32 0.0, %v3384
      %v3386 = vpop.f32.mrb[0].mxu0
      %v3387 = vadd.f32 0.0, %v3386
      %3388 = vmatprep.mubr.bf16.mxu0 0
      %3389 = vmatmul.mubr.bf16.gmra.mrb[0].mxu0 %v3331
      %v3390 = vpop.f32.mrb[0].mxu0
      %v3391 = vadd.f32 0.0, %v3390
      %v3392 = vpop.f32.mrb[0].mxu0
      %v3393 = vadd.f32 0.0, %v3392
      %v3394 = vpop.f32.mrb[0].mxu0
      %v3395 = vadd.f32 0.0, %v3394
      %v3396 = vpop.f32.mrb[0].mxu0
      %v3397 = vadd.f32 0.0, %v3396
      %3398 = vmatprep.mubr.bf16.mxu0 0
      %3399 = vmatmul.mubr.bf16.gmra.mrb[0].mxu0 %v3334
      %v3400 = vpop.f32.mrb[0].mxu0
      %v3401 = vadd.f32 0.0, %v3400
      %v3402 = vpop.f32.mrb[0].mxu0
      %v3403 = vadd.f32 0.0, %v3402
      %v3404 = vpop.f32.mrb[0].mxu0
      %v3405 = vadd.f32 0.0, %v3404
      %v3406 = vpop.f32.mrb[0].mxu0
      %v3407 = vadd.f32 0.0, %v3406
      %3408 = vdwg.mxu0
      %3409 = vmatprep.subr.bf16.mxu0 %v3305
      %3410 = vmatpush1.bf16.msra.mxu0 %v3304
      %3411 = vmatprep.subr.bf16.mxu0 %v3310
      %3412 = vmatpush1.bf16.msra.mxu0 %v3309
      %3413 = vmatprep.subr.bf16.mxu0 0
      %3414 = vmatpush1.bf16.msra.mxu0 0
      %3415 = vmatprep.subr.bf16.mxu0 0
      %3416 = vmatpush1.bf16.msra.mxu0 0
      %3417 = vmatprep.subr.bf16.mxu0 0
      %3418 = vmatpush1.bf16.msra.mxu0 0
      %3419 = vmatprep.subr.bf16.mxu0 0
      %3420 = vmatpush1.bf16.msra.mxu0 0
      %3421 = vmatprep.subr.bf16.mxu0 0
      %3422 = vmatpush1.bf16.msra.mxu0 0
      %3423 = vmatprep.subr.bf16.mxu0 0
      %3424 = vmatpush1.bf16.msra.mxu0 0
      %3425 = vmatprep.subr.bf16.mxu0 0
      %3426 = vmatpush1.bf16.msra.mxu0 0
      %3427 = vmatprep.subr.bf16.mxu0 0
      %3428 = vmatpush1.bf16.msra.mxu0 0
      %3429 = vmatprep.subr.bf16.mxu0 0
      %3430 = vmatpush1.bf16.msra.mxu0 0
      %3431 = vmatprep.subr.bf16.mxu0 0
      %3432 = vmatpush1.bf16.msra.mxu0 0
      %3433 = vmatprep.subr.bf16.mxu0 0
      %3434 = vmatpush1.bf16.msra.mxu0 0
      %3435 = vmatprep.subr.bf16.mxu0 0
      %3436 = vmatpush1.bf16.msra.mxu0 0
      %3437 = vmatprep.subr.bf16.mxu0 0
      %3438 = vmatpush1.bf16.msra.mxu0 0
      %3439 = vmatprep.subr.bf16.mxu0 0
      %3440 = vmatpush1.bf16.msra.mxu0 0
      %3441 = vmatprep.mubr.bf16.mxu0 0
      %3442 = vmatmul.mubr.bf16.gmra.mrb[0].mxu0 %v3325
      %v3443 = vpop.f32.mrb[0].mxu0
      %v3444 = vadd.f32 0.0, %v3443
      %v3445 = vpop.f32.mrb[0].mxu0
      %v3446 = vadd.f32 0.0, %v3445
      %v3447 = vpop.f32.mrb[0].mxu0
      %v3448 = vadd.f32 0.0, %v3447
      %v3449 = vpop.f32.mrb[0].mxu0
      %v3450 = vadd.f32 0.0, %v3449
      %3451 = vmatprep.mubr.bf16.mxu0 0
      %3452 = vmatmul.mubr.bf16.gmra.mrb[0].mxu0 %v3328
      %v3453 = vpop.f32.mrb[0].mxu0
      %v3454 = vadd.f32 0.0, %v3453
      %v3455 = vpop.f32.mrb[0].mxu0
      %v3456 = vadd.f32 0.0, %v3455
      %v3457 = vpop.f32.mrb[0].mxu0
      %v3458 = vadd.f32 0.0, %v3457
      %v3459 = vpop.f32.mrb[0].mxu0
      %v3460 = vadd.f32 0.0, %v3459
      %3461 = vmatprep.mubr.bf16.mxu0 0
      %3462 = vmatmul.mubr.bf16.gmra.mrb[0].mxu0 %v3331
      %v3463 = vpop.f32.mrb[0].mxu0
      %v3464 = vadd.f32 0.0, %v3463
      %v3465 = vpop.f32.mrb[0].mxu0
      %v3466 = vadd.f32 0.0, %v3465
      %v3467 = vpop.f32.mrb[0].mxu0
      %v3468 = vadd.f32 0.0, %v3467
      %v3469 = vpop.f32.mrb[0].mxu0
      %v3470 = vadd.f32 0.0, %v3469
      %3471 = vmatprep.mubr.bf16.mxu0 0
      %3472 = vmatmul.mubr.bf16.gmra.mrb[0].mxu0 %v3334
      %v3473 = vpop.f32.mrb[0].mxu0
      %v3474 = vadd.f32 0.0, %v3473
      %v3475 = vpop.f32.mrb[0].mxu0
      %v3476 = vadd.f32 0.0, %v3475
      %v3477 = vpop.f32.mrb[0].mxu0
      %v3478 = vadd.f32 0.0, %v3477
      %v3479 = vpop.f32.mrb[0].mxu0
      %v3480 = vadd.f32 0.0, %v3479
      %3481 = vdwg.mxu0
      %3482 = vmatprep.subr.bf16.mxu0 %v3288
      %3483 = vmatpush1.bf16.msra.mxu0 %v3306
      %3484 = vmatprep.subr.bf16.mxu0 %v3300
      %3485 = vmatpush1.bf16.msra.mxu0 %v3311
      %3486 = vmatprep.subr.bf16.mxu0 0
      %3487 = vmatpush1.bf16.msra.mxu0 0
      %3488 = vmatprep.subr.bf16.mxu0 0
      %3489 = vmatpush1.bf16.msra.mxu0 0
      %3490 = vmatprep.subr.bf16.mxu0 0
      %3491 = vmatpush1.bf16.msra.mxu0 0
      %3492 = vmatprep.subr.bf16.mxu0 0
      %3493 = vmatpush1.bf16.msra.mxu0 0
      %3494 = vmatprep.subr.bf16.mxu0 0
      %3495 = vmatpush1.bf16.msra.mxu0 0
      %3496 = vmatprep.subr.bf16.mxu0 0
      %3497 = vmatpush1.bf16.msra.mxu0 0
      %3498 = vmatprep.subr.bf16.mxu0 0
      %3499 = vmatpush1.bf16.msra.mxu0 0
      %3500 = vmatprep.subr.bf16.mxu0 0
      %3501 = vmatpush1.bf16.msra.mxu0 0
      %3502 = vmatprep.subr.bf16.mxu0 0
      %3503 = vmatpush1.bf16.msra.mxu0 0
      %3504 = vmatprep.subr.bf16.mxu0 0
      %3505 = vmatpush1.bf16.msra.mxu0 0
      %3506 = vmatprep.subr.bf16.mxu0 0
      %3507 = vmatpush1.bf16.msra.mxu0 0
      %3508 = vmatprep.subr.bf16.mxu0 0
      %3509 = vmatpush1.bf16.msra.mxu0 0
      %3510 = vmatprep.subr.bf16.mxu0 0
      %3511 = vmatpush1.bf16.msra.mxu0 0
      %3512 = vmatprep.subr.bf16.mxu0 0
      %3513 = vmatpush1.bf16.msra.mxu0 0
      %3514 = vmatprep.mubr.bf16.mxu0 0
      %3515 = vmatmul.mubr.bf16.gmra.mrb[0].mxu0 %v3325
      %v3516 = vpop.f32.mrb[0].mxu0
      %v3517 = vadd.f32 0.0, %v3516
      %v3518 = vpop.f32.mrb[0].mxu0
      %v3519 = vadd.f32 0.0, %v3518
      %v3520 = vpop.f32.mrb[0].mxu0
      %v3521 = vadd.f32 0.0, %v3520
      %v3522 = vpop.f32.mrb[0].mxu0
      %v3523 = vadd.f32 0.0, %v3522
      %3524 = vmatprep.mubr.bf16.mxu0 0
      %3525 = vmatmul.mubr.bf16.gmra.mrb[0].mxu0 %v3328
      %v3526 = vpop.f32.mrb[0].mxu0
      %v3527 = vadd.f32 0.0, %v3526
      %v3528 = vpop.f32.mrb[0].mxu0
      %v3529 = vadd.f32 0.0, %v3528
      %v3530 = vpop.f32.mrb[0].mxu0
      %v3531 = vadd.f32 0.0, %v3530
      %v3532 = vpop.f32.mrb[0].mxu0
      %v3533 = vadd.f32 0.0, %v3532
      %3534 = vmatprep.mubr.bf16.mxu0 0
      %3535 = vmatmul.mubr.bf16.gmra.mrb[0].mxu0 %v3331
      %v3536 = vpop.f32.mrb[0].mxu0
      %v3537 = vadd.f32 0.0, %v3536
      %v3538 = vpop.f32.mrb[0].mxu0
      %v3539 = vadd.f32 0.0, %v3538
      %v3540 = vpop.f32.mrb[0].mxu0
      %v3541 = vadd.f32 0.0, %v3540
      %v3542 = vpop.f32.mrb[0].mxu0
      %v3543 = vadd.f32 0.0, %v3542
      %3544 = vmatprep.mubr.bf16.mxu0 0
      %3545 = vmatmul.mubr.bf16.gmra.mrb[0].mxu0 %v3334
      %v3546 = vpop.f32.mrb[0].mxu0
      %v3547 = vadd.f32 0.0, %v3546
      %v3548 = vpop.f32.mrb[0].mxu0
      %v3549 = vadd.f32 0.0, %v3548
      %v3550 = vpop.f32.mrb[0].mxu0
      %v3551 = vadd.f32 0.0, %v3550
      %v3552 = vpop.f32.mrb[0].mxu0
      %v3553 = vadd.f32 0.0, %v3552
      %3554 = vdwg.mxu0
      %v3555 = vadd.f32 %v3200, %v3371
      %v3556 = vadd.f32 %v3201, %v3373
      %v3557 = vadd.f32 %v3202, %v3444
      %v3558 = vadd.f32 %v3203, %v3446
      %v3559 = vadd.f32 %v3204, %v3517
      %v3560 = vadd.f32 %v3205, %v3519
      %v3561 = vadd.f32 %v3206, %v3375
      %v3562 = vadd.f32 %v3207, %v3377
      %v3563 = vadd.f32 %v3208, %v3448
      %v3564 = vadd.f32 %v3209, %v3450
      %v3565 = vadd.f32 %v3210, %v3521
      %v3566 = vadd.f32 %v3211, %v3523
      %v3567 = vadd.f32 %v3212, %v3381
      %v3568 = vadd.f32 %v3213, %v3383
      %v3569 = vadd.f32 %v3214, %v3454
      %v3570 = vadd.f32 %v3215, %v3456
      %v3571 = vadd.f32 %v3216, %v3527
      %v3572 = vadd.f32 %v3217, %v3529
      %v3573 = vadd.f32 %v3218, %v3385
      %v3574 = vadd.f32 %v3219, %v3387
      %v3575 = vadd.f32 %v3220, %v3458
      %v3576 = vadd.f32 %v3221, %v3460
      %v3577 = vadd.f32 %v3222, %v3531
      %v3578 = vadd.f32 %v3223, %v3533
      %v3579 = vadd.f32 %v3224, %v3391
      %v3580 = vadd.f32 %v3225, %v3393
      %v3581 = vadd.f32 %v3226, %v3464
      %v3582 = vadd.f32 %v3227, %v3466
      %v3583 = vadd.f32 %v3228, %v3537
      %v3584 = vadd.f32 %v3229, %v3539
      %v3585 = vadd.f32 %v3230, %v3395
      %v3586 = vadd.f32 %v3231, %v3397
      %v3587 = vadd.f32 %v3232, %v3468
      %v3588 = vadd.f32 %v3233, %v3470
      %v3589 = vadd.f32 %v3234, %v3541
      %v3590 = vadd.f32 %v3235, %v3543
      %v3591 = vadd.f32 %v3236, %v3401
      %v3592 = vadd.f32 %v3237, %v3403
      %v3593 = vadd.f32 %v3238, %v3474
      %v3594 = vadd.f32 %v3239, %v3476
      %v3595 = vadd.f32 %v3240, %v3547
      %v3596 = vadd.f32 %v3241, %v3549
      %v3597 = vadd.f32 %v3242, %v3405
      %v3598 = vadd.f32 %v3243, %v3407
      %v3599 = vadd.f32 %v3244, %v3478
      %v3600 = vadd.f32 %v3245, %v3480
      %v3601 = vadd.f32 %v3246, %v3551
      %v3602 = vadd.f32 %v3247, %v3553
      %s3603 = scalar_lea.vmem %s3, 160
      %v3604 = vld [vmem:[%s3603] sm:$0xf]
      %v3605 = vld [vmem:[%s3603 + $0x4] sm:$0xf]
      %v3606 = vld [vmem:[%s3603 + $0x8] sm:$0xf]
      %v3607 = vld [vmem:[%s3603 + $0xc] sm:$0xf]
      %v3608 = vld [vmem:[%s3603 + $0x10] sm:$0xf]
      %v3609 = vld [vmem:[%s3603 + $0x14] sm:$0xf]
      %v3610 = vld [vmem:[%s3603 + $0x18] sm:$0xf]
      %v3611 = vld [vmem:[%s3603 + $0x1c] sm:$0xf]
      %v3620 = vunpack.c.l.b16 %v3604
      %v3621 = vunpack.c.l.b16 %v3605
      %v3622 = vunpack.c.l.b16 %v3606
      %v3623 = vunpack.c.l.b16 %v3607
      %v3624 = vunpack.c.l.b16 %v3608
      %v3625 = vunpack.c.l.b16 %v3609
      %v3626 = vunpack.c.l.b16 %v3610
      %v3627 = vunpack.c.l.b16 %v3611
      %v3628 = vpack.c.b16 %v3621, %v3620
      %v3629 = vpack.c.b16 %v3623, %v3622
      %v3630 = vpack.c.b16 %v3625, %v3624
      %v3631 = vpack.c.b16 %v3627, %v3626
      %3632 = vrot.lane.b32.xlu0 %v1955, 98
      %v3633 = vpop.permute.xlu0 %3632
      %3634 = vrot.lane.b32.xlu0 %v1956, 98
      %v3635 = vpop.permute.xlu0 %3634
      %3636 = vrot.lane.b32.xlu0 %v1957, 98
      %v3637 = vpop.permute.xlu0 %3636
      %3638 = vrot.lane.b32.xlu0 %v1958, 98
      %v3639 = vpop.permute.xlu0 %3638
      %3640 = vrot.lane.b32.xlu0 %v1959, 98
      %v3641 = vpop.permute.xlu0 %3640
      %3642 = vrot.lane.b32.xlu0 %v1960, 98
      %v3643 = vpop.permute.xlu0 %3642
      %3644 = vrot.lane.b32.xlu0 %v1961, 98
      %v3645 = vpop.permute.xlu0 %3644
      %3646 = vrot.lane.b32.xlu0 %v1962, 98
      %v3647 = vpop.permute.xlu0 %3646
      %3648 = vrot.lane.b32.xlu0 %v1963, 98
      %v3649 = vpop.permute.xlu0 %3648
      %3650 = vrot.lane.b32.xlu0 %v1964, 98
      %v3651 = vpop.permute.xlu0 %3650
      %3652 = vrot.lane.b32.xlu0 %v1965, 98
      %v3653 = vpop.permute.xlu0 %3652
      %3654 = vrot.lane.b32.xlu0 %v1966, 98
      %v3655 = vpop.permute.xlu0 %3654
      %vm3656 = vcmask 801792
      %v3657 = vsel %vm3656, %v3633, %v3635
      %v3658 = vsel %vm3656, %v3635, %v3637
      %v3659 = vsel %vm3656, %v3637, %v3639
      %v3660 = vsel %vm3656, %v3639, %v3641
      %v3661 = vsel %vm3656, %v3641, %v3643
      %v3662 = vsel %vm3656, %v3645, %v3647
      %v3663 = vsel %vm3656, %v3647, %v3649
      %v3664 = vsel %vm3656, %v3649, %v3651
      %v3665 = vsel %vm3656, %v3651, %v3653
      %v3666 = vsel %vm3656, %v3653, %v3655
      %v3680 = vsel %vm2055, %v3628, 0
      %v3683 = vsel %vm2055, %v3629, 0
      %v3686 = vsel %vm2055, %v3630, 0
      %v3689 = vsel %vm2055, %v3631, 0
      %3691 = vmatprep.subr.bf16.mxu0 %v3658
      %3692 = vmatpush1.bf16.msra.mxu0 %v3657
      %3693 = vmatprep.subr.bf16.mxu0 %v3663
      %3694 = vmatpush1.bf16.msra.mxu0 %v3662
      %3695 = vmatprep.subr.bf16.mxu0 0
      %3696 = vmatpush1.bf16.msra.mxu0 0
      %3697 = vmatprep.subr.bf16.mxu0 0
      %3698 = vmatpush1.bf16.msra.mxu0 0
      %3699 = vmatprep.subr.bf16.mxu0 0
      %3700 = vmatpush1.bf16.msra.mxu0 0
      %3701 = vmatprep.subr.bf16.mxu0 0
      %3702 = vmatpush1.bf16.msra.mxu0 0
      %3703 = vmatprep.subr.bf16.mxu0 0
      %3704 = vmatpush1.bf16.msra.mxu0 0
      %3705 = vmatprep.subr.bf16.mxu0 0
      %3706 = vmatpush1.bf16.msra.mxu0 0
      %3707 = vmatprep.subr.bf16.mxu0 0
      %3708 = vmatpush1.bf16.msra.mxu0 0
      %3709 = vmatprep.subr.bf16.mxu0 0
      %3710 = vmatpush1.bf16.msra.mxu0 0
      %3711 = vmatprep.subr.bf16.mxu0 0
      %3712 = vmatpush1.bf16.msra.mxu0 0
      %3713 = vmatprep.subr.bf16.mxu0 0
      %3714 = vmatpush1.bf16.msra.mxu0 0
      %3715 = vmatprep.subr.bf16.mxu0 0
      %3716 = vmatpush1.bf16.msra.mxu0 0
      %3717 = vmatprep.subr.bf16.mxu0 0
      %3718 = vmatpush1.bf16.msra.mxu0 0
      %3719 = vmatprep.subr.bf16.mxu0 0
      %3720 = vmatpush1.bf16.msra.mxu0 0
      %3721 = vmatprep.subr.bf16.mxu0 0
      %3722 = vmatpush1.bf16.msra.mxu0 0
      %3723 = vmatprep.mubr.bf16.mxu0 0
      %3724 = vmatmul.mubr.bf16.gmra.mrb[0].mxu0 %v3680
      %v3725 = vpop.f32.mrb[0].mxu0
      %v3726 = vadd.f32 0.0, %v3725
      %v3727 = vpop.f32.mrb[0].mxu0
      %v3728 = vadd.f32 0.0, %v3727
      %v3729 = vpop.f32.mrb[0].mxu0
      %v3730 = vadd.f32 0.0, %v3729
      %v3731 = vpop.f32.mrb[0].mxu0
      %v3732 = vadd.f32 0.0, %v3731
      %3733 = vmatprep.mubr.bf16.mxu0 0
      %3734 = vmatmul.mubr.bf16.gmra.mrb[0].mxu0 %v3683
      %v3735 = vpop.f32.mrb[0].mxu0
      %v3736 = vadd.f32 0.0, %v3735
      %v3737 = vpop.f32.mrb[0].mxu0
      %v3738 = vadd.f32 0.0, %v3737
      %v3739 = vpop.f32.mrb[0].mxu0
      %v3740 = vadd.f32 0.0, %v3739
      %v3741 = vpop.f32.mrb[0].mxu0
      %v3742 = vadd.f32 0.0, %v3741
      %3743 = vmatprep.mubr.bf16.mxu0 0
      %3744 = vmatmul.mubr.bf16.gmra.mrb[0].mxu0 %v3686
      %v3745 = vpop.f32.mrb[0].mxu0
      %v3746 = vadd.f32 0.0, %v3745
      %v3747 = vpop.f32.mrb[0].mxu0
      %v3748 = vadd.f32 0.0, %v3747
      %v3749 = vpop.f32.mrb[0].mxu0
      %v3750 = vadd.f32 0.0, %v3749
      %v3751 = vpop.f32.mrb[0].mxu0
      %v3752 = vadd.f32 0.0, %v3751
      %3753 = vmatprep.mubr.bf16.mxu0 0
      %3754 = vmatmul.mubr.bf16.gmra.mrb[0].mxu0 %v3689
      %v3755 = vpop.f32.mrb[0].mxu0
      %v3756 = vadd.f32 0.0, %v3755
      %v3757 = vpop.f32.mrb[0].mxu0
      %v3758 = vadd.f32 0.0, %v3757
      %v3759 = vpop.f32.mrb[0].mxu0
      %v3760 = vadd.f32 0.0, %v3759
      %v3761 = vpop.f32.mrb[0].mxu0
      %v3762 = vadd.f32 0.0, %v3761
      %3763 = vdwg.mxu0
      %3764 = vmatprep.subr.bf16.mxu0 %v3660
      %3765 = vmatpush1.bf16.msra.mxu0 %v3659
      %3766 = vmatprep.subr.bf16.mxu0 %v3665
      %3767 = vmatpush1.bf16.msra.mxu0 %v3664
      %3768 = vmatprep.subr.bf16.mxu0 0
      %3769 = vmatpush1.bf16.msra.mxu0 0
      %3770 = vmatprep.subr.bf16.mxu0 0
      %3771 = vmatpush1.bf16.msra.mxu0 0
      %3772 = vmatprep.subr.bf16.mxu0 0
      %3773 = vmatpush1.bf16.msra.mxu0 0
      %3774 = vmatprep.subr.bf16.mxu0 0
      %3775 = vmatpush1.bf16.msra.mxu0 0
      %3776 = vmatprep.subr.bf16.mxu0 0
      %3777 = vmatpush1.bf16.msra.mxu0 0
      %3778 = vmatprep.subr.bf16.mxu0 0
      %3779 = vmatpush1.bf16.msra.mxu0 0
      %3780 = vmatprep.subr.bf16.mxu0 0
      %3781 = vmatpush1.bf16.msra.mxu0 0
      %3782 = vmatprep.subr.bf16.mxu0 0
      %3783 = vmatpush1.bf16.msra.mxu0 0
      %3784 = vmatprep.subr.bf16.mxu0 0
      %3785 = vmatpush1.bf16.msra.mxu0 0
      %3786 = vmatprep.subr.bf16.mxu0 0
      %3787 = vmatpush1.bf16.msra.mxu0 0
      %3788 = vmatprep.subr.bf16.mxu0 0
      %3789 = vmatpush1.bf16.msra.mxu0 0
      %3790 = vmatprep.subr.bf16.mxu0 0
      %3791 = vmatpush1.bf16.msra.mxu0 0
      %3792 = vmatprep.subr.bf16.mxu0 0
      %3793 = vmatpush1.bf16.msra.mxu0 0
      %3794 = vmatprep.subr.bf16.mxu0 0
      %3795 = vmatpush1.bf16.msra.mxu0 0
      %3796 = vmatprep.mubr.bf16.mxu0 0
      %3797 = vmatmul.mubr.bf16.gmra.mrb[0].mxu0 %v3680
      %v3798 = vpop.f32.mrb[0].mxu0
      %v3799 = vadd.f32 0.0, %v3798
      %v3800 = vpop.f32.mrb[0].mxu0
      %v3801 = vadd.f32 0.0, %v3800
      %v3802 = vpop.f32.mrb[0].mxu0
      %v3803 = vadd.f32 0.0, %v3802
      %v3804 = vpop.f32.mrb[0].mxu0
      %v3805 = vadd.f32 0.0, %v3804
      %3806 = vmatprep.mubr.bf16.mxu0 0
      %3807 = vmatmul.mubr.bf16.gmra.mrb[0].mxu0 %v3683
      %v3808 = vpop.f32.mrb[0].mxu0
      %v3809 = vadd.f32 0.0, %v3808
      %v3810 = vpop.f32.mrb[0].mxu0
      %v3811 = vadd.f32 0.0, %v3810
      %v3812 = vpop.f32.mrb[0].mxu0
      %v3813 = vadd.f32 0.0, %v3812
      %v3814 = vpop.f32.mrb[0].mxu0
      %v3815 = vadd.f32 0.0, %v3814
      %3816 = vmatprep.mubr.bf16.mxu0 0
      %3817 = vmatmul.mubr.bf16.gmra.mrb[0].mxu0 %v3686
      %v3818 = vpop.f32.mrb[0].mxu0
      %v3819 = vadd.f32 0.0, %v3818
      %v3820 = vpop.f32.mrb[0].mxu0
      %v3821 = vadd.f32 0.0, %v3820
      %v3822 = vpop.f32.mrb[0].mxu0
      %v3823 = vadd.f32 0.0, %v3822
      %v3824 = vpop.f32.mrb[0].mxu0
      %v3825 = vadd.f32 0.0, %v3824
      %3826 = vmatprep.mubr.bf16.mxu0 0
      %3827 = vmatmul.mubr.bf16.gmra.mrb[0].mxu0 %v3689
      %v3828 = vpop.f32.mrb[0].mxu0
      %v3829 = vadd.f32 0.0, %v3828
      %v3830 = vpop.f32.mrb[0].mxu0
      %v3831 = vadd.f32 0.0, %v3830
      %v3832 = vpop.f32.mrb[0].mxu0
      %v3833 = vadd.f32 0.0, %v3832
      %v3834 = vpop.f32.mrb[0].mxu0
      %v3835 = vadd.f32 0.0, %v3834
      %3836 = vdwg.mxu0
      %3837 = vmatprep.subr.bf16.mxu0 %v3643
      %3838 = vmatpush1.bf16.msra.mxu0 %v3661
      %3839 = vmatprep.subr.bf16.mxu0 %v3655
      %3840 = vmatpush1.bf16.msra.mxu0 %v3666
      %3841 = vmatprep.subr.bf16.mxu0 0
      %3842 = vmatpush1.bf16.msra.mxu0 0
      %3843 = vmatprep.subr.bf16.mxu0 0
      %3844 = vmatpush1.bf16.msra.mxu0 0
      %3845 = vmatprep.subr.bf16.mxu0 0
      %3846 = vmatpush1.bf16.msra.mxu0 0
      %3847 = vmatprep.subr.bf16.mxu0 0
      %3848 = vmatpush1.bf16.msra.mxu0 0
      %3849 = vmatprep.subr.bf16.mxu0 0
      %3850 = vmatpush1.bf16.msra.mxu0 0
      %3851 = vmatprep.subr.bf16.mxu0 0
      %3852 = vmatpush1.bf16.msra.mxu0 0
      %3853 = vmatprep.subr.bf16.mxu0 0
      %3854 = vmatpush1.bf16.msra.mxu0 0
      %3855 = vmatprep.subr.bf16.mxu0 0
      %3856 = vmatpush1.bf16.msra.mxu0 0
      %3857 = vmatprep.subr.bf16.mxu0 0
      %3858 = vmatpush1.bf16.msra.mxu0 0
      %3859 = vmatprep.subr.bf16.mxu0 0
      %3860 = vmatpush1.bf16.msra.mxu0 0
      %3861 = vmatprep.subr.bf16.mxu0 0
      %3862 = vmatpush1.bf16.msra.mxu0 0
      %3863 = vmatprep.subr.bf16.mxu0 0
      %3864 = vmatpush1.bf16.msra.mxu0 0
      %3865 = vmatprep.subr.bf16.mxu0 0
      %3866 = vmatpush1.bf16.msra.mxu0 0
      %3867 = vmatprep.subr.bf16.mxu0 0
      %3868 = vmatpush1.bf16.msra.mxu0 0
      %3869 = vmatprep.mubr.bf16.mxu0 0
      %3870 = vmatmul.mubr.bf16.gmra.mrb[0].mxu0 %v3680
      %v3871 = vpop.f32.mrb[0].mxu0
      %v3872 = vadd.f32 0.0, %v3871
      %v3873 = vpop.f32.mrb[0].mxu0
      %v3874 = vadd.f32 0.0, %v3873
      %v3875 = vpop.f32.mrb[0].mxu0
      %v3876 = vadd.f32 0.0, %v3875
      %v3877 = vpop.f32.mrb[0].mxu0
      %v3878 = vadd.f32 0.0, %v3877
      %3879 = vmatprep.mubr.bf16.mxu0 0
      %3880 = vmatmul.mubr.bf16.gmra.mrb[0].mxu0 %v3683
      %v3881 = vpop.f32.mrb[0].mxu0
      %v3882 = vadd.f32 0.0, %v3881
      %v3883 = vpop.f32.mrb[0].mxu0
      %v3884 = vadd.f32 0.0, %v3883
      %v3885 = vpop.f32.mrb[0].mxu0
      %v3886 = vadd.f32 0.0, %v3885
      %v3887 = vpop.f32.mrb[0].mxu0
      %v3888 = vadd.f32 0.0, %v3887
      %3889 = vmatprep.mubr.bf16.mxu0 0
      %3890 = vmatmul.mubr.bf16.gmra.mrb[0].mxu0 %v3686
      %v3891 = vpop.f32.mrb[0].mxu0
      %v3892 = vadd.f32 0.0, %v3891
      %v3893 = vpop.f32.mrb[0].mxu0
      %v3894 = vadd.f32 0.0, %v3893
      %v3895 = vpop.f32.mrb[0].mxu0
      %v3896 = vadd.f32 0.0, %v3895
      %v3897 = vpop.f32.mrb[0].mxu0
      %v3898 = vadd.f32 0.0, %v3897
      %3899 = vmatprep.mubr.bf16.mxu0 0
      %3900 = vmatmul.mubr.bf16.gmra.mrb[0].mxu0 %v3689
      %v3901 = vpop.f32.mrb[0].mxu0
      %v3902 = vadd.f32 0.0, %v3901
      %v3903 = vpop.f32.mrb[0].mxu0
      %v3904 = vadd.f32 0.0, %v3903
      %v3905 = vpop.f32.mrb[0].mxu0
      %v3906 = vadd.f32 0.0, %v3905
      %v3907 = vpop.f32.mrb[0].mxu0
      %v3908 = vadd.f32 0.0, %v3907
      %3909 = vdwg.mxu0
      %v3910 = vadd.f32 %v3555, %v3726
      %v3911 = vadd.f32 %v3556, %v3728
      %v3912 = vadd.f32 %v3557, %v3799
      %v3913 = vadd.f32 %v3558, %v3801
      %v3914 = vadd.f32 %v3559, %v3872
      %v3915 = vadd.f32 %v3560, %v3874
      %v3916 = vadd.f32 %v3561, %v3730
      %v3917 = vadd.f32 %v3562, %v3732
      %v3918 = vadd.f32 %v3563, %v3803
      %v3919 = vadd.f32 %v3564, %v3805
      %v3920 = vadd.f32 %v3565, %v3876
      %v3921 = vadd.f32 %v3566, %v3878
      %v3922 = vadd.f32 %v3567, %v3736
      %v3923 = vadd.f32 %v3568, %v3738
      %v3924 = vadd.f32 %v3569, %v3809
      %v3925 = vadd.f32 %v3570, %v3811
      %v3926 = vadd.f32 %v3571, %v3882
      %v3927 = vadd.f32 %v3572, %v3884
      %v3928 = vadd.f32 %v3573, %v3740
      %v3929 = vadd.f32 %v3574, %v3742
      %v3930 = vadd.f32 %v3575, %v3813
      %v3931 = vadd.f32 %v3576, %v3815
      %v3932 = vadd.f32 %v3577, %v3886
      %v3933 = vadd.f32 %v3578, %v3888
      %v3934 = vadd.f32 %v3579, %v3746
      %v3935 = vadd.f32 %v3580, %v3748
      %v3936 = vadd.f32 %v3581, %v3819
      %v3937 = vadd.f32 %v3582, %v3821
      %v3938 = vadd.f32 %v3583, %v3892
      %v3939 = vadd.f32 %v3584, %v3894
      %v3940 = vadd.f32 %v3585, %v3750
      %v3941 = vadd.f32 %v3586, %v3752
      %v3942 = vadd.f32 %v3587, %v3823
      %v3943 = vadd.f32 %v3588, %v3825
      %v3944 = vadd.f32 %v3589, %v3896
      %v3945 = vadd.f32 %v3590, %v3898
      %v3946 = vadd.f32 %v3591, %v3756
      %v3947 = vadd.f32 %v3592, %v3758
      %v3948 = vadd.f32 %v3593, %v3829
      %v3949 = vadd.f32 %v3594, %v3831
      %v3950 = vadd.f32 %v3595, %v3902
      %v3951 = vadd.f32 %v3596, %v3904
      %v3952 = vadd.f32 %v3597, %v3760
      %v3953 = vadd.f32 %v3598, %v3762
      %v3954 = vadd.f32 %v3599, %v3833
      %v3955 = vadd.f32 %v3600, %v3835
      %v3956 = vadd.f32 %v3601, %v3906
      %v3957 = vadd.f32 %v3602, %v3908
      %s3958 = scalar_lea.vmem %s3, 192
      %v3959 = vld [vmem:[%s3958] sm:$0xf]
      %v3960 = vld [vmem:[%s3958 + $0x4] sm:$0xf]
      %v3961 = vld [vmem:[%s3958 + $0x8] sm:$0xf]
      %v3962 = vld [vmem:[%s3958 + $0xc] sm:$0xf]
      %v3963 = vld [vmem:[%s3958 + $0x10] sm:$0xf]
      %v3964 = vld [vmem:[%s3958 + $0x14] sm:$0xf]
      %v3965 = vld [vmem:[%s3958 + $0x18] sm:$0xf]
      %v3966 = vld [vmem:[%s3958 + $0x1c] sm:$0xf]
      %v3975 = vunpack.c.l.b16 %v3959
      %v3976 = vunpack.c.l.b16 %v3960
      %v3977 = vunpack.c.l.b16 %v3961
      %v3978 = vunpack.c.l.b16 %v3962
      %v3979 = vunpack.c.l.b16 %v3963
      %v3980 = vunpack.c.l.b16 %v3964
      %v3981 = vunpack.c.l.b16 %v3965
      %v3982 = vunpack.c.l.b16 %v3966
      %v3983 = vpack.c.b16 %v3976, %v3975
      %v3984 = vpack.c.b16 %v3978, %v3977
      %v3985 = vpack.c.b16 %v3980, %v3979
      %v3986 = vpack.c.b16 %v3982, %v3981
      %3987 = vrot.lane.b32.xlu0 %v1955, 72
      %v3988 = vpop.permute.xlu0 %3987
      %3989 = vrot.lane.b32.xlu0 %v1956, 72
      %v3990 = vpop.permute.xlu0 %3989
      %3991 = vrot.lane.b32.xlu0 %v1957, 72
      %v3992 = vpop.permute.xlu0 %3991
      %3993 = vrot.lane.b32.xlu0 %v1958, 72
      %v3994 = vpop.permute.xlu0 %3993
      %3995 = vrot.lane.b32.xlu0 %v1959, 72
      %v3996 = vpop.permute.xlu0 %3995
      %3997 = vrot.lane.b32.xlu0 %v1960, 72
      %v3998 = vpop.permute.xlu0 %3997
      %3999 = vrot.lane.b32.xlu0 %v1961, 72
      %v4000 = vpop.permute.xlu0 %3999
      %4001 = vrot.lane.b32.xlu0 %v1962, 72
      %v4002 = vpop.permute.xlu0 %4001
      %4003 = vrot.lane.b32.xlu0 %v1963, 72
      %v4004 = vpop.permute.xlu0 %4003
      %4005 = vrot.lane.b32.xlu0 %v1964, 72
      %v4006 = vpop.permute.xlu0 %4005
      %4007 = vrot.lane.b32.xlu0 %v1965, 72
      %v4008 = vpop.permute.xlu0 %4007
      %4009 = vrot.lane.b32.xlu0 %v1966, 72
      %v4010 = vpop.permute.xlu0 %4009
      %vm4011 = vcmask 588800
      %v4012 = vsel %vm4011, %v3988, %v3990
      %v4013 = vsel %vm4011, %v3990, %v3992
      %v4014 = vsel %vm4011, %v3992, %v3994
      %v4015 = vsel %vm4011, %v3994, %v3996
      %v4016 = vsel %vm4011, %v3996, %v3998
      %v4017 = vsel %vm4011, %v4000, %v4002
      %v4018 = vsel %vm4011, %v4002, %v4004
      %v4019 = vsel %vm4011, %v4004, %v4006
      %v4020 = vsel %vm4011, %v4006, %v4008
      %v4021 = vsel %vm4011, %v4008, %v4010
      %v4035 = vsel %vm2055, %v3983, 0
      %v4038 = vsel %vm2055, %v3984, 0
      %v4041 = vsel %vm2055, %v3985, 0
      %v4044 = vsel %vm2055, %v3986, 0
      %4046 = vmatprep.subr.bf16.mxu0 %v4013
      %4047 = vmatpush1.bf16.msra.mxu0 %v4012
      %4048 = vmatprep.subr.bf16.mxu0 %v4018
      %4049 = vmatpush1.bf16.msra.mxu0 %v4017
      %4050 = vmatprep.subr.bf16.mxu0 0
      %4051 = vmatpush1.bf16.msra.mxu0 0
      %4052 = vmatprep.subr.bf16.mxu0 0
      %4053 = vmatpush1.bf16.msra.mxu0 0
      %4054 = vmatprep.subr.bf16.mxu0 0
      %4055 = vmatpush1.bf16.msra.mxu0 0
      %4056 = vmatprep.subr.bf16.mxu0 0
      %4057 = vmatpush1.bf16.msra.mxu0 0
      %4058 = vmatprep.subr.bf16.mxu0 0
      %4059 = vmatpush1.bf16.msra.mxu0 0
      %4060 = vmatprep.subr.bf16.mxu0 0
      %4061 = vmatpush1.bf16.msra.mxu0 0
      %4062 = vmatprep.subr.bf16.mxu0 0
      %4063 = vmatpush1.bf16.msra.mxu0 0
      %4064 = vmatprep.subr.bf16.mxu0 0
      %4065 = vmatpush1.bf16.msra.mxu0 0
      %4066 = vmatprep.subr.bf16.mxu0 0
      %4067 = vmatpush1.bf16.msra.mxu0 0
      %4068 = vmatprep.subr.bf16.mxu0 0
      %4069 = vmatpush1.bf16.msra.mxu0 0
      %4070 = vmatprep.subr.bf16.mxu0 0
      %4071 = vmatpush1.bf16.msra.mxu0 0
      %4072 = vmatprep.subr.bf16.mxu0 0
      %4073 = vmatpush1.bf16.msra.mxu0 0
      %4074 = vmatprep.subr.bf16.mxu0 0
      %4075 = vmatpush1.bf16.msra.mxu0 0
      %4076 = vmatprep.subr.bf16.mxu0 0
      %4077 = vmatpush1.bf16.msra.mxu0 0
      %4078 = vmatprep.mubr.bf16.mxu0 0
      %4079 = vmatmul.mubr.bf16.gmra.mrb[0].mxu0 %v4035
      %v4080 = vpop.f32.mrb[0].mxu0
      %v4081 = vadd.f32 0.0, %v4080
      %v4082 = vpop.f32.mrb[0].mxu0
      %v4083 = vadd.f32 0.0, %v4082
      %v4084 = vpop.f32.mrb[0].mxu0
      %v4085 = vadd.f32 0.0, %v4084
      %v4086 = vpop.f32.mrb[0].mxu0
      %v4087 = vadd.f32 0.0, %v4086
      %4088 = vmatprep.mubr.bf16.mxu0 0
      %4089 = vmatmul.mubr.bf16.gmra.mrb[0].mxu0 %v4038
      %v4090 = vpop.f32.mrb[0].mxu0
      %v4091 = vadd.f32 0.0, %v4090
      %v4092 = vpop.f32.mrb[0].mxu0
      %v4093 = vadd.f32 0.0, %v4092
      %v4094 = vpop.f32.mrb[0].mxu0
      %v4095 = vadd.f32 0.0, %v4094
      %v4096 = vpop.f32.mrb[0].mxu0
      %v4097 = vadd.f32 0.0, %v4096
      %4098 = vmatprep.mubr.bf16.mxu0 0
      %4099 = vmatmul.mubr.bf16.gmra.mrb[0].mxu0 %v4041
      %v4100 = vpop.f32.mrb[0].mxu0
      %v4101 = vadd.f32 0.0, %v4100
      %v4102 = vpop.f32.mrb[0].mxu0
      %v4103 = vadd.f32 0.0, %v4102
      %v4104 = vpop.f32.mrb[0].mxu0
      %v4105 = vadd.f32 0.0, %v4104
      %v4106 = vpop.f32.mrb[0].mxu0
      %v4107 = vadd.f32 0.0, %v4106
      %4108 = vmatprep.mubr.bf16.mxu0 0
      %4109 = vmatmul.mubr.bf16.gmra.mrb[0].mxu0 %v4044
      %v4110 = vpop.f32.mrb[0].mxu0
      %v4111 = vadd.f32 0.0, %v4110
      %v4112 = vpop.f32.mrb[0].mxu0
      %v4113 = vadd.f32 0.0, %v4112
      %v4114 = vpop.f32.mrb[0].mxu0
      %v4115 = vadd.f32 0.0, %v4114
      %v4116 = vpop.f32.mrb[0].mxu0
      %v4117 = vadd.f32 0.0, %v4116
      %4118 = vdwg.mxu0
      %4119 = vmatprep.subr.bf16.mxu0 %v4015
      %4120 = vmatpush1.bf16.msra.mxu0 %v4014
      %4121 = vmatprep.subr.bf16.mxu0 %v4020
      %4122 = vmatpush1.bf16.msra.mxu0 %v4019
      %4123 = vmatprep.subr.bf16.mxu0 0
      %4124 = vmatpush1.bf16.msra.mxu0 0
      %4125 = vmatprep.subr.bf16.mxu0 0
      %4126 = vmatpush1.bf16.msra.mxu0 0
      %4127 = vmatprep.subr.bf16.mxu0 0
      %4128 = vmatpush1.bf16.msra.mxu0 0
      %4129 = vmatprep.subr.bf16.mxu0 0
      %4130 = vmatpush1.bf16.msra.mxu0 0
      %4131 = vmatprep.subr.bf16.mxu0 0
      %4132 = vmatpush1.bf16.msra.mxu0 0
      %4133 = vmatprep.subr.bf16.mxu0 0
      %4134 = vmatpush1.bf16.msra.mxu0 0
      %4135 = vmatprep.subr.bf16.mxu0 0
      %4136 = vmatpush1.bf16.msra.mxu0 0
      %4137 = vmatprep.subr.bf16.mxu0 0
      %4138 = vmatpush1.bf16.msra.mxu0 0
      %4139 = vmatprep.subr.bf16.mxu0 0
      %4140 = vmatpush1.bf16.msra.mxu0 0
      %4141 = vmatprep.subr.bf16.mxu0 0
      %4142 = vmatpush1.bf16.msra.mxu0 0
      %4143 = vmatprep.subr.bf16.mxu0 0
      %4144 = vmatpush1.bf16.msra.mxu0 0
      %4145 = vmatprep.subr.bf16.mxu0 0
      %4146 = vmatpush1.bf16.msra.mxu0 0
      %4147 = vmatprep.subr.bf16.mxu0 0
      %4148 = vmatpush1.bf16.msra.mxu0 0
      %4149 = vmatprep.subr.bf16.mxu0 0
      %4150 = vmatpush1.bf16.msra.mxu0 0
      %4151 = vmatprep.mubr.bf16.mxu0 0
      %4152 = vmatmul.mubr.bf16.gmra.mrb[0].mxu0 %v4035
      %v4153 = vpop.f32.mrb[0].mxu0
      %v4154 = vadd.f32 0.0, %v4153
      %v4155 = vpop.f32.mrb[0].mxu0
      %v4156 = vadd.f32 0.0, %v4155
      %v4157 = vpop.f32.mrb[0].mxu0
      %v4158 = vadd.f32 0.0, %v4157
      %v4159 = vpop.f32.mrb[0].mxu0
      %v4160 = vadd.f32 0.0, %v4159
      %4161 = vmatprep.mubr.bf16.mxu0 0
      %4162 = vmatmul.mubr.bf16.gmra.mrb[0].mxu0 %v4038
      %v4163 = vpop.f32.mrb[0].mxu0
      %v4164 = vadd.f32 0.0, %v4163
      %v4165 = vpop.f32.mrb[0].mxu0
      %v4166 = vadd.f32 0.0, %v4165
      %v4167 = vpop.f32.mrb[0].mxu0
      %v4168 = vadd.f32 0.0, %v4167
      %v4169 = vpop.f32.mrb[0].mxu0
      %v4170 = vadd.f32 0.0, %v4169
      %4171 = vmatprep.mubr.bf16.mxu0 0
      %4172 = vmatmul.mubr.bf16.gmra.mrb[0].mxu0 %v4041
      %v4173 = vpop.f32.mrb[0].mxu0
      %v4174 = vadd.f32 0.0, %v4173
      %v4175 = vpop.f32.mrb[0].mxu0
      %v4176 = vadd.f32 0.0, %v4175
      %v4177 = vpop.f32.mrb[0].mxu0
      %v4178 = vadd.f32 0.0, %v4177
      %v4179 = vpop.f32.mrb[0].mxu0
      %v4180 = vadd.f32 0.0, %v4179
      %4181 = vmatprep.mubr.bf16.mxu0 0
      %4182 = vmatmul.mubr.bf16.gmra.mrb[0].mxu0 %v4044
      %v4183 = vpop.f32.mrb[0].mxu0
      %v4184 = vadd.f32 0.0, %v4183
      %v4185 = vpop.f32.mrb[0].mxu0
      %v4186 = vadd.f32 0.0, %v4185
      %v4187 = vpop.f32.mrb[0].mxu0
      %v4188 = vadd.f32 0.0, %v4187
      %v4189 = vpop.f32.mrb[0].mxu0
      %v4190 = vadd.f32 0.0, %v4189
      %4191 = vdwg.mxu0
      %4192 = vmatprep.subr.bf16.mxu0 %v3998
      %4193 = vmatpush1.bf16.msra.mxu0 %v4016
      %4194 = vmatprep.subr.bf16.mxu0 %v4010
      %4195 = vmatpush1.bf16.msra.mxu0 %v4021
      %4196 = vmatprep.subr.bf16.mxu0 0
      %4197 = vmatpush1.bf16.msra.mxu0 0
      %4198 = vmatprep.subr.bf16.mxu0 0
      %4199 = vmatpush1.bf16.msra.mxu0 0
      %4200 = vmatprep.subr.bf16.mxu0 0
      %4201 = vmatpush1.bf16.msra.mxu0 0
      %4202 = vmatprep.subr.bf16.mxu0 0
      %4203 = vmatpush1.bf16.msra.mxu0 0
      %4204 = vmatprep.subr.bf16.mxu0 0
      %4205 = vmatpush1.bf16.msra.mxu0 0
      %4206 = vmatprep.subr.bf16.mxu0 0
      %4207 = vmatpush1.bf16.msra.mxu0 0
      %4208 = vmatprep.subr.bf16.mxu0 0
      %4209 = vmatpush1.bf16.msra.mxu0 0
      %4210 = vmatprep.subr.bf16.mxu0 0
      %4211 = vmatpush1.bf16.msra.mxu0 0
      %4212 = vmatprep.subr.bf16.mxu0 0
      %4213 = vmatpush1.bf16.msra.mxu0 0
      %4214 = vmatprep.subr.bf16.mxu0 0
      %4215 = vmatpush1.bf16.msra.mxu0 0
      %4216 = vmatprep.subr.bf16.mxu0 0
      %4217 = vmatpush1.bf16.msra.mxu0 0
      %4218 = vmatprep.subr.bf16.mxu0 0
      %4219 = vmatpush1.bf16.msra.mxu0 0
      %4220 = vmatprep.subr.bf16.mxu0 0
      %4221 = vmatpush1.bf16.msra.mxu0 0
      %4222 = vmatprep.subr.bf16.mxu0 0
      %4223 = vmatpush1.bf16.msra.mxu0 0
      %4224 = vmatprep.mubr.bf16.mxu0 0
      %4225 = vmatmul.mubr.bf16.gmra.mrb[0].mxu0 %v4035
      %v4226 = vpop.f32.mrb[0].mxu0
      %v4227 = vadd.f32 0.0, %v4226
      %v4228 = vpop.f32.mrb[0].mxu0
      %v4229 = vadd.f32 0.0, %v4228
      %v4230 = vpop.f32.mrb[0].mxu0
      %v4231 = vadd.f32 0.0, %v4230
      %v4232 = vpop.f32.mrb[0].mxu0
      %v4233 = vadd.f32 0.0, %v4232
      %4234 = vmatprep.mubr.bf16.mxu0 0
      %4235 = vmatmul.mubr.bf16.gmra.mrb[0].mxu0 %v4038
      %v4236 = vpop.f32.mrb[0].mxu0
      %v4237 = vadd.f32 0.0, %v4236
      %v4238 = vpop.f32.mrb[0].mxu0
      %v4239 = vadd.f32 0.0, %v4238
      %v4240 = vpop.f32.mrb[0].mxu0
      %v4241 = vadd.f32 0.0, %v4240
      %v4242 = vpop.f32.mrb[0].mxu0
      %v4243 = vadd.f32 0.0, %v4242
      %4244 = vmatprep.mubr.bf16.mxu0 0
      %4245 = vmatmul.mubr.bf16.gmra.mrb[0].mxu0 %v4041
      %v4246 = vpop.f32.mrb[0].mxu0
      %v4247 = vadd.f32 0.0, %v4246
      %v4248 = vpop.f32.mrb[0].mxu0
      %v4249 = vadd.f32 0.0, %v4248
      %v4250 = vpop.f32.mrb[0].mxu0
      %v4251 = vadd.f32 0.0, %v4250
      %v4252 = vpop.f32.mrb[0].mxu0
      %v4253 = vadd.f32 0.0, %v4252
      %4254 = vmatprep.mubr.bf16.mxu0 0
      %4255 = vmatmul.mubr.bf16.gmra.mrb[0].mxu0 %v4044
      %v4256 = vpop.f32.mrb[0].mxu0
      %v4257 = vadd.f32 0.0, %v4256
      %v4258 = vpop.f32.mrb[0].mxu0
      %v4259 = vadd.f32 0.0, %v4258
      %v4260 = vpop.f32.mrb[0].mxu0
      %v4261 = vadd.f32 0.0, %v4260
      %v4262 = vpop.f32.mrb[0].mxu0
      %v4263 = vadd.f32 0.0, %v4262
      %4264 = vdwg.mxu0
      %v4265 = vadd.f32 %v3910, %v4081
      %v4266 = vadd.f32 %v3911, %v4083
      %v4267 = vadd.f32 %v3912, %v4154
      %v4268 = vadd.f32 %v3913, %v4156
      %v4269 = vadd.f32 %v3914, %v4227
      %v4270 = vadd.f32 %v3915, %v4229
      %v4271 = vadd.f32 %v3916, %v4085
      %v4272 = vadd.f32 %v3917, %v4087
      %v4273 = vadd.f32 %v3918, %v4158
      %v4274 = vadd.f32 %v3919, %v4160
      %v4275 = vadd.f32 %v3920, %v4231
      %v4276 = vadd.f32 %v3921, %v4233
      %v4277 = vadd.f32 %v3922, %v4091
      %v4278 = vadd.f32 %v3923, %v4093
      %v4279 = vadd.f32 %v3924, %v4164
      %v4280 = vadd.f32 %v3925, %v4166
      %v4281 = vadd.f32 %v3926, %v4237
      %v4282 = vadd.f32 %v3927, %v4239
      %v4283 = vadd.f32 %v3928, %v4095
      %v4284 = vadd.f32 %v3929, %v4097
      %v4285 = vadd.f32 %v3930, %v4168
      %v4286 = vadd.f32 %v3931, %v4170
      %v4287 = vadd.f32 %v3932, %v4241
      %v4288 = vadd.f32 %v3933, %v4243
      %v4289 = vadd.f32 %v3934, %v4101
      %v4290 = vadd.f32 %v3935, %v4103
      %v4291 = vadd.f32 %v3936, %v4174
      %v4292 = vadd.f32 %v3937, %v4176
      %v4293 = vadd.f32 %v3938, %v4247
      %v4294 = vadd.f32 %v3939, %v4249
      %v4295 = vadd.f32 %v3940, %v4105
      %v4296 = vadd.f32 %v3941, %v4107
      %v4297 = vadd.f32 %v3942, %v4178
      %v4298 = vadd.f32 %v3943, %v4180
      %v4299 = vadd.f32 %v3944, %v4251
      %v4300 = vadd.f32 %v3945, %v4253
      %v4301 = vadd.f32 %v3946, %v4111
      %v4302 = vadd.f32 %v3947, %v4113
      %v4303 = vadd.f32 %v3948, %v4184
      %v4304 = vadd.f32 %v3949, %v4186
      %v4305 = vadd.f32 %v3950, %v4257
      %v4306 = vadd.f32 %v3951, %v4259
      %v4307 = vadd.f32 %v3952, %v4115
      %v4308 = vadd.f32 %v3953, %v4117
      %v4309 = vadd.f32 %v3954, %v4188
      %v4310 = vadd.f32 %v3955, %v4190
      %v4311 = vadd.f32 %v3956, %v4261
      %v4312 = vadd.f32 %v3957, %v4263
      %s4313 = scalar_lea.vmem %s3, 224
      %v4314 = vld [vmem:[%s4313] sm:$0xf]
      %v4315 = vld [vmem:[%s4313 + $0x4] sm:$0xf]
      %v4316 = vld [vmem:[%s4313 + $0x8] sm:$0xf]
      %v4317 = vld [vmem:[%s4313 + $0xc] sm:$0xf]
      %v4318 = vld [vmem:[%s4313 + $0x10] sm:$0xf]
      %v4319 = vld [vmem:[%s4313 + $0x14] sm:$0xf]
      %v4320 = vld [vmem:[%s4313 + $0x18] sm:$0xf]
      %v4321 = vld [vmem:[%s4313 + $0x1c] sm:$0xf]
      %v4330 = vunpack.c.l.b16 %v4314
      %v4331 = vunpack.c.l.b16 %v4315
      %v4332 = vunpack.c.l.b16 %v4316
      %v4333 = vunpack.c.l.b16 %v4317
      %v4334 = vunpack.c.l.b16 %v4318
      %v4335 = vunpack.c.l.b16 %v4319
      %v4336 = vunpack.c.l.b16 %v4320
      %v4337 = vunpack.c.l.b16 %v4321
      %v4338 = vpack.c.b16 %v4331, %v4330
      %v4339 = vpack.c.b16 %v4333, %v4332
      %v4340 = vpack.c.b16 %v4335, %v4334
      %v4341 = vpack.c.b16 %v4337, %v4336
      %4342 = vrot.lane.b32.xlu0 %v1955, 71
      %v4343 = vpop.permute.xlu0 %4342
      %4344 = vrot.lane.b32.xlu0 %v1956, 71
      %v4345 = vpop.permute.xlu0 %4344
      %4346 = vrot.lane.b32.xlu0 %v1957, 71
      %v4347 = vpop.permute.xlu0 %4346
      %4348 = vrot.lane.b32.xlu0 %v1958, 71
      %v4349 = vpop.permute.xlu0 %4348
      %4350 = vrot.lane.b32.xlu0 %v1959, 71
      %v4351 = vpop.permute.xlu0 %4350
      %4352 = vrot.lane.b32.xlu0 %v1960, 71
      %v4353 = vpop.permute.xlu0 %4352
      %4354 = vrot.lane.b32.xlu0 %v1961, 71
      %v4355 = vpop.permute.xlu0 %4354
      %4356 = vrot.lane.b32.xlu0 %v1962, 71
      %v4357 = vpop.permute.xlu0 %4356
      %4358 = vrot.lane.b32.xlu0 %v1963, 71
      %v4359 = vpop.permute.xlu0 %4358
      %4360 = vrot.lane.b32.xlu0 %v1964, 71
      %v4361 = vpop.permute.xlu0 %4360
      %4362 = vrot.lane.b32.xlu0 %v1965, 71
      %v4363 = vpop.permute.xlu0 %4362
      %4364 = vrot.lane.b32.xlu0 %v1966, 71
      %v4365 = vpop.permute.xlu0 %4364
      %vm4366 = vcmask 580608
      %v4367 = vsel %vm4366, %v4343, %v4345
      %v4368 = vsel %vm4366, %v4345, %v4347
      %v4369 = vsel %vm4366, %v4347, %v4349
      %v4370 = vsel %vm4366, %v4349, %v4351
      %v4371 = vsel %vm4366, %v4351, %v4353
      %v4372 = vsel %vm4366, %v4355, %v4357
      %v4373 = vsel %vm4366, %v4357, %v4359
      %v4374 = vsel %vm4366, %v4359, %v4361
      %v4375 = vsel %vm4366, %v4361, %v4363
      %v4376 = vsel %vm4366, %v4363, %v4365
      %v4390 = vsel %vm2055, %v4338, 0
      %v4393 = vsel %vm2055, %v4339, 0
      %v4396 = vsel %vm2055, %v4340, 0
      %v4399 = vsel %vm2055, %v4341, 0
      %4401 = vmatprep.subr.bf16.mxu0 %v4368
      %4402 = vmatpush1.bf16.msra.mxu0 %v4367
      %4403 = vmatprep.subr.bf16.mxu0 %v4373
      %4404 = vmatpush1.bf16.msra.mxu0 %v4372
      %4405 = vmatprep.subr.bf16.mxu0 0
      %4406 = vmatpush1.bf16.msra.mxu0 0
      %4407 = vmatprep.subr.bf16.mxu0 0
      %4408 = vmatpush1.bf16.msra.mxu0 0
      %4409 = vmatprep.subr.bf16.mxu0 0
      %4410 = vmatpush1.bf16.msra.mxu0 0
      %4411 = vmatprep.subr.bf16.mxu0 0
      %4412 = vmatpush1.bf16.msra.mxu0 0
      %4413 = vmatprep.subr.bf16.mxu0 0
      %4414 = vmatpush1.bf16.msra.mxu0 0
      %4415 = vmatprep.subr.bf16.mxu0 0
      %4416 = vmatpush1.bf16.msra.mxu0 0
      %4417 = vmatprep.subr.bf16.mxu0 0
      %4418 = vmatpush1.bf16.msra.mxu0 0
      %4419 = vmatprep.subr.bf16.mxu0 0
      %4420 = vmatpush1.bf16.msra.mxu0 0
      %4421 = vmatprep.subr.bf16.mxu0 0
      %4422 = vmatpush1.bf16.msra.mxu0 0
      %4423 = vmatprep.subr.bf16.mxu0 0
      %4424 = vmatpush1.bf16.msra.mxu0 0
      %4425 = vmatprep.subr.bf16.mxu0 0
      %4426 = vmatpush1.bf16.msra.mxu0 0
      %4427 = vmatprep.subr.bf16.mxu0 0
      %4428 = vmatpush1.bf16.msra.mxu0 0
      %4429 = vmatprep.subr.bf16.mxu0 0
      %4430 = vmatpush1.bf16.msra.mxu0 0
      %4431 = vmatprep.subr.bf16.mxu0 0
      %4432 = vmatpush1.bf16.msra.mxu0 0
      %4433 = vmatprep.mubr.bf16.mxu0 0
      %4434 = vmatmul.mubr.bf16.gmra.mrb[0].mxu0 %v4390
      %v4435 = vpop.f32.mrb[0].mxu0
      %v4436 = vadd.f32 0.0, %v4435
      %v4437 = vpop.f32.mrb[0].mxu0
      %v4438 = vadd.f32 0.0, %v4437
      %v4439 = vpop.f32.mrb[0].mxu0
      %v4440 = vadd.f32 0.0, %v4439
      %v4441 = vpop.f32.mrb[0].mxu0
      %v4442 = vadd.f32 0.0, %v4441
      %4443 = vmatprep.mubr.bf16.mxu0 0
      %4444 = vmatmul.mubr.bf16.gmra.mrb[0].mxu0 %v4393
      %v4445 = vpop.f32.mrb[0].mxu0
      %v4446 = vadd.f32 0.0, %v4445
      %v4447 = vpop.f32.mrb[0].mxu0
      %v4448 = vadd.f32 0.0, %v4447
      %v4449 = vpop.f32.mrb[0].mxu0
      %v4450 = vadd.f32 0.0, %v4449
      %v4451 = vpop.f32.mrb[0].mxu0
      %v4452 = vadd.f32 0.0, %v4451
      %4453 = vmatprep.mubr.bf16.mxu0 0
      %4454 = vmatmul.mubr.bf16.gmra.mrb[0].mxu0 %v4396
      %v4455 = vpop.f32.mrb[0].mxu0
      %v4456 = vadd.f32 0.0, %v4455
      %v4457 = vpop.f32.mrb[0].mxu0
      %v4458 = vadd.f32 0.0, %v4457
      %v4459 = vpop.f32.mrb[0].mxu0
      %v4460 = vadd.f32 0.0, %v4459
      %v4461 = vpop.f32.mrb[0].mxu0
      %v4462 = vadd.f32 0.0, %v4461
      %4463 = vmatprep.mubr.bf16.mxu0 0
      %4464 = vmatmul.mubr.bf16.gmra.mrb[0].mxu0 %v4399
      %v4465 = vpop.f32.mrb[0].mxu0
      %v4466 = vadd.f32 0.0, %v4465
      %v4467 = vpop.f32.mrb[0].mxu0
      %v4468 = vadd.f32 0.0, %v4467
      %v4469 = vpop.f32.mrb[0].mxu0
      %v4470 = vadd.f32 0.0, %v4469
      %v4471 = vpop.f32.mrb[0].mxu0
      %v4472 = vadd.f32 0.0, %v4471
      %4473 = vdwg.mxu0
      %4474 = vmatprep.subr.bf16.mxu0 %v4370
      %4475 = vmatpush1.bf16.msra.mxu0 %v4369
      %4476 = vmatprep.subr.bf16.mxu0 %v4375
      %4477 = vmatpush1.bf16.msra.mxu0 %v4374
      %4478 = vmatprep.subr.bf16.mxu0 0
      %4479 = vmatpush1.bf16.msra.mxu0 0
      %4480 = vmatprep.subr.bf16.mxu0 0
      %4481 = vmatpush1.bf16.msra.mxu0 0
      %4482 = vmatprep.subr.bf16.mxu0 0
      %4483 = vmatpush1.bf16.msra.mxu0 0
      %4484 = vmatprep.subr.bf16.mxu0 0
      %4485 = vmatpush1.bf16.msra.mxu0 0
      %4486 = vmatprep.subr.bf16.mxu0 0
      %4487 = vmatpush1.bf16.msra.mxu0 0
      %4488 = vmatprep.subr.bf16.mxu0 0
      %4489 = vmatpush1.bf16.msra.mxu0 0
      %4490 = vmatprep.subr.bf16.mxu0 0
      %4491 = vmatpush1.bf16.msra.mxu0 0
      %4492 = vmatprep.subr.bf16.mxu0 0
      %4493 = vmatpush1.bf16.msra.mxu0 0
      %4494 = vmatprep.subr.bf16.mxu0 0
      %4495 = vmatpush1.bf16.msra.mxu0 0
      %4496 = vmatprep.subr.bf16.mxu0 0
      %4497 = vmatpush1.bf16.msra.mxu0 0
      %4498 = vmatprep.subr.bf16.mxu0 0
      %4499 = vmatpush1.bf16.msra.mxu0 0
      %4500 = vmatprep.subr.bf16.mxu0 0
      %4501 = vmatpush1.bf16.msra.mxu0 0
      %4502 = vmatprep.subr.bf16.mxu0 0
      %4503 = vmatpush1.bf16.msra.mxu0 0
      %4504 = vmatprep.subr.bf16.mxu0 0
      %4505 = vmatpush1.bf16.msra.mxu0 0
      %4506 = vmatprep.mubr.bf16.mxu0 0
      %4507 = vmatmul.mubr.bf16.gmra.mrb[0].mxu0 %v4390
      %v4508 = vpop.f32.mrb[0].mxu0
      %v4509 = vadd.f32 0.0, %v4508
      %v4510 = vpop.f32.mrb[0].mxu0
      %v4511 = vadd.f32 0.0, %v4510
      %v4512 = vpop.f32.mrb[0].mxu0
      %v4513 = vadd.f32 0.0, %v4512
      %v4514 = vpop.f32.mrb[0].mxu0
      %v4515 = vadd.f32 0.0, %v4514
      %4516 = vmatprep.mubr.bf16.mxu0 0
      %4517 = vmatmul.mubr.bf16.gmra.mrb[0].mxu0 %v4393
      %v4518 = vpop.f32.mrb[0].mxu0
      %v4519 = vadd.f32 0.0, %v4518
      %v4520 = vpop.f32.mrb[0].mxu0
      %v4521 = vadd.f32 0.0, %v4520
      %v4522 = vpop.f32.mrb[0].mxu0
      %v4523 = vadd.f32 0.0, %v4522
      %v4524 = vpop.f32.mrb[0].mxu0
      %v4525 = vadd.f32 0.0, %v4524
      %4526 = vmatprep.mubr.bf16.mxu0 0
      %4527 = vmatmul.mubr.bf16.gmra.mrb[0].mxu0 %v4396
      %v4528 = vpop.f32.mrb[0].mxu0
      %v4529 = vadd.f32 0.0, %v4528
      %v4530 = vpop.f32.mrb[0].mxu0
      %v4531 = vadd.f32 0.0, %v4530
      %v4532 = vpop.f32.mrb[0].mxu0
      %v4533 = vadd.f32 0.0, %v4532
      %v4534 = vpop.f32.mrb[0].mxu0
      %v4535 = vadd.f32 0.0, %v4534
      %4536 = vmatprep.mubr.bf16.mxu0 0
      %4537 = vmatmul.mubr.bf16.gmra.mrb[0].mxu0 %v4399
      %v4538 = vpop.f32.mrb[0].mxu0
      %v4539 = vadd.f32 0.0, %v4538
      %v4540 = vpop.f32.mrb[0].mxu0
      %v4541 = vadd.f32 0.0, %v4540
      %v4542 = vpop.f32.mrb[0].mxu0
      %v4543 = vadd.f32 0.0, %v4542
      %v4544 = vpop.f32.mrb[0].mxu0
      %v4545 = vadd.f32 0.0, %v4544
      %4546 = vdwg.mxu0
      %4547 = vmatprep.subr.bf16.mxu0 %v4353
      %4548 = vmatpush1.bf16.msra.mxu0 %v4371
      %4549 = vmatprep.subr.bf16.mxu0 %v4365
      %4550 = vmatpush1.bf16.msra.mxu0 %v4376
      %4551 = vmatprep.subr.bf16.mxu0 0
      %4552 = vmatpush1.bf16.msra.mxu0 0
      %4553 = vmatprep.subr.bf16.mxu0 0
      %4554 = vmatpush1.bf16.msra.mxu0 0
      %4555 = vmatprep.subr.bf16.mxu0 0
      %4556 = vmatpush1.bf16.msra.mxu0 0
      %4557 = vmatprep.subr.bf16.mxu0 0
      %4558 = vmatpush1.bf16.msra.mxu0 0
      %4559 = vmatprep.subr.bf16.mxu0 0
      %4560 = vmatpush1.bf16.msra.mxu0 0
      %4561 = vmatprep.subr.bf16.mxu0 0
      %4562 = vmatpush1.bf16.msra.mxu0 0
      %4563 = vmatprep.subr.bf16.mxu0 0
      %4564 = vmatpush1.bf16.msra.mxu0 0
      %4565 = vmatprep.subr.bf16.mxu0 0
      %4566 = vmatpush1.bf16.msra.mxu0 0
      %4567 = vmatprep.subr.bf16.mxu0 0
      %4568 = vmatpush1.bf16.msra.mxu0 0
      %4569 = vmatprep.subr.bf16.mxu0 0
      %4570 = vmatpush1.bf16.msra.mxu0 0
      %4571 = vmatprep.subr.bf16.mxu0 0
      %4572 = vmatpush1.bf16.msra.mxu0 0
      %4573 = vmatprep.subr.bf16.mxu0 0
      %4574 = vmatpush1.bf16.msra.mxu0 0
      %4575 = vmatprep.subr.bf16.mxu0 0
      %4576 = vmatpush1.bf16.msra.mxu0 0
      %4577 = vmatprep.subr.bf16.mxu0 0
      %4578 = vmatpush1.bf16.msra.mxu0 0
      %4579 = vmatprep.mubr.bf16.mxu0 0
      %4580 = vmatmul.mubr.bf16.gmra.mrb[0].mxu0 %v4390
      %v4581 = vpop.f32.mrb[0].mxu0
      %v4582 = vadd.f32 0.0, %v4581
      %v4583 = vpop.f32.mrb[0].mxu0
      %v4584 = vadd.f32 0.0, %v4583
      %v4585 = vpop.f32.mrb[0].mxu0
      %v4586 = vadd.f32 0.0, %v4585
      %v4587 = vpop.f32.mrb[0].mxu0
      %v4588 = vadd.f32 0.0, %v4587
      %4589 = vmatprep.mubr.bf16.mxu0 0
      %4590 = vmatmul.mubr.bf16.gmra.mrb[0].mxu0 %v4393
      %v4591 = vpop.f32.mrb[0].mxu0
      %v4592 = vadd.f32 0.0, %v4591
      %v4593 = vpop.f32.mrb[0].mxu0
      %v4594 = vadd.f32 0.0, %v4593
      %v4595 = vpop.f32.mrb[0].mxu0
      %v4596 = vadd.f32 0.0, %v4595
      %v4597 = vpop.f32.mrb[0].mxu0
      %v4598 = vadd.f32 0.0, %v4597
      %4599 = vmatprep.mubr.bf16.mxu0 0
      %4600 = vmatmul.mubr.bf16.gmra.mrb[0].mxu0 %v4396
      %v4601 = vpop.f32.mrb[0].mxu0
      %v4602 = vadd.f32 0.0, %v4601
      %v4603 = vpop.f32.mrb[0].mxu0
      %v4604 = vadd.f32 0.0, %v4603
      %v4605 = vpop.f32.mrb[0].mxu0
      %v4606 = vadd.f32 0.0, %v4605
      %v4607 = vpop.f32.mrb[0].mxu0
      %v4608 = vadd.f32 0.0, %v4607
      %4609 = vmatprep.mubr.bf16.mxu0 0
      %4610 = vmatmul.mubr.bf16.gmra.mrb[0].mxu0 %v4399
      %v4611 = vpop.f32.mrb[0].mxu0
      %v4612 = vadd.f32 0.0, %v4611
      %v4613 = vpop.f32.mrb[0].mxu0
      %v4614 = vadd.f32 0.0, %v4613
      %v4615 = vpop.f32.mrb[0].mxu0
      %v4616 = vadd.f32 0.0, %v4615
      %v4617 = vpop.f32.mrb[0].mxu0
      %v4618 = vadd.f32 0.0, %v4617
      %4619 = vdwg.mxu0
      %v4620 = vadd.f32 %v4265, %v4436
      %v4621 = vadd.f32 %v4266, %v4438
      %v4622 = vadd.f32 %v4267, %v4509
      %v4623 = vadd.f32 %v4268, %v4511
      %v4624 = vadd.f32 %v4269, %v4582
      %v4625 = vadd.f32 %v4270, %v4584
      %v4626 = vadd.f32 %v4271, %v4440
      %v4627 = vadd.f32 %v4272, %v4442
      %v4628 = vadd.f32 %v4273, %v4513
      %v4629 = vadd.f32 %v4274, %v4515
      %v4630 = vadd.f32 %v4275, %v4586
      %v4631 = vadd.f32 %v4276, %v4588
      %v4632 = vadd.f32 %v4277, %v4446
      %v4633 = vadd.f32 %v4278, %v4448
      %v4634 = vadd.f32 %v4279, %v4519
      %v4635 = vadd.f32 %v4280, %v4521
      %v4636 = vadd.f32 %v4281, %v4592
      %v4637 = vadd.f32 %v4282, %v4594
      %v4638 = vadd.f32 %v4283, %v4450
      %v4639 = vadd.f32 %v4284, %v4452
      %v4640 = vadd.f32 %v4285, %v4523
      %v4641 = vadd.f32 %v4286, %v4525
      %v4642 = vadd.f32 %v4287, %v4596
      %v4643 = vadd.f32 %v4288, %v4598
      %v4644 = vadd.f32 %v4289, %v4456
      %v4645 = vadd.f32 %v4290, %v4458
      %v4646 = vadd.f32 %v4291, %v4529
      %v4647 = vadd.f32 %v4292, %v4531
      %v4648 = vadd.f32 %v4293, %v4602
      %v4649 = vadd.f32 %v4294, %v4604
      %v4650 = vadd.f32 %v4295, %v4460
      %v4651 = vadd.f32 %v4296, %v4462
      %v4652 = vadd.f32 %v4297, %v4533
      %v4653 = vadd.f32 %v4298, %v4535
      %v4654 = vadd.f32 %v4299, %v4606
      %v4655 = vadd.f32 %v4300, %v4608
      %v4656 = vadd.f32 %v4301, %v4466
      %v4657 = vadd.f32 %v4302, %v4468
      %v4658 = vadd.f32 %v4303, %v4539
      %v4659 = vadd.f32 %v4304, %v4541
      %v4660 = vadd.f32 %v4305, %v4612
      %v4661 = vadd.f32 %v4306, %v4614
      %v4662 = vadd.f32 %v4307, %v4470
      %v4663 = vadd.f32 %v4308, %v4472
      %v4664 = vadd.f32 %v4309, %v4543
      %v4665 = vadd.f32 %v4310, %v4545
      %v4666 = vadd.f32 %v4311, %v4616
      %v4667 = vadd.f32 %v4312, %v4618
      %s4668 = scalar_lea.vmem %s3, 256
      %v4669 = vld [vmem:[%s4668] sm:$0xf]
      %v4670 = vld [vmem:[%s4668 + $0x4] sm:$0xf]
      %v4671 = vld [vmem:[%s4668 + $0x8] sm:$0xf]
      %v4672 = vld [vmem:[%s4668 + $0xc] sm:$0xf]
      %v4673 = vld [vmem:[%s4668 + $0x10] sm:$0xf]
      %v4674 = vld [vmem:[%s4668 + $0x14] sm:$0xf]
      %v4675 = vld [vmem:[%s4668 + $0x18] sm:$0xf]
      %v4676 = vld [vmem:[%s4668 + $0x1c] sm:$0xf]
      %v4685 = vunpack.c.l.b16 %v4669
      %v4686 = vunpack.c.l.b16 %v4670
      %v4687 = vunpack.c.l.b16 %v4671
      %v4688 = vunpack.c.l.b16 %v4672
      %v4689 = vunpack.c.l.b16 %v4673
      %v4690 = vunpack.c.l.b16 %v4674
      %v4691 = vunpack.c.l.b16 %v4675
      %v4692 = vunpack.c.l.b16 %v4676
      %v4693 = vpack.c.b16 %v4686, %v4685
      %v4694 = vpack.c.b16 %v4688, %v4687
      %v4695 = vpack.c.b16 %v4690, %v4689
      %v4696 = vpack.c.b16 %v4692, %v4691
      %4697 = vrot.lane.b32.xlu0 %v1955, 70
      %v4698 = vpop.permute.xlu0 %4697
      %4699 = vrot.lane.b32.xlu0 %v1956, 70
      %v4700 = vpop.permute.xlu0 %4699
      %4701 = vrot.lane.b32.xlu0 %v1957, 70
      %v4702 = vpop.permute.xlu0 %4701
      %4703 = vrot.lane.b32.xlu0 %v1958, 70
      %v4704 = vpop.permute.xlu0 %4703
      %4705 = vrot.lane.b32.xlu0 %v1959, 70
      %v4706 = vpop.permute.xlu0 %4705
      %4707 = vrot.lane.b32.xlu0 %v1960, 70
      %v4708 = vpop.permute.xlu0 %4707
      %4709 = vrot.lane.b32.xlu0 %v1961, 70
      %v4710 = vpop.permute.xlu0 %4709
      %4711 = vrot.lane.b32.xlu0 %v1962, 70
      %v4712 = vpop.permute.xlu0 %4711
      %4713 = vrot.lane.b32.xlu0 %v1963, 70
      %v4714 = vpop.permute.xlu0 %4713
      %4715 = vrot.lane.b32.xlu0 %v1964, 70
      %v4716 = vpop.permute.xlu0 %4715
      %4717 = vrot.lane.b32.xlu0 %v1965, 70
      %v4718 = vpop.permute.xlu0 %4717
      %4719 = vrot.lane.b32.xlu0 %v1966, 70
      %v4720 = vpop.permute.xlu0 %4719
      %vm4721 = vcmask 572416
      %v4722 = vsel %vm4721, %v4698, %v4700
      %v4723 = vsel %vm4721, %v4700, %v4702
      %v4724 = vsel %vm4721, %v4702, %v4704
      %v4725 = vsel %vm4721, %v4704, %v4706
      %v4726 = vsel %vm4721, %v4706, %v4708
      %v4727 = vsel %vm4721, %v4710, %v4712
      %v4728 = vsel %vm4721, %v4712, %v4714
      %v4729 = vsel %vm4721, %v4714, %v4716
      %v4730 = vsel %vm4721, %v4716, %v4718
      %v4731 = vsel %vm4721, %v4718, %v4720
      %v4745 = vsel %vm2055, %v4693, 0
      %v4748 = vsel %vm2055, %v4694, 0
      %v4751 = vsel %vm2055, %v4695, 0
      %v4754 = vsel %vm2055, %v4696, 0
      %4756 = vmatprep.subr.bf16.mxu0 %v4723
      %4757 = vmatpush1.bf16.msra.mxu0 %v4722
      %4758 = vmatprep.subr.bf16.mxu0 %v4728
      %4759 = vmatpush1.bf16.msra.mxu0 %v4727
      %4760 = vmatprep.subr.bf16.mxu0 0
      %4761 = vmatpush1.bf16.msra.mxu0 0
      %4762 = vmatprep.subr.bf16.mxu0 0
      %4763 = vmatpush1.bf16.msra.mxu0 0
      %4764 = vmatprep.subr.bf16.mxu0 0
      %4765 = vmatpush1.bf16.msra.mxu0 0
      %4766 = vmatprep.subr.bf16.mxu0 0
      %4767 = vmatpush1.bf16.msra.mxu0 0
      %4768 = vmatprep.subr.bf16.mxu0 0
      %4769 = vmatpush1.bf16.msra.mxu0 0
      %4770 = vmatprep.subr.bf16.mxu0 0
      %4771 = vmatpush1.bf16.msra.mxu0 0
      %4772 = vmatprep.subr.bf16.mxu0 0
      %4773 = vmatpush1.bf16.msra.mxu0 0
      %4774 = vmatprep.subr.bf16.mxu0 0
      %4775 = vmatpush1.bf16.msra.mxu0 0
      %4776 = vmatprep.subr.bf16.mxu0 0
      %4777 = vmatpush1.bf16.msra.mxu0 0
      %4778 = vmatprep.subr.bf16.mxu0 0
      %4779 = vmatpush1.bf16.msra.mxu0 0
      %4780 = vmatprep.subr.bf16.mxu0 0
      %4781 = vmatpush1.bf16.msra.mxu0 0
      %4782 = vmatprep.subr.bf16.mxu0 0
      %4783 = vmatpush1.bf16.msra.mxu0 0
      %4784 = vmatprep.subr.bf16.mxu0 0
      %4785 = vmatpush1.bf16.msra.mxu0 0
      %4786 = vmatprep.subr.bf16.mxu0 0
      %4787 = vmatpush1.bf16.msra.mxu0 0
      %4788 = vmatprep.mubr.bf16.mxu0 0
      %4789 = vmatmul.mubr.bf16.gmra.mrb[0].mxu0 %v4745
      %v4790 = vpop.f32.mrb[0].mxu0
      %v4791 = vadd.f32 0.0, %v4790
      %v4792 = vpop.f32.mrb[0].mxu0
      %v4793 = vadd.f32 0.0, %v4792
      %v4794 = vpop.f32.mrb[0].mxu0
      %v4795 = vadd.f32 0.0, %v4794
      %v4796 = vpop.f32.mrb[0].mxu0
      %v4797 = vadd.f32 0.0, %v4796
      %4798 = vmatprep.mubr.bf16.mxu0 0
      %4799 = vmatmul.mubr.bf16.gmra.mrb[0].mxu0 %v4748
      %v4800 = vpop.f32.mrb[0].mxu0
      %v4801 = vadd.f32 0.0, %v4800
      %v4802 = vpop.f32.mrb[0].mxu0
      %v4803 = vadd.f32 0.0, %v4802
      %v4804 = vpop.f32.mrb[0].mxu0
      %v4805 = vadd.f32 0.0, %v4804
      %v4806 = vpop.f32.mrb[0].mxu0
      %v4807 = vadd.f32 0.0, %v4806
      %4808 = vmatprep.mubr.bf16.mxu0 0
      %4809 = vmatmul.mubr.bf16.gmra.mrb[0].mxu0 %v4751
      %v4810 = vpop.f32.mrb[0].mxu0
      %v4811 = vadd.f32 0.0, %v4810
      %v4812 = vpop.f32.mrb[0].mxu0
      %v4813 = vadd.f32 0.0, %v4812
      %v4814 = vpop.f32.mrb[0].mxu0
      %v4815 = vadd.f32 0.0, %v4814
      %v4816 = vpop.f32.mrb[0].mxu0
      %v4817 = vadd.f32 0.0, %v4816
      %4818 = vmatprep.mubr.bf16.mxu0 0
      %4819 = vmatmul.mubr.bf16.gmra.mrb[0].mxu0 %v4754
      %v4820 = vpop.f32.mrb[0].mxu0
      %v4821 = vadd.f32 0.0, %v4820
      %v4822 = vpop.f32.mrb[0].mxu0
      %v4823 = vadd.f32 0.0, %v4822
      %v4824 = vpop.f32.mrb[0].mxu0
      %v4825 = vadd.f32 0.0, %v4824
      %v4826 = vpop.f32.mrb[0].mxu0
      %v4827 = vadd.f32 0.0, %v4826
      %4828 = vdwg.mxu0
      %4829 = vmatprep.subr.bf16.mxu0 %v4725
      %4830 = vmatpush1.bf16.msra.mxu0 %v4724
      %4831 = vmatprep.subr.bf16.mxu0 %v4730
      %4832 = vmatpush1.bf16.msra.mxu0 %v4729
      %4833 = vmatprep.subr.bf16.mxu0 0
      %4834 = vmatpush1.bf16.msra.mxu0 0
      %4835 = vmatprep.subr.bf16.mxu0 0
      %4836 = vmatpush1.bf16.msra.mxu0 0
      %4837 = vmatprep.subr.bf16.mxu0 0
      %4838 = vmatpush1.bf16.msra.mxu0 0
      %4839 = vmatprep.subr.bf16.mxu0 0
      %4840 = vmatpush1.bf16.msra.mxu0 0
      %4841 = vmatprep.subr.bf16.mxu0 0
      %4842 = vmatpush1.bf16.msra.mxu0 0
      %4843 = vmatprep.subr.bf16.mxu0 0
      %4844 = vmatpush1.bf16.msra.mxu0 0
      %4845 = vmatprep.subr.bf16.mxu0 0
      %4846 = vmatpush1.bf16.msra.mxu0 0
      %4847 = vmatprep.subr.bf16.mxu0 0
      %4848 = vmatpush1.bf16.msra.mxu0 0
      %4849 = vmatprep.subr.bf16.mxu0 0
      %4850 = vmatpush1.bf16.msra.mxu0 0
      %4851 = vmatprep.subr.bf16.mxu0 0
      %4852 = vmatpush1.bf16.msra.mxu0 0
      %4853 = vmatprep.subr.bf16.mxu0 0
      %4854 = vmatpush1.bf16.msra.mxu0 0
      %4855 = vmatprep.subr.bf16.mxu0 0
      %4856 = vmatpush1.bf16.msra.mxu0 0
      %4857 = vmatprep.subr.bf16.mxu0 0
      %4858 = vmatpush1.bf16.msra.mxu0 0
      %4859 = vmatprep.subr.bf16.mxu0 0
      %4860 = vmatpush1.bf16.msra.mxu0 0
      %4861 = vmatprep.mubr.bf16.mxu0 0
      %4862 = vmatmul.mubr.bf16.gmra.mrb[0].mxu0 %v4745
      %v4863 = vpop.f32.mrb[0].mxu0
      %v4864 = vadd.f32 0.0, %v4863
      %v4865 = vpop.f32.mrb[0].mxu0
      %v4866 = vadd.f32 0.0, %v4865
      %v4867 = vpop.f32.mrb[0].mxu0
      %v4868 = vadd.f32 0.0, %v4867
      %v4869 = vpop.f32.mrb[0].mxu0
      %v4870 = vadd.f32 0.0, %v4869
      %4871 = vmatprep.mubr.bf16.mxu0 0
      %4872 = vmatmul.mubr.bf16.gmra.mrb[0].mxu0 %v4748
      %v4873 = vpop.f32.mrb[0].mxu0
      %v4874 = vadd.f32 0.0, %v4873
      %v4875 = vpop.f32.mrb[0].mxu0
      %v4876 = vadd.f32 0.0, %v4875
      %v4877 = vpop.f32.mrb[0].mxu0
      %v4878 = vadd.f32 0.0, %v4877
      %v4879 = vpop.f32.mrb[0].mxu0
      %v4880 = vadd.f32 0.0, %v4879
      %4881 = vmatprep.mubr.bf16.mxu0 0
      %4882 = vmatmul.mubr.bf16.gmra.mrb[0].mxu0 %v4751
      %v4883 = vpop.f32.mrb[0].mxu0
      %v4884 = vadd.f32 0.0, %v4883
      %v4885 = vpop.f32.mrb[0].mxu0
      %v4886 = vadd.f32 0.0, %v4885
      %v4887 = vpop.f32.mrb[0].mxu0
      %v4888 = vadd.f32 0.0, %v4887
      %v4889 = vpop.f32.mrb[0].mxu0
      %v4890 = vadd.f32 0.0, %v4889
      %4891 = vmatprep.mubr.bf16.mxu0 0
      %4892 = vmatmul.mubr.bf16.gmra.mrb[0].mxu0 %v4754
      %v4893 = vpop.f32.mrb[0].mxu0
      %v4894 = vadd.f32 0.0, %v4893
      %v4895 = vpop.f32.mrb[0].mxu0
      %v4896 = vadd.f32 0.0, %v4895
      %v4897 = vpop.f32.mrb[0].mxu0
      %v4898 = vadd.f32 0.0, %v4897
      %v4899 = vpop.f32.mrb[0].mxu0
      %v4900 = vadd.f32 0.0, %v4899
      %4901 = vdwg.mxu0
      %4902 = vmatprep.subr.bf16.mxu0 %v4708
      %4903 = vmatpush1.bf16.msra.mxu0 %v4726
      %4904 = vmatprep.subr.bf16.mxu0 %v4720
      %4905 = vmatpush1.bf16.msra.mxu0 %v4731
      %4906 = vmatprep.subr.bf16.mxu0 0
      %4907 = vmatpush1.bf16.msra.mxu0 0
      %4908 = vmatprep.subr.bf16.mxu0 0
      %4909 = vmatpush1.bf16.msra.mxu0 0
      %4910 = vmatprep.subr.bf16.mxu0 0
      %4911 = vmatpush1.bf16.msra.mxu0 0
      %4912 = vmatprep.subr.bf16.mxu0 0
      %4913 = vmatpush1.bf16.msra.mxu0 0
      %4914 = vmatprep.subr.bf16.mxu0 0
      %4915 = vmatpush1.bf16.msra.mxu0 0
      %4916 = vmatprep.subr.bf16.mxu0 0
      %4917 = vmatpush1.bf16.msra.mxu0 0
      %4918 = vmatprep.subr.bf16.mxu0 0
      %4919 = vmatpush1.bf16.msra.mxu0 0
      %4920 = vmatprep.subr.bf16.mxu0 0
      %4921 = vmatpush1.bf16.msra.mxu0 0
      %4922 = vmatprep.subr.bf16.mxu0 0
      %4923 = vmatpush1.bf16.msra.mxu0 0
      %4924 = vmatprep.subr.bf16.mxu0 0
      %4925 = vmatpush1.bf16.msra.mxu0 0
      %4926 = vmatprep.subr.bf16.mxu0 0
      %4927 = vmatpush1.bf16.msra.mxu0 0
      %4928 = vmatprep.subr.bf16.mxu0 0
      %4929 = vmatpush1.bf16.msra.mxu0 0
      %4930 = vmatprep.subr.bf16.mxu0 0
      %4931 = vmatpush1.bf16.msra.mxu0 0
      %4932 = vmatprep.subr.bf16.mxu0 0
      %4933 = vmatpush1.bf16.msra.mxu0 0
      %4934 = vmatprep.mubr.bf16.mxu0 0
      %4935 = vmatmul.mubr.bf16.gmra.mrb[0].mxu0 %v4745
      %v4936 = vpop.f32.mrb[0].mxu0
      %v4937 = vadd.f32 0.0, %v4936
      %v4938 = vpop.f32.mrb[0].mxu0
      %v4939 = vadd.f32 0.0, %v4938
      %v4940 = vpop.f32.mrb[0].mxu0
      %v4941 = vadd.f32 0.0, %v4940
      %v4942 = vpop.f32.mrb[0].mxu0
      %v4943 = vadd.f32 0.0, %v4942
      %4944 = vmatprep.mubr.bf16.mxu0 0
      %4945 = vmatmul.mubr.bf16.gmra.mrb[0].mxu0 %v4748
      %v4946 = vpop.f32.mrb[0].mxu0
      %v4947 = vadd.f32 0.0, %v4946
      %v4948 = vpop.f32.mrb[0].mxu0
      %v4949 = vadd.f32 0.0, %v4948
      %v4950 = vpop.f32.mrb[0].mxu0
      %v4951 = vadd.f32 0.0, %v4950
      %v4952 = vpop.f32.mrb[0].mxu0
      %v4953 = vadd.f32 0.0, %v4952
      %4954 = vmatprep.mubr.bf16.mxu0 0
      %4955 = vmatmul.mubr.bf16.gmra.mrb[0].mxu0 %v4751
      %v4956 = vpop.f32.mrb[0].mxu0
      %v4957 = vadd.f32 0.0, %v4956
      %v4958 = vpop.f32.mrb[0].mxu0
      %v4959 = vadd.f32 0.0, %v4958
      %v4960 = vpop.f32.mrb[0].mxu0
      %v4961 = vadd.f32 0.0, %v4960
      %v4962 = vpop.f32.mrb[0].mxu0
      %v4963 = vadd.f32 0.0, %v4962
      %4964 = vmatprep.mubr.bf16.mxu0 0
      %4965 = vmatmul.mubr.bf16.gmra.mrb[0].mxu0 %v4754
      %v4966 = vpop.f32.mrb[0].mxu0
      %v4967 = vadd.f32 0.0, %v4966
      %v4968 = vpop.f32.mrb[0].mxu0
      %v4969 = vadd.f32 0.0, %v4968
      %v4970 = vpop.f32.mrb[0].mxu0
      %v4971 = vadd.f32 0.0, %v4970
      %v4972 = vpop.f32.mrb[0].mxu0
      %v4973 = vadd.f32 0.0, %v4972
      %4974 = vdwg.mxu0
      %v4975 = vadd.f32 %v4620, %v4791
      %v4976 = vadd.f32 %v4621, %v4793
      %v4977 = vadd.f32 %v4622, %v4864
      %v4978 = vadd.f32 %v4623, %v4866
      %v4979 = vadd.f32 %v4624, %v4937
      %v4980 = vadd.f32 %v4625, %v4939
      %v4981 = vadd.f32 %v4626, %v4795
      %v4982 = vadd.f32 %v4627, %v4797
      %v4983 = vadd.f32 %v4628, %v4868
      %v4984 = vadd.f32 %v4629, %v4870
      %v4985 = vadd.f32 %v4630, %v4941
      %v4986 = vadd.f32 %v4631, %v4943
      %v4987 = vadd.f32 %v4632, %v4801
      %v4988 = vadd.f32 %v4633, %v4803
      %v4989 = vadd.f32 %v4634, %v4874
      %v4990 = vadd.f32 %v4635, %v4876
      %v4991 = vadd.f32 %v4636, %v4947
      %v4992 = vadd.f32 %v4637, %v4949
      %v4993 = vadd.f32 %v4638, %v4805
      %v4994 = vadd.f32 %v4639, %v4807
      %v4995 = vadd.f32 %v4640, %v4878
      %v4996 = vadd.f32 %v4641, %v4880
      %v4997 = vadd.f32 %v4642, %v4951
      %v4998 = vadd.f32 %v4643, %v4953
      %v4999 = vadd.f32 %v4644, %v4811
      %v5000 = vadd.f32 %v4645, %v4813
      %v5001 = vadd.f32 %v4646, %v4884
      %v5002 = vadd.f32 %v4647, %v4886
      %v5003 = vadd.f32 %v4648, %v4957
      %v5004 = vadd.f32 %v4649, %v4959
      %v5005 = vadd.f32 %v4650, %v4815
      %v5006 = vadd.f32 %v4651, %v4817
      %v5007 = vadd.f32 %v4652, %v4888
      %v5008 = vadd.f32 %v4653, %v4890
      %v5009 = vadd.f32 %v4654, %v4961
      %v5010 = vadd.f32 %v4655, %v4963
      %v5011 = vadd.f32 %v4656, %v4821
      %v5012 = vadd.f32 %v4657, %v4823
      %v5013 = vadd.f32 %v4658, %v4894
      %v5014 = vadd.f32 %v4659, %v4896
      %v5015 = vadd.f32 %v4660, %v4967
      %v5016 = vadd.f32 %v4661, %v4969
      %v5017 = vadd.f32 %v4662, %v4825
      %v5018 = vadd.f32 %v4663, %v4827
      %v5019 = vadd.f32 %v4664, %v4898
      %v5020 = vadd.f32 %v4665, %v4900
      %v5021 = vadd.f32 %v4666, %v4971
      %v5022 = vadd.f32 %v4667, %v4973
      %5024 = vset.pattern.permute.xlu0 0
      %5025 = vperm.xlu0 %5024, %v259
      %v5026 = vpop.permute.xlu0 %5025
      %5029 = vset.pattern.permute.xlu0 0
      %5030 = vperm.xlu0 %5029, %v260
      %v5031 = vpop.permute.xlu0 %5030
      %5034 = vset.pattern.permute.xlu0 0
      %5035 = vperm.xlu0 %5034, %v261
      %v5036 = vpop.permute.xlu0 %5035
      %5039 = vset.pattern.permute.xlu0 0
      %5040 = vperm.xlu0 %5039, %v262
      %v5041 = vpop.permute.xlu0 %5040
      %5044 = vset.pattern.permute.xlu0 0
      %5045 = vperm.xlu0 %5044, %v263
      %v5046 = vpop.permute.xlu0 %5045
      %5049 = vset.pattern.permute.xlu0 0
      %5050 = vperm.xlu0 %5049, %v264
      %v5051 = vpop.permute.xlu0 %5050
      %5054 = vset.pattern.permute.xlu0 0
      %5055 = vperm.xlu0 %5054, %v265
      %v5056 = vpop.permute.xlu0 %5055
      %5059 = vset.pattern.permute.xlu0 0
      %5060 = vperm.xlu0 %5059, %v266
      %v5061 = vpop.permute.xlu0 %5060
      %v5063 = vadd.f32 %v4975, %v5026
      %v5064 = vadd.f32 %v4976, %v5026
      %v5065 = vadd.f32 %v4977, %v5026
      %v5066 = vadd.f32 %v4978, %v5026
      %v5067 = vadd.f32 %v4979, %v5026
      %v5068 = vadd.f32 %v4980, %v5026
      %v5069 = vadd.f32 %v4981, %v5031
      %v5070 = vadd.f32 %v4982, %v5031
      %v5071 = vadd.f32 %v4983, %v5031
      %v5072 = vadd.f32 %v4984, %v5031
      %v5073 = vadd.f32 %v4985, %v5031
      %v5074 = vadd.f32 %v4986, %v5031
      %v5075 = vadd.f32 %v4987, %v5036
      %v5076 = vadd.f32 %v4988, %v5036
      %v5077 = vadd.f32 %v4989, %v5036
      %v5078 = vadd.f32 %v4990, %v5036
      %v5079 = vadd.f32 %v4991, %v5036
      %v5080 = vadd.f32 %v4992, %v5036
      %v5081 = vadd.f32 %v4993, %v5041
      %v5082 = vadd.f32 %v4994, %v5041
      %v5083 = vadd.f32 %v4995, %v5041
      %v5084 = vadd.f32 %v4996, %v5041
      %v5085 = vadd.f32 %v4997, %v5041
      %v5086 = vadd.f32 %v4998, %v5041
      %v5087 = vadd.f32 %v4999, %v5046
      %v5088 = vadd.f32 %v5000, %v5046
      %v5089 = vadd.f32 %v5001, %v5046
      %v5090 = vadd.f32 %v5002, %v5046
      %v5091 = vadd.f32 %v5003, %v5046
      %v5092 = vadd.f32 %v5004, %v5046
      %v5093 = vadd.f32 %v5005, %v5051
      %v5094 = vadd.f32 %v5006, %v5051
      %v5095 = vadd.f32 %v5007, %v5051
      %v5096 = vadd.f32 %v5008, %v5051
      %v5097 = vadd.f32 %v5009, %v5051
      %v5098 = vadd.f32 %v5010, %v5051
      %v5099 = vadd.f32 %v5011, %v5056
      %v5100 = vadd.f32 %v5012, %v5056
      %v5101 = vadd.f32 %v5013, %v5056
      %v5102 = vadd.f32 %v5014, %v5056
      %v5103 = vadd.f32 %v5015, %v5056
      %v5104 = vadd.f32 %v5016, %v5056
      %v5105 = vadd.f32 %v5017, %v5061
      %v5106 = vadd.f32 %v5018, %v5061
      %v5107 = vadd.f32 %v5019, %v5061
      %v5108 = vadd.f32 %v5020, %v5061
      %v5109 = vadd.f32 %v5021, %v5061
      %v5110 = vadd.f32 %v5022, %v5061
      %v5111 = vmax.f32 %v5063, 0.0
      %v5112 = vmax.f32 %v5064, 0.0
      %v5113 = vmax.f32 %v5065, 0.0
      %v5114 = vmax.f32 %v5066, 0.0
      %v5115 = vmax.f32 %v5067, 0.0
      %v5116 = vmax.f32 %v5068, 0.0
      %v5117 = vmax.f32 %v5069, 0.0
      %v5118 = vmax.f32 %v5070, 0.0
      %v5119 = vmax.f32 %v5071, 0.0
      %v5120 = vmax.f32 %v5072, 0.0
      %v5121 = vmax.f32 %v5073, 0.0
      %v5122 = vmax.f32 %v5074, 0.0
      %v5123 = vmax.f32 %v5075, 0.0
      %v5124 = vmax.f32 %v5076, 0.0
      %v5125 = vmax.f32 %v5077, 0.0
      %v5126 = vmax.f32 %v5078, 0.0
      %v5127 = vmax.f32 %v5079, 0.0
      %v5128 = vmax.f32 %v5080, 0.0
      %v5129 = vmax.f32 %v5081, 0.0
      %v5130 = vmax.f32 %v5082, 0.0
      %v5131 = vmax.f32 %v5083, 0.0
      %v5132 = vmax.f32 %v5084, 0.0
      %v5133 = vmax.f32 %v5085, 0.0
      %v5134 = vmax.f32 %v5086, 0.0
      %v5135 = vmax.f32 %v5087, 0.0
      %v5136 = vmax.f32 %v5088, 0.0
      %v5137 = vmax.f32 %v5089, 0.0
      %v5138 = vmax.f32 %v5090, 0.0
      %v5139 = vmax.f32 %v5091, 0.0
      %v5140 = vmax.f32 %v5092, 0.0
      %v5141 = vmax.f32 %v5093, 0.0
      %v5142 = vmax.f32 %v5094, 0.0
      %v5143 = vmax.f32 %v5095, 0.0
      %v5144 = vmax.f32 %v5096, 0.0
      %v5145 = vmax.f32 %v5097, 0.0
      %v5146 = vmax.f32 %v5098, 0.0
      %v5147 = vmax.f32 %v5099, 0.0
      %v5148 = vmax.f32 %v5100, 0.0
      %v5149 = vmax.f32 %v5101, 0.0
      %v5150 = vmax.f32 %v5102, 0.0
      %v5151 = vmax.f32 %v5103, 0.0
      %v5152 = vmax.f32 %v5104, 0.0
      %v5153 = vmax.f32 %v5105, 0.0
      %v5154 = vmax.f32 %v5106, 0.0
      %v5155 = vmax.f32 %v5107, 0.0
      %v5156 = vmax.f32 %v5108, 0.0
      %v5157 = vmax.f32 %v5109, 0.0
      %v5158 = vmax.f32 %v5110, 0.0
      %5207 = vrot.lane.b32.xlu0 %v5111, 100
      %v5208 = vpop.permute.xlu0 %5207
      %5209 = vrot.lane.b32.xlu0 %v5112, 100
      %v5210 = vpop.permute.xlu0 %5209
      %5211 = vrot.lane.b32.xlu0 %v5113, 100
      %v5212 = vpop.permute.xlu0 %5211
      %5213 = vrot.lane.b32.xlu0 %v5114, 100
      %v5214 = vpop.permute.xlu0 %5213
      %5215 = vrot.lane.b32.xlu0 %v5115, 100
      %v5216 = vpop.permute.xlu0 %5215
      %5217 = vrot.lane.b32.xlu0 %v5116, 100
      %v5218 = vpop.permute.xlu0 %5217
      %5219 = vrot.lane.b32.xlu0 %v5117, 100
      %v5220 = vpop.permute.xlu0 %5219
      %5221 = vrot.lane.b32.xlu0 %v5118, 100
      %v5222 = vpop.permute.xlu0 %5221
      %5223 = vrot.lane.b32.xlu0 %v5119, 100
      %v5224 = vpop.permute.xlu0 %5223
      %5225 = vrot.lane.b32.xlu0 %v5120, 100
      %v5226 = vpop.permute.xlu0 %5225
      %5227 = vrot.lane.b32.xlu0 %v5121, 100
      %v5228 = vpop.permute.xlu0 %5227
      %5229 = vrot.lane.b32.xlu0 %v5122, 100
      %v5230 = vpop.permute.xlu0 %5229
      %5231 = vrot.lane.b32.xlu0 %v5123, 100
      %v5232 = vpop.permute.xlu0 %5231
      %5233 = vrot.lane.b32.xlu0 %v5124, 100
      %v5234 = vpop.permute.xlu0 %5233
      %5235 = vrot.lane.b32.xlu0 %v5125, 100
      %v5236 = vpop.permute.xlu0 %5235
      %5237 = vrot.lane.b32.xlu0 %v5126, 100
      %v5238 = vpop.permute.xlu0 %5237
      %5239 = vrot.lane.b32.xlu0 %v5127, 100
      %v5240 = vpop.permute.xlu0 %5239
      %5241 = vrot.lane.b32.xlu0 %v5128, 100
      %v5242 = vpop.permute.xlu0 %5241
      %5243 = vrot.lane.b32.xlu0 %v5129, 100
      %v5244 = vpop.permute.xlu0 %5243
      %5245 = vrot.lane.b32.xlu0 %v5130, 100
      %v5246 = vpop.permute.xlu0 %5245
      %5247 = vrot.lane.b32.xlu0 %v5131, 100
      %v5248 = vpop.permute.xlu0 %5247
      %5249 = vrot.lane.b32.xlu0 %v5132, 100
      %v5250 = vpop.permute.xlu0 %5249
      %5251 = vrot.lane.b32.xlu0 %v5133, 100
      %v5252 = vpop.permute.xlu0 %5251
      %5253 = vrot.lane.b32.xlu0 %v5134, 100
      %v5254 = vpop.permute.xlu0 %5253
      %5255 = vrot.lane.b32.xlu0 %v5135, 100
      %v5256 = vpop.permute.xlu0 %5255
      %5257 = vrot.lane.b32.xlu0 %v5136, 100
      %v5258 = vpop.permute.xlu0 %5257
      %5259 = vrot.lane.b32.xlu0 %v5137, 100
      %v5260 = vpop.permute.xlu0 %5259
      %5261 = vrot.lane.b32.xlu0 %v5138, 100
      %v5262 = vpop.permute.xlu0 %5261
      %5263 = vrot.lane.b32.xlu0 %v5139, 100
      %v5264 = vpop.permute.xlu0 %5263
      %5265 = vrot.lane.b32.xlu0 %v5140, 100
      %v5266 = vpop.permute.xlu0 %5265
      %5267 = vrot.lane.b32.xlu0 %v5141, 100
      %v5268 = vpop.permute.xlu0 %5267
      %5269 = vrot.lane.b32.xlu0 %v5142, 100
      %v5270 = vpop.permute.xlu0 %5269
      %5271 = vrot.lane.b32.xlu0 %v5143, 100
      %v5272 = vpop.permute.xlu0 %5271
      %5273 = vrot.lane.b32.xlu0 %v5144, 100
      %v5274 = vpop.permute.xlu0 %5273
      %5275 = vrot.lane.b32.xlu0 %v5145, 100
      %v5276 = vpop.permute.xlu0 %5275
      %5277 = vrot.lane.b32.xlu0 %v5146, 100
      %v5278 = vpop.permute.xlu0 %5277
      %5279 = vrot.lane.b32.xlu0 %v5147, 100
      %v5280 = vpop.permute.xlu0 %5279
      %5281 = vrot.lane.b32.xlu0 %v5148, 100
      %v5282 = vpop.permute.xlu0 %5281
      %5283 = vrot.lane.b32.xlu0 %v5149, 100
      %v5284 = vpop.permute.xlu0 %5283
      %5285 = vrot.lane.b32.xlu0 %v5150, 100
      %v5286 = vpop.permute.xlu0 %5285
      %5287 = vrot.lane.b32.xlu0 %v5151, 100
      %v5288 = vpop.permute.xlu0 %5287
      %5289 = vrot.lane.b32.xlu0 %v5152, 100
      %v5290 = vpop.permute.xlu0 %5289
      %5291 = vrot.lane.b32.xlu0 %v5153, 100
      %v5292 = vpop.permute.xlu0 %5291
      %5293 = vrot.lane.b32.xlu0 %v5154, 100
      %v5294 = vpop.permute.xlu0 %5293
      %5295 = vrot.lane.b32.xlu0 %v5155, 100
      %v5296 = vpop.permute.xlu0 %5295
      %5297 = vrot.lane.b32.xlu0 %v5156, 100
      %v5298 = vpop.permute.xlu0 %5297
      %5299 = vrot.lane.b32.xlu0 %v5157, 100
      %v5300 = vpop.permute.xlu0 %5299
      %5301 = vrot.lane.b32.xlu0 %v5158, 100
      %v5302 = vpop.permute.xlu0 %5301
      %v5303 = vsel %vm840, %v5208, %v5210
      %v5304 = vsel %vm840, %v5210, %v5212
      %v5305 = vsel %vm840, %v5212, %v5214
      %v5306 = vsel %vm840, %v5214, %v5216
      %v5307 = vsel %vm840, %v5216, %v5218
      %v5308 = vsel %vm840, %v5220, %v5222
      %v5309 = vsel %vm840, %v5222, %v5224
      %v5310 = vsel %vm840, %v5224, %v5226
      %v5311 = vsel %vm840, %v5226, %v5228
      %v5312 = vsel %vm840, %v5228, %v5230
      %v5313 = vsel %vm840, %v5232, %v5234
      %v5314 = vsel %vm840, %v5234, %v5236
      %v5315 = vsel %vm840, %v5236, %v5238
      %v5316 = vsel %vm840, %v5238, %v5240
      %v5317 = vsel %vm840, %v5240, %v5242
      %v5318 = vsel %vm840, %v5244, %v5246
      %v5319 = vsel %vm840, %v5246, %v5248
      %v5320 = vsel %vm840, %v5248, %v5250
      %v5321 = vsel %vm840, %v5250, %v5252
      %v5322 = vsel %vm840, %v5252, %v5254
      %v5323 = vsel %vm840, %v5256, %v5258
      %v5324 = vsel %vm840, %v5258, %v5260
      %v5325 = vsel %vm840, %v5260, %v5262
      %v5326 = vsel %vm840, %v5262, %v5264
      %v5327 = vsel %vm840, %v5264, %v5266
      %v5328 = vsel %vm840, %v5268, %v5270
      %v5329 = vsel %vm840, %v5270, %v5272
      %v5330 = vsel %vm840, %v5272, %v5274
      %v5331 = vsel %vm840, %v5274, %v5276
      %v5332 = vsel %vm840, %v5276, %v5278
      %v5333 = vsel %vm840, %v5280, %v5282
      %v5334 = vsel %vm840, %v5282, %v5284
      %v5335 = vsel %vm840, %v5284, %v5286
      %v5336 = vsel %vm840, %v5286, %v5288
      %v5337 = vsel %vm840, %v5288, %v5290
      %v5338 = vsel %vm840, %v5292, %v5294
      %v5339 = vsel %vm840, %v5294, %v5296
      %v5340 = vsel %vm840, %v5296, %v5298
      %v5341 = vsel %vm840, %v5298, %v5300
      %v5342 = vsel %vm840, %v5300, %v5302
      %v5383 = vmax.f32 %v5111, %v5303
      %v5384 = vmax.f32 %v5112, %v5304
      %v5385 = vmax.f32 %v5113, %v5305
      %v5386 = vmax.f32 %v5114, %v5306
      %v5387 = vmax.f32 %v5115, %v5307
      %v5388 = vmax.f32 %v5117, %v5308
      %v5389 = vmax.f32 %v5118, %v5309
      %v5390 = vmax.f32 %v5119, %v5310
      %v5391 = vmax.f32 %v5120, %v5311
      %v5392 = vmax.f32 %v5121, %v5312
      %v5393 = vmax.f32 %v5123, %v5313
      %v5394 = vmax.f32 %v5124, %v5314
      %v5395 = vmax.f32 %v5125, %v5315
      %v5396 = vmax.f32 %v5126, %v5316
      %v5397 = vmax.f32 %v5127, %v5317
      %v5398 = vmax.f32 %v5129, %v5318
      %v5399 = vmax.f32 %v5130, %v5319
      %v5400 = vmax.f32 %v5131, %v5320
      %v5401 = vmax.f32 %v5132, %v5321
      %v5402 = vmax.f32 %v5133, %v5322
      %v5403 = vmax.f32 %v5135, %v5323
      %v5404 = vmax.f32 %v5136, %v5324
      %v5405 = vmax.f32 %v5137, %v5325
      %v5406 = vmax.f32 %v5138, %v5326
      %v5407 = vmax.f32 %v5139, %v5327
      %v5408 = vmax.f32 %v5141, %v5328
      %v5409 = vmax.f32 %v5142, %v5329
      %v5410 = vmax.f32 %v5143, %v5330
      %v5411 = vmax.f32 %v5144, %v5331
      %v5412 = vmax.f32 %v5145, %v5332
      %v5413 = vmax.f32 %v5147, %v5333
      %v5414 = vmax.f32 %v5148, %v5334
      %v5415 = vmax.f32 %v5149, %v5335
      %v5416 = vmax.f32 %v5150, %v5336
      %v5417 = vmax.f32 %v5151, %v5337
      %v5418 = vmax.f32 %v5153, %v5338
      %v5419 = vmax.f32 %v5154, %v5339
      %v5420 = vmax.f32 %v5155, %v5340
      %v5421 = vmax.f32 %v5156, %v5341
      %v5422 = vmax.f32 %v5157, %v5342
      %5463 = vrot.lane.b32.xlu0 %v5383, 127
      %v5464 = vpop.permute.xlu0 %5463
      %5465 = vrot.lane.b32.xlu0 %v5384, 127
      %v5466 = vpop.permute.xlu0 %5465
      %5467 = vrot.lane.b32.xlu0 %v5385, 127
      %v5468 = vpop.permute.xlu0 %5467
      %5469 = vrot.lane.b32.xlu0 %v5386, 127
      %v5470 = vpop.permute.xlu0 %5469
      %5471 = vrot.lane.b32.xlu0 %v5387, 127
      %v5472 = vpop.permute.xlu0 %5471
      %5473 = vrot.lane.b32.xlu0 %v5388, 127
      %v5474 = vpop.permute.xlu0 %5473
      %5475 = vrot.lane.b32.xlu0 %v5389, 127
      %v5476 = vpop.permute.xlu0 %5475
      %5477 = vrot.lane.b32.xlu0 %v5390, 127
      %v5478 = vpop.permute.xlu0 %5477
      %5479 = vrot.lane.b32.xlu0 %v5391, 127
      %v5480 = vpop.permute.xlu0 %5479
      %5481 = vrot.lane.b32.xlu0 %v5392, 127
      %v5482 = vpop.permute.xlu0 %5481
      %5483 = vrot.lane.b32.xlu0 %v5393, 127
      %v5484 = vpop.permute.xlu0 %5483
      %5485 = vrot.lane.b32.xlu0 %v5394, 127
      %v5486 = vpop.permute.xlu0 %5485
      %5487 = vrot.lane.b32.xlu0 %v5395, 127
      %v5488 = vpop.permute.xlu0 %5487
      %5489 = vrot.lane.b32.xlu0 %v5396, 127
      %v5490 = vpop.permute.xlu0 %5489
      %5491 = vrot.lane.b32.xlu0 %v5397, 127
      %v5492 = vpop.permute.xlu0 %5491
      %5493 = vrot.lane.b32.xlu0 %v5398, 127
      %v5494 = vpop.permute.xlu0 %5493
      %5495 = vrot.lane.b32.xlu0 %v5399, 127
      %v5496 = vpop.permute.xlu0 %5495
      %5497 = vrot.lane.b32.xlu0 %v5400, 127
      %v5498 = vpop.permute.xlu0 %5497
      %5499 = vrot.lane.b32.xlu0 %v5401, 127
      %v5500 = vpop.permute.xlu0 %5499
      %5501 = vrot.lane.b32.xlu0 %v5402, 127
      %v5502 = vpop.permute.xlu0 %5501
      %5503 = vrot.lane.b32.xlu0 %v5403, 127
      %v5504 = vpop.permute.xlu0 %5503
      %5505 = vrot.lane.b32.xlu0 %v5404, 127
      %v5506 = vpop.permute.xlu0 %5505
      %5507 = vrot.lane.b32.xlu0 %v5405, 127
      %v5508 = vpop.permute.xlu0 %5507
      %5509 = vrot.lane.b32.xlu0 %v5406, 127
      %v5510 = vpop.permute.xlu0 %5509
      %5511 = vrot.lane.b32.xlu0 %v5407, 127
      %v5512 = vpop.permute.xlu0 %5511
      %5513 = vrot.lane.b32.xlu0 %v5408, 127
      %v5514 = vpop.permute.xlu0 %5513
      %5515 = vrot.lane.b32.xlu0 %v5409, 127
      %v5516 = vpop.permute.xlu0 %5515
      %5517 = vrot.lane.b32.xlu0 %v5410, 127
      %v5518 = vpop.permute.xlu0 %5517
      %5519 = vrot.lane.b32.xlu0 %v5411, 127
      %v5520 = vpop.permute.xlu0 %5519
      %5521 = vrot.lane.b32.xlu0 %v5412, 127
      %v5522 = vpop.permute.xlu0 %5521
      %5523 = vrot.lane.b32.xlu0 %v5413, 127
      %v5524 = vpop.permute.xlu0 %5523
      %5525 = vrot.lane.b32.xlu0 %v5414, 127
      %v5526 = vpop.permute.xlu0 %5525
      %5527 = vrot.lane.b32.xlu0 %v5415, 127
      %v5528 = vpop.permute.xlu0 %5527
      %5529 = vrot.lane.b32.xlu0 %v5416, 127
      %v5530 = vpop.permute.xlu0 %5529
      %5531 = vrot.lane.b32.xlu0 %v5417, 127
      %v5532 = vpop.permute.xlu0 %5531
      %5533 = vrot.lane.b32.xlu0 %v5418, 127
      %v5534 = vpop.permute.xlu0 %5533
      %5535 = vrot.lane.b32.xlu0 %v5419, 127
      %v5536 = vpop.permute.xlu0 %5535
      %5537 = vrot.lane.b32.xlu0 %v5420, 127
      %v5538 = vpop.permute.xlu0 %5537
      %5539 = vrot.lane.b32.xlu0 %v5421, 127
      %v5540 = vpop.permute.xlu0 %5539
      %5541 = vrot.lane.b32.xlu0 %v5422, 127
      %v5542 = vpop.permute.xlu0 %5541
      %v5543 = vsel %vm478, %v5464, %v5466
      %v5544 = vsel %vm478, %v5466, %v5468
      %v5545 = vsel %vm478, %v5468, %v5470
      %v5546 = vsel %vm478, %v5470, %v5472
      %v5547 = vsel %vm478, %v5474, %v5476
      %v5548 = vsel %vm478, %v5476, %v5478
      %v5549 = vsel %vm478, %v5478, %v5480
      %v5550 = vsel %vm478, %v5480, %v5482
      %v5551 = vsel %vm478, %v5484, %v5486
      %v5552 = vsel %vm478, %v5486, %v5488
      %v5553 = vsel %vm478, %v5488, %v5490
      %v5554 = vsel %vm478, %v5490, %v5492
      %v5555 = vsel %vm478, %v5494, %v5496
      %v5556 = vsel %vm478, %v5496, %v5498
      %v5557 = vsel %vm478, %v5498, %v5500
      %v5558 = vsel %vm478, %v5500, %v5502
      %v5559 = vsel %vm478, %v5504, %v5506
      %v5560 = vsel %vm478, %v5506, %v5508
      %v5561 = vsel %vm478, %v5508, %v5510
      %v5562 = vsel %vm478, %v5510, %v5512
      %v5563 = vsel %vm478, %v5514, %v5516
      %v5564 = vsel %vm478, %v5516, %v5518
      %v5565 = vsel %vm478, %v5518, %v5520
      %v5566 = vsel %vm478, %v5520, %v5522
      %v5567 = vsel %vm478, %v5524, %v5526
      %v5568 = vsel %vm478, %v5526, %v5528
      %v5569 = vsel %vm478, %v5528, %v5530
      %v5570 = vsel %vm478, %v5530, %v5532
      %v5571 = vsel %vm478, %v5534, %v5536
      %v5572 = vsel %vm478, %v5536, %v5538
      %v5573 = vsel %vm478, %v5538, %v5540
      %v5574 = vsel %vm478, %v5540, %v5542
      %v5615 = vmax.f32 %v5383, %v5543
      %v5616 = vmax.f32 %v5384, %v5544
      %v5617 = vmax.f32 %v5385, %v5545
      %v5618 = vmax.f32 %v5386, %v5546
      %v5619 = vmax.f32 %v5387, %v5472
      %v5620 = vmax.f32 %v5388, %v5547
      %v5621 = vmax.f32 %v5389, %v5548
      %v5622 = vmax.f32 %v5390, %v5549
      %v5623 = vmax.f32 %v5391, %v5550
      %v5624 = vmax.f32 %v5392, %v5482
      %v5625 = vmax.f32 %v5393, %v5551
      %v5626 = vmax.f32 %v5394, %v5552
      %v5627 = vmax.f32 %v5395, %v5553
      %v5628 = vmax.f32 %v5396, %v5554
      %v5629 = vmax.f32 %v5397, %v5492
      %v5630 = vmax.f32 %v5398, %v5555
      %v5631 = vmax.f32 %v5399, %v5556
      %v5632 = vmax.f32 %v5400, %v5557
      %v5633 = vmax.f32 %v5401, %v5558
      %v5634 = vmax.f32 %v5402, %v5502
      %v5635 = vmax.f32 %v5403, %v5559
      %v5636 = vmax.f32 %v5404, %v5560
      %v5637 = vmax.f32 %v5405, %v5561
      %v5638 = vmax.f32 %v5406, %v5562
      %v5639 = vmax.f32 %v5407, %v5512
      %v5640 = vmax.f32 %v5408, %v5563
      %v5641 = vmax.f32 %v5409, %v5564
      %v5642 = vmax.f32 %v5410, %v5565
      %v5643 = vmax.f32 %v5411, %v5566
      %v5644 = vmax.f32 %v5412, %v5522
      %v5645 = vmax.f32 %v5413, %v5567
      %v5646 = vmax.f32 %v5414, %v5568
      %v5647 = vmax.f32 %v5415, %v5569
      %v5648 = vmax.f32 %v5416, %v5570
      %v5649 = vmax.f32 %v5417, %v5532
      %v5650 = vmax.f32 %v5418, %v5571
      %v5651 = vmax.f32 %v5419, %v5572
      %v5652 = vmax.f32 %v5420, %v5573
      %v5653 = vmax.f32 %v5421, %v5574
      %v5654 = vmax.f32 %v5422, %v5542
      %v5655 = vpack.c.bf16 %v5620, %v5615
      %v5656 = vpack.c.bf16 %v5621, %v5616
      %v5657 = vpack.c.bf16 %v5622, %v5617
      %v5658 = vpack.c.bf16 %v5623, %v5618
      %v5659 = vpack.c.bf16 %v5624, %v5619
      %v5660 = vpack.c.bf16 %v5630, %v5625
      %v5661 = vpack.c.bf16 %v5631, %v5626
      %v5662 = vpack.c.bf16 %v5632, %v5627
      %v5663 = vpack.c.bf16 %v5633, %v5628
      %v5664 = vpack.c.bf16 %v5634, %v5629
      %v5665 = vpack.c.bf16 %v5640, %v5635
      %v5666 = vpack.c.bf16 %v5641, %v5636
      %v5667 = vpack.c.bf16 %v5642, %v5637
      %v5668 = vpack.c.bf16 %v5643, %v5638
      %v5669 = vpack.c.bf16 %v5644, %v5639
      %v5670 = vpack.c.bf16 %v5650, %v5645
      %v5671 = vpack.c.bf16 %v5651, %v5646
      %v5672 = vpack.c.bf16 %v5652, %v5647
      %v5673 = vpack.c.bf16 %v5653, %v5648
      %v5674 = vpack.c.bf16 %v5654, %v5649
      %v5675 = vld [vmem:[%s5] sm:$0xff]
      %v5676 = vld [vmem:[%s5 + $0x8] sm:$0xff]
      %v5677 = vld [vmem:[%s5 + $0x10] sm:$0xff]
      %v5678 = vld [vmem:[%s5 + $0x18] sm:$0xff]
      %v5679 = vld [vmem:[%s5 + $0x20] sm:$0xff]
      %v5680 = vld [vmem:[%s5 + $0x28] sm:$0xff]
      %v5681 = vld [vmem:[%s5 + $0x30] sm:$0xff]
      %v5682 = vld [vmem:[%s5 + $0x38] sm:$0xff]
      %v5683 = vld [vmem:[%s5 + $0x40] sm:$0xff]
      %v5684 = vld [vmem:[%s5 + $0x48] sm:$0xff]
      %v5685 = vld [vmem:[%s5 + $0x50] sm:$0xff]
      %v5686 = vld [vmem:[%s5 + $0x58] sm:$0xff]
      %v5687 = vld [vmem:[%s5 + $0x60] sm:$0xff]
      %v5688 = vld [vmem:[%s5 + $0x68] sm:$0xff]
      %v5689 = vld [vmem:[%s5 + $0x70] sm:$0xff]
      %v5690 = vld [vmem:[%s5 + $0x78] sm:$0xff]
      %v5691 = vld [vmem:[%s5 + $0x80] sm:$0xff]
      %v5692 = vld [vmem:[%s5 + $0x88] sm:$0xff]
      %v5693 = vld [vmem:[%s5 + $0x90] sm:$0xff]
      %v5694 = vld [vmem:[%s5 + $0x98] sm:$0xff]
      %v5695 = vld [vmem:[%s5 + $0xa0] sm:$0xff]
      %v5696 = vld [vmem:[%s5 + $0xa8] sm:$0xff]
      %v5697 = vld [vmem:[%s5 + $0xb0] sm:$0xff]
      %v5698 = vld [vmem:[%s5 + $0xb8] sm:$0xff]
      %v5699 = vld [vmem:[%s5 + $0xc0] sm:$0xff]
      %v5700 = vld [vmem:[%s5 + $0xc8] sm:$0xff]
      %v5701 = vld [vmem:[%s5 + $0xd0] sm:$0xff]
      %v5702 = vld [vmem:[%s5 + $0xd8] sm:$0xff]
      %v5703 = vld [vmem:[%s5 + $0xe0] sm:$0xff]
      %v5704 = vld [vmem:[%s5 + $0xe8] sm:$0xff]
      %v5705 = vld [vmem:[%s5 + $0xf0] sm:$0xff]
      %v5706 = vld [vmem:[%s5 + $0xf8] sm:$0xff]
      %v5707 = vld [vmem:[%s5 + $0x100] sm:$0xff]
      %v5708 = vld [vmem:[%s5 + $0x108] sm:$0xff]
      %v5709 = vld [vmem:[%s5 + $0x110] sm:$0xff]
      %v5710 = vld [vmem:[%s5 + $0x118] sm:$0xff]
      %v5711 = vld [vmem:[%s5 + $0x120] sm:$0xff]
      %v5712 = vld [vmem:[%s5 + $0x128] sm:$0xff]
      %v5713 = vld [vmem:[%s5 + $0x130] sm:$0xff]
      %v5714 = vld [vmem:[%s5 + $0x138] sm:$0xff]
      %v5715 = vld [vmem:[%s5 + $0x140] sm:$0xff]
      %v5716 = vld [vmem:[%s5 + $0x148] sm:$0xff]
      %v5717 = vld [vmem:[%s5 + $0x150] sm:$0xff]
      %v5718 = vld [vmem:[%s5 + $0x158] sm:$0xff]
      %v5719 = vld [vmem:[%s5 + $0x160] sm:$0xff]
      %v5720 = vld [vmem:[%s5 + $0x168] sm:$0xff]
      %v5721 = vld [vmem:[%s5 + $0x170] sm:$0xff]
      %v5722 = vld [vmem:[%s5 + $0x178] sm:$0xff]
      %v5723 = vld [vmem:[%s5 + $0x180] sm:$0xff]
      %v5724 = vld [vmem:[%s5 + $0x188] sm:$0xff]
      %v5725 = vld [vmem:[%s5 + $0x190] sm:$0xff]
      %v5726 = vld [vmem:[%s5 + $0x198] sm:$0xff]
      %v5727 = vld [vmem:[%s5 + $0x1a0] sm:$0xff]
      %v5728 = vld [vmem:[%s5 + $0x1a8] sm:$0xff]
      %v5729 = vld [vmem:[%s5 + $0x1b0] sm:$0xff]
      %v5730 = vld [vmem:[%s5 + $0x1b8] sm:$0xff]
      %v5731 = vld [vmem:[%s5 + $0x1c0] sm:$0xff]
      %v5732 = vld [vmem:[%s5 + $0x1c8] sm:$0xff]
      %v5733 = vld [vmem:[%s5 + $0x1d0] sm:$0xff]
      %v5734 = vld [vmem:[%s5 + $0x1d8] sm:$0xff]
      %v5735 = vld [vmem:[%s5 + $0x1e0] sm:$0xff]
      %v5736 = vld [vmem:[%s5 + $0x1e8] sm:$0xff]
      %v5737 = vld [vmem:[%s5 + $0x1f0] sm:$0xff]
      %v5738 = vld [vmem:[%s5 + $0x1f8] sm:$0xff]
      %v5739 = vld [vmem:[%s5 + $0x200] sm:$0xff]
      %v5740 = vld [vmem:[%s5 + $0x208] sm:$0xff]
      %v5741 = vld [vmem:[%s5 + $0x210] sm:$0xff]
      %v5742 = vld [vmem:[%s5 + $0x218] sm:$0xff]
      %v5743 = vld [vmem:[%s5 + $0x220] sm:$0xff]
      %v5744 = vld [vmem:[%s5 + $0x228] sm:$0xff]
      %v5745 = vld [vmem:[%s5 + $0x230] sm:$0xff]
      %v5746 = vld [vmem:[%s5 + $0x238] sm:$0xff]
      %v5747 = vld [vmem:[%s5 + $0x240] sm:$0xff]
      %v5748 = vld [vmem:[%s5 + $0x248] sm:$0xff]
      %v5749 = vld [vmem:[%s5 + $0x250] sm:$0xff]
      %v5750 = vld [vmem:[%s5 + $0x258] sm:$0xff]
      %v5751 = vld [vmem:[%s5 + $0x260] sm:$0xff]
      %v5752 = vld [vmem:[%s5 + $0x268] sm:$0xff]
      %v5753 = vld [vmem:[%s5 + $0x270] sm:$0xff]
      %v5754 = vld [vmem:[%s5 + $0x278] sm:$0xff]
      %v5835 = vunpack.c.l.b16 %v5675
      %v5836 = vunpack.c.h.b16 %v5675
      %v5837 = vunpack.c.l.b16 %v5676
      %v5838 = vunpack.c.h.b16 %v5676
      %v5839 = vunpack.c.l.b16 %v5677
      %v5840 = vunpack.c.h.b16 %v5677
      %v5841 = vunpack.c.l.b16 %v5678
      %v5842 = vunpack.c.h.b16 %v5678
      %v5843 = vunpack.c.l.b16 %v5679
      %v5844 = vunpack.c.h.b16 %v5679
      %v5845 = vunpack.c.l.b16 %v5680
      %v5846 = vunpack.c.h.b16 %v5680
      %v5847 = vunpack.c.l.b16 %v5681
      %v5848 = vunpack.c.h.b16 %v5681
      %v5849 = vunpack.c.l.b16 %v5682
      %v5850 = vunpack.c.h.b16 %v5682
      %v5851 = vunpack.c.l.b16 %v5683
      %v5852 = vunpack.c.h.b16 %v5683
      %v5853 = vunpack.c.l.b16 %v5684
      %v5854 = vunpack.c.h.b16 %v5684
      %v5855 = vunpack.c.l.b16 %v5685
      %v5856 = vunpack.c.h.b16 %v5685
      %v5857 = vunpack.c.l.b16 %v5686
      %v5858 = vunpack.c.h.b16 %v5686
      %v5859 = vunpack.c.l.b16 %v5687
      %v5860 = vunpack.c.h.b16 %v5687
      %v5861 = vunpack.c.l.b16 %v5688
      %v5862 = vunpack.c.h.b16 %v5688
      %v5863 = vunpack.c.l.b16 %v5689
      %v5864 = vunpack.c.h.b16 %v5689
      %v5865 = vunpack.c.l.b16 %v5690
      %v5866 = vunpack.c.h.b16 %v5690
      %v5867 = vunpack.c.l.b16 %v5691
      %v5868 = vunpack.c.h.b16 %v5691
      %v5869 = vunpack.c.l.b16 %v5692
      %v5870 = vunpack.c.h.b16 %v5692
      %v5871 = vunpack.c.l.b16 %v5693
      %v5872 = vunpack.c.h.b16 %v5693
      %v5873 = vunpack.c.l.b16 %v5694
      %v5874 = vunpack.c.h.b16 %v5694
      %v5875 = vunpack.c.l.b16 %v5695
      %v5876 = vunpack.c.h.b16 %v5695
      %v5877 = vunpack.c.l.b16 %v5696
      %v5878 = vunpack.c.h.b16 %v5696
      %v5879 = vunpack.c.l.b16 %v5697
      %v5880 = vunpack.c.h.b16 %v5697
      %v5881 = vunpack.c.l.b16 %v5698
      %v5882 = vunpack.c.h.b16 %v5698
      %v5883 = vunpack.c.l.b16 %v5699
      %v5884 = vunpack.c.h.b16 %v5699
      %v5885 = vunpack.c.l.b16 %v5700
      %v5886 = vunpack.c.h.b16 %v5700
      %v5887 = vunpack.c.l.b16 %v5701
      %v5888 = vunpack.c.h.b16 %v5701
      %v5889 = vunpack.c.l.b16 %v5702
      %v5890 = vunpack.c.h.b16 %v5702
      %v5891 = vunpack.c.l.b16 %v5703
      %v5892 = vunpack.c.h.b16 %v5703
      %v5893 = vunpack.c.l.b16 %v5704
      %v5894 = vunpack.c.h.b16 %v5704
      %v5895 = vunpack.c.l.b16 %v5705
      %v5896 = vunpack.c.h.b16 %v5705
      %v5897 = vunpack.c.l.b16 %v5706
      %v5898 = vunpack.c.h.b16 %v5706
      %v5899 = vunpack.c.l.b16 %v5707
      %v5900 = vunpack.c.h.b16 %v5707
      %v5901 = vunpack.c.l.b16 %v5708
      %v5902 = vunpack.c.h.b16 %v5708
      %v5903 = vunpack.c.l.b16 %v5709
      %v5904 = vunpack.c.h.b16 %v5709
      %v5905 = vunpack.c.l.b16 %v5710
      %v5906 = vunpack.c.h.b16 %v5710
      %v5907 = vunpack.c.l.b16 %v5711
      %v5908 = vunpack.c.h.b16 %v5711
      %v5909 = vunpack.c.l.b16 %v5712
      %v5910 = vunpack.c.h.b16 %v5712
      %v5911 = vunpack.c.l.b16 %v5713
      %v5912 = vunpack.c.h.b16 %v5713
      %v5913 = vunpack.c.l.b16 %v5714
      %v5914 = vunpack.c.h.b16 %v5714
      %v5915 = vunpack.c.l.b16 %v5715
      %v5916 = vunpack.c.h.b16 %v5715
      %v5917 = vunpack.c.l.b16 %v5716
      %v5918 = vunpack.c.h.b16 %v5716
      %v5919 = vunpack.c.l.b16 %v5717
      %v5920 = vunpack.c.h.b16 %v5717
      %v5921 = vunpack.c.l.b16 %v5718
      %v5922 = vunpack.c.h.b16 %v5718
      %v5923 = vunpack.c.l.b16 %v5719
      %v5924 = vunpack.c.h.b16 %v5719
      %v5925 = vunpack.c.l.b16 %v5720
      %v5926 = vunpack.c.h.b16 %v5720
      %v5927 = vunpack.c.l.b16 %v5721
      %v5928 = vunpack.c.h.b16 %v5721
      %v5929 = vunpack.c.l.b16 %v5722
      %v5930 = vunpack.c.h.b16 %v5722
      %v5931 = vunpack.c.l.b16 %v5723
      %v5932 = vunpack.c.h.b16 %v5723
      %v5933 = vunpack.c.l.b16 %v5724
      %v5934 = vunpack.c.h.b16 %v5724
      %v5935 = vunpack.c.l.b16 %v5725
      %v5936 = vunpack.c.h.b16 %v5725
      %v5937 = vunpack.c.l.b16 %v5726
      %v5938 = vunpack.c.h.b16 %v5726
      %v5939 = vunpack.c.l.b16 %v5727
      %v5940 = vunpack.c.h.b16 %v5727
      %v5941 = vunpack.c.l.b16 %v5728
      %v5942 = vunpack.c.h.b16 %v5728
      %v5943 = vunpack.c.l.b16 %v5729
      %v5944 = vunpack.c.h.b16 %v5729
      %v5945 = vunpack.c.l.b16 %v5730
      %v5946 = vunpack.c.h.b16 %v5730
      %v5947 = vunpack.c.l.b16 %v5731
      %v5948 = vunpack.c.h.b16 %v5731
      %v5949 = vunpack.c.l.b16 %v5732
      %v5950 = vunpack.c.h.b16 %v5732
      %v5951 = vunpack.c.l.b16 %v5733
      %v5952 = vunpack.c.h.b16 %v5733
      %v5953 = vunpack.c.l.b16 %v5734
      %v5954 = vunpack.c.h.b16 %v5734
      %v5955 = vunpack.c.l.b16 %v5735
      %v5956 = vunpack.c.h.b16 %v5735
      %v5957 = vunpack.c.l.b16 %v5736
      %v5958 = vunpack.c.h.b16 %v5736
      %v5959 = vunpack.c.l.b16 %v5737
      %v5960 = vunpack.c.h.b16 %v5737
      %v5961 = vunpack.c.l.b16 %v5738
      %v5962 = vunpack.c.h.b16 %v5738
      %v5963 = vunpack.c.l.b16 %v5739
      %v5964 = vunpack.c.h.b16 %v5739
      %v5965 = vunpack.c.l.b16 %v5740
      %v5966 = vunpack.c.h.b16 %v5740
      %v5967 = vunpack.c.l.b16 %v5741
      %v5968 = vunpack.c.h.b16 %v5741
      %v5969 = vunpack.c.l.b16 %v5742
      %v5970 = vunpack.c.h.b16 %v5742
      %v5971 = vunpack.c.l.b16 %v5743
      %v5972 = vunpack.c.h.b16 %v5743
      %v5973 = vunpack.c.l.b16 %v5744
      %v5974 = vunpack.c.h.b16 %v5744
      %v5975 = vunpack.c.l.b16 %v5745
      %v5976 = vunpack.c.h.b16 %v5745
      %v5977 = vunpack.c.l.b16 %v5746
      %v5978 = vunpack.c.h.b16 %v5746
      %v5979 = vunpack.c.l.b16 %v5747
      %v5980 = vunpack.c.h.b16 %v5747
      %v5981 = vunpack.c.l.b16 %v5748
      %v5982 = vunpack.c.h.b16 %v5748
      %v5983 = vunpack.c.l.b16 %v5749
      %v5984 = vunpack.c.h.b16 %v5749
      %v5985 = vunpack.c.l.b16 %v5750
      %v5986 = vunpack.c.h.b16 %v5750
      %v5987 = vunpack.c.l.b16 %v5751
      %v5988 = vunpack.c.h.b16 %v5751
      %v5989 = vunpack.c.l.b16 %v5752
      %v5990 = vunpack.c.h.b16 %v5752
      %v5991 = vunpack.c.l.b16 %v5753
      %v5992 = vunpack.c.h.b16 %v5753
      %v5993 = vunpack.c.l.b16 %v5754
      %v5994 = vunpack.c.h.b16 %v5754
      %v5995 = vpack.c.b16 %v5837, %v5835
      %v5996 = vpack.c.b16 %v5838, %v5836
      %v5997 = vpack.c.b16 %v5841, %v5839
      %v5998 = vpack.c.b16 %v5842, %v5840
      %v5999 = vpack.c.b16 %v5845, %v5843
      %v6000 = vpack.c.b16 %v5846, %v5844
      %v6001 = vpack.c.b16 %v5849, %v5847
      %v6002 = vpack.c.b16 %v5850, %v5848
      %v6003 = vpack.c.b16 %v5853, %v5851
      %v6004 = vpack.c.b16 %v5854, %v5852
      %v6005 = vpack.c.b16 %v5857, %v5855
      %v6006 = vpack.c.b16 %v5858, %v5856
      %v6007 = vpack.c.b16 %v5861, %v5859
      %v6008 = vpack.c.b16 %v5862, %v5860
      %v6009 = vpack.c.b16 %v5865, %v5863
      %v6010 = vpack.c.b16 %v5866, %v5864
      %v6011 = vpack.c.b16 %v5869, %v5867
      %v6012 = vpack.c.b16 %v5870, %v5868
      %v6013 = vpack.c.b16 %v5873, %v5871
      %v6014 = vpack.c.b16 %v5874, %v5872
      %v6015 = vpack.c.b16 %v5877, %v5875
      %v6016 = vpack.c.b16 %v5878, %v5876
      %v6017 = vpack.c.b16 %v5881, %v5879
      %v6018 = vpack.c.b16 %v5882, %v5880
      %v6019 = vpack.c.b16 %v5885, %v5883
      %v6020 = vpack.c.b16 %v5886, %v5884
      %v6021 = vpack.c.b16 %v5889, %v5887
      %v6022 = vpack.c.b16 %v5890, %v5888
      %v6023 = vpack.c.b16 %v5893, %v5891
      %v6024 = vpack.c.b16 %v5894, %v5892
      %v6025 = vpack.c.b16 %v5897, %v5895
      %v6026 = vpack.c.b16 %v5898, %v5896
      %v6027 = vpack.c.b16 %v5901, %v5899
      %v6028 = vpack.c.b16 %v5902, %v5900
      %v6029 = vpack.c.b16 %v5905, %v5903
      %v6030 = vpack.c.b16 %v5906, %v5904
      %v6031 = vpack.c.b16 %v5909, %v5907
      %v6032 = vpack.c.b16 %v5910, %v5908
      %v6033 = vpack.c.b16 %v5913, %v5911
      %v6034 = vpack.c.b16 %v5914, %v5912
      %v6035 = vpack.c.b16 %v5917, %v5915
      %v6036 = vpack.c.b16 %v5918, %v5916
      %v6037 = vpack.c.b16 %v5921, %v5919
      %v6038 = vpack.c.b16 %v5922, %v5920
      %v6039 = vpack.c.b16 %v5925, %v5923
      %v6040 = vpack.c.b16 %v5926, %v5924
      %v6041 = vpack.c.b16 %v5929, %v5927
      %v6042 = vpack.c.b16 %v5930, %v5928
      %v6043 = vpack.c.b16 %v5933, %v5931
      %v6044 = vpack.c.b16 %v5934, %v5932
      %v6045 = vpack.c.b16 %v5937, %v5935
      %v6046 = vpack.c.b16 %v5938, %v5936
      %v6047 = vpack.c.b16 %v5941, %v5939
      %v6048 = vpack.c.b16 %v5942, %v5940
      %v6049 = vpack.c.b16 %v5945, %v5943
      %v6050 = vpack.c.b16 %v5946, %v5944
      %v6051 = vpack.c.b16 %v5949, %v5947
      %v6052 = vpack.c.b16 %v5950, %v5948
      %v6053 = vpack.c.b16 %v5953, %v5951
      %v6054 = vpack.c.b16 %v5954, %v5952
      %v6055 = vpack.c.b16 %v5957, %v5955
      %v6056 = vpack.c.b16 %v5958, %v5956
      %v6057 = vpack.c.b16 %v5961, %v5959
      %v6058 = vpack.c.b16 %v5962, %v5960
      %v6059 = vpack.c.b16 %v5965, %v5963
      %v6060 = vpack.c.b16 %v5966, %v5964
      %v6061 = vpack.c.b16 %v5969, %v5967
      %v6062 = vpack.c.b16 %v5970, %v5968
      %v6063 = vpack.c.b16 %v5973, %v5971
      %v6064 = vpack.c.b16 %v5974, %v5972
      %v6065 = vpack.c.b16 %v5977, %v5975
      %v6066 = vpack.c.b16 %v5978, %v5976
      %v6067 = vpack.c.b16 %v5981, %v5979
      %v6068 = vpack.c.b16 %v5982, %v5980
      %v6069 = vpack.c.b16 %v5985, %v5983
      %v6070 = vpack.c.b16 %v5986, %v5984
      %v6071 = vpack.c.b16 %v5989, %v5987
      %v6072 = vpack.c.b16 %v5990, %v5988
      %v6073 = vpack.c.b16 %v5993, %v5991
      %v6074 = vpack.c.b16 %v5994, %v5992
      %v6154 = vsel %vm478, %v5659, 0
      %v6157 = vsel %vm478, %v5664, 0
      %v6160 = vsel %vm478, %v5669, 0
      %v6163 = vsel %vm478, %v5674, 0
      %vm6165 = vcmask 1046528
      %vm6166 = vcmask 1047552
      %v6167 = vsel %vm6165, 4294967295, 65535
      %v6168 = vsel %vm6166, %v6167, 0
      %v6170 = vand.u32 %v6073, %v6168
      %v6173 = vand.u32 %v6074, %v6168
      %6175 = vmatprep.subr.bf16.mxu0 %v5996
      %6176 = vmatpush1.bf16.msra.mxu0 %v5995
      %6177 = vmatprep.subr.bf16.mxu0 %v5998
      %6178 = vmatpush1.bf16.msra.mxu0 %v5997
      %6179 = vmatprep.subr.bf16.mxu0 %v6000
      %6180 = vmatpush1.bf16.msra.mxu0 %v5999
      %6181 = vmatprep.subr.bf16.mxu0 %v6002
      %6182 = vmatpush1.bf16.msra.mxu0 %v6001
      %6183 = vmatprep.subr.bf16.mxu0 %v6004
      %6184 = vmatpush1.bf16.msra.mxu0 %v6003
      %6185 = vmatprep.subr.bf16.mxu0 %v6006
      %6186 = vmatpush1.bf16.msra.mxu0 %v6005
      %6187 = vmatprep.subr.bf16.mxu0 %v6008
      %6188 = vmatpush1.bf16.msra.mxu0 %v6007
      %6189 = vmatprep.subr.bf16.mxu0 %v6010
      %6190 = vmatpush1.bf16.msra.mxu0 %v6009
      %6191 = vmatprep.subr.bf16.mxu0 %v6012
      %6192 = vmatpush1.bf16.msra.mxu0 %v6011
      %6193 = vmatprep.subr.bf16.mxu0 %v6014
      %6194 = vmatpush1.bf16.msra.mxu0 %v6013
      %6195 = vmatprep.subr.bf16.mxu0 %v6016
      %6196 = vmatpush1.bf16.msra.mxu0 %v6015
      %6197 = vmatprep.subr.bf16.mxu0 %v6018
      %6198 = vmatpush1.bf16.msra.mxu0 %v6017
      %6199 = vmatprep.subr.bf16.mxu0 %v6020
      %6200 = vmatpush1.bf16.msra.mxu0 %v6019
      %6201 = vmatprep.subr.bf16.mxu0 %v6022
      %6202 = vmatpush1.bf16.msra.mxu0 %v6021
      %6203 = vmatprep.subr.bf16.mxu0 %v6024
      %6204 = vmatpush1.bf16.msra.mxu0 %v6023
      %6205 = vmatprep.subr.bf16.mxu0 %v6026
      %6206 = vmatpush1.bf16.msra.mxu0 %v6025
      %6207 = vmatprep.mubr.bf16.mxu0 %v5656
      %6208 = vmatmul.mubr.bf16.gmra.mrb[0].mxu0 %v5655
      %v6209 = vpop.f32.mrb[0].mxu0
      %v6210 = vadd.f32 0.0, %v6209
      %v6211 = vpop.f32.mrb[0].mxu0
      %v6212 = vadd.f32 0.0, %v6211
      %v6213 = vpop.f32.mrb[0].mxu0
      %v6214 = vadd.f32 0.0, %v6213
      %v6215 = vpop.f32.mrb[0].mxu0
      %v6216 = vadd.f32 0.0, %v6215
      %6217 = vmatprep.mubr.bf16.mxu0 %v5661
      %6218 = vmatmul.mubr.bf16.gmra.mrb[0].mxu0 %v5660
      %v6219 = vpop.f32.mrb[0].mxu0
      %v6220 = vadd.f32 0.0, %v6219
      %v6221 = vpop.f32.mrb[0].mxu0
      %v6222 = vadd.f32 0.0, %v6221
      %v6223 = vpop.f32.mrb[0].mxu0
      %v6224 = vadd.f32 0.0, %v6223
      %v6225 = vpop.f32.mrb[0].mxu0
      %v6226 = vadd.f32 0.0, %v6225
      %6227 = vmatprep.mubr.bf16.mxu0 %v5666
      %6228 = vmatmul.mubr.bf16.gmra.mrb[0].mxu0 %v5665
      %v6229 = vpop.f32.mrb[0].mxu0
      %v6230 = vadd.f32 0.0, %v6229
      %v6231 = vpop.f32.mrb[0].mxu0
      %v6232 = vadd.f32 0.0, %v6231
      %v6233 = vpop.f32.mrb[0].mxu0
      %v6234 = vadd.f32 0.0, %v6233
      %v6235 = vpop.f32.mrb[0].mxu0
      %v6236 = vadd.f32 0.0, %v6235
      %6237 = vmatprep.mubr.bf16.mxu0 %v5671
      %6238 = vmatmul.mubr.bf16.gmra.mrb[0].mxu0 %v5670
      %v6239 = vpop.f32.mrb[0].mxu0
      %v6240 = vadd.f32 0.0, %v6239
      %v6241 = vpop.f32.mrb[0].mxu0
      %v6242 = vadd.f32 0.0, %v6241
      %v6243 = vpop.f32.mrb[0].mxu0
      %v6244 = vadd.f32 0.0, %v6243
      %v6245 = vpop.f32.mrb[0].mxu0
      %v6246 = vadd.f32 0.0, %v6245
      %6247 = vdwg.mxu0
      %6248 = vmatprep.subr.bf16.mxu0 %v6028
      %6249 = vmatpush1.bf16.msra.mxu0 %v6027
      %6250 = vmatprep.subr.bf16.mxu0 %v6030
      %6251 = vmatpush1.bf16.msra.mxu0 %v6029
      %6252 = vmatprep.subr.bf16.mxu0 %v6032
      %6253 = vmatpush1.bf16.msra.mxu0 %v6031
      %6254 = vmatprep.subr.bf16.mxu0 %v6034
      %6255 = vmatpush1.bf16.msra.mxu0 %v6033
      %6256 = vmatprep.subr.bf16.mxu0 %v6036
      %6257 = vmatpush1.bf16.msra.mxu0 %v6035
      %6258 = vmatprep.subr.bf16.mxu0 %v6038
      %6259 = vmatpush1.bf16.msra.mxu0 %v6037
      %6260 = vmatprep.subr.bf16.mxu0 %v6040
      %6261 = vmatpush1.bf16.msra.mxu0 %v6039
      %6262 = vmatprep.subr.bf16.mxu0 %v6042
      %6263 = vmatpush1.bf16.msra.mxu0 %v6041
      %6264 = vmatprep.subr.bf16.mxu0 %v6044
      %6265 = vmatpush1.bf16.msra.mxu0 %v6043
      %6266 = vmatprep.subr.bf16.mxu0 %v6046
      %6267 = vmatpush1.bf16.msra.mxu0 %v6045
      %6268 = vmatprep.subr.bf16.mxu0 %v6048
      %6269 = vmatpush1.bf16.msra.mxu0 %v6047
      %6270 = vmatprep.subr.bf16.mxu0 %v6050
      %6271 = vmatpush1.bf16.msra.mxu0 %v6049
      %6272 = vmatprep.subr.bf16.mxu0 %v6052
      %6273 = vmatpush1.bf16.msra.mxu0 %v6051
      %6274 = vmatprep.subr.bf16.mxu0 %v6054
      %6275 = vmatpush1.bf16.msra.mxu0 %v6053
      %6276 = vmatprep.subr.bf16.mxu0 %v6056
      %6277 = vmatpush1.bf16.msra.mxu0 %v6055
      %6278 = vmatprep.subr.bf16.mxu0 %v6058
      %6279 = vmatpush1.bf16.msra.mxu0 %v6057
      %6280 = vmatprep.mubr.bf16.mxu0 %v5658
      %6281 = vmatmul.mubr.bf16.gmra.mrb[0].mxu0 %v5657
      %v6282 = vpop.f32.mrb[0].mxu0
      %v6283 = vadd.f32 %v6210, %v6282
      %v6284 = vpop.f32.mrb[0].mxu0
      %v6285 = vadd.f32 %v6212, %v6284
      %v6286 = vpop.f32.mrb[0].mxu0
      %v6287 = vadd.f32 %v6214, %v6286
      %v6288 = vpop.f32.mrb[0].mxu0
      %v6289 = vadd.f32 %v6216, %v6288
      %6290 = vmatprep.mubr.bf16.mxu0 %v5663
      %6291 = vmatmul.mubr.bf16.gmra.mrb[0].mxu0 %v5662
      %v6292 = vpop.f32.mrb[0].mxu0
      %v6293 = vadd.f32 %v6220, %v6292
      %v6294 = vpop.f32.mrb[0].mxu0
      %v6295 = vadd.f32 %v6222, %v6294
      %v6296 = vpop.f32.mrb[0].mxu0
      %v6297 = vadd.f32 %v6224, %v6296
      %v6298 = vpop.f32.mrb[0].mxu0
      %v6299 = vadd.f32 %v6226, %v6298
      %6300 = vmatprep.mubr.bf16.mxu0 %v5668
      %6301 = vmatmul.mubr.bf16.gmra.mrb[0].mxu0 %v5667
      %v6302 = vpop.f32.mrb[0].mxu0
      %v6303 = vadd.f32 %v6230, %v6302
      %v6304 = vpop.f32.mrb[0].mxu0
      %v6305 = vadd.f32 %v6232, %v6304
      %v6306 = vpop.f32.mrb[0].mxu0
      %v6307 = vadd.f32 %v6234, %v6306
      %v6308 = vpop.f32.mrb[0].mxu0
      %v6309 = vadd.f32 %v6236, %v6308
      %6310 = vmatprep.mubr.bf16.mxu0 %v5673
      %6311 = vmatmul.mubr.bf16.gmra.mrb[0].mxu0 %v5672
      %v6312 = vpop.f32.mrb[0].mxu0
      %v6313 = vadd.f32 %v6240, %v6312
      %v6314 = vpop.f32.mrb[0].mxu0
      %v6315 = vadd.f32 %v6242, %v6314
      %v6316 = vpop.f32.mrb[0].mxu0
      %v6317 = vadd.f32 %v6244, %v6316
      %v6318 = vpop.f32.mrb[0].mxu0
      %v6319 = vadd.f32 %v6246, %v6318
      %6320 = vdwg.mxu0
      %6321 = vmatprep.subr.bf16.mxu0 %v6060
      %6322 = vmatpush1.bf16.msra.mxu0 %v6059
      %6323 = vmatprep.subr.bf16.mxu0 %v6062
      %6324 = vmatpush1.bf16.msra.mxu0 %v6061
      %6325 = vmatprep.subr.bf16.mxu0 %v6064
      %6326 = vmatpush1.bf16.msra.mxu0 %v6063
      %6327 = vmatprep.subr.bf16.mxu0 %v6066
      %6328 = vmatpush1.bf16.msra.mxu0 %v6065
      %6329 = vmatprep.subr.bf16.mxu0 %v6068
      %6330 = vmatpush1.bf16.msra.mxu0 %v6067
      %6331 = vmatprep.subr.bf16.mxu0 %v6070
      %6332 = vmatpush1.bf16.msra.mxu0 %v6069
      %6333 = vmatprep.subr.bf16.mxu0 %v6072
      %6334 = vmatpush1.bf16.msra.mxu0 %v6071
      %6335 = vmatprep.subr.bf16.mxu0 %v6173
      %6336 = vmatpush1.bf16.msra.mxu0 %v6170
      %6337 = vmatprep.subr.bf16.mxu0 0
      %6338 = vmatpush1.bf16.msra.mxu0 0
      %6339 = vmatprep.subr.bf16.mxu0 0
      %6340 = vmatpush1.bf16.msra.mxu0 0
      %6341 = vmatprep.subr.bf16.mxu0 0
      %6342 = vmatpush1.bf16.msra.mxu0 0
      %6343 = vmatprep.subr.bf16.mxu0 0
      %6344 = vmatpush1.bf16.msra.mxu0 0
      %6345 = vmatprep.subr.bf16.mxu0 0
      %6346 = vmatpush1.bf16.msra.mxu0 0
      %6347 = vmatprep.subr.bf16.mxu0 0
      %6348 = vmatpush1.bf16.msra.mxu0 0
      %6349 = vmatprep.subr.bf16.mxu0 0
      %6350 = vmatpush1.bf16.msra.mxu0 0
      %6351 = vmatprep.subr.bf16.mxu0 0
      %6352 = vmatpush1.bf16.msra.mxu0 0
      %6353 = vmatprep.mubr.bf16.mxu0 0
      %6354 = vmatmul.mubr.bf16.gmra.mrb[0].mxu0 %v6154
      %v6355 = vpop.f32.mrb[0].mxu0
      %v6356 = vadd.f32 %v6283, %v6355
      %v6357 = vpop.f32.mrb[0].mxu0
      %v6358 = vadd.f32 %v6285, %v6357
      %v6359 = vpop.f32.mrb[0].mxu0
      %v6360 = vadd.f32 %v6287, %v6359
      %v6361 = vpop.f32.mrb[0].mxu0
      %v6362 = vadd.f32 %v6289, %v6361
      %6363 = vmatprep.mubr.bf16.mxu0 0
      %6364 = vmatmul.mubr.bf16.gmra.mrb[0].mxu0 %v6157
      %v6365 = vpop.f32.mrb[0].mxu0
      %v6366 = vadd.f32 %v6293, %v6365
      %v6367 = vpop.f32.mrb[0].mxu0
      %v6368 = vadd.f32 %v6295, %v6367
      %v6369 = vpop.f32.mrb[0].mxu0
      %v6370 = vadd.f32 %v6297, %v6369
      %v6371 = vpop.f32.mrb[0].mxu0
      %v6372 = vadd.f32 %v6299, %v6371
      %6373 = vmatprep.mubr.bf16.mxu0 0
      %6374 = vmatmul.mubr.bf16.gmra.mrb[0].mxu0 %v6160
      %v6375 = vpop.f32.mrb[0].mxu0
      %v6376 = vadd.f32 %v6303, %v6375
      %v6377 = vpop.f32.mrb[0].mxu0
      %v6378 = vadd.f32 %v6305, %v6377
      %v6379 = vpop.f32.mrb[0].mxu0
      %v6380 = vadd.f32 %v6307, %v6379
      %v6381 = vpop.f32.mrb[0].mxu0
      %v6382 = vadd.f32 %v6309, %v6381
      %6383 = vmatprep.mubr.bf16.mxu0 0
      %6384 = vmatmul.mubr.bf16.gmra.mrb[0].mxu0 %v6163
      %v6385 = vpop.f32.mrb[0].mxu0
      %v6386 = vadd.f32 %v6313, %v6385
      %v6387 = vpop.f32.mrb[0].mxu0
      %v6388 = vadd.f32 %v6315, %v6387
      %v6389 = vpop.f32.mrb[0].mxu0
      %v6390 = vadd.f32 %v6317, %v6389
      %v6391 = vpop.f32.mrb[0].mxu0
      %v6392 = vadd.f32 %v6319, %v6391
      %6393 = vdwg.mxu0
      %v6394 = vpack.c.bf16 %v6360, %v6356
      %v6395 = vpack.c.bf16 %v6362, %v6358
      %v6396 = vpack.c.bf16 %v6370, %v6366
      %v6397 = vpack.c.bf16 %v6372, %v6368
      %v6398 = vpack.c.bf16 %v6380, %v6376
      %v6399 = vpack.c.bf16 %v6382, %v6378
      %v6400 = vpack.c.bf16 %v6390, %v6386
      %v6401 = vpack.c.bf16 %v6392, %v6388
      %v6410 = vunpack.c.l.b16 %v6394
      %v6411 = vunpack.c.l.b16 %v6395
      %v6412 = vunpack.c.h.b16 %v6394
      %v6413 = vunpack.c.h.b16 %v6395
      %v6414 = vunpack.c.l.b16 %v6396
      %v6415 = vunpack.c.l.b16 %v6397
      %v6416 = vunpack.c.h.b16 %v6396
      %v6417 = vunpack.c.h.b16 %v6397
      %v6418 = vunpack.c.l.b16 %v6398
      %v6419 = vunpack.c.l.b16 %v6399
      %v6420 = vunpack.c.h.b16 %v6398
      %v6421 = vunpack.c.h.b16 %v6399
      %v6422 = vunpack.c.l.b16 %v6400
      %v6423 = vunpack.c.l.b16 %v6401
      %v6424 = vunpack.c.h.b16 %v6400
      %v6425 = vunpack.c.h.b16 %v6401
      %v6426 = vpack.c.b16 %v6411, %v6410
      %v6427 = vpack.c.b16 %v6413, %v6412
      %v6428 = vpack.c.b16 %v6415, %v6414
      %v6429 = vpack.c.b16 %v6417, %v6416
      %v6430 = vpack.c.b16 %v6419, %v6418
      %v6431 = vpack.c.b16 %v6421, %v6420
      %v6432 = vpack.c.b16 %v6423, %v6422
      %v6433 = vpack.c.b16 %v6425, %v6424
      %vm6442 = vcmask 1043456
      %vm6443 = vcmask 130052
      %vm6444 = vmor %vm6443, %vm6442
      %6445 = vst.msk [vmem:[%s248] sm:$0xff] %vm6444, %v6426
      %6446 = vst.msk [vmem:[%s248 + $0x8] sm:$0xff] %vm6444, %v6427
      %6447 = vst.msk [vmem:[%s248 + $0x10] sm:$0xff] %vm6444, %v6428
      %6448 = vst.msk [vmem:[%s248 + $0x18] sm:$0xff] %vm6444, %v6429
      %6449 = vst.msk [vmem:[%s248 + $0x20] sm:$0xff] %vm6444, %v6430
      %6450 = vst.msk [vmem:[%s248 + $0x28] sm:$0xff] %vm6444, %v6431
      %6451 = vst.msk [vmem:[%s248 + $0x30] sm:$0xff] %vm6444, %v6432
      %6452 = vst.msk [vmem:[%s248 + $0x38] sm:$0xff] %vm6444, %v6433
      %p6453 = scmp.lt.s32.totalorder %s17, 1
      %s6454 = scalar_select %p6453, %s17, 1
      %s6455 = smul.addr %s6454, 16
      %s6456 = smul.addr %s6455, 4
      %s6457 = scalar_lea.vmem %s6, %s6456
      // Predicated region
      $region45: #{cnn_forward.2} parent=43 // pred_check
        %p6458 = pneg %p166
      $region46: #{cnn_forward.2} parent=43 // pred_check_branch
        %6460 = sbr.rel (%p6458) target = $region48
      $region47: #{cnn_forward.2} parent=43 // pred_region
        _
      $region48: #{cnn_forward.2} parent=43 // pred_fallthru
        _
    $region44: #{cnn_forward.2} parent=5 // pred_fallthru
      _
    %p6461 = scmp.le.s32.totalorder 2, %s12
    // Predicated region
    $region49: #{cnn_forward.2} parent=5 // pred_check
      %p6462 = pneg %p6461
    $region50: #{cnn_forward.2} parent=5 // pred_check_branch
      %6464 = sbr.rel (%p6462) target = $region52
    $region51: #{cnn_forward.2} parent=5 // pred_region
      %s6465 = ssub.s32 %s12, 2
      // Predicated region
      $region53: #{cnn_forward.2} parent=51 // pred_check
        %p6466 = pneg %p172
      $region54: #{cnn_forward.2} parent=51 // pred_check_branch
        %6468 = sbr.rel (%p6466) target = $region56
      $region55: #{cnn_forward.2} parent=51 // pred_region
        %p6469 = scmp.lt.s32.totalorder %s18, 1
        %s6470 = scalar_select %p6469, %s18, 1
        %s6471 = smul.addr %s6470, 16
        %s6472 = smul.addr %s6471, 4
        %s6473 = scalar_lea.vmem %s6, %s6472
      $region56: #{cnn_forward.2} parent=51 // pred_fallthru
        _
    $region52: #{cnn_forward.2} parent=5 // pred_fallthru
      _
  $region6: #{cnn_forward.2} parent=0 // loop_footer
    %s16 = sadd.s32 1, %s12
  $region7: #{cnn_forward.2} parent=0 // loop_footer_branch
    %11 = sbr.rel target = $region3
  $region8: #{cnn_forward.2} parent=0 // loop_exit
    _

// kernel: cnn_forward.3
$region0: #{cnn_forward.3}
  #allocation0 [shape = 'u32[]', space=smem, size = 0x4, offset = 0x4, fixed_abs, tag = 'smem constant byte address 0x4 - core index']
  #allocation1 [shape = 'u32[144,128]{1,0:T(1,128)}', space=vmem, size = 0x12000, scoped, tag = 'internal scratch']
  %s0 = inlined_call_operand.vmem [shape: bf16[2,9216], index: 0, kind: input, shape index: {}]
  %s1 = inlined_call_operand.hbm [shape: bf16[9216,128], index: 1, kind: input, shape index: {}]
  %s2 = inlined_call_operand.hbm [shape: f32[1,128], index: 2, kind: input, shape index: {}]
  %s3 = inlined_call_operand.vmem [shape: bf16[128,10], index: 3, kind: input, shape index: {}]
  %s4 = inlined_call_operand.hbm [shape: f32[1,10], index: 4, kind: input, shape index: {}]
  %s5 = inlined_call_operand.hbm [shape: f32[2,10], index: 5, kind: output, shape index: {}]
  %s6 = sld [smem:[#allocation0]]
  $region42: #{cnn_forward.3} parent=0
    _
  %s8 = ssub.s32 1, %s6
  %s9 = scalar_select 0, %s8, %s6
  $region1: #{cnn_forward.3} parent=0
    #allocation2 [shape = 'u8[2359296]{0}', space=vmem, size = 0x240000, scoped, tag = 'input window, operand 1, single buffered']
    #allocation3 [shape = 's32[1]{0}', space=sflag, size = 0x4, scoped, tag = 'scoped memory for cnn_forward.3']
    #allocation4 [shape = 's32[1]{0}', space=sflag, size = 0x4, scoped, tag = 'scoped memory for cnn_forward.3']
    #allocation5 [shape = 'u8[512]{0}', space=vmem, size = 0x400, scoped, tag = 'input window, operand 2, single buffered']
    #allocation6 [shape = 's32[1]{0}', space=sflag, size = 0x4, scoped, tag = 'scoped memory for cnn_forward.3']
    #allocation7 [shape = 'u8[512]{0}', space=vmem, size = 0x400, scoped, tag = 'input window, operand 4, single buffered']
    #allocation8 [shape = 'u8[1024]{0}', space=vmem, size = 0x400, scoped, tag = 'output window, operand 0, single buffered']
    %10 = vsyncpa [#allocation3], 0
    %11 = vsyncpa [#allocation6], 0
    %12 = vsyncpa [#allocation4], 0
    // Predicated region
    $region2: #{cnn_forward.3} parent=1 // pred_check
      _
    $region3: #{cnn_forward.3} parent=1 // pred_check_branch
      %14 = sbr.rel (0) target = $region5
    $region4: #{cnn_forward.3} parent=1 // pred_region
      _
    $region5: #{cnn_forward.3} parent=1 // pred_fallthru
      _
    // Predicated region
    $region6: #{cnn_forward.3} parent=1 // pred_check
      _
    $region7: #{cnn_forward.3} parent=1 // pred_check_branch
      %16 = sbr.rel (0) target = $region9
    $region8: #{cnn_forward.3} parent=1 // pred_region
      %s18 = ssub.s32 73728, 73728
      %19 = vsyncadd [#allocation3], %s18
      %s20 = sshll.u32 [#allocation2], 4
      %s21 = int_to_ptr.vmem [resolvable:$true] %s20
      %26 = dma.hbm_to_vmem [thread:$0]  %s1, 73728, %s21, [#allocation3], 64, 64, 4
    $region9: #{cnn_forward.3} parent=1 // pred_fallthru
      _
    // Predicated region
    $region10: #{cnn_forward.3} parent=1 // pred_check
      _
    $region11: #{cnn_forward.3} parent=1 // pred_check_branch
      %28 = sbr.rel (0) target = $region13
    $region12: #{cnn_forward.3} parent=1 // pred_region
      %s30 = ssub.s32 16, 16
      %31 = vsyncadd [#allocation6], %s30
      %s33 = sshll.u32 [#allocation5], 4
      %s34 = int_to_ptr.vmem [resolvable:$true] %s33
      %36 = dma.hbm_to_vmem [thread:$0]  %s2, 16, %s34, [#allocation6]
    $region13: #{cnn_forward.3} parent=1 // pred_fallthru
      _
    // Predicated region
    $region14: #{cnn_forward.3} parent=1 // pred_check
      _
    $region15: #{cnn_forward.3} parent=1 // pred_check_branch
      %38 = sbr.rel (0) target = $region17
    $region16: #{cnn_forward.3} parent=1 // pred_region
      _
    $region17: #{cnn_forward.3} parent=1 // pred_fallthru
      _
    // Predicated region
    $region18: #{cnn_forward.3} parent=1 // pred_check
      _
    $region19: #{cnn_forward.3} parent=1 // pred_check_branch
      %40 = sbr.rel (0) target = $region21
    $region20: #{cnn_forward.3} parent=1 // pred_region
      %s42 = ssub.s32 16, 16
      %43 = vsyncadd [#allocation6], %s42
      %s45 = sshll.u32 [#allocation7], 4
      %s46 = int_to_ptr.vmem [resolvable:$true] %s45
      %48 = dma.hbm_to_vmem [thread:$0]  %s4, 16, %s46, [#allocation6]
    $region21: #{cnn_forward.3} parent=1 // pred_fallthru
      _
    // Predicated region
    $region22: #{cnn_forward.3} parent=1 // pred_check
      _
    $region23: #{cnn_forward.3} parent=1 // pred_check_branch
      %50 = sbr.rel (0) target = $region25
    $region24: #{cnn_forward.3} parent=1 // pred_region
      %51 = dma.done [#allocation3], 73728
    $region25: #{cnn_forward.3} parent=1 // pred_fallthru
      _
    // Predicated region
    $region26: #{cnn_forward.3} parent=1 // pred_check
      _
    $region27: #{cnn_forward.3} parent=1 // pred_check_branch
      %53 = sbr.rel (0) target = $region29
    $region28: #{cnn_forward.3} parent=1 // pred_region
      %54 = dma.done [#allocation6], 16
    $region29: #{cnn_forward.3} parent=1 // pred_fallthru
      _
    // Predicated region
    $region30: #{cnn_forward.3} parent=1 // pred_check
      _
    $region31: #{cnn_forward.3} parent=1 // pred_check_branch
      %56 = sbr.rel (0) target = $region33
    $region32: #{cnn_forward.3} parent=1 // pred_region
      %57 = dma.done [#allocation6], 16
    $region33: #{cnn_forward.3} parent=1 // pred_fallthru
      _
    %v59 = vld [vmem:[%s0] sm:$0xff]
    %v60 = vld [vmem:[%s0 + $0x8] sm:$0xff]
    %v61 = vld [vmem:[%s0 + $0x10] sm:$0xff]
    %v62 = vld [vmem:[%s0 + $0x18] sm:$0xff]
    %v63 = vld [vmem:[%s0 + $0x20] sm:$0xff]
    %v64 = vld [vmem:[%s0 + $0x28] sm:$0xff]
    %v65 = vld [vmem:[%s0 + $0x30] sm:$0xff]
    %v66 = vld [vmem:[%s0 + $0x38] sm:$0xff]
    %v67 = vld [vmem:[%s0 + $0x40] sm:$0xff]
    %v68 = vld [vmem:[#allocation2] sm:$0xf]
    %v69 = vld [vmem:[#allocation2 + $0x4] sm:$0xf]
    %v70 = vld [vmem:[#allocation2 + $0x8] sm:$0xf]
    %v71 = vld [vmem:[#allocation2 + $0xc] sm:$0xf]
    %v72 = vld [vmem:[#allocation2 + $0x10] sm:$0xf]
    %v73 = vld [vmem:[#allocation2 + $0x14] sm:$0xf]
    %v74 = vld [vmem:[#allocation2 + $0x18] sm:$0xf]
    %v75 = vld [vmem:[#allocation2 + $0x1c] sm:$0xf]
    %v76 = vld [vmem:[#allocation2 + $0x20] sm:$0xf]
    %v77 = vld [vmem:[#allocation2 + $0x24] sm:$0xf]
    %v78 = vld [vmem:[#allocation2 + $0x28] sm:$0xf]
    %v79 = vld [vmem:[#allocation2 + $0x2c] sm:$0xf]
    %v80 = vld [vmem:[#allocation2 + $0x30] sm:$0xf]
    %v81 = vld [vmem:[#allocation2 + $0x34] sm:$0xf]
    %v82 = vld [vmem:[#allocation2 + $0x38] sm:$0xf]
    %v83 = vld [vmem:[#allocation2 + $0x3c] sm:$0xf]
    %v84 = vld [vmem:[#allocation2 + $0x40] sm:$0xf]
    %v85 = vld [vmem:[#allocation2 + $0x44] sm:$0xf]
    %v86 = vld [vmem:[#allocation2 + $0x48] sm:$0xf]
    %v87 = vld [vmem:[#allocation2 + $0x4c] sm:$0xf]
    %v88 = vld [vmem:[#allocation2 + $0x50] sm:$0xf]
    %v89 = vld [vmem:[#allocation2 + $0x54] sm:$0xf]
    %v90 = vld [vmem:[#allocation2 + $0x58] sm:$0xf]
    %v91 = vld [vmem:[#allocation2 + $0x5c] sm:$0xf]
    %v92 = vld [vmem:[#allocation2 + $0x60] sm:$0xf]
    %v93 = vld [vmem:[#allocation2 + $0x64] sm:$0xf]
    %v94 = vld [vmem:[#allocation2 + $0x68] sm:$0xf]
    %v95 = vld [vmem:[#allocation2 + $0x6c] sm:$0xf]
    %v96 = vld [vmem:[#allocation2 + $0x70] sm:$0xf]
    %v97 = vld [vmem:[#allocation2 + $0x74] sm:$0xf]
    %v98 = vld [vmem:[#allocation2 + $0x78] sm:$0xf]
    %v99 = vld [vmem:[#allocation2 + $0x7c] sm:$0xf]
    %v100 = vld [vmem:[#allocation2 + $0x80] sm:$0xf]
    %v101 = vld [vmem:[#allocation2 + $0x84] sm:$0xf]
    %v102 = vld [vmem:[#allocation2 + $0x88] sm:$0xf]
    %v103 = vld [vmem:[#allocation2 + $0x8c] sm:$0xf]
    %v104 = vld [vmem:[#allocation2 + $0x90] sm:$0xf]
    %v105 = vld [vmem:[#allocation2 + $0x94] sm:$0xf]
    %v106 = vld [vmem:[#allocation2 + $0x98] sm:$0xf]
    %v107 = vld [vmem:[#allocation2 + $0x9c] sm:$0xf]
    %v108 = vld [vmem:[#allocation2 + $0xa0] sm:$0xf]
    %v109 = vld [vmem:[#allocation2 + $0xa4] sm:$0xf]
    %v110 = vld [vmem:[#allocation2 + $0xa8] sm:$0xf]
    %v111 = vld [vmem:[#allocation2 + $0xac] sm:$0xf]
    %v112 = vld [vmem:[#allocation2 + $0xb0] sm:$0xf]
    %v113 = vld [vmem:[#allocation2 + $0xb4] sm:$0xf]
    %v114 = vld [vmem:[#allocation2 + $0xb8] sm:$0xf]
    %v115 = vld [vmem:[#allocation2 + $0xbc] sm:$0xf]
    %v116 = vld [vmem:[#allocation2 + $0xc0] sm:$0xf]
    %v117 = vld [vmem:[#allocation2 + $0xc4] sm:$0xf]
    %v118 = vld [vmem:[#allocation2 + $0xc8] sm:$0xf]
    %v119 = vld [vmem:[#allocation2 + $0xcc] sm:$0xf]
    %v120 = vld [vmem:[#allocation2 + $0xd0] sm:$0xf]
    %v121 = vld [vmem:[#allocation2 + $0xd4] sm:$0xf]
    %v122 = vld [vmem:[#allocation2 + $0xd8] sm:$0xf]
    %v123 = vld [vmem:[#allocation2 + $0xdc] sm:$0xf]
    %v124 = vld [vmem:[#allocation2 + $0xe0] sm:$0xf]
    %v125 = vld [vmem:[#allocation2 + $0xe4] sm:$0xf]
    %v126 = vld [vmem:[#allocation2 + $0xe8] sm:$0xf]
    %v127 = vld [vmem:[#allocation2 + $0xec] sm:$0xf]
    %v128 = vld [vmem:[#allocation2 + $0xf0] sm:$0xf]
    %v129 = vld [vmem:[#allocation2 + $0xf4] sm:$0xf]
    %v130 = vld [vmem:[#allocation2 + $0xf8] sm:$0xf]
    %v131 = vld [vmem:[#allocation2 + $0xfc] sm:$0xf]
    %v132 = vld [vmem:[#allocation2 + $0x100] sm:$0xf]
    %v133 = vld [vmem:[#allocation2 + $0x104] sm:$0xf]
    %v134 = vld [vmem:[#allocation2 + $0x108] sm:$0xf]
    %v135 = vld [vmem:[#allocation2 + $0x10c] sm:$0xf]
    %v136 = vld [vmem:[#allocation2 + $0x110] sm:$0xf]
    %v137 = vld [vmem:[#allocation2 + $0x114] sm:$0xf]
    %v138 = vld [vmem:[#allocation2 + $0x118] sm:$0xf]
    %v139 = vld [vmem:[#allocation2 + $0x11c] sm:$0xf]
    %v140 = vld [vmem:[#allocation2 + $0x120] sm:$0xf]
    %v141 = vld [vmem:[#allocation2 + $0x124] sm:$0xf]
    %v142 = vld [vmem:[#allocation2 + $0x128] sm:$0xf]
    %v143 = vld [vmem:[#allocation2 + $0x12c] sm:$0xf]
    %v144 = vld [vmem:[#allocation2 + $0x130] sm:$0xf]
    %v145 = vld [vmem:[#allocation2 + $0x134] sm:$0xf]
    %v146 = vld [vmem:[#allocation2 + $0x138] sm:$0xf]
    %v147 = vld [vmem:[#allocation2 + $0x13c] sm:$0xf]
    %v148 = vld [vmem:[#allocation2 + $0x140] sm:$0xf]
    %v149 = vld [vmem:[#allocation2 + $0x144] sm:$0xf]
    %v150 = vld [vmem:[#allocation2 + $0x148] sm:$0xf]
    %v151 = vld [vmem:[#allocation2 + $0x14c] sm:$0xf]
    %v152 = vld [vmem:[#allocation2 + $0x150] sm:$0xf]
    %v153 = vld [vmem:[#allocation2 + $0x154] sm:$0xf]
    %v154 = vld [vmem:[#allocation2 + $0x158] sm:$0xf]
    %v155 = vld [vmem:[#allocation2 + $0x15c] sm:$0xf]
    %v156 = vld [vmem:[#allocation2 + $0x160] sm:$0xf]
    %v157 = vld [vmem:[#allocation2 + $0x164] sm:$0xf]
    %v158 = vld [vmem:[#allocation2 + $0x168] sm:$0xf]
    %v159 = vld [vmem:[#allocation2 + $0x16c] sm:$0xf]
    %v160 = vld [vmem:[#allocation2 + $0x170] sm:$0xf]
    %v161 = vld [vmem:[#allocation2 + $0x174] sm:$0xf]
    %v162 = vld [vmem:[#allocation2 + $0x178] sm:$0xf]
    %v163 = vld [vmem:[#allocation2 + $0x17c] sm:$0xf]
    %v164 = vld [vmem:[#allocation2 + $0x180] sm:$0xf]
    %v165 = vld [vmem:[#allocation2 + $0x184] sm:$0xf]
    %v166 = vld [vmem:[#allocation2 + $0x188] sm:$0xf]
    %v167 = vld [vmem:[#allocation2 + $0x18c] sm:$0xf]
    %v168 = vld [vmem:[#allocation2 + $0x190] sm:$0xf]
    %v169 = vld [vmem:[#allocation2 + $0x194] sm:$0xf]
    %v170 = vld [vmem:[#allocation2 + $0x198] sm:$0xf]
    %v171 = vld [vmem:[#allocation2 + $0x19c] sm:$0xf]
    %v172 = vld [vmem:[#allocation2 + $0x1a0] sm:$0xf]
    %v173 = vld [vmem:[#allocation2 + $0x1a4] sm:$0xf]
    %v174 = vld [vmem:[#allocation2 + $0x1a8] sm:$0xf]
    %v175 = vld [vmem:[#allocation2 + $0x1ac] sm:$0xf]
    %v176 = vld [vmem:[#allocation2 + $0x1b0] sm:$0xf]
    %v177 = vld [vmem:[#allocation2 + $0x1b4] sm:$0xf]
    %v178 = vld [vmem:[#allocation2 + $0x1b8] sm:$0xf]
    %v179 = vld [vmem:[#allocation2 + $0x1bc] sm:$0xf]
    %v180 = vld [vmem:[#allocation2 + $0x1c0] sm:$0xf]
    %v181 = vld [vmem:[#allocation2 + $0x1c4] sm:$0xf]
    %v182 = vld [vmem:[#allocation2 + $0x1c8] sm:$0xf]
    %v183 = vld [vmem:[#allocation2 + $0x1cc] sm:$0xf]
    %v184 = vld [vmem:[#allocation2 + $0x1d0] sm:$0xf]
    %v185 = vld [vmem:[#allocation2 + $0x1d4] sm:$0xf]
    %v186 = vld [vmem:[#allocation2 + $0x1d8] sm:$0xf]
    %v187 = vld [vmem:[#allocation2 + $0x1dc] sm:$0xf]
    %v188 = vld [vmem:[#allocation2 + $0x1e0] sm:$0xf]
    %v189 = vld [vmem:[#allocation2 + $0x1e4] sm:$0xf]
    %v190 = vld [vmem:[#allocation2 + $0x1e8] sm:$0xf]
    %v191 = vld [vmem:[#allocation2 + $0x1ec] sm:$0xf]
    %v192 = vld [vmem:[#allocation2 + $0x1f0] sm:$0xf]
    %v193 = vld [vmem:[#allocation2 + $0x1f4] sm:$0xf]
    %v194 = vld [vmem:[#allocation2 + $0x1f8] sm:$0xf]
    %v195 = vld [vmem:[#allocation2 + $0x1fc] sm:$0xf]
    %v196 = vld [vmem:[#allocation2 + $0x200] sm:$0xf]
    %v197 = vld [vmem:[#allocation2 + $0x204] sm:$0xf]
    %v198 = vld [vmem:[#allocation2 + $0x208] sm:$0xf]
    %v199 = vld [vmem:[#allocation2 + $0x20c] sm:$0xf]
    %v200 = vld [vmem:[#allocation2 + $0x210] sm:$0xf]
    %v201 = vld [vmem:[#allocation2 + $0x214] sm:$0xf]
    %v202 = vld [vmem:[#allocation2 + $0x218] sm:$0xf]
    %v203 = vld [vmem:[#allocation2 + $0x21c] sm:$0xf]
    %v204 = vld [vmem:[#allocation2 + $0x220] sm:$0xf]
    %v205 = vld [vmem:[#allocation2 + $0x224] sm:$0xf]
    %v206 = vld [vmem:[#allocation2 + $0x228] sm:$0xf]
    %v207 = vld [vmem:[#allocation2 + $0x22c] sm:$0xf]
    %v208 = vld [vmem:[#allocation2 + $0x230] sm:$0xf]
    %v209 = vld [vmem:[#allocation2 + $0x234] sm:$0xf]
    %v210 = vld [vmem:[#allocation2 + $0x238] sm:$0xf]
    %v211 = vld [vmem:[#allocation2 + $0x23c] sm:$0xf]
    %v212 = vld [vmem:[#allocation2 + $0x240] sm:$0xf]
    %v213 = vld [vmem:[#allocation2 + $0x244] sm:$0xf]
    %v214 = vld [vmem:[#allocation2 + $0x248] sm:$0xf]
    %v215 = vld [vmem:[#allocation2 + $0x24c] sm:$0xf]
    %v216 = vld [vmem:[#allocation2 + $0x250] sm:$0xf]
    %v217 = vld [vmem:[#allocation2 + $0x254] sm:$0xf]
    %v218 = vld [vmem:[#allocation2 + $0x258] sm:$0xf]
    %v219 = vld [vmem:[#allocation2 + $0x25c] sm:$0xf]
    %v220 = vld [vmem:[#allocation2 + $0x260] sm:$0xf]
    %v221 = vld [vmem:[#allocation2 + $0x264] sm:$0xf]
    %v222 = vld [vmem:[#allocation2 + $0x268] sm:$0xf]
    %v223 = vld [vmem:[#allocation2 + $0x26c] sm:$0xf]
    %v224 = vld [vmem:[#allocation2 + $0x270] sm:$0xf]
    %v225 = vld [vmem:[#allocation2 + $0x274] sm:$0xf]
    %v226 = vld [vmem:[#allocation2 + $0x278] sm:$0xf]
    %v227 = vld [vmem:[#allocation2 + $0x27c] sm:$0xf]
    %v228 = vld [vmem:[#allocation2 + $0x280] sm:$0xf]
    %v229 = vld [vmem:[#allocation2 + $0x284] sm:$0xf]
    %v230 = vld [vmem:[#allocation2 + $0x288] sm:$0xf]
    %v231 = vld [vmem:[#allocation2 + $0x28c] sm:$0xf]
    %v232 = vld [vmem:[#allocation2 + $0x290] sm:$0xf]
    %v233 = vld [vmem:[#allocation2 + $0x294] sm:$0xf]
    %v234 = vld [vmem:[#allocation2 + $0x298] sm:$0xf]
    %v235 = vld [vmem:[#allocation2 + $0x29c] sm:$0xf]
    %v236 = vld [vmem:[#allocation2 + $0x2a0] sm:$0xf]
    %v237 = vld [vmem:[#allocation2 + $0x2a4] sm:$0xf]
    %v238 = vld [vmem:[#allocation2 + $0x2a8] sm:$0xf]
    %v239 = vld [vmem:[#allocation2 + $0x2ac] sm:$0xf]
    %v240 = vld [vmem:[#allocation2 + $0x2b0] sm:$0xf]
    %v241 = vld [vmem:[#allocation2 + $0x2b4] sm:$0xf]
    %v242 = vld [vmem:[#allocation2 + $0x2b8] sm:$0xf]
    %v243 = vld [vmem:[#allocation2 + $0x2bc] sm:$0xf]
    %v244 = vld [vmem:[#allocation2 + $0x2c0] sm:$0xf]
    %v245 = vld [vmem:[#allocation2 + $0x2c4] sm:$0xf]
    %v246 = vld [vmem:[#allocation2 + $0x2c8] sm:$0xf]
    %v247 = vld [vmem:[#allocation2 + $0x2cc] sm:$0xf]
    %v248 = vld [vmem:[#allocation2 + $0x2d0] sm:$0xf]
    %v249 = vld [vmem:[#allocation2 + $0x2d4] sm:$0xf]
    %v250 = vld [vmem:[#allocation2 + $0x2d8] sm:$0xf]
    %v251 = vld [vmem:[#allocation2 + $0x2dc] sm:$0xf]
    %v252 = vld [vmem:[#allocation2 + $0x2e0] sm:$0xf]
    %v253 = vld [vmem:[#allocation2 + $0x2e4] sm:$0xf]
    %v254 = vld [vmem:[#allocation2 + $0x2e8] sm:$0xf]
    %v255 = vld [vmem:[#allocation2 + $0x2ec] sm:$0xf]
    %v256 = vld [vmem:[#allocation2 + $0x2f0] sm:$0xf]
    %v257 = vld [vmem:[#allocation2 + $0x2f4] sm:$0xf]
    %v258 = vld [vmem:[#allocation2 + $0x2f8] sm:$0xf]
    %v259 = vld [vmem:[#allocation2 + $0x2fc] sm:$0xf]
    %v260 = vld [vmem:[#allocation2 + $0x300] sm:$0xf]
    %v261 = vld [vmem:[#allocation2 + $0x304] sm:$0xf]
    %v262 = vld [vmem:[#allocation2 + $0x308] sm:$0xf]
    %v263 = vld [vmem:[#allocation2 + $0x30c] sm:$0xf]
    %v264 = vld [vmem:[#allocation2 + $0x310] sm:$0xf]
    %v265 = vld [vmem:[#allocation2 + $0x314] sm:$0xf]
    %v266 = vld [vmem:[#allocation2 + $0x318] sm:$0xf]
    %v267 = vld [vmem:[#allocation2 + $0x31c] sm:$0xf]
    %v268 = vld [vmem:[#allocation2 + $0x320] sm:$0xf]
    %v269 = vld [vmem:[#allocation2 + $0x324] sm:$0xf]
    %v270 = vld [vmem:[#allocation2 + $0x328] sm:$0xf]
    %v271 = vld [vmem:[#allocation2 + $0x32c] sm:$0xf]
    %v272 = vld [vmem:[#allocation2 + $0x330] sm:$0xf]
    %v273 = vld [vmem:[#allocation2 + $0x334] sm:$0xf]
    %v274 = vld [vmem:[#allocation2 + $0x338] sm:$0xf]
    %v275 = vld [vmem:[#allocation2 + $0x33c] sm:$0xf]
    %v276 = vld [vmem:[#allocation2 + $0x340] sm:$0xf]
    %v277 = vld [vmem:[#allocation2 + $0x344] sm:$0xf]
    %v278 = vld [vmem:[#allocation2 + $0x348] sm:$0xf]
    %v279 = vld [vmem:[#allocation2 + $0x34c] sm:$0xf]
    %v280 = vld [vmem:[#allocation2 + $0x350] sm:$0xf]
    %v281 = vld [vmem:[#allocation2 + $0x354] sm:$0xf]
    %v282 = vld [vmem:[#allocation2 + $0x358] sm:$0xf]
    %v283 = vld [vmem:[#allocation2 + $0x35c] sm:$0xf]
    %v284 = vld [vmem:[#allocation2 + $0x360] sm:$0xf]
    %v285 = vld [vmem:[#allocation2 + $0x364] sm:$0xf]
    %v286 = vld [vmem:[#allocation2 + $0x368] sm:$0xf]
    %v287 = vld [vmem:[#allocation2 + $0x36c] sm:$0xf]
    %v288 = vld [vmem:[#allocation2 + $0x370] sm:$0xf]
    %v289 = vld [vmem:[#allocation2 + $0x374] sm:$0xf]
    %v290 = vld [vmem:[#allocation2 + $0x378] sm:$0xf]
    %v291 = vld [vmem:[#allocation2 + $0x37c] sm:$0xf]
    %v292 = vld [vmem:[#allocation2 + $0x380] sm:$0xf]
    %v293 = vld [vmem:[#allocation2 + $0x384] sm:$0xf]
    %v294 = vld [vmem:[#allocation2 + $0x388] sm:$0xf]
    %v295 = vld [vmem:[#allocation2 + $0x38c] sm:$0xf]
    %v296 = vld [vmem:[#allocation2 + $0x390] sm:$0xf]
    %v297 = vld [vmem:[#allocation2 + $0x394] sm:$0xf]
    %v298 = vld [vmem:[#allocation2 + $0x398] sm:$0xf]
    %v299 = vld [vmem:[#allocation2 + $0x39c] sm:$0xf]
    %v300 = vld [vmem:[#allocation2 + $0x3a0] sm:$0xf]
    %v301 = vld [vmem:[#allocation2 + $0x3a4] sm:$0xf]
    %v302 = vld [vmem:[#allocation2 + $0x3a8] sm:$0xf]
    %v303 = vld [vmem:[#allocation2 + $0x3ac] sm:$0xf]
    %v304 = vld [vmem:[#allocation2 + $0x3b0] sm:$0xf]
    %v305 = vld [vmem:[#allocation2 + $0x3b4] sm:$0xf]
    %v306 = vld [vmem:[#allocation2 + $0x3b8] sm:$0xf]
    %v307 = vld [vmem:[#allocation2 + $0x3bc] sm:$0xf]
    %v308 = vld [vmem:[#allocation2 + $0x3c0] sm:$0xf]
    %v309 = vld [vmem:[#allocation2 + $0x3c4] sm:$0xf]
    %v310 = vld [vmem:[#allocation2 + $0x3c8] sm:$0xf]
    %v311 = vld [vmem:[#allocation2 + $0x3cc] sm:$0xf]
    %v312 = vld [vmem:[#allocation2 + $0x3d0] sm:$0xf]
    %v313 = vld [vmem:[#allocation2 + $0x3d4] sm:$0xf]
    %v314 = vld [vmem:[#allocation2 + $0x3d8] sm:$0xf]
    %v315 = vld [vmem:[#allocation2 + $0x3dc] sm:$0xf]
    %v316 = vld [vmem:[#allocation2 + $0x3e0] sm:$0xf]
    %v317 = vld [vmem:[#allocation2 + $0x3e4] sm:$0xf]
    %v318 = vld [vmem:[#allocation2 + $0x3e8] sm:$0xf]
    %v319 = vld [vmem:[#allocation2 + $0x3ec] sm:$0xf]
    %v320 = vld [vmem:[#allocation2 + $0x3f0] sm:$0xf]
    %v321 = vld [vmem:[#allocation2 + $0x3f4] sm:$0xf]
    %v322 = vld [vmem:[#allocation2 + $0x3f8] sm:$0xf]
    %v323 = vld [vmem:[#allocation2 + $0x3fc] sm:$0xf]
    %v324 = vld [vmem:[#allocation2 + $0x400] sm:$0xf]
    %v325 = vld [vmem:[#allocation2 + $0x404] sm:$0xf]
    %v326 = vld [vmem:[#allocation2 + $0x408] sm:$0xf]
    %v327 = vld [vmem:[#allocation2 + $0x40c] sm:$0xf]
    %v328 = vld [vmem:[#allocation2 + $0x410] sm:$0xf]
    %v329 = vld [vmem:[#allocation2 + $0x414] sm:$0xf]
    %v330 = vld [vmem:[#allocation2 + $0x418] sm:$0xf]
    %v331 = vld [vmem:[#allocation2 + $0x41c] sm:$0xf]
    %v332 = vld [vmem:[#allocation2 + $0x420] sm:$0xf]
    %v333 = vld [vmem:[#allocation2 + $0x424] sm:$0xf]
    %v334 = vld [vmem:[#allocation2 + $0x428] sm:$0xf]
    %v335 = vld [vmem:[#allocation2 + $0x42c] sm:$0xf]
    %v336 = vld [vmem:[#allocation2 + $0x430] sm:$0xf]
    %v337 = vld [vmem:[#allocation2 + $0x434] sm:$0xf]
    %v338 = vld [vmem:[#allocation2 + $0x438] sm:$0xf]
    %v339 = vld [vmem:[#allocation2 + $0x43c] sm:$0xf]
    %v340 = vld [vmem:[#allocation2 + $0x440] sm:$0xf]
    %v341 = vld [vmem:[#allocation2 + $0x444] sm:$0xf]
    %v342 = vld [vmem:[#allocation2 + $0x448] sm:$0xf]
    %v343 = vld [vmem:[#allocation2 + $0x44c] sm:$0xf]
    %v344 = vld [vmem:[#allocation2 + $0x450] sm:$0xf]
    %v345 = vld [vmem:[#allocation2 + $0x454] sm:$0xf]
    %v346 = vld [vmem:[#allocation2 + $0x458] sm:$0xf]
    %v347 = vld [vmem:[#allocation2 + $0x45c] sm:$0xf]
    %v348 = vld [vmem:[#allocation2 + $0x460] sm:$0xf]
    %v349 = vld [vmem:[#allocation2 + $0x464] sm:$0xf]
    %v350 = vld [vmem:[#allocation2 + $0x468] sm:$0xf]
    %v351 = vld [vmem:[#allocation2 + $0x46c] sm:$0xf]
    %v352 = vld [vmem:[#allocation2 + $0x470] sm:$0xf]
    %v353 = vld [vmem:[#allocation2 + $0x474] sm:$0xf]
    %v354 = vld [vmem:[#allocation2 + $0x478] sm:$0xf]
    %v355 = vld [vmem:[#allocation2 + $0x47c] sm:$0xf]
    %v356 = vld [vmem:[#allocation2 + $0x480] sm:$0xf]
    %v357 = vld [vmem:[#allocation2 + $0x484] sm:$0xf]
    %v358 = vld [vmem:[#allocation2 + $0x488] sm:$0xf]
    %v359 = vld [vmem:[#allocation2 + $0x48c] sm:$0xf]
    %v360 = vld [vmem:[#allocation2 + $0x490] sm:$0xf]
    %v361 = vld [vmem:[#allocation2 + $0x494] sm:$0xf]
    %v362 = vld [vmem:[#allocation2 + $0x498] sm:$0xf]
    %v363 = vld [vmem:[#allocation2 + $0x49c] sm:$0xf]
    %v364 = vld [vmem:[#allocation2 + $0x4a0] sm:$0xf]
    %v365 = vld [vmem:[#allocation2 + $0x4a4] sm:$0xf]
    %v366 = vld [vmem:[#allocation2 + $0x4a8] sm:$0xf]
    %v367 = vld [vmem:[#allocation2 + $0x4ac] sm:$0xf]
    %v368 = vld [vmem:[#allocation2 + $0x4b0] sm:$0xf]
    %v369 = vld [vmem:[#allocation2 + $0x4b4] sm:$0xf]
    %v370 = vld [vmem:[#allocation2 + $0x4b8] sm:$0xf]
    %v371 = vld [vmem:[#allocation2 + $0x4bc] sm:$0xf]
    %v372 = vld [vmem:[#allocation2 + $0x4c0] sm:$0xf]
    %v373 = vld [vmem:[#allocation2 + $0x4c4] sm:$0xf]
    %v374 = vld [vmem:[#allocation2 + $0x4c8] sm:$0xf]
    %v375 = vld [vmem:[#allocation2 + $0x4cc] sm:$0xf]
    %v376 = vld [vmem:[#allocation2 + $0x4d0] sm:$0xf]
    %v377 = vld [vmem:[#allocation2 + $0x4d4] sm:$0xf]
    %v378 = vld [vmem:[#allocation2 + $0x4d8] sm:$0xf]
    %v379 = vld [vmem:[#allocation2 + $0x4dc] sm:$0xf]
    %v380 = vld [vmem:[#allocation2 + $0x4e0] sm:$0xf]
    %v381 = vld [vmem:[#allocation2 + $0x4e4] sm:$0xf]
    %v382 = vld [vmem:[#allocation2 + $0x4e8] sm:$0xf]
    %v383 = vld [vmem:[#allocation2 + $0x4ec] sm:$0xf]
    %v384 = vld [vmem:[#allocation2 + $0x4f0] sm:$0xf]
    %v385 = vld [vmem:[#allocation2 + $0x4f4] sm:$0xf]
    %v386 = vld [vmem:[#allocation2 + $0x4f8] sm:$0xf]
    %v387 = vld [vmem:[#allocation2 + $0x4fc] sm:$0xf]
    %v388 = vld [vmem:[#allocation2 + $0x500] sm:$0xf]
    %v389 = vld [vmem:[#allocation2 + $0x504] sm:$0xf]
    %v390 = vld [vmem:[#allocation2 + $0x508] sm:$0xf]
    %v391 = vld [vmem:[#allocation2 + $0x50c] sm:$0xf]
    %v392 = vld [vmem:[#allocation2 + $0x510] sm:$0xf]
    %v393 = vld [vmem:[#allocation2 + $0x514] sm:$0xf]
    %v394 = vld [vmem:[#allocation2 + $0x518] sm:$0xf]
    %v395 = vld [vmem:[#allocation2 + $0x51c] sm:$0xf]
    %v396 = vld [vmem:[#allocation2 + $0x520] sm:$0xf]
    %v397 = vld [vmem:[#allocation2 + $0x524] sm:$0xf]
    %v398 = vld [vmem:[#allocation2 + $0x528] sm:$0xf]
    %v399 = vld [vmem:[#allocation2 + $0x52c] sm:$0xf]
    %v400 = vld [vmem:[#allocation2 + $0x530] sm:$0xf]
    %v401 = vld [vmem:[#allocation2 + $0x534] sm:$0xf]
    %v402 = vld [vmem:[#allocation2 + $0x538] sm:$0xf]
    %v403 = vld [vmem:[#allocation2 + $0x53c] sm:$0xf]
    %v404 = vld [vmem:[#allocation2 + $0x540] sm:$0xf]
    %v405 = vld [vmem:[#allocation2 + $0x544] sm:$0xf]
    %v406 = vld [vmem:[#allocation2 + $0x548] sm:$0xf]
    %v407 = vld [vmem:[#allocation2 + $0x54c] sm:$0xf]
    %v408 = vld [vmem:[#allocation2 + $0x550] sm:$0xf]
    %v409 = vld [vmem:[#allocation2 + $0x554] sm:$0xf]
    %v410 = vld [vmem:[#allocation2 + $0x558] sm:$0xf]
    %v411 = vld [vmem:[#allocation2 + $0x55c] sm:$0xf]
    %v412 = vld [vmem:[#allocation2 + $0x560] sm:$0xf]
    %v413 = vld [vmem:[#allocation2 + $0x564] sm:$0xf]
    %v414 = vld [vmem:[#allocation2 + $0x568] sm:$0xf]
    %v415 = vld [vmem:[#allocation2 + $0x56c] sm:$0xf]
    %v416 = vld [vmem:[#allocation2 + $0x570] sm:$0xf]
    %v417 = vld [vmem:[#allocation2 + $0x574] sm:$0xf]
    %v418 = vld [vmem:[#allocation2 + $0x578] sm:$0xf]
    %v419 = vld [vmem:[#allocation2 + $0x57c] sm:$0xf]
    %v420 = vld [vmem:[#allocation2 + $0x580] sm:$0xf]
    %v421 = vld [vmem:[#allocation2 + $0x584] sm:$0xf]
    %v422 = vld [vmem:[#allocation2 + $0x588] sm:$0xf]
    %v423 = vld [vmem:[#allocation2 + $0x58c] sm:$0xf]
    %v424 = vld [vmem:[#allocation2 + $0x590] sm:$0xf]
    %v425 = vld [vmem:[#allocation2 + $0x594] sm:$0xf]
    %v426 = vld [vmem:[#allocation2 + $0x598] sm:$0xf]
    %v427 = vld [vmem:[#allocation2 + $0x59c] sm:$0xf]
    %v428 = vld [vmem:[#allocation2 + $0x5a0] sm:$0xf]
    %v429 = vld [vmem:[#allocation2 + $0x5a4] sm:$0xf]
    %v430 = vld [vmem:[#allocation2 + $0x5a8] sm:$0xf]
    %v431 = vld [vmem:[#allocation2 + $0x5ac] sm:$0xf]
    %v432 = vld [vmem:[#allocation2 + $0x5b0] sm:$0xf]
    %v433 = vld [vmem:[#allocation2 + $0x5b4] sm:$0xf]
    %v434 = vld [vmem:[#allocation2 + $0x5b8] sm:$0xf]
    %v435 = vld [vmem:[#allocation2 + $0x5bc] sm:$0xf]
    %v436 = vld [vmem:[#allocation2 + $0x5c0] sm:$0xf]
    %v437 = vld [vmem:[#allocation2 + $0x5c4] sm:$0xf]
    %v438 = vld [vmem:[#allocation2 + $0x5c8] sm:$0xf]
    %v439 = vld [vmem:[#allocation2 + $0x5cc] sm:$0xf]
    %v440 = vld [vmem:[#allocation2 + $0x5d0] sm:$0xf]
    %v441 = vld [vmem:[#allocation2 + $0x5d4] sm:$0xf]
    %v442 = vld [vmem:[#allocation2 + $0x5d8] sm:$0xf]
    %v443 = vld [vmem:[#allocation2 + $0x5dc] sm:$0xf]
    %v444 = vld [vmem:[#allocation2 + $0x5e0] sm:$0xf]
    %v445 = vld [vmem:[#allocation2 + $0x5e4] sm:$0xf]
    %v446 = vld [vmem:[#allocation2 + $0x5e8] sm:$0xf]
    %v447 = vld [vmem:[#allocation2 + $0x5ec] sm:$0xf]
    %v448 = vld [vmem:[#allocation2 + $0x5f0] sm:$0xf]
    %v449 = vld [vmem:[#allocation2 + $0x5f4] sm:$0xf]
    %v450 = vld [vmem:[#allocation2 + $0x5f8] sm:$0xf]
    %v451 = vld [vmem:[#allocation2 + $0x5fc] sm:$0xf]
    %v452 = vld [vmem:[#allocation2 + $0x600] sm:$0xf]
    %v453 = vld [vmem:[#allocation2 + $0x604] sm:$0xf]
    %v454 = vld [vmem:[#allocation2 + $0x608] sm:$0xf]
    %v455 = vld [vmem:[#allocation2 + $0x60c] sm:$0xf]
    %v456 = vld [vmem:[#allocation2 + $0x610] sm:$0xf]
    %v457 = vld [vmem:[#allocation2 + $0x614] sm:$0xf]
    %v458 = vld [vmem:[#allocation2 + $0x618] sm:$0xf]
    %v459 = vld [vmem:[#allocation2 + $0x61c] sm:$0xf]
    %v460 = vld [vmem:[#allocation2 + $0x620] sm:$0xf]
    %v461 = vld [vmem:[#allocation2 + $0x624] sm:$0xf]
    %v462 = vld [vmem:[#allocation2 + $0x628] sm:$0xf]
    %v463 = vld [vmem:[#allocation2 + $0x62c] sm:$0xf]
    %v464 = vld [vmem:[#allocation2 + $0x630] sm:$0xf]
    %v465 = vld [vmem:[#allocation2 + $0x634] sm:$0xf]
    %v466 = vld [vmem:[#allocation2 + $0x638] sm:$0xf]
    %v467 = vld [vmem:[#allocation2 + $0x63c] sm:$0xf]
    %v468 = vld [vmem:[#allocation2 + $0x640] sm:$0xf]
    %v469 = vld [vmem:[#allocation2 + $0x644] sm:$0xf]
    %v470 = vld [vmem:[#allocation2 + $0x648] sm:$0xf]
    %v471 = vld [vmem:[#allocation2 + $0x64c] sm:$0xf]
    %v472 = vld [vmem:[#allocation2 + $0x650] sm:$0xf]
    %v473 = vld [vmem:[#allocation2 + $0x654] sm:$0xf]
    %v474 = vld [vmem:[#allocation2 + $0x658] sm:$0xf]
    %v475 = vld [vmem:[#allocation2 + $0x65c] sm:$0xf]
    %v476 = vld [vmem:[#allocation2 + $0x660] sm:$0xf]
    %v477 = vld [vmem:[#allocation2 + $0x664] sm:$0xf]
    %v478 = vld [vmem:[#allocation2 + $0x668] sm:$0xf]
    %v479 = vld [vmem:[#allocation2 + $0x66c] sm:$0xf]
    %v480 = vld [vmem:[#allocation2 + $0x670] sm:$0xf]
    %v481 = vld [vmem:[#allocation2 + $0x674] sm:$0xf]
    %v482 = vld [vmem:[#allocation2 + $0x678] sm:$0xf]
    %v483 = vld [vmem:[#allocation2 + $0x67c] sm:$0xf]
    %v484 = vld [vmem:[#allocation2 + $0x680] sm:$0xf]
    %v485 = vld [vmem:[#allocation2 + $0x684] sm:$0xf]
    %v486 = vld [vmem:[#allocation2 + $0x688] sm:$0xf]
    %v487 = vld [vmem:[#allocation2 + $0x68c] sm:$0xf]
    %v488 = vld [vmem:[#allocation2 + $0x690] sm:$0xf]
    %v489 = vld [vmem:[#allocation2 + $0x694] sm:$0xf]
    %v490 = vld [vmem:[#allocation2 + $0x698] sm:$0xf]
    %v491 = vld [vmem:[#allocation2 + $0x69c] sm:$0xf]
    %v492 = vld [vmem:[#allocation2 + $0x6a0] sm:$0xf]
    %v493 = vld [vmem:[#allocation2 + $0x6a4] sm:$0xf]
    %v494 = vld [vmem:[#allocation2 + $0x6a8] sm:$0xf]
    %v495 = vld [vmem:[#allocation2 + $0x6ac] sm:$0xf]
    %v496 = vld [vmem:[#allocation2 + $0x6b0] sm:$0xf]
    %v497 = vld [vmem:[#allocation2 + $0x6b4] sm:$0xf]
    %v498 = vld [vmem:[#allocation2 + $0x6b8] sm:$0xf]
    %v499 = vld [vmem:[#allocation2 + $0x6bc] sm:$0xf]
    %v500 = vld [vmem:[#allocation2 + $0x6c0] sm:$0xf]
    %v501 = vld [vmem:[#allocation2 + $0x6c4] sm:$0xf]
    %v502 = vld [vmem:[#allocation2 + $0x6c8] sm:$0xf]
    %v503 = vld [vmem:[#allocation2 + $0x6cc] sm:$0xf]
    %v504 = vld [vmem:[#allocation2 + $0x6d0] sm:$0xf]
    %v505 = vld [vmem:[#allocation2 + $0x6d4] sm:$0xf]
    %v506 = vld [vmem:[#allocation2 + $0x6d8] sm:$0xf]
    %v507 = vld [vmem:[#allocation2 + $0x6dc] sm:$0xf]
    %v508 = vld [vmem:[#allocation2 + $0x6e0] sm:$0xf]
    %v509 = vld [vmem:[#allocation2 + $0x6e4] sm:$0xf]
    %v510 = vld [vmem:[#allocation2 + $0x6e8] sm:$0xf]
    %v511 = vld [vmem:[#allocation2 + $0x6ec] sm:$0xf]
    %v512 = vld [vmem:[#allocation2 + $0x6f0] sm:$0xf]
    %v513 = vld [vmem:[#allocation2 + $0x6f4] sm:$0xf]
    %v514 = vld [vmem:[#allocation2 + $0x6f8] sm:$0xf]
    %v515 = vld [vmem:[#allocation2 + $0x6fc] sm:$0xf]
    %v516 = vld [vmem:[#allocation2 + $0x700] sm:$0xf]
    %v517 = vld [vmem:[#allocation2 + $0x704] sm:$0xf]
    %v518 = vld [vmem:[#allocation2 + $0x708] sm:$0xf]
    %v519 = vld [vmem:[#allocation2 + $0x70c] sm:$0xf]
    %v520 = vld [vmem:[#allocation2 + $0x710] sm:$0xf]
    %v521 = vld [vmem:[#allocation2 + $0x714] sm:$0xf]
    %v522 = vld [vmem:[#allocation2 + $0x718] sm:$0xf]
    %v523 = vld [vmem:[#allocation2 + $0x71c] sm:$0xf]
    %v524 = vld [vmem:[#allocation2 + $0x720] sm:$0xf]
    %v525 = vld [vmem:[#allocation2 + $0x724] sm:$0xf]
    %v526 = vld [vmem:[#allocation2 + $0x728] sm:$0xf]
    %v527 = vld [vmem:[#allocation2 + $0x72c] sm:$0xf]
    %v528 = vld [vmem:[#allocation2 + $0x730] sm:$0xf]
    %v529 = vld [vmem:[#allocation2 + $0x734] sm:$0xf]
    %v530 = vld [vmem:[#allocation2 + $0x738] sm:$0xf]
    %v531 = vld [vmem:[#allocation2 + $0x73c] sm:$0xf]
    %v532 = vld [vmem:[#allocation2 + $0x740] sm:$0xf]
    %v533 = vld [vmem:[#allocation2 + $0x744] sm:$0xf]
    %v534 = vld [vmem:[#allocation2 + $0x748] sm:$0xf]
    %v535 = vld [vmem:[#allocation2 + $0x74c] sm:$0xf]
    %v536 = vld [vmem:[#allocation2 + $0x750] sm:$0xf]
    %v537 = vld [vmem:[#allocation2 + $0x754] sm:$0xf]
    %v538 = vld [vmem:[#allocation2 + $0x758] sm:$0xf]
    %v539 = vld [vmem:[#allocation2 + $0x75c] sm:$0xf]
    %v540 = vld [vmem:[#allocation2 + $0x760] sm:$0xf]
    %v541 = vld [vmem:[#allocation2 + $0x764] sm:$0xf]
    %v542 = vld [vmem:[#allocation2 + $0x768] sm:$0xf]
    %v543 = vld [vmem:[#allocation2 + $0x76c] sm:$0xf]
    %v544 = vld [vmem:[#allocation2 + $0x770] sm:$0xf]
    %v545 = vld [vmem:[#allocation2 + $0x774] sm:$0xf]
    %v546 = vld [vmem:[#allocation2 + $0x778] sm:$0xf]
    %v547 = vld [vmem:[#allocation2 + $0x77c] sm:$0xf]
    %v548 = vld [vmem:[#allocation2 + $0x780] sm:$0xf]
    %v549 = vld [vmem:[#allocation2 + $0x784] sm:$0xf]
    %v550 = vld [vmem:[#allocation2 + $0x788] sm:$0xf]
    %v551 = vld [vmem:[#allocation2 + $0x78c] sm:$0xf]
    %v552 = vld [vmem:[#allocation2 + $0x790] sm:$0xf]
    %v553 = vld [vmem:[#allocation2 + $0x794] sm:$0xf]
    %v554 = vld [vmem:[#allocation2 + $0x798] sm:$0xf]
    %v555 = vld [vmem:[#allocation2 + $0x79c] sm:$0xf]
    %v556 = vld [vmem:[#allocation2 + $0x7a0] sm:$0xf]
    %v557 = vld [vmem:[#allocation2 + $0x7a4] sm:$0xf]
    %v558 = vld [vmem:[#allocation2 + $0x7a8] sm:$0xf]
    %v559 = vld [vmem:[#allocation2 + $0x7ac] sm:$0xf]
    %v560 = vld [vmem:[#allocation2 + $0x7b0] sm:$0xf]
    %v561 = vld [vmem:[#allocation2 + $0x7b4] sm:$0xf]
    %v562 = vld [vmem:[#allocation2 + $0x7b8] sm:$0xf]
    %v563 = vld [vmem:[#allocation2 + $0x7bc] sm:$0xf]
    %v564 = vld [vmem:[#allocation2 + $0x7c0] sm:$0xf]
    %v565 = vld [vmem:[#allocation2 + $0x7c4] sm:$0xf]
    %v566 = vld [vmem:[#allocation2 + $0x7c8] sm:$0xf]
    %v567 = vld [vmem:[#allocation2 + $0x7cc] sm:$0xf]
    %v568 = vld [vmem:[#allocation2 + $0x7d0] sm:$0xf]
    %v569 = vld [vmem:[#allocation2 + $0x7d4] sm:$0xf]
    %v570 = vld [vmem:[#allocation2 + $0x7d8] sm:$0xf]
    %v571 = vld [vmem:[#allocation2 + $0x7dc] sm:$0xf]
    %v572 = vld [vmem:[#allocation2 + $0x7e0] sm:$0xf]
    %v573 = vld [vmem:[#allocation2 + $0x7e4] sm:$0xf]
    %v574 = vld [vmem:[#allocation2 + $0x7e8] sm:$0xf]
    %v575 = vld [vmem:[#allocation2 + $0x7ec] sm:$0xf]
    %v576 = vld [vmem:[#allocation2 + $0x7f0] sm:$0xf]
    %v577 = vld [vmem:[#allocation2 + $0x7f4] sm:$0xf]
    %v578 = vld [vmem:[#allocation2 + $0x7f8] sm:$0xf]
    %v579 = vld [vmem:[#allocation2 + $0x7fc] sm:$0xf]
    %v580 = vld [vmem:[#allocation2 + $0x800] sm:$0xf]
    %v581 = vld [vmem:[#allocation2 + $0x804] sm:$0xf]
    %v582 = vld [vmem:[#allocation2 + $0x808] sm:$0xf]
    %v583 = vld [vmem:[#allocation2 + $0x80c] sm:$0xf]
    %v584 = vld [vmem:[#allocation2 + $0x810] sm:$0xf]
    %v585 = vld [vmem:[#allocation2 + $0x814] sm:$0xf]
    %v586 = vld [vmem:[#allocation2 + $0x818] sm:$0xf]
    %v587 = vld [vmem:[#allocation2 + $0x81c] sm:$0xf]
    %v588 = vld [vmem:[#allocation2 + $0x820] sm:$0xf]
    %v589 = vld [vmem:[#allocation2 + $0x824] sm:$0xf]
    %v590 = vld [vmem:[#allocation2 + $0x828] sm:$0xf]
    %v591 = vld [vmem:[#allocation2 + $0x82c] sm:$0xf]
    %v592 = vld [vmem:[#allocation2 + $0x830] sm:$0xf]
    %v593 = vld [vmem:[#allocation2 + $0x834] sm:$0xf]
    %v594 = vld [vmem:[#allocation2 + $0x838] sm:$0xf]
    %v595 = vld [vmem:[#allocation2 + $0x83c] sm:$0xf]
    %v596 = vld [vmem:[#allocation2 + $0x840] sm:$0xf]
    %v597 = vld [vmem:[#allocation2 + $0x844] sm:$0xf]
    %v598 = vld [vmem:[#allocation2 + $0x848] sm:$0xf]
    %v599 = vld [vmem:[#allocation2 + $0x84c] sm:$0xf]
    %v600 = vld [vmem:[#allocation2 + $0x850] sm:$0xf]
    %v601 = vld [vmem:[#allocation2 + $0x854] sm:$0xf]
    %v602 = vld [vmem:[#allocation2 + $0x858] sm:$0xf]
    %v603 = vld [vmem:[#allocation2 + $0x85c] sm:$0xf]
    %v604 = vld [vmem:[#allocation2 + $0x860] sm:$0xf]
    %v605 = vld [vmem:[#allocation2 + $0x864] sm:$0xf]
    %v606 = vld [vmem:[#allocation2 + $0x868] sm:$0xf]
    %v607 = vld [vmem:[#allocation2 + $0x86c] sm:$0xf]
    %v608 = vld [vmem:[#allocation2 + $0x870] sm:$0xf]
    %v609 = vld [vmem:[#allocation2 + $0x874] sm:$0xf]
    %v610 = vld [vmem:[#allocation2 + $0x878] sm:$0xf]
    %v611 = vld [vmem:[#allocation2 + $0x87c] sm:$0xf]
    %v612 = vld [vmem:[#allocation2 + $0x880] sm:$0xf]
    %v613 = vld [vmem:[#allocation2 + $0x884] sm:$0xf]
    %v614 = vld [vmem:[#allocation2 + $0x888] sm:$0xf]
    %v615 = vld [vmem:[#allocation2 + $0x88c] sm:$0xf]
    %v616 = vld [vmem:[#allocation2 + $0x890] sm:$0xf]
    %v617 = vld [vmem:[#allocation2 + $0x894] sm:$0xf]
    %v618 = vld [vmem:[#allocation2 + $0x898] sm:$0xf]
    %v619 = vld [vmem:[#allocation2 + $0x89c] sm:$0xf]
    %v620 = vld [vmem:[#allocation2 + $0x8a0] sm:$0xf]
    %v621 = vld [vmem:[#allocation2 + $0x8a4] sm:$0xf]
    %v622 = vld [vmem:[#allocation2 + $0x8a8] sm:$0xf]
    %v623 = vld [vmem:[#allocation2 + $0x8ac] sm:$0xf]
    %v624 = vld [vmem:[#allocation2 + $0x8b0] sm:$0xf]
    %v625 = vld [vmem:[#allocation2 + $0x8b4] sm:$0xf]
    %v626 = vld [vmem:[#allocation2 + $0x8b8] sm:$0xf]
    %v627 = vld [vmem:[#allocation2 + $0x8bc] sm:$0xf]
    %v628 = vld [vmem:[#allocation2 + $0x8c0] sm:$0xf]
    %v629 = vld [vmem:[#allocation2 + $0x8c4] sm:$0xf]
    %v630 = vld [vmem:[#allocation2 + $0x8c8] sm:$0xf]
    %v631 = vld [vmem:[#allocation2 + $0x8cc] sm:$0xf]
    %v632 = vld [vmem:[#allocation2 + $0x8d0] sm:$0xf]
    %v633 = vld [vmem:[#allocation2 + $0x8d4] sm:$0xf]
    %v634 = vld [vmem:[#allocation2 + $0x8d8] sm:$0xf]
    %v635 = vld [vmem:[#allocation2 + $0x8dc] sm:$0xf]
    %v636 = vld [vmem:[#allocation2 + $0x8e0] sm:$0xf]
    %v637 = vld [vmem:[#allocation2 + $0x8e4] sm:$0xf]
    %v638 = vld [vmem:[#allocation2 + $0x8e8] sm:$0xf]
    %v639 = vld [vmem:[#allocation2 + $0x8ec] sm:$0xf]
    %v640 = vld [vmem:[#allocation2 + $0x8f0] sm:$0xf]
    %v641 = vld [vmem:[#allocation2 + $0x8f4] sm:$0xf]
    %v642 = vld [vmem:[#allocation2 + $0x8f8] sm:$0xf]
    %v643 = vld [vmem:[#allocation2 + $0x8fc] sm:$0xf]
    %v644 = vld [vmem:[#allocation2 + $0x900] sm:$0xf]
    %v645 = vld [vmem:[#allocation2 + $0x904] sm:$0xf]
    %v646 = vld [vmem:[#allocation2 + $0x908] sm:$0xf]
    %v647 = vld [vmem:[#allocation2 + $0x90c] sm:$0xf]
    %v648 = vld [vmem:[#allocation2 + $0x910] sm:$0xf]
    %v649 = vld [vmem:[#allocation2 + $0x914] sm:$0xf]
    %v650 = vld [vmem:[#allocation2 + $0x918] sm:$0xf]
    %v651 = vld [vmem:[#allocation2 + $0x91c] sm:$0xf]
    %v652 = vld [vmem:[#allocation2 + $0x920] sm:$0xf]
    %v653 = vld [vmem:[#allocation2 + $0x924] sm:$0xf]
    %v654 = vld [vmem:[#allocation2 + $0x928] sm:$0xf]
    %v655 = vld [vmem:[#allocation2 + $0x92c] sm:$0xf]
    %v656 = vld [vmem:[#allocation2 + $0x930] sm:$0xf]
    %v657 = vld [vmem:[#allocation2 + $0x934] sm:$0xf]
    %v658 = vld [vmem:[#allocation2 + $0x938] sm:$0xf]
    %v659 = vld [vmem:[#allocation2 + $0x93c] sm:$0xf]
    %v660 = vld [vmem:[#allocation2 + $0x940] sm:$0xf]
    %v661 = vld [vmem:[#allocation2 + $0x944] sm:$0xf]
    %v662 = vld [vmem:[#allocation2 + $0x948] sm:$0xf]
    %v663 = vld [vmem:[#allocation2 + $0x94c] sm:$0xf]
    %v664 = vld [vmem:[#allocation2 + $0x950] sm:$0xf]
    %v665 = vld [vmem:[#allocation2 + $0x954] sm:$0xf]
    %v666 = vld [vmem:[#allocation2 + $0x958] sm:$0xf]
    %v667 = vld [vmem:[#allocation2 + $0x95c] sm:$0xf]
    %v668 = vld [vmem:[#allocation2 + $0x960] sm:$0xf]
    %v669 = vld [vmem:[#allocation2 + $0x964] sm:$0xf]
    %v670 = vld [vmem:[#allocation2 + $0x968] sm:$0xf]
    %v671 = vld [vmem:[#allocation2 + $0x96c] sm:$0xf]
    %v672 = vld [vmem:[#allocation2 + $0x970] sm:$0xf]
    %v673 = vld [vmem:[#allocation2 + $0x974] sm:$0xf]
    %v674 = vld [vmem:[#allocation2 + $0x978] sm:$0xf]
    %v675 = vld [vmem:[#allocation2 + $0x97c] sm:$0xf]
    %v676 = vld [vmem:[#allocation2 + $0x980] sm:$0xf]
    %v677 = vld [vmem:[#allocation2 + $0x984] sm:$0xf]
    %v678 = vld [vmem:[#allocation2 + $0x988] sm:$0xf]
    %v679 = vld [vmem:[#allocation2 + $0x98c] sm:$0xf]
    %v680 = vld [vmem:[#allocation2 + $0x990] sm:$0xf]
    %v681 = vld [vmem:[#allocation2 + $0x994] sm:$0xf]
    %v682 = vld [vmem:[#allocation2 + $0x998] sm:$0xf]
    %v683 = vld [vmem:[#allocation2 + $0x99c] sm:$0xf]
    %v684 = vld [vmem:[#allocation2 + $0x9a0] sm:$0xf]
    %v685 = vld [vmem:[#allocation2 + $0x9a4] sm:$0xf]
    %v686 = vld [vmem:[#allocation2 + $0x9a8] sm:$0xf]
    %v687 = vld [vmem:[#allocation2 + $0x9ac] sm:$0xf]
    %v688 = vld [vmem:[#allocation2 + $0x9b0] sm:$0xf]
    %v689 = vld [vmem:[#allocation2 + $0x9b4] sm:$0xf]
    %v690 = vld [vmem:[#allocation2 + $0x9b8] sm:$0xf]
    %v691 = vld [vmem:[#allocation2 + $0x9bc] sm:$0xf]
    %v692 = vld [vmem:[#allocation2 + $0x9c0] sm:$0xf]
    %v693 = vld [vmem:[#allocation2 + $0x9c4] sm:$0xf]
    %v694 = vld [vmem:[#allocation2 + $0x9c8] sm:$0xf]
    %v695 = vld [vmem:[#allocation2 + $0x9cc] sm:$0xf]
    %v696 = vld [vmem:[#allocation2 + $0x9d0] sm:$0xf]
    %v697 = vld [vmem:[#allocation2 + $0x9d4] sm:$0xf]
    %v698 = vld [vmem:[#allocation2 + $0x9d8] sm:$0xf]
    %v699 = vld [vmem:[#allocation2 + $0x9dc] sm:$0xf]
    %v700 = vld [vmem:[#allocation2 + $0x9e0] sm:$0xf]
    %v701 = vld [vmem:[#allocation2 + $0x9e4] sm:$0xf]
    %v702 = vld [vmem:[#allocation2 + $0x9e8] sm:$0xf]
    %v703 = vld [vmem:[#allocation2 + $0x9ec] sm:$0xf]
    %v704 = vld [vmem:[#allocation2 + $0x9f0] sm:$0xf]
    %v705 = vld [vmem:[#allocation2 + $0x9f4] sm:$0xf]
    %v706 = vld [vmem:[#allocation2 + $0x9f8] sm:$0xf]
    %v707 = vld [vmem:[#allocation2 + $0x9fc] sm:$0xf]
    %v708 = vld [vmem:[#allocation2 + $0xa00] sm:$0xf]
    %v709 = vld [vmem:[#allocation2 + $0xa04] sm:$0xf]
    %v710 = vld [vmem:[#allocation2 + $0xa08] sm:$0xf]
    %v711 = vld [vmem:[#allocation2 + $0xa0c] sm:$0xf]
    %v712 = vld [vmem:[#allocation2 + $0xa10] sm:$0xf]
    %v713 = vld [vmem:[#allocation2 + $0xa14] sm:$0xf]
    %v714 = vld [vmem:[#allocation2 + $0xa18] sm:$0xf]
    %v715 = vld [vmem:[#allocation2 + $0xa1c] sm:$0xf]
    %v716 = vld [vmem:[#allocation2 + $0xa20] sm:$0xf]
    %v717 = vld [vmem:[#allocation2 + $0xa24] sm:$0xf]
    %v718 = vld [vmem:[#allocation2 + $0xa28] sm:$0xf]
    %v719 = vld [vmem:[#allocation2 + $0xa2c] sm:$0xf]
    %v720 = vld [vmem:[#allocation2 + $0xa30] sm:$0xf]
    %v721 = vld [vmem:[#allocation2 + $0xa34] sm:$0xf]
    %v722 = vld [vmem:[#allocation2 + $0xa38] sm:$0xf]
    %v723 = vld [vmem:[#allocation2 + $0xa3c] sm:$0xf]
    %v724 = vld [vmem:[#allocation2 + $0xa40] sm:$0xf]
    %v725 = vld [vmem:[#allocation2 + $0xa44] sm:$0xf]
    %v726 = vld [vmem:[#allocation2 + $0xa48] sm:$0xf]
    %v727 = vld [vmem:[#allocation2 + $0xa4c] sm:$0xf]
    %v728 = vld [vmem:[#allocation2 + $0xa50] sm:$0xf]
    %v729 = vld [vmem:[#allocation2 + $0xa54] sm:$0xf]
    %v730 = vld [vmem:[#allocation2 + $0xa58] sm:$0xf]
    %v731 = vld [vmem:[#allocation2 + $0xa5c] sm:$0xf]
    %v732 = vld [vmem:[#allocation2 + $0xa60] sm:$0xf]
    %v733 = vld [vmem:[#allocation2 + $0xa64] sm:$0xf]
    %v734 = vld [vmem:[#allocation2 + $0xa68] sm:$0xf]
    %v735 = vld [vmem:[#allocation2 + $0xa6c] sm:$0xf]
    %v736 = vld [vmem:[#allocation2 + $0xa70] sm:$0xf]
    %v737 = vld [vmem:[#allocation2 + $0xa74] sm:$0xf]
    %v738 = vld [vmem:[#allocation2 + $0xa78] sm:$0xf]
    %v739 = vld [vmem:[#allocation2 + $0xa7c] sm:$0xf]
    %v740 = vld [vmem:[#allocation2 + $0xa80] sm:$0xf]
    %v741 = vld [vmem:[#allocation2 + $0xa84] sm:$0xf]
    %v742 = vld [vmem:[#allocation2 + $0xa88] sm:$0xf]
    %v743 = vld [vmem:[#allocation2 + $0xa8c] sm:$0xf]
    %v744 = vld [vmem:[#allocation2 + $0xa90] sm:$0xf]
    %v745 = vld [vmem:[#allocation2 + $0xa94] sm:$0xf]
    %v746 = vld [vmem:[#allocation2 + $0xa98] sm:$0xf]
    %v747 = vld [vmem:[#allocation2 + $0xa9c] sm:$0xf]
    %v748 = vld [vmem:[#allocation2 + $0xaa0] sm:$0xf]
    %v749 = vld [vmem:[#allocation2 + $0xaa4] sm:$0xf]
    %v750 = vld [vmem:[#allocation2 + $0xaa8] sm:$0xf]
    %v751 = vld [vmem:[#allocation2 + $0xaac] sm:$0xf]
    %v752 = vld [vmem:[#allocation2 + $0xab0] sm:$0xf]
    %v753 = vld [vmem:[#allocation2 + $0xab4] sm:$0xf]
    %v754 = vld [vmem:[#allocation2 + $0xab8] sm:$0xf]
    %v755 = vld [vmem:[#allocation2 + $0xabc] sm:$0xf]
    %v756 = vld [vmem:[#allocation2 + $0xac0] sm:$0xf]
    %v757 = vld [vmem:[#allocation2 + $0xac4] sm:$0xf]
    %v758 = vld [vmem:[#allocation2 + $0xac8] sm:$0xf]
    %v759 = vld [vmem:[#allocation2 + $0xacc] sm:$0xf]
    %v760 = vld [vmem:[#allocation2 + $0xad0] sm:$0xf]
    %v761 = vld [vmem:[#allocation2 + $0xad4] sm:$0xf]
    %v762 = vld [vmem:[#allocation2 + $0xad8] sm:$0xf]
    %v763 = vld [vmem:[#allocation2 + $0xadc] sm:$0xf]
    %v764 = vld [vmem:[#allocation2 + $0xae0] sm:$0xf]
    %v765 = vld [vmem:[#allocation2 + $0xae4] sm:$0xf]
    %v766 = vld [vmem:[#allocation2 + $0xae8] sm:$0xf]
    %v767 = vld [vmem:[#allocation2 + $0xaec] sm:$0xf]
    %v768 = vld [vmem:[#allocation2 + $0xaf0] sm:$0xf]
    %v769 = vld [vmem:[#allocation2 + $0xaf4] sm:$0xf]
    %v770 = vld [vmem:[#allocation2 + $0xaf8] sm:$0xf]
    %v771 = vld [vmem:[#allocation2 + $0xafc] sm:$0xf]
    %v772 = vld [vmem:[#allocation2 + $0xb00] sm:$0xf]
    %v773 = vld [vmem:[#allocation2 + $0xb04] sm:$0xf]
    %v774 = vld [vmem:[#allocation2 + $0xb08] sm:$0xf]
    %v775 = vld [vmem:[#allocation2 + $0xb0c] sm:$0xf]
    %v776 = vld [vmem:[#allocation2 + $0xb10] sm:$0xf]
    %v777 = vld [vmem:[#allocation2 + $0xb14] sm:$0xf]
    %v778 = vld [vmem:[#allocation2 + $0xb18] sm:$0xf]
    %v779 = vld [vmem:[#allocation2 + $0xb1c] sm:$0xf]
    %v780 = vld [vmem:[#allocation2 + $0xb20] sm:$0xf]
    %v781 = vld [vmem:[#allocation2 + $0xb24] sm:$0xf]
    %v782 = vld [vmem:[#allocation2 + $0xb28] sm:$0xf]
    %v783 = vld [vmem:[#allocation2 + $0xb2c] sm:$0xf]
    %v784 = vld [vmem:[#allocation2 + $0xb30] sm:$0xf]
    %v785 = vld [vmem:[#allocation2 + $0xb34] sm:$0xf]
    %v786 = vld [vmem:[#allocation2 + $0xb38] sm:$0xf]
    %v787 = vld [vmem:[#allocation2 + $0xb3c] sm:$0xf]
    %v788 = vld [vmem:[#allocation2 + $0xb40] sm:$0xf]
    %v789 = vld [vmem:[#allocation2 + $0xb44] sm:$0xf]
    %v790 = vld [vmem:[#allocation2 + $0xb48] sm:$0xf]
    %v791 = vld [vmem:[#allocation2 + $0xb4c] sm:$0xf]
    %v792 = vld [vmem:[#allocation2 + $0xb50] sm:$0xf]
    %v793 = vld [vmem:[#allocation2 + $0xb54] sm:$0xf]
    %v794 = vld [vmem:[#allocation2 + $0xb58] sm:$0xf]
    %v795 = vld [vmem:[#allocation2 + $0xb5c] sm:$0xf]
    %v796 = vld [vmem:[#allocation2 + $0xb60] sm:$0xf]
    %v797 = vld [vmem:[#allocation2 + $0xb64] sm:$0xf]
    %v798 = vld [vmem:[#allocation2 + $0xb68] sm:$0xf]
    %v799 = vld [vmem:[#allocation2 + $0xb6c] sm:$0xf]
    %v800 = vld [vmem:[#allocation2 + $0xb70] sm:$0xf]
    %v801 = vld [vmem:[#allocation2 + $0xb74] sm:$0xf]
    %v802 = vld [vmem:[#allocation2 + $0xb78] sm:$0xf]
    %v803 = vld [vmem:[#allocation2 + $0xb7c] sm:$0xf]
    %v804 = vld [vmem:[#allocation2 + $0xb80] sm:$0xf]
    %v805 = vld [vmem:[#allocation2 + $0xb84] sm:$0xf]
    %v806 = vld [vmem:[#allocation2 + $0xb88] sm:$0xf]
    %v807 = vld [vmem:[#allocation2 + $0xb8c] sm:$0xf]
    %v808 = vld [vmem:[#allocation2 + $0xb90] sm:$0xf]
    %v809 = vld [vmem:[#allocation2 + $0xb94] sm:$0xf]
    %v810 = vld [vmem:[#allocation2 + $0xb98] sm:$0xf]
    %v811 = vld [vmem:[#allocation2 + $0xb9c] sm:$0xf]
    %v812 = vld [vmem:[#allocation2 + $0xba0] sm:$0xf]
    %v813 = vld [vmem:[#allocation2 + $0xba4] sm:$0xf]
    %v814 = vld [vmem:[#allocation2 + $0xba8] sm:$0xf]
    %v815 = vld [vmem:[#allocation2 + $0xbac] sm:$0xf]
    %v816 = vld [vmem:[#allocation2 + $0xbb0] sm:$0xf]
    %v817 = vld [vmem:[#allocation2 + $0xbb4] sm:$0xf]
    %v818 = vld [vmem:[#allocation2 + $0xbb8] sm:$0xf]
    %v819 = vld [vmem:[#allocation2 + $0xbbc] sm:$0xf]
    %v820 = vld [vmem:[#allocation2 + $0xbc0] sm:$0xf]
    %v821 = vld [vmem:[#allocation2 + $0xbc4] sm:$0xf]
    %v822 = vld [vmem:[#allocation2 + $0xbc8] sm:$0xf]
    %v823 = vld [vmem:[#allocation2 + $0xbcc] sm:$0xf]
    %v824 = vld [vmem:[#allocation2 + $0xbd0] sm:$0xf]
    %v825 = vld [vmem:[#allocation2 + $0xbd4] sm:$0xf]
    %v826 = vld [vmem:[#allocation2 + $0xbd8] sm:$0xf]
    %v827 = vld [vmem:[#allocation2 + $0xbdc] sm:$0xf]
    %v828 = vld [vmem:[#allocation2 + $0xbe0] sm:$0xf]
    %v829 = vld [vmem:[#allocation2 + $0xbe4] sm:$0xf]
    %v830 = vld [vmem:[#allocation2 + $0xbe8] sm:$0xf]
    %v831 = vld [vmem:[#allocation2 + $0xbec] sm:$0xf]
    %v832 = vld [vmem:[#allocation2 + $0xbf0] sm:$0xf]
    %v833 = vld [vmem:[#allocation2 + $0xbf4] sm:$0xf]
    %v834 = vld [vmem:[#allocation2 + $0xbf8] sm:$0xf]
    %v835 = vld [vmem:[#allocation2 + $0xbfc] sm:$0xf]
    %v836 = vld [vmem:[#allocation2 + $0xc00] sm:$0xf]
    %v837 = vld [vmem:[#allocation2 + $0xc04] sm:$0xf]
    %v838 = vld [vmem:[#allocation2 + $0xc08] sm:$0xf]
    %v839 = vld [vmem:[#allocation2 + $0xc0c] sm:$0xf]
    %v840 = vld [vmem:[#allocation2 + $0xc10] sm:$0xf]
    %v841 = vld [vmem:[#allocation2 + $0xc14] sm:$0xf]
    %v842 = vld [vmem:[#allocation2 + $0xc18] sm:$0xf]
    %v843 = vld [vmem:[#allocation2 + $0xc1c] sm:$0xf]
    %v844 = vld [vmem:[#allocation2 + $0xc20] sm:$0xf]
    %v845 = vld [vmem:[#allocation2 + $0xc24] sm:$0xf]
    %v846 = vld [vmem:[#allocation2 + $0xc28] sm:$0xf]
    %v847 = vld [vmem:[#allocation2 + $0xc2c] sm:$0xf]
    %v848 = vld [vmem:[#allocation2 + $0xc30] sm:$0xf]
    %v849 = vld [vmem:[#allocation2 + $0xc34] sm:$0xf]
    %v850 = vld [vmem:[#allocation2 + $0xc38] sm:$0xf]
    %v851 = vld [vmem:[#allocation2 + $0xc3c] sm:$0xf]
    %v852 = vld [vmem:[#allocation2 + $0xc40] sm:$0xf]
    %v853 = vld [vmem:[#allocation2 + $0xc44] sm:$0xf]
    %v854 = vld [vmem:[#allocation2 + $0xc48] sm:$0xf]
    %v855 = vld [vmem:[#allocation2 + $0xc4c] sm:$0xf]
    %v856 = vld [vmem:[#allocation2 + $0xc50] sm:$0xf]
    %v857 = vld [vmem:[#allocation2 + $0xc54] sm:$0xf]
    %v858 = vld [vmem:[#allocation2 + $0xc58] sm:$0xf]
    %v859 = vld [vmem:[#allocation2 + $0xc5c] sm:$0xf]
    %v860 = vld [vmem:[#allocation2 + $0xc60] sm:$0xf]
    %v861 = vld [vmem:[#allocation2 + $0xc64] sm:$0xf]
    %v862 = vld [vmem:[#allocation2 + $0xc68] sm:$0xf]
    %v863 = vld [vmem:[#allocation2 + $0xc6c] sm:$0xf]
    %v864 = vld [vmem:[#allocation2 + $0xc70] sm:$0xf]
    %v865 = vld [vmem:[#allocation2 + $0xc74] sm:$0xf]
    %v866 = vld [vmem:[#allocation2 + $0xc78] sm:$0xf]
    %v867 = vld [vmem:[#allocation2 + $0xc7c] sm:$0xf]
    %v868 = vld [vmem:[#allocation2 + $0xc80] sm:$0xf]
    %v869 = vld [vmem:[#allocation2 + $0xc84] sm:$0xf]
    %v870 = vld [vmem:[#allocation2 + $0xc88] sm:$0xf]
    %v871 = vld [vmem:[#allocation2 + $0xc8c] sm:$0xf]
    %v872 = vld [vmem:[#allocation2 + $0xc90] sm:$0xf]
    %v873 = vld [vmem:[#allocation2 + $0xc94] sm:$0xf]
    %v874 = vld [vmem:[#allocation2 + $0xc98] sm:$0xf]
    %v875 = vld [vmem:[#allocation2 + $0xc9c] sm:$0xf]
    %v876 = vld [vmem:[#allocation2 + $0xca0] sm:$0xf]
    %v877 = vld [vmem:[#allocation2 + $0xca4] sm:$0xf]
    %v878 = vld [vmem:[#allocation2 + $0xca8] sm:$0xf]
    %v879 = vld [vmem:[#allocation2 + $0xcac] sm:$0xf]
    %v880 = vld [vmem:[#allocation2 + $0xcb0] sm:$0xf]
    %v881 = vld [vmem:[#allocation2 + $0xcb4] sm:$0xf]
    %v882 = vld [vmem:[#allocation2 + $0xcb8] sm:$0xf]
    %v883 = vld [vmem:[#allocation2 + $0xcbc] sm:$0xf]
    %v884 = vld [vmem:[#allocation2 + $0xcc0] sm:$0xf]
    %v885 = vld [vmem:[#allocation2 + $0xcc4] sm:$0xf]
    %v886 = vld [vmem:[#allocation2 + $0xcc8] sm:$0xf]
    %v887 = vld [vmem:[#allocation2 + $0xccc] sm:$0xf]
    %v888 = vld [vmem:[#allocation2 + $0xcd0] sm:$0xf]
    %v889 = vld [vmem:[#allocation2 + $0xcd4] sm:$0xf]
    %v890 = vld [vmem:[#allocation2 + $0xcd8] sm:$0xf]
    %v891 = vld [vmem:[#allocation2 + $0xcdc] sm:$0xf]
    %v892 = vld [vmem:[#allocation2 + $0xce0] sm:$0xf]
    %v893 = vld [vmem:[#allocation2 + $0xce4] sm:$0xf]
    %v894 = vld [vmem:[#allocation2 + $0xce8] sm:$0xf]
    %v895 = vld [vmem:[#allocation2 + $0xcec] sm:$0xf]
    %v896 = vld [vmem:[#allocation2 + $0xcf0] sm:$0xf]
    %v897 = vld [vmem:[#allocation2 + $0xcf4] sm:$0xf]
    %v898 = vld [vmem:[#allocation2 + $0xcf8] sm:$0xf]
    %v899 = vld [vmem:[#allocation2 + $0xcfc] sm:$0xf]
    %v900 = vld [vmem:[#allocation2 + $0xd00] sm:$0xf]
    %v901 = vld [vmem:[#allocation2 + $0xd04] sm:$0xf]
    %v902 = vld [vmem:[#allocation2 + $0xd08] sm:$0xf]
    %v903 = vld [vmem:[#allocation2 + $0xd0c] sm:$0xf]
    %v904 = vld [vmem:[#allocation2 + $0xd10] sm:$0xf]
    %v905 = vld [vmem:[#allocation2 + $0xd14] sm:$0xf]
    %v906 = vld [vmem:[#allocation2 + $0xd18] sm:$0xf]
    %v907 = vld [vmem:[#allocation2 + $0xd1c] sm:$0xf]
    %v908 = vld [vmem:[#allocation2 + $0xd20] sm:$0xf]
    %v909 = vld [vmem:[#allocation2 + $0xd24] sm:$0xf]
    %v910 = vld [vmem:[#allocation2 + $0xd28] sm:$0xf]
    %v911 = vld [vmem:[#allocation2 + $0xd2c] sm:$0xf]
    %v912 = vld [vmem:[#allocation2 + $0xd30] sm:$0xf]
    %v913 = vld [vmem:[#allocation2 + $0xd34] sm:$0xf]
    %v914 = vld [vmem:[#allocation2 + $0xd38] sm:$0xf]
    %v915 = vld [vmem:[#allocation2 + $0xd3c] sm:$0xf]
    %v916 = vld [vmem:[#allocation2 + $0xd40] sm:$0xf]
    %v917 = vld [vmem:[#allocation2 + $0xd44] sm:$0xf]
    %v918 = vld [vmem:[#allocation2 + $0xd48] sm:$0xf]
    %v919 = vld [vmem:[#allocation2 + $0xd4c] sm:$0xf]
    %v920 = vld [vmem:[#allocation2 + $0xd50] sm:$0xf]
    %v921 = vld [vmem:[#allocation2 + $0xd54] sm:$0xf]
    %v922 = vld [vmem:[#allocation2 + $0xd58] sm:$0xf]
    %v923 = vld [vmem:[#allocation2 + $0xd5c] sm:$0xf]
    %v924 = vld [vmem:[#allocation2 + $0xd60] sm:$0xf]
    %v925 = vld [vmem:[#allocation2 + $0xd64] sm:$0xf]
    %v926 = vld [vmem:[#allocation2 + $0xd68] sm:$0xf]
    %v927 = vld [vmem:[#allocation2 + $0xd6c] sm:$0xf]
    %v928 = vld [vmem:[#allocation2 + $0xd70] sm:$0xf]
    %v929 = vld [vmem:[#allocation2 + $0xd74] sm:$0xf]
    %v930 = vld [vmem:[#allocation2 + $0xd78] sm:$0xf]
    %v931 = vld [vmem:[#allocation2 + $0xd7c] sm:$0xf]
    %v932 = vld [vmem:[#allocation2 + $0xd80] sm:$0xf]
    %v933 = vld [vmem:[#allocation2 + $0xd84] sm:$0xf]
    %v934 = vld [vmem:[#allocation2 + $0xd88] sm:$0xf]
    %v935 = vld [vmem:[#allocation2 + $0xd8c] sm:$0xf]
    %v936 = vld [vmem:[#allocation2 + $0xd90] sm:$0xf]
    %v937 = vld [vmem:[#allocation2 + $0xd94] sm:$0xf]
    %v938 = vld [vmem:[#allocation2 + $0xd98] sm:$0xf]
    %v939 = vld [vmem:[#allocation2 + $0xd9c] sm:$0xf]
    %v940 = vld [vmem:[#allocation2 + $0xda0] sm:$0xf]
    %v941 = vld [vmem:[#allocation2 + $0xda4] sm:$0xf]
    %v942 = vld [vmem:[#allocation2 + $0xda8] sm:$0xf]
    %v943 = vld [vmem:[#allocation2 + $0xdac] sm:$0xf]
    %v944 = vld [vmem:[#allocation2 + $0xdb0] sm:$0xf]
    %v945 = vld [vmem:[#allocation2 + $0xdb4] sm:$0xf]
    %v946 = vld [vmem:[#allocation2 + $0xdb8] sm:$0xf]
    %v947 = vld [vmem:[#allocation2 + $0xdbc] sm:$0xf]
    %v948 = vld [vmem:[#allocation2 + $0xdc0] sm:$0xf]
    %v949 = vld [vmem:[#allocation2 + $0xdc4] sm:$0xf]
    %v950 = vld [vmem:[#allocation2 + $0xdc8] sm:$0xf]
    %v951 = vld [vmem:[#allocation2 + $0xdcc] sm:$0xf]
    %v952 = vld [vmem:[#allocation2 + $0xdd0] sm:$0xf]
    %v953 = vld [vmem:[#allocation2 + $0xdd4] sm:$0xf]
    %v954 = vld [vmem:[#allocation2 + $0xdd8] sm:$0xf]
    %v955 = vld [vmem:[#allocation2 + $0xddc] sm:$0xf]
    %v956 = vld [vmem:[#allocation2 + $0xde0] sm:$0xf]
    %v957 = vld [vmem:[#allocation2 + $0xde4] sm:$0xf]
    %v958 = vld [vmem:[#allocation2 + $0xde8] sm:$0xf]
    %v959 = vld [vmem:[#allocation2 + $0xdec] sm:$0xf]
    %v960 = vld [vmem:[#allocation2 + $0xdf0] sm:$0xf]
    %v961 = vld [vmem:[#allocation2 + $0xdf4] sm:$0xf]
    %v962 = vld [vmem:[#allocation2 + $0xdf8] sm:$0xf]
    %v963 = vld [vmem:[#allocation2 + $0xdfc] sm:$0xf]
    %v964 = vld [vmem:[#allocation2 + $0xe00] sm:$0xf]
    %v965 = vld [vmem:[#allocation2 + $0xe04] sm:$0xf]
    %v966 = vld [vmem:[#allocation2 + $0xe08] sm:$0xf]
    %v967 = vld [vmem:[#allocation2 + $0xe0c] sm:$0xf]
    %v968 = vld [vmem:[#allocation2 + $0xe10] sm:$0xf]
    %v969 = vld [vmem:[#allocation2 + $0xe14] sm:$0xf]
    %v970 = vld [vmem:[#allocation2 + $0xe18] sm:$0xf]
    %v971 = vld [vmem:[#allocation2 + $0xe1c] sm:$0xf]
    %v972 = vld [vmem:[#allocation2 + $0xe20] sm:$0xf]
    %v973 = vld [vmem:[#allocation2 + $0xe24] sm:$0xf]
    %v974 = vld [vmem:[#allocation2 + $0xe28] sm:$0xf]
    %v975 = vld [vmem:[#allocation2 + $0xe2c] sm:$0xf]
    %v976 = vld [vmem:[#allocation2 + $0xe30] sm:$0xf]
    %v977 = vld [vmem:[#allocation2 + $0xe34] sm:$0xf]
    %v978 = vld [vmem:[#allocation2 + $0xe38] sm:$0xf]
    %v979 = vld [vmem:[#allocation2 + $0xe3c] sm:$0xf]
    %v980 = vld [vmem:[#allocation2 + $0xe40] sm:$0xf]
    %v981 = vld [vmem:[#allocation2 + $0xe44] sm:$0xf]
    %v982 = vld [vmem:[#allocation2 + $0xe48] sm:$0xf]
    %v983 = vld [vmem:[#allocation2 + $0xe4c] sm:$0xf]
    %v984 = vld [vmem:[#allocation2 + $0xe50] sm:$0xf]
    %v985 = vld [vmem:[#allocation2 + $0xe54] sm:$0xf]
    %v986 = vld [vmem:[#allocation2 + $0xe58] sm:$0xf]
    %v987 = vld [vmem:[#allocation2 + $0xe5c] sm:$0xf]
    %v988 = vld [vmem:[#allocation2 + $0xe60] sm:$0xf]
    %v989 = vld [vmem:[#allocation2 + $0xe64] sm:$0xf]
    %v990 = vld [vmem:[#allocation2 + $0xe68] sm:$0xf]
    %v991 = vld [vmem:[#allocation2 + $0xe6c] sm:$0xf]
    %v992 = vld [vmem:[#allocation2 + $0xe70] sm:$0xf]
    %v993 = vld [vmem:[#allocation2 + $0xe74] sm:$0xf]
    %v994 = vld [vmem:[#allocation2 + $0xe78] sm:$0xf]
    %v995 = vld [vmem:[#allocation2 + $0xe7c] sm:$0xf]
    %v996 = vld [vmem:[#allocation2 + $0xe80] sm:$0xf]
    %v997 = vld [vmem:[#allocation2 + $0xe84] sm:$0xf]
    %v998 = vld [vmem:[#allocation2 + $0xe88] sm:$0xf]
    %v999 = vld [vmem:[#allocation2 + $0xe8c] sm:$0xf]
    %v1000 = vld [vmem:[#allocation2 + $0xe90] sm:$0xf]
    %v1001 = vld [vmem:[#allocation2 + $0xe94] sm:$0xf]
    %v1002 = vld [vmem:[#allocation2 + $0xe98] sm:$0xf]
    %v1003 = vld [vmem:[#allocation2 + $0xe9c] sm:$0xf]
    %v1004 = vld [vmem:[#allocation2 + $0xea0] sm:$0xf]
    %v1005 = vld [vmem:[#allocation2 + $0xea4] sm:$0xf]
    %v1006 = vld [vmem:[#allocation2 + $0xea8] sm:$0xf]
    %v1007 = vld [vmem:[#allocation2 + $0xeac] sm:$0xf]
    %v1008 = vld [vmem:[#allocation2 + $0xeb0] sm:$0xf]
    %v1009 = vld [vmem:[#allocation2 + $0xeb4] sm:$0xf]
    %v1010 = vld [vmem:[#allocation2 + $0xeb8] sm:$0xf]
    %v1011 = vld [vmem:[#allocation2 + $0xebc] sm:$0xf]
    %v1012 = vld [vmem:[#allocation2 + $0xec0] sm:$0xf]
    %v1013 = vld [vmem:[#allocation2 + $0xec4] sm:$0xf]
    %v1014 = vld [vmem:[#allocation2 + $0xec8] sm:$0xf]
    %v1015 = vld [vmem:[#allocation2 + $0xecc] sm:$0xf]
    %v1016 = vld [vmem:[#allocation2 + $0xed0] sm:$0xf]
    %v1017 = vld [vmem:[#allocation2 + $0xed4] sm:$0xf]
    %v1018 = vld [vmem:[#allocation2 + $0xed8] sm:$0xf]
    %v1019 = vld [vmem:[#allocation2 + $0xedc] sm:$0xf]
    %v1020 = vld [vmem:[#allocation2 + $0xee0] sm:$0xf]
    %v1021 = vld [vmem:[#allocation2 + $0xee4] sm:$0xf]
    %v1022 = vld [vmem:[#allocation2 + $0xee8] sm:$0xf]
    %v1023 = vld [vmem:[#allocation2 + $0xeec] sm:$0xf]
    %v1024 = vld [vmem:[#allocation2 + $0xef0] sm:$0xf]
    %v1025 = vld [vmem:[#allocation2 + $0xef4] sm:$0xf]
    %v1026 = vld [vmem:[#allocation2 + $0xef8] sm:$0xf]
    %v1027 = vld [vmem:[#allocation2 + $0xefc] sm:$0xf]
    %v1028 = vld [vmem:[#allocation2 + $0xf00] sm:$0xf]
    %v1029 = vld [vmem:[#allocation2 + $0xf04] sm:$0xf]
    %v1030 = vld [vmem:[#allocation2 + $0xf08] sm:$0xf]
    %v1031 = vld [vmem:[#allocation2 + $0xf0c] sm:$0xf]
    %v1032 = vld [vmem:[#allocation2 + $0xf10] sm:$0xf]
    %v1033 = vld [vmem:[#allocation2 + $0xf14] sm:$0xf]
    %v1034 = vld [vmem:[#allocation2 + $0xf18] sm:$0xf]
    %v1035 = vld [vmem:[#allocation2 + $0xf1c] sm:$0xf]
    %v1036 = vld [vmem:[#allocation2 + $0xf20] sm:$0xf]
    %v1037 = vld [vmem:[#allocation2 + $0xf24] sm:$0xf]
    %v1038 = vld [vmem:[#allocation2 + $0xf28] sm:$0xf]
    %v1039 = vld [vmem:[#allocation2 + $0xf2c] sm:$0xf]
    %v1040 = vld [vmem:[#allocation2 + $0xf30] sm:$0xf]
    %v1041 = vld [vmem:[#allocation2 + $0xf34] sm:$0xf]
    %v1042 = vld [vmem:[#allocation2 + $0xf38] sm:$0xf]
    %v1043 = vld [vmem:[#allocation2 + $0xf3c] sm:$0xf]
    %v1044 = vld [vmem:[#allocation2 + $0xf40] sm:$0xf]
    %v1045 = vld [vmem:[#allocation2 + $0xf44] sm:$0xf]
    %v1046 = vld [vmem:[#allocation2 + $0xf48] sm:$0xf]
    %v1047 = vld [vmem:[#allocation2 + $0xf4c] sm:$0xf]
    %v1048 = vld [vmem:[#allocation2 + $0xf50] sm:$0xf]
    %v1049 = vld [vmem:[#allocation2 + $0xf54] sm:$0xf]
    %v1050 = vld [vmem:[#allocation2 + $0xf58] sm:$0xf]
    %v1051 = vld [vmem:[#allocation2 + $0xf5c] sm:$0xf]
    %v1052 = vld [vmem:[#allocation2 + $0xf60] sm:$0xf]
    %v1053 = vld [vmem:[#allocation2 + $0xf64] sm:$0xf]
    %v1054 = vld [vmem:[#allocation2 + $0xf68] sm:$0xf]
    %v1055 = vld [vmem:[#allocation2 + $0xf6c] sm:$0xf]
    %v1056 = vld [vmem:[#allocation2 + $0xf70] sm:$0xf]
    %v1057 = vld [vmem:[#allocation2 + $0xf74] sm:$0xf]
    %v1058 = vld [vmem:[#allocation2 + $0xf78] sm:$0xf]
    %v1059 = vld [vmem:[#allocation2 + $0xf7c] sm:$0xf]
    %v1060 = vld [vmem:[#allocation2 + $0xf80] sm:$0xf]
    %v1061 = vld [vmem:[#allocation2 + $0xf84] sm:$0xf]
    %v1062 = vld [vmem:[#allocation2 + $0xf88] sm:$0xf]
    %v1063 = vld [vmem:[#allocation2 + $0xf8c] sm:$0xf]
    %v1064 = vld [vmem:[#allocation2 + $0xf90] sm:$0xf]
    %v1065 = vld [vmem:[#allocation2 + $0xf94] sm:$0xf]
    %v1066 = vld [vmem:[#allocation2 + $0xf98] sm:$0xf]
    %v1067 = vld [vmem:[#allocation2 + $0xf9c] sm:$0xf]
    %v1068 = vld [vmem:[#allocation2 + $0xfa0] sm:$0xf]
    %v1069 = vld [vmem:[#allocation2 + $0xfa4] sm:$0xf]
    %v1070 = vld [vmem:[#allocation2 + $0xfa8] sm:$0xf]
    %v1071 = vld [vmem:[#allocation2 + $0xfac] sm:$0xf]
    %v1072 = vld [vmem:[#allocation2 + $0xfb0] sm:$0xf]
    %v1073 = vld [vmem:[#allocation2 + $0xfb4] sm:$0xf]
    %v1074 = vld [vmem:[#allocation2 + $0xfb8] sm:$0xf]
    %v1075 = vld [vmem:[#allocation2 + $0xfbc] sm:$0xf]
    %v1076 = vld [vmem:[#allocation2 + $0xfc0] sm:$0xf]
    %v1077 = vld [vmem:[#allocation2 + $0xfc4] sm:$0xf]
    %v1078 = vld [vmem:[#allocation2 + $0xfc8] sm:$0xf]
    %v1079 = vld [vmem:[#allocation2 + $0xfcc] sm:$0xf]
    %v1080 = vld [vmem:[#allocation2 + $0xfd0] sm:$0xf]
    %v1081 = vld [vmem:[#allocation2 + $0xfd4] sm:$0xf]
    %v1082 = vld [vmem:[#allocation2 + $0xfd8] sm:$0xf]
    %v1083 = vld [vmem:[#allocation2 + $0xfdc] sm:$0xf]
    %v1084 = vld [vmem:[#allocation2 + $0xfe0] sm:$0xf]
    %v1085 = vld [vmem:[#allocation2 + $0xfe4] sm:$0xf]
    %v1086 = vld [vmem:[#allocation2 + $0xfe8] sm:$0xf]
    %v1087 = vld [vmem:[#allocation2 + $0xfec] sm:$0xf]
    %v1088 = vld [vmem:[#allocation2 + $0xff0] sm:$0xf]
    %v1089 = vld [vmem:[#allocation2 + $0xff4] sm:$0xf]
    %v1090 = vld [vmem:[#allocation2 + $0xff8] sm:$0xf]
    %v1091 = vld [vmem:[#allocation2 + $0xffc] sm:$0xf]
    %v1092 = vld [vmem:[#allocation2 + $0x1000] sm:$0xf]
    %v1093 = vld [vmem:[#allocation2 + $0x1004] sm:$0xf]
    %v1094 = vld [vmem:[#allocation2 + $0x1008] sm:$0xf]
    %v1095 = vld [vmem:[#allocation2 + $0x100c] sm:$0xf]
    %v1096 = vld [vmem:[#allocation2 + $0x1010] sm:$0xf]
    %v1097 = vld [vmem:[#allocation2 + $0x1014] sm:$0xf]
    %v1098 = vld [vmem:[#allocation2 + $0x1018] sm:$0xf]
    %v1099 = vld [vmem:[#allocation2 + $0x101c] sm:$0xf]
    %v1100 = vld [vmem:[#allocation2 + $0x1020] sm:$0xf]
    %v1101 = vld [vmem:[#allocation2 + $0x1024] sm:$0xf]
    %v1102 = vld [vmem:[#allocation2 + $0x1028] sm:$0xf]
    %v1103 = vld [vmem:[#allocation2 + $0x102c] sm:$0xf]
    %v1104 = vld [vmem:[#allocation2 + $0x1030] sm:$0xf]
    %v1105 = vld [vmem:[#allocation2 + $0x1034] sm:$0xf]
    %v1106 = vld [vmem:[#allocation2 + $0x1038] sm:$0xf]
    %v1107 = vld [vmem:[#allocation2 + $0x103c] sm:$0xf]
    %v1108 = vld [vmem:[#allocation2 + $0x1040] sm:$0xf]
    %v1109 = vld [vmem:[#allocation2 + $0x1044] sm:$0xf]
    %v1110 = vld [vmem:[#allocation2 + $0x1048] sm:$0xf]
    %v1111 = vld [vmem:[#allocation2 + $0x104c] sm:$0xf]
    %v1112 = vld [vmem:[#allocation2 + $0x1050] sm:$0xf]
    %v1113 = vld [vmem:[#allocation2 + $0x1054] sm:$0xf]
    %v1114 = vld [vmem:[#allocation2 + $0x1058] sm:$0xf]
    %v1115 = vld [vmem:[#allocation2 + $0x105c] sm:$0xf]
    %v1116 = vld [vmem:[#allocation2 + $0x1060] sm:$0xf]
    %v1117 = vld [vmem:[#allocation2 + $0x1064] sm:$0xf]
    %v1118 = vld [vmem:[#allocation2 + $0x1068] sm:$0xf]
    %v1119 = vld [vmem:[#allocation2 + $0x106c] sm:$0xf]
    %v1120 = vld [vmem:[#allocation2 + $0x1070] sm:$0xf]
    %v1121 = vld [vmem:[#allocation2 + $0x1074] sm:$0xf]
    %v1122 = vld [vmem:[#allocation2 + $0x1078] sm:$0xf]
    %v1123 = vld [vmem:[#allocation2 + $0x107c] sm:$0xf]
    %v1124 = vld [vmem:[#allocation2 + $0x1080] sm:$0xf]
    %v1125 = vld [vmem:[#allocation2 + $0x1084] sm:$0xf]
    %v1126 = vld [vmem:[#allocation2 + $0x1088] sm:$0xf]
    %v1127 = vld [vmem:[#allocation2 + $0x108c] sm:$0xf]
    %v1128 = vld [vmem:[#allocation2 + $0x1090] sm:$0xf]
    %v1129 = vld [vmem:[#allocation2 + $0x1094] sm:$0xf]
    %v1130 = vld [vmem:[#allocation2 + $0x1098] sm:$0xf]
    %v1131 = vld [vmem:[#allocation2 + $0x109c] sm:$0xf]
    %v1132 = vld [vmem:[#allocation2 + $0x10a0] sm:$0xf]
    %v1133 = vld [vmem:[#allocation2 + $0x10a4] sm:$0xf]
    %v1134 = vld [vmem:[#allocation2 + $0x10a8] sm:$0xf]
    %v1135 = vld [vmem:[#allocation2 + $0x10ac] sm:$0xf]
    %v1136 = vld [vmem:[#allocation2 + $0x10b0] sm:$0xf]
    %v1137 = vld [vmem:[#allocation2 + $0x10b4] sm:$0xf]
    %v1138 = vld [vmem:[#allocation2 + $0x10b8] sm:$0xf]
    %v1139 = vld [vmem:[#allocation2 + $0x10bc] sm:$0xf]
    %v1140 = vld [vmem:[#allocation2 + $0x10c0] sm:$0xf]
    %v1141 = vld [vmem:[#allocation2 + $0x10c4] sm:$0xf]
    %v1142 = vld [vmem:[#allocation2 + $0x10c8] sm:$0xf]
    %v1143 = vld [vmem:[#allocation2 + $0x10cc] sm:$0xf]
    %v1144 = vld [vmem:[#allocation2 + $0x10d0] sm:$0xf]
    %v1145 = vld [vmem:[#allocation2 + $0x10d4] sm:$0xf]
    %v1146 = vld [vmem:[#allocation2 + $0x10d8] sm:$0xf]
    %v1147 = vld [vmem:[#allocation2 + $0x10dc] sm:$0xf]
    %v1148 = vld [vmem:[#allocation2 + $0x10e0] sm:$0xf]
    %v1149 = vld [vmem:[#allocation2 + $0x10e4] sm:$0xf]
    %v1150 = vld [vmem:[#allocation2 + $0x10e8] sm:$0xf]
    %v1151 = vld [vmem:[#allocation2 + $0x10ec] sm:$0xf]
    %v1152 = vld [vmem:[#allocation2 + $0x10f0] sm:$0xf]
    %v1153 = vld [vmem:[#allocation2 + $0x10f4] sm:$0xf]
    %v1154 = vld [vmem:[#allocation2 + $0x10f8] sm:$0xf]
    %v1155 = vld [vmem:[#allocation2 + $0x10fc] sm:$0xf]
    %v1156 = vld [vmem:[#allocation2 + $0x1100] sm:$0xf]
    %v1157 = vld [vmem:[#allocation2 + $0x1104] sm:$0xf]
    %v1158 = vld [vmem:[#allocation2 + $0x1108] sm:$0xf]
    %v1159 = vld [vmem:[#allocation2 + $0x110c] sm:$0xf]
    %v1160 = vld [vmem:[#allocation2 + $0x1110] sm:$0xf]
    %v1161 = vld [vmem:[#allocation2 + $0x1114] sm:$0xf]
    %v1162 = vld [vmem:[#allocation2 + $0x1118] sm:$0xf]
    %v1163 = vld [vmem:[#allocation2 + $0x111c] sm:$0xf]
    %v1164 = vld [vmem:[#allocation2 + $0x1120] sm:$0xf]
    %v1165 = vld [vmem:[#allocation2 + $0x1124] sm:$0xf]
    %v1166 = vld [vmem:[#allocation2 + $0x1128] sm:$0xf]
    %v1167 = vld [vmem:[#allocation2 + $0x112c] sm:$0xf]
    %v1168 = vld [vmem:[#allocation2 + $0x1130] sm:$0xf]
    %v1169 = vld [vmem:[#allocation2 + $0x1134] sm:$0xf]
    %v1170 = vld [vmem:[#allocation2 + $0x1138] sm:$0xf]
    %v1171 = vld [vmem:[#allocation2 + $0x113c] sm:$0xf]
    %v1172 = vld [vmem:[#allocation2 + $0x1140] sm:$0xf]
    %v1173 = vld [vmem:[#allocation2 + $0x1144] sm:$0xf]
    %v1174 = vld [vmem:[#allocation2 + $0x1148] sm:$0xf]
    %v1175 = vld [vmem:[#allocation2 + $0x114c] sm:$0xf]
    %v1176 = vld [vmem:[#allocation2 + $0x1150] sm:$0xf]
    %v1177 = vld [vmem:[#allocation2 + $0x1154] sm:$0xf]
    %v1178 = vld [vmem:[#allocation2 + $0x1158] sm:$0xf]
    %v1179 = vld [vmem:[#allocation2 + $0x115c] sm:$0xf]
    %v1180 = vld [vmem:[#allocation2 + $0x1160] sm:$0xf]
    %v1181 = vld [vmem:[#allocation2 + $0x1164] sm:$0xf]
    %v1182 = vld [vmem:[#allocation2 + $0x1168] sm:$0xf]
    %v1183 = vld [vmem:[#allocation2 + $0x116c] sm:$0xf]
    %v1184 = vld [vmem:[#allocation2 + $0x1170] sm:$0xf]
    %v1185 = vld [vmem:[#allocation2 + $0x1174] sm:$0xf]
    %v1186 = vld [vmem:[#allocation2 + $0x1178] sm:$0xf]
    %v1187 = vld [vmem:[#allocation2 + $0x117c] sm:$0xf]
    %v1188 = vld [vmem:[#allocation2 + $0x1180] sm:$0xf]
    %v1189 = vld [vmem:[#allocation2 + $0x1184] sm:$0xf]
    %v1190 = vld [vmem:[#allocation2 + $0x1188] sm:$0xf]
    %v1191 = vld [vmem:[#allocation2 + $0x118c] sm:$0xf]
    %v1192 = vld [vmem:[#allocation2 + $0x1190] sm:$0xf]
    %v1193 = vld [vmem:[#allocation2 + $0x1194] sm:$0xf]
    %v1194 = vld [vmem:[#allocation2 + $0x1198] sm:$0xf]
    %v1195 = vld [vmem:[#allocation2 + $0x119c] sm:$0xf]
    %v1196 = vld [vmem:[#allocation2 + $0x11a0] sm:$0xf]
    %v1197 = vld [vmem:[#allocation2 + $0x11a4] sm:$0xf]
    %v1198 = vld [vmem:[#allocation2 + $0x11a8] sm:$0xf]
    %v1199 = vld [vmem:[#allocation2 + $0x11ac] sm:$0xf]
    %v1200 = vld [vmem:[#allocation2 + $0x11b0] sm:$0xf]
    %v1201 = vld [vmem:[#allocation2 + $0x11b4] sm:$0xf]
    %v1202 = vld [vmem:[#allocation2 + $0x11b8] sm:$0xf]
    %v1203 = vld [vmem:[#allocation2 + $0x11bc] sm:$0xf]
    %v1204 = vld [vmem:[#allocation2 + $0x11c0] sm:$0xf]
    %v1205 = vld [vmem:[#allocation2 + $0x11c4] sm:$0xf]
    %v1206 = vld [vmem:[#allocation2 + $0x11c8] sm:$0xf]
    %v1207 = vld [vmem:[#allocation2 + $0x11cc] sm:$0xf]
    %v1208 = vld [vmem:[#allocation2 + $0x11d0] sm:$0xf]
    %v1209 = vld [vmem:[#allocation2 + $0x11d4] sm:$0xf]
    %v1210 = vld [vmem:[#allocation2 + $0x11d8] sm:$0xf]
    %v1211 = vld [vmem:[#allocation2 + $0x11dc] sm:$0xf]
    %v1212 = vld [vmem:[#allocation2 + $0x11e0] sm:$0xf]
    %v1213 = vld [vmem:[#allocation2 + $0x11e4] sm:$0xf]
    %v1214 = vld [vmem:[#allocation2 + $0x11e8] sm:$0xf]
    %v1215 = vld [vmem:[#allocation2 + $0x11ec] sm:$0xf]
    %v1216 = vld [vmem:[#allocation2 + $0x11f0] sm:$0xf]
    %v1217 = vld [vmem:[#allocation2 + $0x11f4] sm:$0xf]
    %v1218 = vld [vmem:[#allocation2 + $0x11f8] sm:$0xf]
    %v1219 = vld [vmem:[#allocation2 + $0x11fc] sm:$0xf]
    %v1220 = vld [vmem:[#allocation5] sm:$0x1]
    %v1222 = vlaneseq
    %v1223 = vshrl.u32 %v1222, 7
    %v1224 = vsub.s32 0, %v1223
    %v1225 = vrot.slane %v1220, %v1224
    %v1236 = vcombine.high %v59, %v59
    %v1238 = vunpack.c.l.s4 1966171168
    %v1239 = vunpack.c.0.s8 %v1238
    %v1240 = vlaneseq
    %v1241 = vshrl.u32 %v1240, 7
    %v1242 = vsub.s32 %v1239, %v1241
    %v1243 = vrot.slane %v59, %v1242
    %v1245 = vunpack.c.l.s4 1966171168
    %v1246 = vunpack.c.0.s8 %v1245
    %v1247 = vlaneseq
    %v1248 = vshrl.u32 %v1247, 7
    %v1249 = vsub.s32 %v1246, %v1248
    %v1250 = vrot.slane %v1236, %v1249
    %v1251 = vcombine.high %v1243, %v1243
    %v1252 = vcombine.high %v1250, %v1250
    %v1254 = vunpack.c.l.s4 1966171168
    %v1255 = vunpack.c.0.s8 %v1254
    %v1256 = vlaneseq
    %v1257 = vshrl.u32 %v1256, 7
    %v1258 = vsub.s32 %v1255, %v1257
    %v1259 = vrot.slane %v1243, %v1258
    %v1261 = vunpack.c.l.s4 1966171168
    %v1262 = vunpack.c.0.s8 %v1261
    %v1263 = vlaneseq
    %v1264 = vshrl.u32 %v1263, 7
    %v1265 = vsub.s32 %v1262, %v1264
    %v1266 = vrot.slane %v1250, %v1265
    %v1268 = vunpack.c.l.s4 1966171168
    %v1269 = vunpack.c.0.s8 %v1268
    %v1270 = vlaneseq
    %v1271 = vshrl.u32 %v1270, 7
    %v1272 = vsub.s32 %v1269, %v1271
    %v1273 = vrot.slane %v1251, %v1272
    %v1275 = vunpack.c.l.s4 1966171168
    %v1276 = vunpack.c.0.s8 %v1275
    %v1277 = vlaneseq
    %v1278 = vshrl.u32 %v1277, 7
    %v1279 = vsub.s32 %v1276, %v1278
    %v1280 = vrot.slane %v1252, %v1279
    %v1281 = vcombine.high %v1259, %v1259
    %v1282 = vcombine.high %v1266, %v1266
    %v1283 = vcombine.high %v1273, %v1273
    %v1284 = vcombine.high %v1280, %v1280
    %v1285 = vcombine.high %v60, %v60
    %v1287 = vunpack.c.l.s4 1966171168
    %v1288 = vunpack.c.0.s8 %v1287
    %v1289 = vlaneseq
    %v1290 = vshrl.u32 %v1289, 7
    %v1291 = vsub.s32 %v1288, %v1290
    %v1292 = vrot.slane %v60, %v1291
    %v1294 = vunpack.c.l.s4 1966171168
    %v1295 = vunpack.c.0.s8 %v1294
    %v1296 = vlaneseq
    %v1297 = vshrl.u32 %v1296, 7
    %v1298 = vsub.s32 %v1295, %v1297
    %v1299 = vrot.slane %v1285, %v1298
    %v1300 = vcombine.high %v1292, %v1292
    %v1301 = vcombine.high %v1299, %v1299
    %v1303 = vunpack.c.l.s4 1966171168
    %v1304 = vunpack.c.0.s8 %v1303
    %v1305 = vlaneseq
    %v1306 = vshrl.u32 %v1305, 7
    %v1307 = vsub.s32 %v1304, %v1306
    %v1308 = vrot.slane %v1292, %v1307
    %v1310 = vunpack.c.l.s4 1966171168
    %v1311 = vunpack.c.0.s8 %v1310
    %v1312 = vlaneseq
    %v1313 = vshrl.u32 %v1312, 7
    %v1314 = vsub.s32 %v1311, %v1313
    %v1315 = vrot.slane %v1299, %v1314
    %v1317 = vunpack.c.l.s4 1966171168
    %v1318 = vunpack.c.0.s8 %v1317
    %v1319 = vlaneseq
    %v1320 = vshrl.u32 %v1319, 7
    %v1321 = vsub.s32 %v1318, %v1320
    %v1322 = vrot.slane %v1300, %v1321
    %v1324 = vunpack.c.l.s4 1966171168
    %v1325 = vunpack.c.0.s8 %v1324
    %v1326 = vlaneseq
    %v1327 = vshrl.u32 %v1326, 7
    %v1328 = vsub.s32 %v1325, %v1327
    %v1329 = vrot.slane %v1301, %v1328
    %v1330 = vcombine.high %v1308, %v1308
    %v1331 = vcombine.high %v1315, %v1315
    %v1332 = vcombine.high %v1322, %v1322
    %v1333 = vcombine.high %v1329, %v1329
    %v1334 = vcombine.high %v61, %v61
    %v1336 = vunpack.c.l.s4 1966171168
    %v1337 = vunpack.c.0.s8 %v1336
    %v1338 = vlaneseq
    %v1339 = vshrl.u32 %v1338, 7
    %v1340 = vsub.s32 %v1337, %v1339
    %v1341 = vrot.slane %v61, %v1340
    %v1343 = vunpack.c.l.s4 1966171168
    %v1344 = vunpack.c.0.s8 %v1343
    %v1345 = vlaneseq
    %v1346 = vshrl.u32 %v1345, 7
    %v1347 = vsub.s32 %v1344, %v1346
    %v1348 = vrot.slane %v1334, %v1347
    %v1349 = vcombine.high %v1341, %v1341
    %v1350 = vcombine.high %v1348, %v1348
    %v1352 = vunpack.c.l.s4 1966171168
    %v1353 = vunpack.c.0.s8 %v1352
    %v1354 = vlaneseq
    %v1355 = vshrl.u32 %v1354, 7
    %v1356 = vsub.s32 %v1353, %v1355
    %v1357 = vrot.slane %v1341, %v1356
    %v1359 = vunpack.c.l.s4 1966171168
    %v1360 = vunpack.c.0.s8 %v1359
    %v1361 = vlaneseq
    %v1362 = vshrl.u32 %v1361, 7
    %v1363 = vsub.s32 %v1360, %v1362
    %v1364 = vrot.slane %v1348, %v1363
    %v1366 = vunpack.c.l.s4 1966171168
    %v1367 = vunpack.c.0.s8 %v1366
    %v1368 = vlaneseq
    %v1369 = vshrl.u32 %v1368, 7
    %v1370 = vsub.s32 %v1367, %v1369
    %v1371 = vrot.slane %v1349, %v1370
    %v1373 = vunpack.c.l.s4 1966171168
    %v1374 = vunpack.c.0.s8 %v1373
    %v1375 = vlaneseq
    %v1376 = vshrl.u32 %v1375, 7
    %v1377 = vsub.s32 %v1374, %v1376
    %v1378 = vrot.slane %v1350, %v1377
    %v1379 = vcombine.high %v1357, %v1357
    %v1380 = vcombine.high %v1364, %v1364
    %v1381 = vcombine.high %v1371, %v1371
    %v1382 = vcombine.high %v1378, %v1378
    %v1383 = vcombine.high %v62, %v62
    %v1385 = vunpack.c.l.s4 1966171168
    %v1386 = vunpack.c.0.s8 %v1385
    %v1387 = vlaneseq
    %v1388 = vshrl.u32 %v1387, 7
    %v1389 = vsub.s32 %v1386, %v1388
    %v1390 = vrot.slane %v62, %v1389
    %v1392 = vunpack.c.l.s4 1966171168
    %v1393 = vunpack.c.0.s8 %v1392
    %v1394 = vlaneseq
    %v1395 = vshrl.u32 %v1394, 7
    %v1396 = vsub.s32 %v1393, %v1395
    %v1397 = vrot.slane %v1383, %v1396
    %v1398 = vcombine.high %v1390, %v1390
    %v1399 = vcombine.high %v1397, %v1397
    %v1401 = vunpack.c.l.s4 1966171168
    %v1402 = vunpack.c.0.s8 %v1401
    %v1403 = vlaneseq
    %v1404 = vshrl.u32 %v1403, 7
    %v1405 = vsub.s32 %v1402, %v1404
    %v1406 = vrot.slane %v1390, %v1405
    %v1408 = vunpack.c.l.s4 1966171168
    %v1409 = vunpack.c.0.s8 %v1408
    %v1410 = vlaneseq
    %v1411 = vshrl.u32 %v1410, 7
    %v1412 = vsub.s32 %v1409, %v1411
    %v1413 = vrot.slane %v1397, %v1412
    %v1415 = vunpack.c.l.s4 1966171168
    %v1416 = vunpack.c.0.s8 %v1415
    %v1417 = vlaneseq
    %v1418 = vshrl.u32 %v1417, 7
    %v1419 = vsub.s32 %v1416, %v1418
    %v1420 = vrot.slane %v1398, %v1419
    %v1422 = vunpack.c.l.s4 1966171168
    %v1423 = vunpack.c.0.s8 %v1422
    %v1424 = vlaneseq
    %v1425 = vshrl.u32 %v1424, 7
    %v1426 = vsub.s32 %v1423, %v1425
    %v1427 = vrot.slane %v1399, %v1426
    %v1428 = vcombine.high %v1406, %v1406
    %v1429 = vcombine.high %v1413, %v1413
    %v1430 = vcombine.high %v1420, %v1420
    %v1431 = vcombine.high %v1427, %v1427
    %v1432 = vcombine.high %v63, %v63
    %v1434 = vunpack.c.l.s4 1966171168
    %v1435 = vunpack.c.0.s8 %v1434
    %v1436 = vlaneseq
    %v1437 = vshrl.u32 %v1436, 7
    %v1438 = vsub.s32 %v1435, %v1437
    %v1439 = vrot.slane %v63, %v1438
    %v1441 = vunpack.c.l.s4 1966171168
    %v1442 = vunpack.c.0.s8 %v1441
    %v1443 = vlaneseq
    %v1444 = vshrl.u32 %v1443, 7
    %v1445 = vsub.s32 %v1442, %v1444
    %v1446 = vrot.slane %v1432, %v1445
    %v1447 = vcombine.high %v1439, %v1439
    %v1448 = vcombine.high %v1446, %v1446
    %v1450 = vunpack.c.l.s4 1966171168
    %v1451 = vunpack.c.0.s8 %v1450
    %v1452 = vlaneseq
    %v1453 = vshrl.u32 %v1452, 7
    %v1454 = vsub.s32 %v1451, %v1453
    %v1455 = vrot.slane %v1439, %v1454
    %v1457 = vunpack.c.l.s4 1966171168
    %v1458 = vunpack.c.0.s8 %v1457
    %v1459 = vlaneseq
    %v1460 = vshrl.u32 %v1459, 7
    %v1461 = vsub.s32 %v1458, %v1460
    %v1462 = vrot.slane %v1446, %v1461
    %v1464 = vunpack.c.l.s4 1966171168
    %v1465 = vunpack.c.0.s8 %v1464
    %v1466 = vlaneseq
    %v1467 = vshrl.u32 %v1466, 7
    %v1468 = vsub.s32 %v1465, %v1467
    %v1469 = vrot.slane %v1447, %v1468
    %v1471 = vunpack.c.l.s4 1966171168
    %v1472 = vunpack.c.0.s8 %v1471
    %v1473 = vlaneseq
    %v1474 = vshrl.u32 %v1473, 7
    %v1475 = vsub.s32 %v1472, %v1474
    %v1476 = vrot.slane %v1448, %v1475
    %v1477 = vcombine.high %v1455, %v1455
    %v1478 = vcombine.high %v1462, %v1462
    %v1479 = vcombine.high %v1469, %v1469
    %v1480 = vcombine.high %v1476, %v1476
    %v1481 = vcombine.high %v64, %v64
    %v1483 = vunpack.c.l.s4 1966171168
    %v1484 = vunpack.c.0.s8 %v1483
    %v1485 = vlaneseq
    %v1486 = vshrl.u32 %v1485, 7
    %v1487 = vsub.s32 %v1484, %v1486
    %v1488 = vrot.slane %v64, %v1487
    %v1490 = vunpack.c.l.s4 1966171168
    %v1491 = vunpack.c.0.s8 %v1490
    %v1492 = vlaneseq
    %v1493 = vshrl.u32 %v1492, 7
    %v1494 = vsub.s32 %v1491, %v1493
    %v1495 = vrot.slane %v1481, %v1494
    %v1496 = vcombine.high %v1488, %v1488
    %v1497 = vcombine.high %v1495, %v1495
    %v1499 = vunpack.c.l.s4 1966171168
    %v1500 = vunpack.c.0.s8 %v1499
    %v1501 = vlaneseq
    %v1502 = vshrl.u32 %v1501, 7
    %v1503 = vsub.s32 %v1500, %v1502
    %v1504 = vrot.slane %v1488, %v1503
    %v1506 = vunpack.c.l.s4 1966171168
    %v1507 = vunpack.c.0.s8 %v1506
    %v1508 = vlaneseq
    %v1509 = vshrl.u32 %v1508, 7
    %v1510 = vsub.s32 %v1507, %v1509
    %v1511 = vrot.slane %v1495, %v1510
    %v1513 = vunpack.c.l.s4 1966171168
    %v1514 = vunpack.c.0.s8 %v1513
    %v1515 = vlaneseq
    %v1516 = vshrl.u32 %v1515, 7
    %v1517 = vsub.s32 %v1514, %v1516
    %v1518 = vrot.slane %v1496, %v1517
    %v1520 = vunpack.c.l.s4 1966171168
    %v1521 = vunpack.c.0.s8 %v1520
    %v1522 = vlaneseq
    %v1523 = vshrl.u32 %v1522, 7
    %v1524 = vsub.s32 %v1521, %v1523
    %v1525 = vrot.slane %v1497, %v1524
    %v1526 = vcombine.high %v1504, %v1504
    %v1527 = vcombine.high %v1511, %v1511
    %v1528 = vcombine.high %v1518, %v1518
    %v1529 = vcombine.high %v1525, %v1525
    %v1530 = vcombine.high %v65, %v65
    %v1532 = vunpack.c.l.s4 1966171168
    %v1533 = vunpack.c.0.s8 %v1532
    %v1534 = vlaneseq
    %v1535 = vshrl.u32 %v1534, 7
    %v1536 = vsub.s32 %v1533, %v1535
    %v1537 = vrot.slane %v65, %v1536
    %v1539 = vunpack.c.l.s4 1966171168
    %v1540 = vunpack.c.0.s8 %v1539
    %v1541 = vlaneseq
    %v1542 = vshrl.u32 %v1541, 7
    %v1543 = vsub.s32 %v1540, %v1542
    %v1544 = vrot.slane %v1530, %v1543
    %v1545 = vcombine.high %v1537, %v1537
    %v1546 = vcombine.high %v1544, %v1544
    %v1548 = vunpack.c.l.s4 1966171168
    %v1549 = vunpack.c.0.s8 %v1548
    %v1550 = vlaneseq
    %v1551 = vshrl.u32 %v1550, 7
    %v1552 = vsub.s32 %v1549, %v1551
    %v1553 = vrot.slane %v1537, %v1552
    %v1555 = vunpack.c.l.s4 1966171168
    %v1556 = vunpack.c.0.s8 %v1555
    %v1557 = vlaneseq
    %v1558 = vshrl.u32 %v1557, 7
    %v1559 = vsub.s32 %v1556, %v1558
    %v1560 = vrot.slane %v1544, %v1559
    %v1562 = vunpack.c.l.s4 1966171168
    %v1563 = vunpack.c.0.s8 %v1562
    %v1564 = vlaneseq
    %v1565 = vshrl.u32 %v1564, 7
    %v1566 = vsub.s32 %v1563, %v1565
    %v1567 = vrot.slane %v1545, %v1566
    %v1569 = vunpack.c.l.s4 1966171168
    %v1570 = vunpack.c.0.s8 %v1569
    %v1571 = vlaneseq
    %v1572 = vshrl.u32 %v1571, 7
    %v1573 = vsub.s32 %v1570, %v1572
    %v1574 = vrot.slane %v1546, %v1573
    %v1575 = vcombine.high %v1553, %v1553
    %v1576 = vcombine.high %v1560, %v1560
    %v1577 = vcombine.high %v1567, %v1567
    %v1578 = vcombine.high %v1574, %v1574
    %v1579 = vcombine.high %v66, %v66
    %v1581 = vunpack.c.l.s4 1966171168
    %v1582 = vunpack.c.0.s8 %v1581
    %v1583 = vlaneseq
    %v1584 = vshrl.u32 %v1583, 7
    %v1585 = vsub.s32 %v1582, %v1584
    %v1586 = vrot.slane %v66, %v1585
    %v1588 = vunpack.c.l.s4 1966171168
    %v1589 = vunpack.c.0.s8 %v1588
    %v1590 = vlaneseq
    %v1591 = vshrl.u32 %v1590, 7
    %v1592 = vsub.s32 %v1589, %v1591
    %v1593 = vrot.slane %v1579, %v1592
    %v1594 = vcombine.high %v1586, %v1586
    %v1595 = vcombine.high %v1593, %v1593
    %v1597 = vunpack.c.l.s4 1966171168
    %v1598 = vunpack.c.0.s8 %v1597
    %v1599 = vlaneseq
    %v1600 = vshrl.u32 %v1599, 7
    %v1601 = vsub.s32 %v1598, %v1600
    %v1602 = vrot.slane %v1586, %v1601
    %v1604 = vunpack.c.l.s4 1966171168
    %v1605 = vunpack.c.0.s8 %v1604
    %v1606 = vlaneseq
    %v1607 = vshrl.u32 %v1606, 7
    %v1608 = vsub.s32 %v1605, %v1607
    %v1609 = vrot.slane %v1593, %v1608
    %v1611 = vunpack.c.l.s4 1966171168
    %v1612 = vunpack.c.0.s8 %v1611
    %v1613 = vlaneseq
    %v1614 = vshrl.u32 %v1613, 7
    %v1615 = vsub.s32 %v1612, %v1614
    %v1616 = vrot.slane %v1594, %v1615
    %v1618 = vunpack.c.l.s4 1966171168
    %v1619 = vunpack.c.0.s8 %v1618
    %v1620 = vlaneseq
    %v1621 = vshrl.u32 %v1620, 7
    %v1622 = vsub.s32 %v1619, %v1621
    %v1623 = vrot.slane %v1595, %v1622
    %v1624 = vcombine.high %v1602, %v1602
    %v1625 = vcombine.high %v1609, %v1609
    %v1626 = vcombine.high %v1616, %v1616
    %v1627 = vcombine.high %v1623, %v1623
    %v1628 = vcombine.high %v67, %v67
    %v1630 = vunpack.c.l.s4 1966171168
    %v1631 = vunpack.c.0.s8 %v1630
    %v1632 = vlaneseq
    %v1633 = vshrl.u32 %v1632, 7
    %v1634 = vsub.s32 %v1631, %v1633
    %v1635 = vrot.slane %v67, %v1634
    %v1637 = vunpack.c.l.s4 1966171168
    %v1638 = vunpack.c.0.s8 %v1637
    %v1639 = vlaneseq
    %v1640 = vshrl.u32 %v1639, 7
    %v1641 = vsub.s32 %v1638, %v1640
    %v1642 = vrot.slane %v1628, %v1641
    %v1643 = vcombine.high %v1635, %v1635
    %v1644 = vcombine.high %v1642, %v1642
    %v1646 = vunpack.c.l.s4 1966171168
    %v1647 = vunpack.c.0.s8 %v1646
    %v1648 = vlaneseq
    %v1649 = vshrl.u32 %v1648, 7
    %v1650 = vsub.s32 %v1647, %v1649
    %v1651 = vrot.slane %v1635, %v1650
    %v1653 = vunpack.c.l.s4 1966171168
    %v1654 = vunpack.c.0.s8 %v1653
    %v1655 = vlaneseq
    %v1656 = vshrl.u32 %v1655, 7
    %v1657 = vsub.s32 %v1654, %v1656
    %v1658 = vrot.slane %v1642, %v1657
    %v1660 = vunpack.c.l.s4 1966171168
    %v1661 = vunpack.c.0.s8 %v1660
    %v1662 = vlaneseq
    %v1663 = vshrl.u32 %v1662, 7
    %v1664 = vsub.s32 %v1661, %v1663
    %v1665 = vrot.slane %v1643, %v1664
    %v1667 = vunpack.c.l.s4 1966171168
    %v1668 = vunpack.c.0.s8 %v1667
    %v1669 = vlaneseq
    %v1670 = vshrl.u32 %v1669, 7
    %v1671 = vsub.s32 %v1668, %v1670
    %v1672 = vrot.slane %v1644, %v1671
    %v1673 = vcombine.high %v1651, %v1651
    %v1674 = vcombine.high %v1658, %v1658
    %v1675 = vcombine.high %v1665, %v1665
    %v1676 = vcombine.high %v1672, %v1672
    %v2901 = vunpack.c.l.b16 %v68
    %v2902 = vunpack.c.l.b16 %v69
    %v2903 = vunpack.c.l.b16 %v70
    %v2904 = vunpack.c.l.b16 %v71
    %v2905 = vunpack.c.l.b16 %v72
    %v2906 = vunpack.c.l.b16 %v73
    %v2907 = vunpack.c.l.b16 %v74
    %v2908 = vunpack.c.l.b16 %v75
    %v2909 = vunpack.c.l.b16 %v76
    %v2910 = vunpack.c.l.b16 %v77
    %v2911 = vunpack.c.l.b16 %v78
    %v2912 = vunpack.c.l.b16 %v79
    %v2913 = vunpack.c.l.b16 %v80
    %v2914 = vunpack.c.l.b16 %v81
    %v2915 = vunpack.c.l.b16 %v82
    %v2916 = vunpack.c.l.b16 %v83
    %v2917 = vunpack.c.l.b16 %v84
    %v2918 = vunpack.c.l.b16 %v85
    %v2919 = vunpack.c.l.b16 %v86
    %v2920 = vunpack.c.l.b16 %v87
    %v2921 = vunpack.c.l.b16 %v88
    %v2922 = vunpack.c.l.b16 %v89
    %v2923 = vunpack.c.l.b16 %v90
    %v2924 = vunpack.c.l.b16 %v91
    %v2925 = vunpack.c.l.b16 %v92
    %v2926 = vunpack.c.l.b16 %v93
    %v2927 = vunpack.c.l.b16 %v94
    %v2928 = vunpack.c.l.b16 %v95
    %v2929 = vunpack.c.l.b16 %v96
    %v2930 = vunpack.c.l.b16 %v97
    %v2931 = vunpack.c.l.b16 %v98
    %v2932 = vunpack.c.l.b16 %v99
    %v2933 = vunpack.c.l.b16 %v100
    %v2934 = vunpack.c.l.b16 %v101
    %v2935 = vunpack.c.l.b16 %v102
    %v2936 = vunpack.c.l.b16 %v103
    %v2937 = vunpack.c.l.b16 %v104
    %v2938 = vunpack.c.l.b16 %v105
    %v2939 = vunpack.c.l.b16 %v106
    %v2940 = vunpack.c.l.b16 %v107
    %v2941 = vunpack.c.l.b16 %v108
    %v2942 = vunpack.c.l.b16 %v109
    %v2943 = vunpack.c.l.b16 %v110
    %v2944 = vunpack.c.l.b16 %v111
    %v2945 = vunpack.c.l.b16 %v112
    %v2946 = vunpack.c.l.b16 %v113
    %v2947 = vunpack.c.l.b16 %v114
    %v2948 = vunpack.c.l.b16 %v115
    %v2949 = vunpack.c.l.b16 %v116
    %v2950 = vunpack.c.l.b16 %v117
    %v2951 = vunpack.c.l.b16 %v118
    %v2952 = vunpack.c.l.b16 %v119
    %v2953 = vunpack.c.l.b16 %v120
    %v2954 = vunpack.c.l.b16 %v121
    %v2955 = vunpack.c.l.b16 %v122
    %v2956 = vunpack.c.l.b16 %v123
    %v2957 = vunpack.c.l.b16 %v124
    %v2958 = vunpack.c.l.b16 %v125
    %v2959 = vunpack.c.l.b16 %v126
    %v2960 = vunpack.c.l.b16 %v127
    %v2961 = vunpack.c.l.b16 %v128
    %v2962 = vunpack.c.l.b16 %v129
    %v2963 = vunpack.c.l.b16 %v130
    %v2964 = vunpack.c.l.b16 %v131
    %v2965 = vunpack.c.l.b16 %v132
    %v2966 = vunpack.c.l.b16 %v133
    %v2967 = vunpack.c.l.b16 %v134
    %v2968 = vunpack.c.l.b16 %v135
    %v2969 = vunpack.c.l.b16 %v136
    %v2970 = vunpack.c.l.b16 %v137
    %v2971 = vunpack.c.l.b16 %v138
    %v2972 = vunpack.c.l.b16 %v139
    %v2973 = vunpack.c.l.b16 %v140
    %v2974 = vunpack.c.l.b16 %v141
    %v2975 = vunpack.c.l.b16 %v142
    %v2976 = vunpack.c.l.b16 %v143
    %v2977 = vunpack.c.l.b16 %v144
    %v2978 = vunpack.c.l.b16 %v145
    %v2979 = vunpack.c.l.b16 %v146
    %v2980 = vunpack.c.l.b16 %v147
    %v2981 = vunpack.c.l.b16 %v148
    %v2982 = vunpack.c.l.b16 %v149
    %v2983 = vunpack.c.l.b16 %v150
    %v2984 = vunpack.c.l.b16 %v151
    %v2985 = vunpack.c.l.b16 %v152
    %v2986 = vunpack.c.l.b16 %v153
    %v2987 = vunpack.c.l.b16 %v154
    %v2988 = vunpack.c.l.b16 %v155
    %v2989 = vunpack.c.l.b16 %v156
    %v2990 = vunpack.c.l.b16 %v157
    %v2991 = vunpack.c.l.b16 %v158
    %v2992 = vunpack.c.l.b16 %v159
    %v2993 = vunpack.c.l.b16 %v160
    %v2994 = vunpack.c.l.b16 %v161
    %v2995 = vunpack.c.l.b16 %v162
    %v2996 = vunpack.c.l.b16 %v163
    %v2997 = vunpack.c.l.b16 %v164
    %v2998 = vunpack.c.l.b16 %v165
    %v2999 = vunpack.c.l.b16 %v166
    %v3000 = vunpack.c.l.b16 %v167
    %v3001 = vunpack.c.l.b16 %v168
    %v3002 = vunpack.c.l.b16 %v169
    %v3003 = vunpack.c.l.b16 %v170
    %v3004 = vunpack.c.l.b16 %v171
    %v3005 = vunpack.c.l.b16 %v172
    %v3006 = vunpack.c.l.b16 %v173
    %v3007 = vunpack.c.l.b16 %v174
    %v3008 = vunpack.c.l.b16 %v175
    %v3009 = vunpack.c.l.b16 %v176
    %v3010 = vunpack.c.l.b16 %v177
    %v3011 = vunpack.c.l.b16 %v178
    %v3012 = vunpack.c.l.b16 %v179
    %v3013 = vunpack.c.l.b16 %v180
    %v3014 = vunpack.c.l.b16 %v181
    %v3015 = vunpack.c.l.b16 %v182
    %v3016 = vunpack.c.l.b16 %v183
    %v3017 = vunpack.c.l.b16 %v184
    %v3018 = vunpack.c.l.b16 %v185
    %v3019 = vunpack.c.l.b16 %v186
    %v3020 = vunpack.c.l.b16 %v187
    %v3021 = vunpack.c.l.b16 %v188
    %v3022 = vunpack.c.l.b16 %v189
    %v3023 = vunpack.c.l.b16 %v190
    %v3024 = vunpack.c.l.b16 %v191
    %v3025 = vunpack.c.l.b16 %v192
    %v3026 = vunpack.c.l.b16 %v193
    %v3027 = vunpack.c.l.b16 %v194
    %v3028 = vunpack.c.l.b16 %v195
    %v3029 = vunpack.c.l.b16 %v196
    %v3030 = vunpack.c.l.b16 %v197
    %v3031 = vunpack.c.l.b16 %v198
    %v3032 = vunpack.c.l.b16 %v199
    %v3033 = vunpack.c.l.b16 %v200
    %v3034 = vunpack.c.l.b16 %v201
    %v3035 = vunpack.c.l.b16 %v202
    %v3036 = vunpack.c.l.b16 %v203
    %v3037 = vunpack.c.l.b16 %v204
    %v3038 = vunpack.c.l.b16 %v205
    %v3039 = vunpack.c.l.b16 %v206
    %v3040 = vunpack.c.l.b16 %v207
    %v3041 = vunpack.c.l.b16 %v208
    %v3042 = vunpack.c.l.b16 %v209
    %v3043 = vunpack.c.l.b16 %v210
    %v3044 = vunpack.c.l.b16 %v211
    %v3045 = vunpack.c.l.b16 %v212
    %v3046 = vunpack.c.l.b16 %v213
    %v3047 = vunpack.c.l.b16 %v214
    %v3048 = vunpack.c.l.b16 %v215
    %v3049 = vunpack.c.l.b16 %v216
    %v3050 = vunpack.c.l.b16 %v217
    %v3051 = vunpack.c.l.b16 %v218
    %v3052 = vunpack.c.l.b16 %v219
    %v3053 = vunpack.c.l.b16 %v220
    %v3054 = vunpack.c.l.b16 %v221
    %v3055 = vunpack.c.l.b16 %v222
    %v3056 = vunpack.c.l.b16 %v223
    %v3057 = vunpack.c.l.b16 %v224
    %v3058 = vunpack.c.l.b16 %v225
    %v3059 = vunpack.c.l.b16 %v226
    %v3060 = vunpack.c.l.b16 %v227
    %v3061 = vunpack.c.l.b16 %v228
    %v3062 = vunpack.c.l.b16 %v229
    %v3063 = vunpack.c.l.b16 %v230
    %v3064 = vunpack.c.l.b16 %v231
    %v3065 = vunpack.c.l.b16 %v232
    %v3066 = vunpack.c.l.b16 %v233
    %v3067 = vunpack.c.l.b16 %v234
    %v3068 = vunpack.c.l.b16 %v235
    %v3069 = vunpack.c.l.b16 %v236
    %v3070 = vunpack.c.l.b16 %v237
    %v3071 = vunpack.c.l.b16 %v238
    %v3072 = vunpack.c.l.b16 %v239
    %v3073 = vunpack.c.l.b16 %v240
    %v3074 = vunpack.c.l.b16 %v241
    %v3075 = vunpack.c.l.b16 %v242
    %v3076 = vunpack.c.l.b16 %v243
    %v3077 = vunpack.c.l.b16 %v244
    %v3078 = vunpack.c.l.b16 %v245
    %v3079 = vunpack.c.l.b16 %v246
    %v3080 = vunpack.c.l.b16 %v247
    %v3081 = vunpack.c.l.b16 %v248
    %v3082 = vunpack.c.l.b16 %v249
    %v3083 = vunpack.c.l.b16 %v250
    %v3084 = vunpack.c.l.b16 %v251
    %v3085 = vunpack.c.l.b16 %v252
    %v3086 = vunpack.c.l.b16 %v253
    %v3087 = vunpack.c.l.b16 %v254
    %v3088 = vunpack.c.l.b16 %v255
    %v3089 = vunpack.c.l.b16 %v256
    %v3090 = vunpack.c.l.b16 %v257
    %v3091 = vunpack.c.l.b16 %v258
    %v3092 = vunpack.c.l.b16 %v259
    %v3093 = vunpack.c.l.b16 %v260
    %v3094 = vunpack.c.l.b16 %v261
    %v3095 = vunpack.c.l.b16 %v262
    %v3096 = vunpack.c.l.b16 %v263
    %v3097 = vunpack.c.l.b16 %v264
    %v3098 = vunpack.c.l.b16 %v265
    %v3099 = vunpack.c.l.b16 %v266
    %v3100 = vunpack.c.l.b16 %v267
    %v3101 = vunpack.c.l.b16 %v268
    %v3102 = vunpack.c.l.b16 %v269
    %v3103 = vunpack.c.l.b16 %v270
    %v3104 = vunpack.c.l.b16 %v271
    %v3105 = vunpack.c.l.b16 %v272
    %v3106 = vunpack.c.l.b16 %v273
    %v3107 = vunpack.c.l.b16 %v274
    %v3108 = vunpack.c.l.b16 %v275
    %v3109 = vunpack.c.l.b16 %v276
    %v3110 = vunpack.c.l.b16 %v277
    %v3111 = vunpack.c.l.b16 %v278
    %v3112 = vunpack.c.l.b16 %v279
    %v3113 = vunpack.c.l.b16 %v280
    %v3114 = vunpack.c.l.b16 %v281
    %v3115 = vunpack.c.l.b16 %v282
    %v3116 = vunpack.c.l.b16 %v283
    %v3117 = vunpack.c.l.b16 %v284
    %v3118 = vunpack.c.l.b16 %v285
    %v3119 = vunpack.c.l.b16 %v286
    %v3120 = vunpack.c.l.b16 %v287
    %v3121 = vunpack.c.l.b16 %v288
    %v3122 = vunpack.c.l.b16 %v289
    %v3123 = vunpack.c.l.b16 %v290
    %v3124 = vunpack.c.l.b16 %v291
    %v3125 = vunpack.c.l.b16 %v292
    %v3126 = vunpack.c.l.b16 %v293
    %v3127 = vunpack.c.l.b16 %v294
    %v3128 = vunpack.c.l.b16 %v295
    %v3129 = vunpack.c.l.b16 %v296
    %v3130 = vunpack.c.l.b16 %v297
    %v3131 = vunpack.c.l.b16 %v298
    %v3132 = vunpack.c.l.b16 %v299
    %v3133 = vunpack.c.l.b16 %v300
    %v3134 = vunpack.c.l.b16 %v301
    %v3135 = vunpack.c.l.b16 %v302
    %v3136 = vunpack.c.l.b16 %v303
    %v3137 = vunpack.c.l.b16 %v304
    %v3138 = vunpack.c.l.b16 %v305
    %v3139 = vunpack.c.l.b16 %v306
    %v3140 = vunpack.c.l.b16 %v307
    %v3141 = vunpack.c.l.b16 %v308
    %v3142 = vunpack.c.l.b16 %v309
    %v3143 = vunpack.c.l.b16 %v310
    %v3144 = vunpack.c.l.b16 %v311
    %v3145 = vunpack.c.l.b16 %v312
    %v3146 = vunpack.c.l.b16 %v313
    %v3147 = vunpack.c.l.b16 %v314
    %v3148 = vunpack.c.l.b16 %v315
    %v3149 = vunpack.c.l.b16 %v316
    %v3150 = vunpack.c.l.b16 %v317
    %v3151 = vunpack.c.l.b16 %v318
    %v3152 = vunpack.c.l.b16 %v319
    %v3153 = vunpack.c.l.b16 %v320
    %v3154 = vunpack.c.l.b16 %v321
    %v3155 = vunpack.c.l.b16 %v322
    %v3156 = vunpack.c.l.b16 %v323
    %v3157 = vunpack.c.l.b16 %v324
    %v3158 = vunpack.c.l.b16 %v325
    %v3159 = vunpack.c.l.b16 %v326
    %v3160 = vunpack.c.l.b16 %v327
    %v3161 = vunpack.c.l.b16 %v328
    %v3162 = vunpack.c.l.b16 %v329
    %v3163 = vunpack.c.l.b16 %v330
    %v3164 = vunpack.c.l.b16 %v331
    %v3165 = vunpack.c.l.b16 %v332
    %v3166 = vunpack.c.l.b16 %v333
    %v3167 = vunpack.c.l.b16 %v334
    %v3168 = vunpack.c.l.b16 %v335
    %v3169 = vunpack.c.l.b16 %v336
    %v3170 = vunpack.c.l.b16 %v337
    %v3171 = vunpack.c.l.b16 %v338
    %v3172 = vunpack.c.l.b16 %v339
    %v3173 = vunpack.c.l.b16 %v340
    %v3174 = vunpack.c.l.b16 %v341
    %v3175 = vunpack.c.l.b16 %v342
    %v3176 = vunpack.c.l.b16 %v343
    %v3177 = vunpack.c.l.b16 %v344
    %v3178 = vunpack.c.l.b16 %v345
    %v3179 = vunpack.c.l.b16 %v346
    %v3180 = vunpack.c.l.b16 %v347
    %v3181 = vunpack.c.l.b16 %v348
    %v3182 = vunpack.c.l.b16 %v349
    %v3183 = vunpack.c.l.b16 %v350
    %v3184 = vunpack.c.l.b16 %v351
    %v3185 = vunpack.c.l.b16 %v352
    %v3186 = vunpack.c.l.b16 %v353
    %v3187 = vunpack.c.l.b16 %v354
    %v3188 = vunpack.c.l.b16 %v355
    %v3189 = vunpack.c.l.b16 %v356
    %v3190 = vunpack.c.l.b16 %v357
    %v3191 = vunpack.c.l.b16 %v358
    %v3192 = vunpack.c.l.b16 %v359
    %v3193 = vunpack.c.l.b16 %v360
    %v3194 = vunpack.c.l.b16 %v361
    %v3195 = vunpack.c.l.b16 %v362
    %v3196 = vunpack.c.l.b16 %v363
    %v3197 = vunpack.c.l.b16 %v364
    %v3198 = vunpack.c.l.b16 %v365
    %v3199 = vunpack.c.l.b16 %v366
    %v3200 = vunpack.c.l.b16 %v367
    %v3201 = vunpack.c.l.b16 %v368
    %v3202 = vunpack.c.l.b16 %v369
    %v3203 = vunpack.c.l.b16 %v370
    %v3204 = vunpack.c.l.b16 %v371
    %v3205 = vunpack.c.l.b16 %v372
    %v3206 = vunpack.c.l.b16 %v373
    %v3207 = vunpack.c.l.b16 %v374
    %v3208 = vunpack.c.l.b16 %v375
    %v3209 = vunpack.c.l.b16 %v376
    %v3210 = vunpack.c.l.b16 %v377
    %v3211 = vunpack.c.l.b16 %v378
    %v3212 = vunpack.c.l.b16 %v379
    %v3213 = vunpack.c.l.b16 %v380
    %v3214 = vunpack.c.l.b16 %v381
    %v3215 = vunpack.c.l.b16 %v382
    %v3216 = vunpack.c.l.b16 %v383
    %v3217 = vunpack.c.l.b16 %v384
    %v3218 = vunpack.c.l.b16 %v385
    %v3219 = vunpack.c.l.b16 %v386
    %v3220 = vunpack.c.l.b16 %v387
    %v3221 = vunpack.c.l.b16 %v388
    %v3222 = vunpack.c.l.b16 %v389
    %v3223 = vunpack.c.l.b16 %v390
    %v3224 = vunpack.c.l.b16 %v391
    %v3225 = vunpack.c.l.b16 %v392
    %v3226 = vunpack.c.l.b16 %v393
    %v3227 = vunpack.c.l.b16 %v394
    %v3228 = vunpack.c.l.b16 %v395
    %v3229 = vunpack.c.l.b16 %v396
    %v3230 = vunpack.c.l.b16 %v397
    %v3231 = vunpack.c.l.b16 %v398
    %v3232 = vunpack.c.l.b16 %v399
    %v3233 = vunpack.c.l.b16 %v400
    %v3234 = vunpack.c.l.b16 %v401
    %v3235 = vunpack.c.l.b16 %v402
    %v3236 = vunpack.c.l.b16 %v403
    %v3237 = vunpack.c.l.b16 %v404
    %v3238 = vunpack.c.l.b16 %v405
    %v3239 = vunpack.c.l.b16 %v406
    %v3240 = vunpack.c.l.b16 %v407
    %v3241 = vunpack.c.l.b16 %v408
    %v3242 = vunpack.c.l.b16 %v409
    %v3243 = vunpack.c.l.b16 %v410
    %v3244 = vunpack.c.l.b16 %v411
    %v3245 = vunpack.c.l.b16 %v412
    %v3246 = vunpack.c.l.b16 %v413
    %v3247 = vunpack.c.l.b16 %v414
    %v3248 = vunpack.c.l.b16 %v415
    %v3249 = vunpack.c.l.b16 %v416
    %v3250 = vunpack.c.l.b16 %v417
    %v3251 = vunpack.c.l.b16 %v418
    %v3252 = vunpack.c.l.b16 %v419
    %v3253 = vunpack.c.l.b16 %v420
    %v3254 = vunpack.c.l.b16 %v421
    %v3255 = vunpack.c.l.b16 %v422
    %v3256 = vunpack.c.l.b16 %v423
    %v3257 = vunpack.c.l.b16 %v424
    %v3258 = vunpack.c.l.b16 %v425
    %v3259 = vunpack.c.l.b16 %v426
    %v3260 = vunpack.c.l.b16 %v427
    %v3261 = vunpack.c.l.b16 %v428
    %v3262 = vunpack.c.l.b16 %v429
    %v3263 = vunpack.c.l.b16 %v430
    %v3264 = vunpack.c.l.b16 %v431
    %v3265 = vunpack.c.l.b16 %v432
    %v3266 = vunpack.c.l.b16 %v433
    %v3267 = vunpack.c.l.b16 %v434
    %v3268 = vunpack.c.l.b16 %v435
    %v3269 = vunpack.c.l.b16 %v436
    %v3270 = vunpack.c.l.b16 %v437
    %v3271 = vunpack.c.l.b16 %v438
    %v3272 = vunpack.c.l.b16 %v439
    %v3273 = vunpack.c.l.b16 %v440
    %v3274 = vunpack.c.l.b16 %v441
    %v3275 = vunpack.c.l.b16 %v442
    %v3276 = vunpack.c.l.b16 %v443
    %v3277 = vunpack.c.l.b16 %v444
    %v3278 = vunpack.c.l.b16 %v445
    %v3279 = vunpack.c.l.b16 %v446
    %v3280 = vunpack.c.l.b16 %v447
    %v3281 = vunpack.c.l.b16 %v448
    %v3282 = vunpack.c.l.b16 %v449
    %v3283 = vunpack.c.l.b16 %v450
    %v3284 = vunpack.c.l.b16 %v451
    %v3285 = vunpack.c.l.b16 %v452
    %v3286 = vunpack.c.l.b16 %v453
    %v3287 = vunpack.c.l.b16 %v454
    %v3288 = vunpack.c.l.b16 %v455
    %v3289 = vunpack.c.l.b16 %v456
    %v3290 = vunpack.c.l.b16 %v457
    %v3291 = vunpack.c.l.b16 %v458
    %v3292 = vunpack.c.l.b16 %v459
    %v3293 = vunpack.c.l.b16 %v460
    %v3294 = vunpack.c.l.b16 %v461
    %v3295 = vunpack.c.l.b16 %v462
    %v3296 = vunpack.c.l.b16 %v463
    %v3297 = vunpack.c.l.b16 %v464
    %v3298 = vunpack.c.l.b16 %v465
    %v3299 = vunpack.c.l.b16 %v466
    %v3300 = vunpack.c.l.b16 %v467
    %v3301 = vunpack.c.l.b16 %v468
    %v3302 = vunpack.c.l.b16 %v469
    %v3303 = vunpack.c.l.b16 %v470
    %v3304 = vunpack.c.l.b16 %v471
    %v3305 = vunpack.c.l.b16 %v472
    %v3306 = vunpack.c.l.b16 %v473
    %v3307 = vunpack.c.l.b16 %v474
    %v3308 = vunpack.c.l.b16 %v475
    %v3309 = vunpack.c.l.b16 %v476
    %v3310 = vunpack.c.l.b16 %v477
    %v3311 = vunpack.c.l.b16 %v478
    %v3312 = vunpack.c.l.b16 %v479
    %v3313 = vunpack.c.l.b16 %v480
    %v3314 = vunpack.c.l.b16 %v481
    %v3315 = vunpack.c.l.b16 %v482
    %v3316 = vunpack.c.l.b16 %v483
    %v3317 = vunpack.c.l.b16 %v484
    %v3318 = vunpack.c.l.b16 %v485
    %v3319 = vunpack.c.l.b16 %v486
    %v3320 = vunpack.c.l.b16 %v487
    %v3321 = vunpack.c.l.b16 %v488
    %v3322 = vunpack.c.l.b16 %v489
    %v3323 = vunpack.c.l.b16 %v490
    %v3324 = vunpack.c.l.b16 %v491
    %v3325 = vunpack.c.l.b16 %v492
    %v3326 = vunpack.c.l.b16 %v493
    %v3327 = vunpack.c.l.b16 %v494
    %v3328 = vunpack.c.l.b16 %v495
    %v3329 = vunpack.c.l.b16 %v496
    %v3330 = vunpack.c.l.b16 %v497
    %v3331 = vunpack.c.l.b16 %v498
    %v3332 = vunpack.c.l.b16 %v499
    %v3333 = vunpack.c.l.b16 %v500
    %v3334 = vunpack.c.l.b16 %v501
    %v3335 = vunpack.c.l.b16 %v502
    %v3336 = vunpack.c.l.b16 %v503
    %v3337 = vunpack.c.l.b16 %v504
    %v3338 = vunpack.c.l.b16 %v505
    %v3339 = vunpack.c.l.b16 %v506
    %v3340 = vunpack.c.l.b16 %v507
    %v3341 = vunpack.c.l.b16 %v508
    %v3342 = vunpack.c.l.b16 %v509
    %v3343 = vunpack.c.l.b16 %v510
    %v3344 = vunpack.c.l.b16 %v511
    %v3345 = vunpack.c.l.b16 %v512
    %v3346 = vunpack.c.l.b16 %v513
    %v3347 = vunpack.c.l.b16 %v514
    %v3348 = vunpack.c.l.b16 %v515
    %v3349 = vunpack.c.l.b16 %v516
    %v3350 = vunpack.c.l.b16 %v517
    %v3351 = vunpack.c.l.b16 %v518
    %v3352 = vunpack.c.l.b16 %v519
    %v3353 = vunpack.c.l.b16 %v520
    %v3354 = vunpack.c.l.b16 %v521
    %v3355 = vunpack.c.l.b16 %v522
    %v3356 = vunpack.c.l.b16 %v523
    %v3357 = vunpack.c.l.b16 %v524
    %v3358 = vunpack.c.l.b16 %v525
    %v3359 = vunpack.c.l.b16 %v526
    %v3360 = vunpack.c.l.b16 %v527
    %v3361 = vunpack.c.l.b16 %v528
    %v3362 = vunpack.c.l.b16 %v529
    %v3363 = vunpack.c.l.b16 %v530
    %v3364 = vunpack.c.l.b16 %v531
    %v3365 = vunpack.c.l.b16 %v532
    %v3366 = vunpack.c.l.b16 %v533
    %v3367 = vunpack.c.l.b16 %v534
    %v3368 = vunpack.c.l.b16 %v535
    %v3369 = vunpack.c.l.b16 %v536
    %v3370 = vunpack.c.l.b16 %v537
    %v3371 = vunpack.c.l.b16 %v538
    %v3372 = vunpack.c.l.b16 %v539
    %v3373 = vunpack.c.l.b16 %v540
    %v3374 = vunpack.c.l.b16 %v541
    %v3375 = vunpack.c.l.b16 %v542
    %v3376 = vunpack.c.l.b16 %v543
    %v3377 = vunpack.c.l.b16 %v544
    %v3378 = vunpack.c.l.b16 %v545
    %v3379 = vunpack.c.l.b16 %v546
    %v3380 = vunpack.c.l.b16 %v547
    %v3381 = vunpack.c.l.b16 %v548
    %v3382 = vunpack.c.l.b16 %v549
    %v3383 = vunpack.c.l.b16 %v550
    %v3384 = vunpack.c.l.b16 %v551
    %v3385 = vunpack.c.l.b16 %v552
    %v3386 = vunpack.c.l.b16 %v553
    %v3387 = vunpack.c.l.b16 %v554
    %v3388 = vunpack.c.l.b16 %v555
    %v3389 = vunpack.c.l.b16 %v556
    %v3390 = vunpack.c.l.b16 %v557
    %v3391 = vunpack.c.l.b16 %v558
    %v3392 = vunpack.c.l.b16 %v559
    %v3393 = vunpack.c.l.b16 %v560
    %v3394 = vunpack.c.l.b16 %v561
    %v3395 = vunpack.c.l.b16 %v562
    %v3396 = vunpack.c.l.b16 %v563
    %v3397 = vunpack.c.l.b16 %v564
    %v3398 = vunpack.c.l.b16 %v565
    %v3399 = vunpack.c.l.b16 %v566
    %v3400 = vunpack.c.l.b16 %v567
    %v3401 = vunpack.c.l.b16 %v568
    %v3402 = vunpack.c.l.b16 %v569
    %v3403 = vunpack.c.l.b16 %v570
    %v3404 = vunpack.c.l.b16 %v571
    %v3405 = vunpack.c.l.b16 %v572
    %v3406 = vunpack.c.l.b16 %v573
    %v3407 = vunpack.c.l.b16 %v574
    %v3408 = vunpack.c.l.b16 %v575
    %v3409 = vunpack.c.l.b16 %v576
    %v3410 = vunpack.c.l.b16 %v577
    %v3411 = vunpack.c.l.b16 %v578
    %v3412 = vunpack.c.l.b16 %v579
    %v3413 = vunpack.c.l.b16 %v580
    %v3414 = vunpack.c.l.b16 %v581
    %v3415 = vunpack.c.l.b16 %v582
    %v3416 = vunpack.c.l.b16 %v583
    %v3417 = vunpack.c.l.b16 %v584
    %v3418 = vunpack.c.l.b16 %v585
    %v3419 = vunpack.c.l.b16 %v586
    %v3420 = vunpack.c.l.b16 %v587
    %v3421 = vunpack.c.l.b16 %v588
    %v3422 = vunpack.c.l.b16 %v589
    %v3423 = vunpack.c.l.b16 %v590
    %v3424 = vunpack.c.l.b16 %v591
    %v3425 = vunpack.c.l.b16 %v592
    %v3426 = vunpack.c.l.b16 %v593
    %v3427 = vunpack.c.l.b16 %v594
    %v3428 = vunpack.c.l.b16 %v595
    %v3429 = vunpack.c.l.b16 %v596
    %v3430 = vunpack.c.l.b16 %v597
    %v3431 = vunpack.c.l.b16 %v598
    %v3432 = vunpack.c.l.b16 %v599
    %v3433 = vunpack.c.l.b16 %v600
    %v3434 = vunpack.c.l.b16 %v601
    %v3435 = vunpack.c.l.b16 %v602
    %v3436 = vunpack.c.l.b16 %v603
    %v3437 = vunpack.c.l.b16 %v604
    %v3438 = vunpack.c.l.b16 %v605
    %v3439 = vunpack.c.l.b16 %v606
    %v3440 = vunpack.c.l.b16 %v607
    %v3441 = vunpack.c.l.b16 %v608
    %v3442 = vunpack.c.l.b16 %v609
    %v3443 = vunpack.c.l.b16 %v610
    %v3444 = vunpack.c.l.b16 %v611
    %v3445 = vunpack.c.l.b16 %v612
    %v3446 = vunpack.c.l.b16 %v613
    %v3447 = vunpack.c.l.b16 %v614
    %v3448 = vunpack.c.l.b16 %v615
    %v3449 = vunpack.c.l.b16 %v616
    %v3450 = vunpack.c.l.b16 %v617
    %v3451 = vunpack.c.l.b16 %v618
    %v3452 = vunpack.c.l.b16 %v619
    %v3453 = vunpack.c.l.b16 %v620
    %v3454 = vunpack.c.l.b16 %v621
    %v3455 = vunpack.c.l.b16 %v622
    %v3456 = vunpack.c.l.b16 %v623
    %v3457 = vunpack.c.l.b16 %v624
    %v3458 = vunpack.c.l.b16 %v625
    %v3459 = vunpack.c.l.b16 %v626
    %v3460 = vunpack.c.l.b16 %v627
    %v3461 = vunpack.c.l.b16 %v628
    %v3462 = vunpack.c.l.b16 %v629
    %v3463 = vunpack.c.l.b16 %v630
    %v3464 = vunpack.c.l.b16 %v631
    %v3465 = vunpack.c.l.b16 %v632
    %v3466 = vunpack.c.l.b16 %v633
    %v3467 = vunpack.c.l.b16 %v634
    %v3468 = vunpack.c.l.b16 %v635
    %v3469 = vunpack.c.l.b16 %v636
    %v3470 = vunpack.c.l.b16 %v637
    %v3471 = vunpack.c.l.b16 %v638
    %v3472 = vunpack.c.l.b16 %v639
    %v3473 = vunpack.c.l.b16 %v640
    %v3474 = vunpack.c.l.b16 %v641
    %v3475 = vunpack.c.l.b16 %v642
    %v3476 = vunpack.c.l.b16 %v643
    %v3477 = vunpack.c.l.b16 %v644
    %v3478 = vunpack.c.l.b16 %v645
    %v3479 = vunpack.c.l.b16 %v646
    %v3480 = vunpack.c.l.b16 %v647
    %v3481 = vunpack.c.l.b16 %v648
    %v3482 = vunpack.c.l.b16 %v649
    %v3483 = vunpack.c.l.b16 %v650
    %v3484 = vunpack.c.l.b16 %v651
    %v3485 = vunpack.c.l.b16 %v652
    %v3486 = vunpack.c.l.b16 %v653
    %v3487 = vunpack.c.l.b16 %v654
    %v3488 = vunpack.c.l.b16 %v655
    %v3489 = vunpack.c.l.b16 %v656
    %v3490 = vunpack.c.l.b16 %v657
    %v3491 = vunpack.c.l.b16 %v658
    %v3492 = vunpack.c.l.b16 %v659
    %v3493 = vunpack.c.l.b16 %v660
    %v3494 = vunpack.c.l.b16 %v661
    %v3495 = vunpack.c.l.b16 %v662
    %v3496 = vunpack.c.l.b16 %v663
    %v3497 = vunpack.c.l.b16 %v664
    %v3498 = vunpack.c.l.b16 %v665
    %v3499 = vunpack.c.l.b16 %v666
    %v3500 = vunpack.c.l.b16 %v667
    %v3501 = vunpack.c.l.b16 %v668
    %v3502 = vunpack.c.l.b16 %v669
    %v3503 = vunpack.c.l.b16 %v670
    %v3504 = vunpack.c.l.b16 %v671
    %v3505 = vunpack.c.l.b16 %v672
    %v3506 = vunpack.c.l.b16 %v673
    %v3507 = vunpack.c.l.b16 %v674
    %v3508 = vunpack.c.l.b16 %v675
    %v3509 = vunpack.c.l.b16 %v676
    %v3510 = vunpack.c.l.b16 %v677
    %v3511 = vunpack.c.l.b16 %v678
    %v3512 = vunpack.c.l.b16 %v679
    %v3513 = vunpack.c.l.b16 %v680
    %v3514 = vunpack.c.l.b16 %v681
    %v3515 = vunpack.c.l.b16 %v682
    %v3516 = vunpack.c.l.b16 %v683
    %v3517 = vunpack.c.l.b16 %v684
    %v3518 = vunpack.c.l.b16 %v685
    %v3519 = vunpack.c.l.b16 %v686
    %v3520 = vunpack.c.l.b16 %v687
    %v3521 = vunpack.c.l.b16 %v688
    %v3522 = vunpack.c.l.b16 %v689
    %v3523 = vunpack.c.l.b16 %v690
    %v3524 = vunpack.c.l.b16 %v691
    %v3525 = vunpack.c.l.b16 %v692
    %v3526 = vunpack.c.l.b16 %v693
    %v3527 = vunpack.c.l.b16 %v694
    %v3528 = vunpack.c.l.b16 %v695
    %v3529 = vunpack.c.l.b16 %v696
    %v3530 = vunpack.c.l.b16 %v697
    %v3531 = vunpack.c.l.b16 %v698
    %v3532 = vunpack.c.l.b16 %v699
    %v3533 = vunpack.c.l.b16 %v700
    %v3534 = vunpack.c.l.b16 %v701
    %v3535 = vunpack.c.l.b16 %v702
    %v3536 = vunpack.c.l.b16 %v703
    %v3537 = vunpack.c.l.b16 %v704
    %v3538 = vunpack.c.l.b16 %v705
    %v3539 = vunpack.c.l.b16 %v706
    %v3540 = vunpack.c.l.b16 %v707
    %v3541 = vunpack.c.l.b16 %v708
    %v3542 = vunpack.c.l.b16 %v709
    %v3543 = vunpack.c.l.b16 %v710
    %v3544 = vunpack.c.l.b16 %v711
    %v3545 = vunpack.c.l.b16 %v712
    %v3546 = vunpack.c.l.b16 %v713
    %v3547 = vunpack.c.l.b16 %v714
    %v3548 = vunpack.c.l.b16 %v715
    %v3549 = vunpack.c.l.b16 %v716
    %v3550 = vunpack.c.l.b16 %v717
    %v3551 = vunpack.c.l.b16 %v718
    %v3552 = vunpack.c.l.b16 %v719
    %v3553 = vunpack.c.l.b16 %v720
    %v3554 = vunpack.c.l.b16 %v721
    %v3555 = vunpack.c.l.b16 %v722
    %v3556 = vunpack.c.l.b16 %v723
    %v3557 = vunpack.c.l.b16 %v724
    %v3558 = vunpack.c.l.b16 %v725
    %v3559 = vunpack.c.l.b16 %v726
    %v3560 = vunpack.c.l.b16 %v727
    %v3561 = vunpack.c.l.b16 %v728
    %v3562 = vunpack.c.l.b16 %v729
    %v3563 = vunpack.c.l.b16 %v730
    %v3564 = vunpack.c.l.b16 %v731
    %v3565 = vunpack.c.l.b16 %v732
    %v3566 = vunpack.c.l.b16 %v733
    %v3567 = vunpack.c.l.b16 %v734
    %v3568 = vunpack.c.l.b16 %v735
    %v3569 = vunpack.c.l.b16 %v736
    %v3570 = vunpack.c.l.b16 %v737
    %v3571 = vunpack.c.l.b16 %v738
    %v3572 = vunpack.c.l.b16 %v739
    %v3573 = vunpack.c.l.b16 %v740
    %v3574 = vunpack.c.l.b16 %v741
    %v3575 = vunpack.c.l.b16 %v742
    %v3576 = vunpack.c.l.b16 %v743
    %v3577 = vunpack.c.l.b16 %v744
    %v3578 = vunpack.c.l.b16 %v745
    %v3579 = vunpack.c.l.b16 %v746
    %v3580 = vunpack.c.l.b16 %v747
    %v3581 = vunpack.c.l.b16 %v748
    %v3582 = vunpack.c.l.b16 %v749
    %v3583 = vunpack.c.l.b16 %v750
    %v3584 = vunpack.c.l.b16 %v751
    %v3585 = vunpack.c.l.b16 %v752
    %v3586 = vunpack.c.l.b16 %v753
    %v3587 = vunpack.c.l.b16 %v754
    %v3588 = vunpack.c.l.b16 %v755
    %v3589 = vunpack.c.l.b16 %v756
    %v3590 = vunpack.c.l.b16 %v757
    %v3591 = vunpack.c.l.b16 %v758
    %v3592 = vunpack.c.l.b16 %v759
    %v3593 = vunpack.c.l.b16 %v760
    %v3594 = vunpack.c.l.b16 %v761
    %v3595 = vunpack.c.l.b16 %v762
    %v3596 = vunpack.c.l.b16 %v763
    %v3597 = vunpack.c.l.b16 %v764
    %v3598 = vunpack.c.l.b16 %v765
    %v3599 = vunpack.c.l.b16 %v766
    %v3600 = vunpack.c.l.b16 %v767
    %v3601 = vunpack.c.l.b16 %v768
    %v3602 = vunpack.c.l.b16 %v769
    %v3603 = vunpack.c.l.b16 %v770
    %v3604 = vunpack.c.l.b16 %v771
    %v3605 = vunpack.c.l.b16 %v772
    %v3606 = vunpack.c.l.b16 %v773
    %v3607 = vunpack.c.l.b16 %v774
    %v3608 = vunpack.c.l.b16 %v775
    %v3609 = vunpack.c.l.b16 %v776
    %v3610 = vunpack.c.l.b16 %v777
    %v3611 = vunpack.c.l.b16 %v778
    %v3612 = vunpack.c.l.b16 %v779
    %v3613 = vunpack.c.l.b16 %v780
    %v3614 = vunpack.c.l.b16 %v781
    %v3615 = vunpack.c.l.b16 %v782
    %v3616 = vunpack.c.l.b16 %v783
    %v3617 = vunpack.c.l.b16 %v784
    %v3618 = vunpack.c.l.b16 %v785
    %v3619 = vunpack.c.l.b16 %v786
    %v3620 = vunpack.c.l.b16 %v787
    %v3621 = vunpack.c.l.b16 %v788
    %v3622 = vunpack.c.l.b16 %v789
    %v3623 = vunpack.c.l.b16 %v790
    %v3624 = vunpack.c.l.b16 %v791
    %v3625 = vunpack.c.l.b16 %v792
    %v3626 = vunpack.c.l.b16 %v793
    %v3627 = vunpack.c.l.b16 %v794
    %v3628 = vunpack.c.l.b16 %v795
    %v3629 = vunpack.c.l.b16 %v796
    %v3630 = vunpack.c.l.b16 %v797
    %v3631 = vunpack.c.l.b16 %v798
    %v3632 = vunpack.c.l.b16 %v799
    %v3633 = vunpack.c.l.b16 %v800
    %v3634 = vunpack.c.l.b16 %v801
    %v3635 = vunpack.c.l.b16 %v802
    %v3636 = vunpack.c.l.b16 %v803
    %v3637 = vunpack.c.l.b16 %v804
    %v3638 = vunpack.c.l.b16 %v805
    %v3639 = vunpack.c.l.b16 %v806
    %v3640 = vunpack.c.l.b16 %v807
    %v3641 = vunpack.c.l.b16 %v808
    %v3642 = vunpack.c.l.b16 %v809
    %v3643 = vunpack.c.l.b16 %v810
    %v3644 = vunpack.c.l.b16 %v811
    %v3645 = vunpack.c.l.b16 %v812
    %v3646 = vunpack.c.l.b16 %v813
    %v3647 = vunpack.c.l.b16 %v814
    %v3648 = vunpack.c.l.b16 %v815
    %v3649 = vunpack.c.l.b16 %v816
    %v3650 = vunpack.c.l.b16 %v817
    %v3651 = vunpack.c.l.b16 %v818
    %v3652 = vunpack.c.l.b16 %v819
    %v3653 = vunpack.c.l.b16 %v820
    %v3654 = vunpack.c.l.b16 %v821
    %v3655 = vunpack.c.l.b16 %v822
    %v3656 = vunpack.c.l.b16 %v823
    %v3657 = vunpack.c.l.b16 %v824
    %v3658 = vunpack.c.l.b16 %v825
    %v3659 = vunpack.c.l.b16 %v826
    %v3660 = vunpack.c.l.b16 %v827
    %v3661 = vunpack.c.l.b16 %v828
    %v3662 = vunpack.c.l.b16 %v829
    %v3663 = vunpack.c.l.b16 %v830
    %v3664 = vunpack.c.l.b16 %v831
    %v3665 = vunpack.c.l.b16 %v832
    %v3666 = vunpack.c.l.b16 %v833
    %v3667 = vunpack.c.l.b16 %v834
    %v3668 = vunpack.c.l.b16 %v835
    %v3669 = vunpack.c.l.b16 %v836
    %v3670 = vunpack.c.l.b16 %v837
    %v3671 = vunpack.c.l.b16 %v838
    %v3672 = vunpack.c.l.b16 %v839
    %v3673 = vunpack.c.l.b16 %v840
    %v3674 = vunpack.c.l.b16 %v841
    %v3675 = vunpack.c.l.b16 %v842
    %v3676 = vunpack.c.l.b16 %v843
    %v3677 = vunpack.c.l.b16 %v844
    %v3678 = vunpack.c.l.b16 %v845
    %v3679 = vunpack.c.l.b16 %v846
    %v3680 = vunpack.c.l.b16 %v847
    %v3681 = vunpack.c.l.b16 %v848
    %v3682 = vunpack.c.l.b16 %v849
    %v3683 = vunpack.c.l.b16 %v850
    %v3684 = vunpack.c.l.b16 %v851
    %v3685 = vunpack.c.l.b16 %v852
    %v3686 = vunpack.c.l.b16 %v853
    %v3687 = vunpack.c.l.b16 %v854
    %v3688 = vunpack.c.l.b16 %v855
    %v3689 = vunpack.c.l.b16 %v856
    %v3690 = vunpack.c.l.b16 %v857
    %v3691 = vunpack.c.l.b16 %v858
    %v3692 = vunpack.c.l.b16 %v859
    %v3693 = vunpack.c.l.b16 %v860
    %v3694 = vunpack.c.l.b16 %v861
    %v3695 = vunpack.c.l.b16 %v862
    %v3696 = vunpack.c.l.b16 %v863
    %v3697 = vunpack.c.l.b16 %v864
    %v3698 = vunpack.c.l.b16 %v865
    %v3699 = vunpack.c.l.b16 %v866
    %v3700 = vunpack.c.l.b16 %v867
    %v3701 = vunpack.c.l.b16 %v868
    %v3702 = vunpack.c.l.b16 %v869
    %v3703 = vunpack.c.l.b16 %v870
    %v3704 = vunpack.c.l.b16 %v871
    %v3705 = vunpack.c.l.b16 %v872
    %v3706 = vunpack.c.l.b16 %v873
    %v3707 = vunpack.c.l.b16 %v874
    %v3708 = vunpack.c.l.b16 %v875
    %v3709 = vunpack.c.l.b16 %v876
    %v3710 = vunpack.c.l.b16 %v877
    %v3711 = vunpack.c.l.b16 %v878
    %v3712 = vunpack.c.l.b16 %v879
    %v3713 = vunpack.c.l.b16 %v880
    %v3714 = vunpack.c.l.b16 %v881
    %v3715 = vunpack.c.l.b16 %v882
    %v3716 = vunpack.c.l.b16 %v883
    %v3717 = vunpack.c.l.b16 %v884
    %v3718 = vunpack.c.l.b16 %v885
    %v3719 = vunpack.c.l.b16 %v886
    %v3720 = vunpack.c.l.b16 %v887
    %v3721 = vunpack.c.l.b16 %v888
    %v3722 = vunpack.c.l.b16 %v889
    %v3723 = vunpack.c.l.b16 %v890
    %v3724 = vunpack.c.l.b16 %v891
    %v3725 = vunpack.c.l.b16 %v892
    %v3726 = vunpack.c.l.b16 %v893
    %v3727 = vunpack.c.l.b16 %v894
    %v3728 = vunpack.c.l.b16 %v895
    %v3729 = vunpack.c.l.b16 %v896
    %v3730 = vunpack.c.l.b16 %v897
    %v3731 = vunpack.c.l.b16 %v898
    %v3732 = vunpack.c.l.b16 %v899
    %v3733 = vunpack.c.l.b16 %v900
    %v3734 = vunpack.c.l.b16 %v901
    %v3735 = vunpack.c.l.b16 %v902
    %v3736 = vunpack.c.l.b16 %v903
    %v3737 = vunpack.c.l.b16 %v904
    %v3738 = vunpack.c.l.b16 %v905
    %v3739 = vunpack.c.l.b16 %v906
    %v3740 = vunpack.c.l.b16 %v907
    %v3741 = vunpack.c.l.b16 %v908
    %v3742 = vunpack.c.l.b16 %v909
    %v3743 = vunpack.c.l.b16 %v910
    %v3744 = vunpack.c.l.b16 %v911
    %v3745 = vunpack.c.l.b16 %v912
    %v3746 = vunpack.c.l.b16 %v913
    %v3747 = vunpack.c.l.b16 %v914
    %v3748 = vunpack.c.l.b16 %v915
    %v3749 = vunpack.c.l.b16 %v916
    %v3750 = vunpack.c.l.b16 %v917
    %v3751 = vunpack.c.l.b16 %v918
    %v3752 = vunpack.c.l.b16 %v919
    %v3753 = vunpack.c.l.b16 %v920
    %v3754 = vunpack.c.l.b16 %v921
    %v3755 = vunpack.c.l.b16 %v922
    %v3756 = vunpack.c.l.b16 %v923
    %v3757 = vunpack.c.l.b16 %v924
    %v3758 = vunpack.c.l.b16 %v925
    %v3759 = vunpack.c.l.b16 %v926
    %v3760 = vunpack.c.l.b16 %v927
    %v3761 = vunpack.c.l.b16 %v928
    %v3762 = vunpack.c.l.b16 %v929
    %v3763 = vunpack.c.l.b16 %v930
    %v3764 = vunpack.c.l.b16 %v931
    %v3765 = vunpack.c.l.b16 %v932
    %v3766 = vunpack.c.l.b16 %v933
    %v3767 = vunpack.c.l.b16 %v934
    %v3768 = vunpack.c.l.b16 %v935
    %v3769 = vunpack.c.l.b16 %v936
    %v3770 = vunpack.c.l.b16 %v937
    %v3771 = vunpack.c.l.b16 %v938
    %v3772 = vunpack.c.l.b16 %v939
    %v3773 = vunpack.c.l.b16 %v940
    %v3774 = vunpack.c.l.b16 %v941
    %v3775 = vunpack.c.l.b16 %v942
    %v3776 = vunpack.c.l.b16 %v943
    %v3777 = vunpack.c.l.b16 %v944
    %v3778 = vunpack.c.l.b16 %v945
    %v3779 = vunpack.c.l.b16 %v946
    %v3780 = vunpack.c.l.b16 %v947
    %v3781 = vunpack.c.l.b16 %v948
    %v3782 = vunpack.c.l.b16 %v949
    %v3783 = vunpack.c.l.b16 %v950
    %v3784 = vunpack.c.l.b16 %v951
    %v3785 = vunpack.c.l.b16 %v952
    %v3786 = vunpack.c.l.b16 %v953
    %v3787 = vunpack.c.l.b16 %v954
    %v3788 = vunpack.c.l.b16 %v955
    %v3789 = vunpack.c.l.b16 %v956
    %v3790 = vunpack.c.l.b16 %v957
    %v3791 = vunpack.c.l.b16 %v958
    %v3792 = vunpack.c.l.b16 %v959
    %v3793 = vunpack.c.l.b16 %v960
    %v3794 = vunpack.c.l.b16 %v961
    %v3795 = vunpack.c.l.b16 %v962
    %v3796 = vunpack.c.l.b16 %v963
    %v3797 = vunpack.c.l.b16 %v964
    %v3798 = vunpack.c.l.b16 %v965
    %v3799 = vunpack.c.l.b16 %v966
    %v3800 = vunpack.c.l.b16 %v967
    %v3801 = vunpack.c.l.b16 %v968
    %v3802 = vunpack.c.l.b16 %v969
    %v3803 = vunpack.c.l.b16 %v970
    %v3804 = vunpack.c.l.b16 %v971
    %v3805 = vunpack.c.l.b16 %v972
    %v3806 = vunpack.c.l.b16 %v973
    %v3807 = vunpack.c.l.b16 %v974
    %v3808 = vunpack.c.l.b16 %v975
    %v3809 = vunpack.c.l.b16 %v976
    %v3810 = vunpack.c.l.b16 %v977
    %v3811 = vunpack.c.l.b16 %v978
    %v3812 = vunpack.c.l.b16 %v979
    %v3813 = vunpack.c.l.b16 %v980
    %v3814 = vunpack.c.l.b16 %v981
    %v3815 = vunpack.c.l.b16 %v982
    %v3816 = vunpack.c.l.b16 %v983
    %v3817 = vunpack.c.l.b16 %v984
    %v3818 = vunpack.c.l.b16 %v985
    %v3819 = vunpack.c.l.b16 %v986
    %v3820 = vunpack.c.l.b16 %v987
    %v3821 = vunpack.c.l.b16 %v988
    %v3822 = vunpack.c.l.b16 %v989
    %v3823 = vunpack.c.l.b16 %v990
    %v3824 = vunpack.c.l.b16 %v991
    %v3825 = vunpack.c.l.b16 %v992
    %v3826 = vunpack.c.l.b16 %v993
    %v3827 = vunpack.c.l.b16 %v994
    %v3828 = vunpack.c.l.b16 %v995
    %v3829 = vunpack.c.l.b16 %v996
    %v3830 = vunpack.c.l.b16 %v997
    %v3831 = vunpack.c.l.b16 %v998
    %v3832 = vunpack.c.l.b16 %v999
    %v3833 = vunpack.c.l.b16 %v1000
    %v3834 = vunpack.c.l.b16 %v1001
    %v3835 = vunpack.c.l.b16 %v1002
    %v3836 = vunpack.c.l.b16 %v1003
    %v3837 = vunpack.c.l.b16 %v1004
    %v3838 = vunpack.c.l.b16 %v1005
    %v3839 = vunpack.c.l.b16 %v1006
    %v3840 = vunpack.c.l.b16 %v1007
    %v3841 = vunpack.c.l.b16 %v1008
    %v3842 = vunpack.c.l.b16 %v1009
    %v3843 = vunpack.c.l.b16 %v1010
    %v3844 = vunpack.c.l.b16 %v1011
    %v3845 = vunpack.c.l.b16 %v1012
    %v3846 = vunpack.c.l.b16 %v1013
    %v3847 = vunpack.c.l.b16 %v1014
    %v3848 = vunpack.c.l.b16 %v1015
    %v3849 = vunpack.c.l.b16 %v1016
    %v3850 = vunpack.c.l.b16 %v1017
    %v3851 = vunpack.c.l.b16 %v1018
    %v3852 = vunpack.c.l.b16 %v1019
    %v3853 = vunpack.c.l.b16 %v1020
    %v3854 = vunpack.c.l.b16 %v1021
    %v3855 = vunpack.c.l.b16 %v1022
    %v3856 = vunpack.c.l.b16 %v1023
    %v3857 = vunpack.c.l.b16 %v1024
    %v3858 = vunpack.c.l.b16 %v1025
    %v3859 = vunpack.c.l.b16 %v1026
    %v3860 = vunpack.c.l.b16 %v1027
    %v3861 = vunpack.c.l.b16 %v1028
    %v3862 = vunpack.c.l.b16 %v1029
    %v3863 = vunpack.c.l.b16 %v1030
    %v3864 = vunpack.c.l.b16 %v1031
    %v3865 = vunpack.c.l.b16 %v1032
    %v3866 = vunpack.c.l.b16 %v1033
    %v3867 = vunpack.c.l.b16 %v1034
    %v3868 = vunpack.c.l.b16 %v1035
    %v3869 = vunpack.c.l.b16 %v1036
    %v3870 = vunpack.c.l.b16 %v1037
    %v3871 = vunpack.c.l.b16 %v1038
    %v3872 = vunpack.c.l.b16 %v1039
    %v3873 = vunpack.c.l.b16 %v1040
    %v3874 = vunpack.c.l.b16 %v1041
    %v3875 = vunpack.c.l.b16 %v1042
    %v3876 = vunpack.c.l.b16 %v1043
    %v3877 = vunpack.c.l.b16 %v1044
    %v3878 = vunpack.c.l.b16 %v1045
    %v3879 = vunpack.c.l.b16 %v1046
    %v3880 = vunpack.c.l.b16 %v1047
    %v3881 = vunpack.c.l.b16 %v1048
    %v3882 = vunpack.c.l.b16 %v1049
    %v3883 = vunpack.c.l.b16 %v1050
    %v3884 = vunpack.c.l.b16 %v1051
    %v3885 = vunpack.c.l.b16 %v1052
    %v3886 = vunpack.c.l.b16 %v1053
    %v3887 = vunpack.c.l.b16 %v1054
    %v3888 = vunpack.c.l.b16 %v1055
    %v3889 = vunpack.c.l.b16 %v1056
    %v3890 = vunpack.c.l.b16 %v1057
    %v3891 = vunpack.c.l.b16 %v1058
    %v3892 = vunpack.c.l.b16 %v1059
    %v3893 = vunpack.c.l.b16 %v1060
    %v3894 = vunpack.c.l.b16 %v1061
    %v3895 = vunpack.c.l.b16 %v1062
    %v3896 = vunpack.c.l.b16 %v1063
    %v3897 = vunpack.c.l.b16 %v1064
    %v3898 = vunpack.c.l.b16 %v1065
    %v3899 = vunpack.c.l.b16 %v1066
    %v3900 = vunpack.c.l.b16 %v1067
    %v3901 = vunpack.c.l.b16 %v1068
    %v3902 = vunpack.c.l.b16 %v1069
    %v3903 = vunpack.c.l.b16 %v1070
    %v3904 = vunpack.c.l.b16 %v1071
    %v3905 = vunpack.c.l.b16 %v1072
    %v3906 = vunpack.c.l.b16 %v1073
    %v3907 = vunpack.c.l.b16 %v1074
    %v3908 = vunpack.c.l.b16 %v1075
    %v3909 = vunpack.c.l.b16 %v1076
    %v3910 = vunpack.c.l.b16 %v1077
    %v3911 = vunpack.c.l.b16 %v1078
    %v3912 = vunpack.c.l.b16 %v1079
    %v3913 = vunpack.c.l.b16 %v1080
    %v3914 = vunpack.c.l.b16 %v1081
    %v3915 = vunpack.c.l.b16 %v1082
    %v3916 = vunpack.c.l.b16 %v1083
    %v3917 = vunpack.c.l.b16 %v1084
    %v3918 = vunpack.c.l.b16 %v1085
    %v3919 = vunpack.c.l.b16 %v1086
    %v3920 = vunpack.c.l.b16 %v1087
    %v3921 = vunpack.c.l.b16 %v1088
    %v3922 = vunpack.c.l.b16 %v1089
    %v3923 = vunpack.c.l.b16 %v1090
    %v3924 = vunpack.c.l.b16 %v1091
    %v3925 = vunpack.c.l.b16 %v1092
    %v3926 = vunpack.c.l.b16 %v1093
    %v3927 = vunpack.c.l.b16 %v1094
    %v3928 = vunpack.c.l.b16 %v1095
    %v3929 = vunpack.c.l.b16 %v1096
    %v3930 = vunpack.c.l.b16 %v1097
    %v3931 = vunpack.c.l.b16 %v1098
    %v3932 = vunpack.c.l.b16 %v1099
    %v3933 = vunpack.c.l.b16 %v1100
    %v3934 = vunpack.c.l.b16 %v1101
    %v3935 = vunpack.c.l.b16 %v1102
    %v3936 = vunpack.c.l.b16 %v1103
    %v3937 = vunpack.c.l.b16 %v1104
    %v3938 = vunpack.c.l.b16 %v1105
    %v3939 = vunpack.c.l.b16 %v1106
    %v3940 = vunpack.c.l.b16 %v1107
    %v3941 = vunpack.c.l.b16 %v1108
    %v3942 = vunpack.c.l.b16 %v1109
    %v3943 = vunpack.c.l.b16 %v1110
    %v3944 = vunpack.c.l.b16 %v1111
    %v3945 = vunpack.c.l.b16 %v1112
    %v3946 = vunpack.c.l.b16 %v1113
    %v3947 = vunpack.c.l.b16 %v1114
    %v3948 = vunpack.c.l.b16 %v1115
    %v3949 = vunpack.c.l.b16 %v1116
    %v3950 = vunpack.c.l.b16 %v1117
    %v3951 = vunpack.c.l.b16 %v1118
    %v3952 = vunpack.c.l.b16 %v1119
    %v3953 = vunpack.c.l.b16 %v1120
    %v3954 = vunpack.c.l.b16 %v1121
    %v3955 = vunpack.c.l.b16 %v1122
    %v3956 = vunpack.c.l.b16 %v1123
    %v3957 = vunpack.c.l.b16 %v1124
    %v3958 = vunpack.c.l.b16 %v1125
    %v3959 = vunpack.c.l.b16 %v1126
    %v3960 = vunpack.c.l.b16 %v1127
    %v3961 = vunpack.c.l.b16 %v1128
    %v3962 = vunpack.c.l.b16 %v1129
    %v3963 = vunpack.c.l.b16 %v1130
    %v3964 = vunpack.c.l.b16 %v1131
    %v3965 = vunpack.c.l.b16 %v1132
    %v3966 = vunpack.c.l.b16 %v1133
    %v3967 = vunpack.c.l.b16 %v1134
    %v3968 = vunpack.c.l.b16 %v1135
    %v3969 = vunpack.c.l.b16 %v1136
    %v3970 = vunpack.c.l.b16 %v1137
    %v3971 = vunpack.c.l.b16 %v1138
    %v3972 = vunpack.c.l.b16 %v1139
    %v3973 = vunpack.c.l.b16 %v1140
    %v3974 = vunpack.c.l.b16 %v1141
    %v3975 = vunpack.c.l.b16 %v1142
    %v3976 = vunpack.c.l.b16 %v1143
    %v3977 = vunpack.c.l.b16 %v1144
    %v3978 = vunpack.c.l.b16 %v1145
    %v3979 = vunpack.c.l.b16 %v1146
    %v3980 = vunpack.c.l.b16 %v1147
    %v3981 = vunpack.c.l.b16 %v1148
    %v3982 = vunpack.c.l.b16 %v1149
    %v3983 = vunpack.c.l.b16 %v1150
    %v3984 = vunpack.c.l.b16 %v1151
    %v3985 = vunpack.c.l.b16 %v1152
    %v3986 = vunpack.c.l.b16 %v1153
    %v3987 = vunpack.c.l.b16 %v1154
    %v3988 = vunpack.c.l.b16 %v1155
    %v3989 = vunpack.c.l.b16 %v1156
    %v3990 = vunpack.c.l.b16 %v1157
    %v3991 = vunpack.c.l.b16 %v1158
    %v3992 = vunpack.c.l.b16 %v1159
    %v3993 = vunpack.c.l.b16 %v1160
    %v3994 = vunpack.c.l.b16 %v1161
    %v3995 = vunpack.c.l.b16 %v1162
    %v3996 = vunpack.c.l.b16 %v1163
    %v3997 = vunpack.c.l.b16 %v1164
    %v3998 = vunpack.c.l.b16 %v1165
    %v3999 = vunpack.c.l.b16 %v1166
    %v4000 = vunpack.c.l.b16 %v1167
    %v4001 = vunpack.c.l.b16 %v1168
    %v4002 = vunpack.c.l.b16 %v1169
    %v4003 = vunpack.c.l.b16 %v1170
    %v4004 = vunpack.c.l.b16 %v1171
    %v4005 = vunpack.c.l.b16 %v1172
    %v4006 = vunpack.c.l.b16 %v1173
    %v4007 = vunpack.c.l.b16 %v1174
    %v4008 = vunpack.c.l.b16 %v1175
    %v4009 = vunpack.c.l.b16 %v1176
    %v4010 = vunpack.c.l.b16 %v1177
    %v4011 = vunpack.c.l.b16 %v1178
    %v4012 = vunpack.c.l.b16 %v1179
    %v4013 = vunpack.c.l.b16 %v1180
    %v4014 = vunpack.c.l.b16 %v1181
    %v4015 = vunpack.c.l.b16 %v1182
    %v4016 = vunpack.c.l.b16 %v1183
    %v4017 = vunpack.c.l.b16 %v1184
    %v4018 = vunpack.c.l.b16 %v1185
    %v4019 = vunpack.c.l.b16 %v1186
    %v4020 = vunpack.c.l.b16 %v1187
    %v4021 = vunpack.c.l.b16 %v1188
    %v4022 = vunpack.c.l.b16 %v1189
    %v4023 = vunpack.c.l.b16 %v1190
    %v4024 = vunpack.c.l.b16 %v1191
    %v4025 = vunpack.c.l.b16 %v1192
    %v4026 = vunpack.c.l.b16 %v1193
    %v4027 = vunpack.c.l.b16 %v1194
    %v4028 = vunpack.c.l.b16 %v1195
    %v4029 = vunpack.c.l.b16 %v1196
    %v4030 = vunpack.c.l.b16 %v1197
    %v4031 = vunpack.c.l.b16 %v1198
    %v4032 = vunpack.c.l.b16 %v1199
    %v4033 = vunpack.c.l.b16 %v1200
    %v4034 = vunpack.c.l.b16 %v1201
    %v4035 = vunpack.c.l.b16 %v1202
    %v4036 = vunpack.c.l.b16 %v1203
    %v4037 = vunpack.c.l.b16 %v1204
    %v4038 = vunpack.c.l.b16 %v1205
    %v4039 = vunpack.c.l.b16 %v1206
    %v4040 = vunpack.c.l.b16 %v1207
    %v4041 = vunpack.c.l.b16 %v1208
    %v4042 = vunpack.c.l.b16 %v1209
    %v4043 = vunpack.c.l.b16 %v1210
    %v4044 = vunpack.c.l.b16 %v1211
    %v4045 = vunpack.c.l.b16 %v1212
    %v4046 = vunpack.c.l.b16 %v1213
    %v4047 = vunpack.c.l.b16 %v1214
    %v4048 = vunpack.c.l.b16 %v1215
    %v4049 = vunpack.c.l.b16 %v1216
    %v4050 = vunpack.c.l.b16 %v1217
    %v4051 = vunpack.c.l.b16 %v1218
    %v4052 = vunpack.c.l.b16 %v1219
    %v4053 = vpack.c.b16 %v2902, %v2901
    %v4054 = vpack.c.b16 %v2904, %v2903
    %v4055 = vpack.c.b16 %v2906, %v2905
    %v4056 = vpack.c.b16 %v2908, %v2907
    %v4057 = vpack.c.b16 %v2910, %v2909
    %v4058 = vpack.c.b16 %v2912, %v2911
    %v4059 = vpack.c.b16 %v2914, %v2913
    %v4060 = vpack.c.b16 %v2916, %v2915
    %v4061 = vpack.c.b16 %v2918, %v2917
    %v4062 = vpack.c.b16 %v2920, %v2919
    %v4063 = vpack.c.b16 %v2922, %v2921
    %v4064 = vpack.c.b16 %v2924, %v2923
    %v4065 = vpack.c.b16 %v2926, %v2925
    %v4066 = vpack.c.b16 %v2928, %v2927
    %v4067 = vpack.c.b16 %v2930, %v2929
    %v4068 = vpack.c.b16 %v2932, %v2931
    %v4069 = vpack.c.b16 %v2934, %v2933
    %v4070 = vpack.c.b16 %v2936, %v2935
    %v4071 = vpack.c.b16 %v2938, %v2937
    %v4072 = vpack.c.b16 %v2940, %v2939
    %v4073 = vpack.c.b16 %v2942, %v2941
    %v4074 = vpack.c.b16 %v2944, %v2943
    %v4075 = vpack.c.b16 %v2946, %v2945
    %v4076 = vpack.c.b16 %v2948, %v2947
    %v4077 = vpack.c.b16 %v2950, %v2949
    %v4078 = vpack.c.b16 %v2952, %v2951
    %v4079 = vpack.c.b16 %v2954, %v2953
    %v4080 = vpack.c.b16 %v2956, %v2955
    %v4081 = vpack.c.b16 %v2958, %v2957
    %v4082 = vpack.c.b16 %v2960, %v2959
    %v4083 = vpack.c.b16 %v2962, %v2961
    %v4084 = vpack.c.b16 %v2964, %v2963
    %v4085 = vpack.c.b16 %v2966, %v2965
    %v4086 = vpack.c.b16 %v2968, %v2967
    %v4087 = vpack.c.b16 %v2970, %v2969
    %v4088 = vpack.c.b16 %v2972, %v2971
    %v4089 = vpack.c.b16 %v2974, %v2973
    %v4090 = vpack.c.b16 %v2976, %v2975
    %v4091 = vpack.c.b16 %v2978, %v2977
    %v4092 = vpack.c.b16 %v2980, %v2979
    %v4093 = vpack.c.b16 %v2982, %v2981
    %v4094 = vpack.c.b16 %v2984, %v2983
    %v4095 = vpack.c.b16 %v2986, %v2985
    %v4096 = vpack.c.b16 %v2988, %v2987
    %v4097 = vpack.c.b16 %v2990, %v2989
    %v4098 = vpack.c.b16 %v2992, %v2991
    %v4099 = vpack.c.b16 %v2994, %v2993
    %v4100 = vpack.c.b16 %v2996, %v2995
    %v4101 = vpack.c.b16 %v2998, %v2997
    %v4102 = vpack.c.b16 %v3000, %v2999
    %v4103 = vpack.c.b16 %v3002, %v3001
    %v4104 = vpack.c.b16 %v3004, %v3003
    %v4105 = vpack.c.b16 %v3006, %v3005
    %v4106 = vpack.c.b16 %v3008, %v3007
    %v4107 = vpack.c.b16 %v3010, %v3009
    %v4108 = vpack.c.b16 %v3012, %v3011
    %v4109 = vpack.c.b16 %v3014, %v3013
    %v4110 = vpack.c.b16 %v3016, %v3015
    %v4111 = vpack.c.b16 %v3018, %v3017
    %v4112 = vpack.c.b16 %v3020, %v3019
    %v4113 = vpack.c.b16 %v3022, %v3021
    %v4114 = vpack.c.b16 %v3024, %v3023
    %v4115 = vpack.c.b16 %v3026, %v3025
    %v4116 = vpack.c.b16 %v3028, %v3027
    %v4117 = vpack.c.b16 %v3030, %v3029
    %v4118 = vpack.c.b16 %v3032, %v3031
    %v4119 = vpack.c.b16 %v3034, %v3033
    %v4120 = vpack.c.b16 %v3036, %v3035
    %v4121 = vpack.c.b16 %v3038, %v3037
    %v4122 = vpack.c.b16 %v3040, %v3039
    %v4123 = vpack.c.b16 %v3042, %v3041
    %v4124 = vpack.c.b16 %v3044, %v3043
    %v4125 = vpack.c.b16 %v3046, %v3045
    %v4126 = vpack.c.b16 %v3048, %v3047
    %v4127 = vpack.c.b16 %v3050, %v3049
    %v4128 = vpack.c.b16 %v3052, %v3051
    %v4129 = vpack.c.b16 %v3054, %v3053
    %v4130 = vpack.c.b16 %v3056, %v3055
    %v4131 = vpack.c.b16 %v3058, %v3057
    %v4132 = vpack.c.b16 %v3060, %v3059
    %v4133 = vpack.c.b16 %v3062, %v3061
    %v4134 = vpack.c.b16 %v3064, %v3063
    %v4135 = vpack.c.b16 %v3066, %v3065
    %v4136 = vpack.c.b16 %v3068, %v3067
    %v4137 = vpack.c.b16 %v3070, %v3069
    %v4138 = vpack.c.b16 %v3072, %v3071
    %v4139 = vpack.c.b16 %v3074, %v3073
    %v4140 = vpack.c.b16 %v3076, %v3075
    %v4141 = vpack.c.b16 %v3078, %v3077
    %v4142 = vpack.c.b16 %v3080, %v3079
    %v4143 = vpack.c.b16 %v3082, %v3081
    %v4144 = vpack.c.b16 %v3084, %v3083
    %v4145 = vpack.c.b16 %v3086, %v3085
    %v4146 = vpack.c.b16 %v3088, %v3087
    %v4147 = vpack.c.b16 %v3090, %v3089
    %v4148 = vpack.c.b16 %v3092, %v3091
    %v4149 = vpack.c.b16 %v3094, %v3093
    %v4150 = vpack.c.b16 %v3096, %v3095
    %v4151 = vpack.c.b16 %v3098, %v3097
    %v4152 = vpack.c.b16 %v3100, %v3099
    %v4153 = vpack.c.b16 %v3102, %v3101
    %v4154 = vpack.c.b16 %v3104, %v3103
    %v4155 = vpack.c.b16 %v3106, %v3105
    %v4156 = vpack.c.b16 %v3108, %v3107
    %v4157 = vpack.c.b16 %v3110, %v3109
    %v4158 = vpack.c.b16 %v3112, %v3111
    %v4159 = vpack.c.b16 %v3114, %v3113
    %v4160 = vpack.c.b16 %v3116, %v3115
    %v4161 = vpack.c.b16 %v3118, %v3117
    %v4162 = vpack.c.b16 %v3120, %v3119
    %v4163 = vpack.c.b16 %v3122, %v3121
    %v4164 = vpack.c.b16 %v3124, %v3123
    %v4165 = vpack.c.b16 %v3126, %v3125
    %v4166 = vpack.c.b16 %v3128, %v3127
    %v4167 = vpack.c.b16 %v3130, %v3129
    %v4168 = vpack.c.b16 %v3132, %v3131
    %v4169 = vpack.c.b16 %v3134, %v3133
    %v4170 = vpack.c.b16 %v3136, %v3135
    %v4171 = vpack.c.b16 %v3138, %v3137
    %v4172 = vpack.c.b16 %v3140, %v3139
    %v4173 = vpack.c.b16 %v3142, %v3141
    %v4174 = vpack.c.b16 %v3144, %v3143
    %v4175 = vpack.c.b16 %v3146, %v3145
    %v4176 = vpack.c.b16 %v3148, %v3147
    %v4177 = vpack.c.b16 %v3150, %v3149
    %v4178 = vpack.c.b16 %v3152, %v3151
    %v4179 = vpack.c.b16 %v3154, %v3153
    %v4180 = vpack.c.b16 %v3156, %v3155
    %v4181 = vpack.c.b16 %v3158, %v3157
    %v4182 = vpack.c.b16 %v3160, %v3159
    %v4183 = vpack.c.b16 %v3162, %v3161
    %v4184 = vpack.c.b16 %v3164, %v3163
    %v4185 = vpack.c.b16 %v3166, %v3165
    %v4186 = vpack.c.b16 %v3168, %v3167
    %v4187 = vpack.c.b16 %v3170, %v3169
    %v4188 = vpack.c.b16 %v3172, %v3171
    %v4189 = vpack.c.b16 %v3174, %v3173
    %v4190 = vpack.c.b16 %v3176, %v3175
    %v4191 = vpack.c.b16 %v3178, %v3177
    %v4192 = vpack.c.b16 %v3180, %v3179
    %v4193 = vpack.c.b16 %v3182, %v3181
    %v4194 = vpack.c.b16 %v3184, %v3183
    %v4195 = vpack.c.b16 %v3186, %v3185
    %v4196 = vpack.c.b16 %v3188, %v3187
    %v4197 = vpack.c.b16 %v3190, %v3189
    %v4198 = vpack.c.b16 %v3192, %v3191
    %v4199 = vpack.c.b16 %v3194, %v3193
    %v4200 = vpack.c.b16 %v3196, %v3195
    %v4201 = vpack.c.b16 %v3198, %v3197
    %v4202 = vpack.c.b16 %v3200, %v3199
    %v4203 = vpack.c.b16 %v3202, %v3201
    %v4204 = vpack.c.b16 %v3204, %v3203
    %v4205 = vpack.c.b16 %v3206, %v3205
    %v4206 = vpack.c.b16 %v3208, %v3207
    %v4207 = vpack.c.b16 %v3210, %v3209
    %v4208 = vpack.c.b16 %v3212, %v3211
    %v4209 = vpack.c.b16 %v3214, %v3213
    %v4210 = vpack.c.b16 %v3216, %v3215
    %v4211 = vpack.c.b16 %v3218, %v3217
    %v4212 = vpack.c.b16 %v3220, %v3219
    %v4213 = vpack.c.b16 %v3222, %v3221
    %v4214 = vpack.c.b16 %v3224, %v3223
    %v4215 = vpack.c.b16 %v3226, %v3225
    %v4216 = vpack.c.b16 %v3228, %v3227
    %v4217 = vpack.c.b16 %v3230, %v3229
    %v4218 = vpack.c.b16 %v3232, %v3231
    %v4219 = vpack.c.b16 %v3234, %v3233
    %v4220 = vpack.c.b16 %v3236, %v3235
    %v4221 = vpack.c.b16 %v3238, %v3237
    %v4222 = vpack.c.b16 %v3240, %v3239
    %v4223 = vpack.c.b16 %v3242, %v3241
    %v4224 = vpack.c.b16 %v3244, %v3243
    %v4225 = vpack.c.b16 %v3246, %v3245
    %v4226 = vpack.c.b16 %v3248, %v3247
    %v4227 = vpack.c.b16 %v3250, %v3249
    %v4228 = vpack.c.b16 %v3252, %v3251
    %v4229 = vpack.c.b16 %v3254, %v3253
    %v4230 = vpack.c.b16 %v3256, %v3255
    %v4231 = vpack.c.b16 %v3258, %v3257
    %v4232 = vpack.c.b16 %v3260, %v3259
    %v4233 = vpack.c.b16 %v3262, %v3261
    %v4234 = vpack.c.b16 %v3264, %v3263
    %v4235 = vpack.c.b16 %v3266, %v3265
    %v4236 = vpack.c.b16 %v3268, %v3267
    %v4237 = vpack.c.b16 %v3270, %v3269
    %v4238 = vpack.c.b16 %v3272, %v3271
    %v4239 = vpack.c.b16 %v3274, %v3273
    %v4240 = vpack.c.b16 %v3276, %v3275
    %v4241 = vpack.c.b16 %v3278, %v3277
    %v4242 = vpack.c.b16 %v3280, %v3279
    %v4243 = vpack.c.b16 %v3282, %v3281
    %v4244 = vpack.c.b16 %v3284, %v3283
    %v4245 = vpack.c.b16 %v3286, %v3285
    %v4246 = vpack.c.b16 %v3288, %v3287
    %v4247 = vpack.c.b16 %v3290, %v3289
    %v4248 = vpack.c.b16 %v3292, %v3291
    %v4249 = vpack.c.b16 %v3294, %v3293
    %v4250 = vpack.c.b16 %v3296, %v3295
    %v4251 = vpack.c.b16 %v3298, %v3297
    %v4252 = vpack.c.b16 %v3300, %v3299
    %v4253 = vpack.c.b16 %v3302, %v3301
    %v4254 = vpack.c.b16 %v3304, %v3303
    %v4255 = vpack.c.b16 %v3306, %v3305
    %v4256 = vpack.c.b16 %v3308, %v3307
    %v4257 = vpack.c.b16 %v3310, %v3309
    %v4258 = vpack.c.b16 %v3312, %v3311
    %v4259 = vpack.c.b16 %v3314, %v3313
    %v4260 = vpack.c.b16 %v3316, %v3315
    %v4261 = vpack.c.b16 %v3318, %v3317
    %v4262 = vpack.c.b16 %v3320, %v3319
    %v4263 = vpack.c.b16 %v3322, %v3321
    %v4264 = vpack.c.b16 %v3324, %v3323
    %v4265 = vpack.c.b16 %v3326, %v3325
    %v4266 = vpack.c.b16 %v3328, %v3327
    %v4267 = vpack.c.b16 %v3330, %v3329
    %v4268 = vpack.c.b16 %v3332, %v3331
    %v4269 = vpack.c.b16 %v3334, %v3333
    %v4270 = vpack.c.b16 %v3336, %v3335
    %v4271 = vpack.c.b16 %v3338, %v3337
    %v4272 = vpack.c.b16 %v3340, %v3339
    %v4273 = vpack.c.b16 %v3342, %v3341
    %v4274 = vpack.c.b16 %v3344, %v3343
    %v4275 = vpack.c.b16 %v3346, %v3345
    %v4276 = vpack.c.b16 %v3348, %v3347
    %v4277 = vpack.c.b16 %v3350, %v3349
    %v4278 = vpack.c.b16 %v3352, %v3351
    %v4279 = vpack.c.b16 %v3354, %v3353
    %v4280 = vpack.c.b16 %v3356, %v3355
    %v4281 = vpack.c.b16 %v3358, %v3357
    %v4282 = vpack.c.b16 %v3360, %v3359
    %v4283 = vpack.c.b16 %v3362, %v3361
    %v4284 = vpack.c.b16 %v3364, %v3363
    %v4285 = vpack.c.b16 %v3366, %v3365
    %v4286 = vpack.c.b16 %v3368, %v3367
    %v4287 = vpack.c.b16 %v3370, %v3369
    %v4288 = vpack.c.b16 %v3372, %v3371
    %v4289 = vpack.c.b16 %v3374, %v3373
    %v4290 = vpack.c.b16 %v3376, %v3375
    %v4291 = vpack.c.b16 %v3378, %v3377
    %v4292 = vpack.c.b16 %v3380, %v3379
    %v4293 = vpack.c.b16 %v3382, %v3381
    %v4294 = vpack.c.b16 %v3384, %v3383
    %v4295 = vpack.c.b16 %v3386, %v3385
    %v4296 = vpack.c.b16 %v3388, %v3387
    %v4297 = vpack.c.b16 %v3390, %v3389
    %v4298 = vpack.c.b16 %v3392, %v3391
    %v4299 = vpack.c.b16 %v3394, %v3393
    %v4300 = vpack.c.b16 %v3396, %v3395
    %v4301 = vpack.c.b16 %v3398, %v3397
    %v4302 = vpack.c.b16 %v3400, %v3399
    %v4303 = vpack.c.b16 %v3402, %v3401
    %v4304 = vpack.c.b16 %v3404, %v3403
    %v4305 = vpack.c.b16 %v3406, %v3405
    %v4306 = vpack.c.b16 %v3408, %v3407
    %v4307 = vpack.c.b16 %v3410, %v3409
    %v4308 = vpack.c.b16 %v3412, %v3411
    %v4309 = vpack.c.b16 %v3414, %v3413
    %v4310 = vpack.c.b16 %v3416, %v3415
    %v4311 = vpack.c.b16 %v3418, %v3417
    %v4312 = vpack.c.b16 %v3420, %v3419
    %v4313 = vpack.c.b16 %v3422, %v3421
    %v4314 = vpack.c.b16 %v3424, %v3423
    %v4315 = vpack.c.b16 %v3426, %v3425
    %v4316 = vpack.c.b16 %v3428, %v3427
    %v4317 = vpack.c.b16 %v3430, %v3429
    %v4318 = vpack.c.b16 %v3432, %v3431
    %v4319 = vpack.c.b16 %v3434, %v3433
    %v4320 = vpack.c.b16 %v3436, %v3435
    %v4321 = vpack.c.b16 %v3438, %v3437
    %v4322 = vpack.c.b16 %v3440, %v3439
    %v4323 = vpack.c.b16 %v3442, %v3441
    %v4324 = vpack.c.b16 %v3444, %v3443
    %v4325 = vpack.c.b16 %v3446, %v3445
    %v4326 = vpack.c.b16 %v3448, %v3447
    %v4327 = vpack.c.b16 %v3450, %v3449
    %v4328 = vpack.c.b16 %v3452, %v3451
    %v4329 = vpack.c.b16 %v3454, %v3453
    %v4330 = vpack.c.b16 %v3456, %v3455
    %v4331 = vpack.c.b16 %v3458, %v3457
    %v4332 = vpack.c.b16 %v3460, %v3459
    %v4333 = vpack.c.b16 %v3462, %v3461
    %v4334 = vpack.c.b16 %v3464, %v3463
    %v4335 = vpack.c.b16 %v3466, %v3465
    %v4336 = vpack.c.b16 %v3468, %v3467
    %v4337 = vpack.c.b16 %v3470, %v3469
    %v4338 = vpack.c.b16 %v3472, %v3471
    %v4339 = vpack.c.b16 %v3474, %v3473
    %v4340 = vpack.c.b16 %v3476, %v3475
    %v4341 = vpack.c.b16 %v3478, %v3477
    %v4342 = vpack.c.b16 %v3480, %v3479
    %v4343 = vpack.c.b16 %v3482, %v3481
    %v4344 = vpack.c.b16 %v3484, %v3483
    %v4345 = vpack.c.b16 %v3486, %v3485
    %v4346 = vpack.c.b16 %v3488, %v3487
    %v4347 = vpack.c.b16 %v3490, %v3489
    %v4348 = vpack.c.b16 %v3492, %v3491
    %v4349 = vpack.c.b16 %v3494, %v3493
    %v4350 = vpack.c.b16 %v3496, %v3495
    %v4351 = vpack.c.b16 %v3498, %v3497
    %v4352 = vpack.c.b16 %v3500, %v3499
    %v4353 = vpack.c.b16 %v3502, %v3501
    %v4354 = vpack.c.b16 %v3504, %v3503
    %v4355 = vpack.c.b16 %v3506, %v3505
    %v4356 = vpack.c.b16 %v3508, %v3507
    %v4357 = vpack.c.b16 %v3510, %v3509
    %v4358 = vpack.c.b16 %v3512, %v3511
    %v4359 = vpack.c.b16 %v3514, %v3513
    %v4360 = vpack.c.b16 %v3516, %v3515
    %v4361 = vpack.c.b16 %v3518, %v3517
    %v4362 = vpack.c.b16 %v3520, %v3519
    %v4363 = vpack.c.b16 %v3522, %v3521
    %v4364 = vpack.c.b16 %v3524, %v3523
    %v4365 = vpack.c.b16 %v3526, %v3525
    %v4366 = vpack.c.b16 %v3528, %v3527
    %v4367 = vpack.c.b16 %v3530, %v3529
    %v4368 = vpack.c.b16 %v3532, %v3531
    %v4369 = vpack.c.b16 %v3534, %v3533
    %v4370 = vpack.c.b16 %v3536, %v3535
    %v4371 = vpack.c.b16 %v3538, %v3537
    %v4372 = vpack.c.b16 %v3540, %v3539
    %v4373 = vpack.c.b16 %v3542, %v3541
    %v4374 = vpack.c.b16 %v3544, %v3543
    %v4375 = vpack.c.b16 %v3546, %v3545
    %v4376 = vpack.c.b16 %v3548, %v3547
    %v4377 = vpack.c.b16 %v3550, %v3549
    %v4378 = vpack.c.b16 %v3552, %v3551
    %v4379 = vpack.c.b16 %v3554, %v3553
    %v4380 = vpack.c.b16 %v3556, %v3555
    %v4381 = vpack.c.b16 %v3558, %v3557
    %v4382 = vpack.c.b16 %v3560, %v3559
    %v4383 = vpack.c.b16 %v3562, %v3561
    %v4384 = vpack.c.b16 %v3564, %v3563
    %v4385 = vpack.c.b16 %v3566, %v3565
    %v4386 = vpack.c.b16 %v3568, %v3567
    %v4387 = vpack.c.b16 %v3570, %v3569
    %v4388 = vpack.c.b16 %v3572, %v3571
    %v4389 = vpack.c.b16 %v3574, %v3573
    %v4390 = vpack.c.b16 %v3576, %v3575
    %v4391 = vpack.c.b16 %v3578, %v3577
    %v4392 = vpack.c.b16 %v3580, %v3579
    %v4393 = vpack.c.b16 %v3582, %v3581
    %v4394 = vpack.c.b16 %v3584, %v3583
    %v4395 = vpack.c.b16 %v3586, %v3585
    %v4396 = vpack.c.b16 %v3588, %v3587
    %v4397 = vpack.c.b16 %v3590, %v3589
    %v4398 = vpack.c.b16 %v3592, %v3591
    %v4399 = vpack.c.b16 %v3594, %v3593
    %v4400 = vpack.c.b16 %v3596, %v3595
    %v4401 = vpack.c.b16 %v3598, %v3597
    %v4402 = vpack.c.b16 %v3600, %v3599
    %v4403 = vpack.c.b16 %v3602, %v3601
    %v4404 = vpack.c.b16 %v3604, %v3603
    %v4405 = vpack.c.b16 %v3606, %v3605
    %v4406 = vpack.c.b16 %v3608, %v3607
    %v4407 = vpack.c.b16 %v3610, %v3609
    %v4408 = vpack.c.b16 %v3612, %v3611
    %v4409 = vpack.c.b16 %v3614, %v3613
    %v4410 = vpack.c.b16 %v3616, %v3615
    %v4411 = vpack.c.b16 %v3618, %v3617
    %v4412 = vpack.c.b16 %v3620, %v3619
    %v4413 = vpack.c.b16 %v3622, %v3621
    %v4414 = vpack.c.b16 %v3624, %v3623
    %v4415 = vpack.c.b16 %v3626, %v3625
    %v4416 = vpack.c.b16 %v3628, %v3627
    %v4417 = vpack.c.b16 %v3630, %v3629
    %v4418 = vpack.c.b16 %v3632, %v3631
    %v4419 = vpack.c.b16 %v3634, %v3633
    %v4420 = vpack.c.b16 %v3636, %v3635
    %v4421 = vpack.c.b16 %v3638, %v3637
    %v4422 = vpack.c.b16 %v3640, %v3639
    %v4423 = vpack.c.b16 %v3642, %v3641
    %v4424 = vpack.c.b16 %v3644, %v3643
    %v4425 = vpack.c.b16 %v3646, %v3645
    %v4426 = vpack.c.b16 %v3648, %v3647
    %v4427 = vpack.c.b16 %v3650, %v3649
    %v4428 = vpack.c.b16 %v3652, %v3651
    %v4429 = vpack.c.b16 %v3654, %v3653
    %v4430 = vpack.c.b16 %v3656, %v3655
    %v4431 = vpack.c.b16 %v3658, %v3657
    %v4432 = vpack.c.b16 %v3660, %v3659
    %v4433 = vpack.c.b16 %v3662, %v3661
    %v4434 = vpack.c.b16 %v3664, %v3663
    %v4435 = vpack.c.b16 %v3666, %v3665
    %v4436 = vpack.c.b16 %v3668, %v3667
    %v4437 = vpack.c.b16 %v3670, %v3669
    %v4438 = vpack.c.b16 %v3672, %v3671
    %v4439 = vpack.c.b16 %v3674, %v3673
    %v4440 = vpack.c.b16 %v3676, %v3675
    %v4441 = vpack.c.b16 %v3678, %v3677
    %v4442 = vpack.c.b16 %v3680, %v3679
    %v4443 = vpack.c.b16 %v3682, %v3681
    %v4444 = vpack.c.b16 %v3684, %v3683
    %v4445 = vpack.c.b16 %v3686, %v3685
    %v4446 = vpack.c.b16 %v3688, %v3687
    %v4447 = vpack.c.b16 %v3690, %v3689
    %v4448 = vpack.c.b16 %v3692, %v3691
    %v4449 = vpack.c.b16 %v3694, %v3693
    %v4450 = vpack.c.b16 %v3696, %v3695
    %v4451 = vpack.c.b16 %v3698, %v3697
    %v4452 = vpack.c.b16 %v3700, %v3699
    %v4453 = vpack.c.b16 %v3702, %v3701
    %v4454 = vpack.c.b16 %v3704, %v3703
    %v4455 = vpack.c.b16 %v3706, %v3705
    %v4456 = vpack.c.b16 %v3708, %v3707
    %v4457 = vpack.c.b16 %v3710, %v3709
    %v4458 = vpack.c.b16 %v3712, %v3711
    %v4459 = vpack.c.b16 %v3714, %v3713
    %v4460 = vpack.c.b16 %v3716, %v3715
    %v4461 = vpack.c.b16 %v3718, %v3717
    %v4462 = vpack.c.b16 %v3720, %v3719
    %v4463 = vpack.c.b16 %v3722, %v3721
    %v4464 = vpack.c.b16 %v3724, %v3723
    %v4465 = vpack.c.b16 %v3726, %v3725
    %v4466 = vpack.c.b16 %v3728, %v3727
    %v4467 = vpack.c.b16 %v3730, %v3729
    %v4468 = vpack.c.b16 %v3732, %v3731
    %v4469 = vpack.c.b16 %v3734, %v3733
    %v4470 = vpack.c.b16 %v3736, %v3735
    %v4471 = vpack.c.b16 %v3738, %v3737
    %v4472 = vpack.c.b16 %v3740, %v3739
    %v4473 = vpack.c.b16 %v3742, %v3741
    %v4474 = vpack.c.b16 %v3744, %v3743
    %v4475 = vpack.c.b16 %v3746, %v3745
    %v4476 = vpack.c.b16 %v3748, %v3747
    %v4477 = vpack.c.b16 %v3750, %v3749
    %v4478 = vpack.c.b16 %v3752, %v3751
    %v4479 = vpack.c.b16 %v3754, %v3753
    %v4480 = vpack.c.b16 %v3756, %v3755
    %v4481 = vpack.c.b16 %v3758, %v3757
    %v4482 = vpack.c.b16 %v3760, %v3759
    %v4483 = vpack.c.b16 %v3762, %v3761
    %v4484 = vpack.c.b16 %v3764, %v3763
    %v4485 = vpack.c.b16 %v3766, %v3765
    %v4486 = vpack.c.b16 %v3768, %v3767
    %v4487 = vpack.c.b16 %v3770, %v3769
    %v4488 = vpack.c.b16 %v3772, %v3771
    %v4489 = vpack.c.b16 %v3774, %v3773
    %v4490 = vpack.c.b16 %v3776, %v3775
    %v4491 = vpack.c.b16 %v3778, %v3777
    %v4492 = vpack.c.b16 %v3780, %v3779
    %v4493 = vpack.c.b16 %v3782, %v3781
    %v4494 = vpack.c.b16 %v3784, %v3783
    %v4495 = vpack.c.b16 %v3786, %v3785
    %v4496 = vpack.c.b16 %v3788, %v3787
    %v4497 = vpack.c.b16 %v3790, %v3789
    %v4498 = vpack.c.b16 %v3792, %v3791
    %v4499 = vpack.c.b16 %v3794, %v3793
    %v4500 = vpack.c.b16 %v3796, %v3795
    %v4501 = vpack.c.b16 %v3798, %v3797
    %v4502 = vpack.c.b16 %v3800, %v3799
    %v4503 = vpack.c.b16 %v3802, %v3801
    %v4504 = vpack.c.b16 %v3804, %v3803
    %v4505 = vpack.c.b16 %v3806, %v3805
    %v4506 = vpack.c.b16 %v3808, %v3807
    %v4507 = vpack.c.b16 %v3810, %v3809
    %v4508 = vpack.c.b16 %v3812, %v3811
    %v4509 = vpack.c.b16 %v3814, %v3813
    %v4510 = vpack.c.b16 %v3816, %v3815
    %v4511 = vpack.c.b16 %v3818, %v3817
    %v4512 = vpack.c.b16 %v3820, %v3819
    %v4513 = vpack.c.b16 %v3822, %v3821
    %v4514 = vpack.c.b16 %v3824, %v3823
    %v4515 = vpack.c.b16 %v3826, %v3825
    %v4516 = vpack.c.b16 %v3828, %v3827
    %v4517 = vpack.c.b16 %v3830, %v3829
    %v4518 = vpack.c.b16 %v3832, %v3831
    %v4519 = vpack.c.b16 %v3834, %v3833
    %v4520 = vpack.c.b16 %v3836, %v3835
    %v4521 = vpack.c.b16 %v3838, %v3837
    %v4522 = vpack.c.b16 %v3840, %v3839
    %v4523 = vpack.c.b16 %v3842, %v3841
    %v4524 = vpack.c.b16 %v3844, %v3843
    %v4525 = vpack.c.b16 %v3846, %v3845
    %v4526 = vpack.c.b16 %v3848, %v3847
    %v4527 = vpack.c.b16 %v3850, %v3849
    %v4528 = vpack.c.b16 %v3852, %v3851
    %v4529 = vpack.c.b16 %v3854, %v3853
    %v4530 = vpack.c.b16 %v3856, %v3855
    %v4531 = vpack.c.b16 %v3858, %v3857
    %v4532 = vpack.c.b16 %v3860, %v3859
    %v4533 = vpack.c.b16 %v3862, %v3861
    %v4534 = vpack.c.b16 %v3864, %v3863
    %v4535 = vpack.c.b16 %v3866, %v3865
    %v4536 = vpack.c.b16 %v3868, %v3867
    %v4537 = vpack.c.b16 %v3870, %v3869
    %v4538 = vpack.c.b16 %v3872, %v3871
    %v4539 = vpack.c.b16 %v3874, %v3873
    %v4540 = vpack.c.b16 %v3876, %v3875
    %v4541 = vpack.c.b16 %v3878, %v3877
    %v4542 = vpack.c.b16 %v3880, %v3879
    %v4543 = vpack.c.b16 %v3882, %v3881
    %v4544 = vpack.c.b16 %v3884, %v3883
    %v4545 = vpack.c.b16 %v3886, %v3885
    %v4546 = vpack.c.b16 %v3888, %v3887
    %v4547 = vpack.c.b16 %v3890, %v3889
    %v4548 = vpack.c.b16 %v3892, %v3891
    %v4549 = vpack.c.b16 %v3894, %v3893
    %v4550 = vpack.c.b16 %v3896, %v3895
    %v4551 = vpack.c.b16 %v3898, %v3897
    %v4552 = vpack.c.b16 %v3900, %v3899
    %v4553 = vpack.c.b16 %v3902, %v3901
    %v4554 = vpack.c.b16 %v3904, %v3903
    %v4555 = vpack.c.b16 %v3906, %v3905
    %v4556 = vpack.c.b16 %v3908, %v3907
    %v4557 = vpack.c.b16 %v3910, %v3909
    %v4558 = vpack.c.b16 %v3912, %v3911
    %v4559 = vpack.c.b16 %v3914, %v3913
    %v4560 = vpack.c.b16 %v3916, %v3915
    %v4561 = vpack.c.b16 %v3918, %v3917
    %v4562 = vpack.c.b16 %v3920, %v3919
    %v4563 = vpack.c.b16 %v3922, %v3921
    %v4564 = vpack.c.b16 %v3924, %v3923
    %v4565 = vpack.c.b16 %v3926, %v3925
    %v4566 = vpack.c.b16 %v3928, %v3927
    %v4567 = vpack.c.b16 %v3930, %v3929
    %v4568 = vpack.c.b16 %v3932, %v3931
    %v4569 = vpack.c.b16 %v3934, %v3933
    %v4570 = vpack.c.b16 %v3936, %v3935
    %v4571 = vpack.c.b16 %v3938, %v3937
    %v4572 = vpack.c.b16 %v3940, %v3939
    %v4573 = vpack.c.b16 %v3942, %v3941
    %v4574 = vpack.c.b16 %v3944, %v3943
    %v4575 = vpack.c.b16 %v3946, %v3945
    %v4576 = vpack.c.b16 %v3948, %v3947
    %v4577 = vpack.c.b16 %v3950, %v3949
    %v4578 = vpack.c.b16 %v3952, %v3951
    %v4579 = vpack.c.b16 %v3954, %v3953
    %v4580 = vpack.c.b16 %v3956, %v3955
    %v4581 = vpack.c.b16 %v3958, %v3957
    %v4582 = vpack.c.b16 %v3960, %v3959
    %v4583 = vpack.c.b16 %v3962, %v3961
    %v4584 = vpack.c.b16 %v3964, %v3963
    %v4585 = vpack.c.b16 %v3966, %v3965
    %v4586 = vpack.c.b16 %v3968, %v3967
    %v4587 = vpack.c.b16 %v3970, %v3969
    %v4588 = vpack.c.b16 %v3972, %v3971
    %v4589 = vpack.c.b16 %v3974, %v3973
    %v4590 = vpack.c.b16 %v3976, %v3975
    %v4591 = vpack.c.b16 %v3978, %v3977
    %v4592 = vpack.c.b16 %v3980, %v3979
    %v4593 = vpack.c.b16 %v3982, %v3981
    %v4594 = vpack.c.b16 %v3984, %v3983
    %v4595 = vpack.c.b16 %v3986, %v3985
    %v4596 = vpack.c.b16 %v3988, %v3987
    %v4597 = vpack.c.b16 %v3990, %v3989
    %v4598 = vpack.c.b16 %v3992, %v3991
    %v4599 = vpack.c.b16 %v3994, %v3993
    %v4600 = vpack.c.b16 %v3996, %v3995
    %v4601 = vpack.c.b16 %v3998, %v3997
    %v4602 = vpack.c.b16 %v4000, %v3999
    %v4603 = vpack.c.b16 %v4002, %v4001
    %v4604 = vpack.c.b16 %v4004, %v4003
    %v4605 = vpack.c.b16 %v4006, %v4005
    %v4606 = vpack.c.b16 %v4008, %v4007
    %v4607 = vpack.c.b16 %v4010, %v4009
    %v4608 = vpack.c.b16 %v4012, %v4011
    %v4609 = vpack.c.b16 %v4014, %v4013
    %v4610 = vpack.c.b16 %v4016, %v4015
    %v4611 = vpack.c.b16 %v4018, %v4017
    %v4612 = vpack.c.b16 %v4020, %v4019
    %v4613 = vpack.c.b16 %v4022, %v4021
    %v4614 = vpack.c.b16 %v4024, %v4023
    %v4615 = vpack.c.b16 %v4026, %v4025
    %v4616 = vpack.c.b16 %v4028, %v4027
    %v4617 = vpack.c.b16 %v4030, %v4029
    %v4618 = vpack.c.b16 %v4032, %v4031
    %v4619 = vpack.c.b16 %v4034, %v4033
    %v4620 = vpack.c.b16 %v4036, %v4035
    %v4621 = vpack.c.b16 %v4038, %v4037
    %v4622 = vpack.c.b16 %v4040, %v4039
    %v4623 = vpack.c.b16 %v4042, %v4041
    %v4624 = vpack.c.b16 %v4044, %v4043
    %v4625 = vpack.c.b16 %v4046, %v4045
    %v4626 = vpack.c.b16 %v4048, %v4047
    %v4627 = vpack.c.b16 %v4050, %v4049
    %v4628 = vpack.c.b16 %v4052, %v4051
    %5205 = vmatprep.subr.bf16.mxu0 0
    %5206 = vmatpush1.bf16.msra.mxu0 %v4053
    %5207 = vmatprep.subr.bf16.mxu0 0
    %5208 = vmatpush1.bf16.msra.mxu0 %v4054
    %5209 = vmatprep.subr.bf16.mxu0 0
    %5210 = vmatpush1.bf16.msra.mxu0 %v4055
    %5211 = vmatprep.subr.bf16.mxu0 0
    %5212 = vmatpush1.bf16.msra.mxu0 %v4056
    %5213 = vmatprep.subr.bf16.mxu0 0
    %5214 = vmatpush1.bf16.msra.mxu0 %v4057
    %5215 = vmatprep.subr.bf16.mxu0 0
    %5216 = vmatpush1.bf16.msra.mxu0 %v4058
    %5217 = vmatprep.subr.bf16.mxu0 0
    %5218 = vmatpush1.bf16.msra.mxu0 %v4059
    %5219 = vmatprep.subr.bf16.mxu0 0
    %5220 = vmatpush1.bf16.msra.mxu0 %v4060
    %5221 = vmatprep.subr.bf16.mxu0 0
    %5222 = vmatpush1.bf16.msra.mxu0 %v4061
    %5223 = vmatprep.subr.bf16.mxu0 0
    %5224 = vmatpush1.bf16.msra.mxu0 %v4062
    %5225 = vmatprep.subr.bf16.mxu0 0
    %5226 = vmatpush1.bf16.msra.mxu0 %v4063
    %5227 = vmatprep.subr.bf16.mxu0 0
    %5228 = vmatpush1.bf16.msra.mxu0 %v4064
    %5229 = vmatprep.subr.bf16.mxu0 0
    %5230 = vmatpush1.bf16.msra.mxu0 %v4065
    %5231 = vmatprep.subr.bf16.mxu0 0
    %5232 = vmatpush1.bf16.msra.mxu0 %v4066
    %5233 = vmatprep.subr.bf16.mxu0 0
    %5234 = vmatpush1.bf16.msra.mxu0 %v4067
    %5235 = vmatprep.subr.bf16.mxu0 0
    %5236 = vmatpush1.bf16.msra.mxu0 %v4068
    %5237 = vmatprep.mubr.bf16.mxu0 %v1273
    %5238 = vmatmul.mubr.bf16.gmra.mrb[0].mxu0 %v1259
    %v5239 = vpop.f32.mrb[0].mxu0
    %v5240 = vadd.f32 %v1225, %v5239
    %v5241 = vpop.f32.mrb[0].mxu0
    %v5242 = vpop.f32.mrb[0].mxu0
    %v5243 = vpop.f32.mrb[0].mxu0
    %5244 = vdwg.mxu0
    %5245 = vmatprep.subr.bf16.mxu0 0
    %5246 = vmatpush1.bf16.msra.mxu0 %v4069
    %5247 = vmatprep.subr.bf16.mxu0 0
    %5248 = vmatpush1.bf16.msra.mxu0 %v4070
    %5249 = vmatprep.subr.bf16.mxu0 0
    %5250 = vmatpush1.bf16.msra.mxu0 %v4071
    %5251 = vmatprep.subr.bf16.mxu0 0
    %5252 = vmatpush1.bf16.msra.mxu0 %v4072
    %5253 = vmatprep.subr.bf16.mxu0 0
    %5254 = vmatpush1.bf16.msra.mxu0 %v4073
    %5255 = vmatprep.subr.bf16.mxu0 0
    %5256 = vmatpush1.bf16.msra.mxu0 %v4074
    %5257 = vmatprep.subr.bf16.mxu0 0
    %5258 = vmatpush1.bf16.msra.mxu0 %v4075
    %5259 = vmatprep.subr.bf16.mxu0 0
    %5260 = vmatpush1.bf16.msra.mxu0 %v4076
    %5261 = vmatprep.subr.bf16.mxu0 0
    %5262 = vmatpush1.bf16.msra.mxu0 %v4077
    %5263 = vmatprep.subr.bf16.mxu0 0
    %5264 = vmatpush1.bf16.msra.mxu0 %v4078
    %5265 = vmatprep.subr.bf16.mxu0 0
    %5266 = vmatpush1.bf16.msra.mxu0 %v4079
    %5267 = vmatprep.subr.bf16.mxu0 0
    %5268 = vmatpush1.bf16.msra.mxu0 %v4080
    %5269 = vmatprep.subr.bf16.mxu0 0
    %5270 = vmatpush1.bf16.msra.mxu0 %v4081
    %5271 = vmatprep.subr.bf16.mxu0 0
    %5272 = vmatpush1.bf16.msra.mxu0 %v4082
    %5273 = vmatprep.subr.bf16.mxu0 0
    %5274 = vmatpush1.bf16.msra.mxu0 %v4083
    %5275 = vmatprep.subr.bf16.mxu0 0
    %5276 = vmatpush1.bf16.msra.mxu0 %v4084
    %5277 = vmatprep.mubr.bf16.mxu0 %v1283
    %5278 = vmatmul.mubr.bf16.gmra.mrb[0].mxu0 %v1281
    %v5279 = vpop.f32.mrb[0].mxu0
    %v5280 = vadd.f32 %v5240, %v5279
    %v5281 = vpop.f32.mrb[0].mxu0
    %v5282 = vpop.f32.mrb[0].mxu0
    %v5283 = vpop.f32.mrb[0].mxu0
    %5284 = vdwg.mxu0
    %5285 = vmatprep.subr.bf16.mxu0 0
    %5286 = vmatpush1.bf16.msra.mxu0 %v4085
    %5287 = vmatprep.subr.bf16.mxu0 0
    %5288 = vmatpush1.bf16.msra.mxu0 %v4086
    %5289 = vmatprep.subr.bf16.mxu0 0
    %5290 = vmatpush1.bf16.msra.mxu0 %v4087
    %5291 = vmatprep.subr.bf16.mxu0 0
    %5292 = vmatpush1.bf16.msra.mxu0 %v4088
    %5293 = vmatprep.subr.bf16.mxu0 0
    %5294 = vmatpush1.bf16.msra.mxu0 %v4089
    %5295 = vmatprep.subr.bf16.mxu0 0
    %5296 = vmatpush1.bf16.msra.mxu0 %v4090
    %5297 = vmatprep.subr.bf16.mxu0 0
    %5298 = vmatpush1.bf16.msra.mxu0 %v4091
    %5299 = vmatprep.subr.bf16.mxu0 0
    %5300 = vmatpush1.bf16.msra.mxu0 %v4092
    %5301 = vmatprep.subr.bf16.mxu0 0
    %5302 = vmatpush1.bf16.msra.mxu0 %v4093
    %5303 = vmatprep.subr.bf16.mxu0 0
    %5304 = vmatpush1.bf16.msra.mxu0 %v4094
    %5305 = vmatprep.subr.bf16.mxu0 0
    %5306 = vmatpush1.bf16.msra.mxu0 %v4095
    %5307 = vmatprep.subr.bf16.mxu0 0
    %5308 = vmatpush1.bf16.msra.mxu0 %v4096
    %5309 = vmatprep.subr.bf16.mxu0 0
    %5310 = vmatpush1.bf16.msra.mxu0 %v4097
    %5311 = vmatprep.subr.bf16.mxu0 0
    %5312 = vmatpush1.bf16.msra.mxu0 %v4098
    %5313 = vmatprep.subr.bf16.mxu0 0
    %5314 = vmatpush1.bf16.msra.mxu0 %v4099
    %5315 = vmatprep.subr.bf16.mxu0 0
    %5316 = vmatpush1.bf16.msra.mxu0 %v4100
    %5317 = vmatprep.mubr.bf16.mxu0 %v1280
    %5318 = vmatmul.mubr.bf16.gmra.mrb[0].mxu0 %v1266
    %v5319 = vpop.f32.mrb[0].mxu0
    %v5320 = vadd.f32 %v5280, %v5319
    %v5321 = vpop.f32.mrb[0].mxu0
    %v5322 = vpop.f32.mrb[0].mxu0
    %v5323 = vpop.f32.mrb[0].mxu0
    %5324 = vdwg.mxu0
    %5325 = vmatprep.subr.bf16.mxu0 0
    %5326 = vmatpush1.bf16.msra.mxu0 %v4101
    %5327 = vmatprep.subr.bf16.mxu0 0
    %5328 = vmatpush1.bf16.msra.mxu0 %v4102
    %5329 = vmatprep.subr.bf16.mxu0 0
    %5330 = vmatpush1.bf16.msra.mxu0 %v4103
    %5331 = vmatprep.subr.bf16.mxu0 0
    %5332 = vmatpush1.bf16.msra.mxu0 %v4104
    %5333 = vmatprep.subr.bf16.mxu0 0
    %5334 = vmatpush1.bf16.msra.mxu0 %v4105
    %5335 = vmatprep.subr.bf16.mxu0 0
    %5336 = vmatpush1.bf16.msra.mxu0 %v4106
    %5337 = vmatprep.subr.bf16.mxu0 0
    %5338 = vmatpush1.bf16.msra.mxu0 %v4107
    %5339 = vmatprep.subr.bf16.mxu0 0
    %5340 = vmatpush1.bf16.msra.mxu0 %v4108
    %5341 = vmatprep.subr.bf16.mxu0 0
    %5342 = vmatpush1.bf16.msra.mxu0 %v4109
    %5343 = vmatprep.subr.bf16.mxu0 0
    %5344 = vmatpush1.bf16.msra.mxu0 %v4110
    %5345 = vmatprep.subr.bf16.mxu0 0
    %5346 = vmatpush1.bf16.msra.mxu0 %v4111
    %5347 = vmatprep.subr.bf16.mxu0 0
    %5348 = vmatpush1.bf16.msra.mxu0 %v4112
    %5349 = vmatprep.subr.bf16.mxu0 0
    %5350 = vmatpush1.bf16.msra.mxu0 %v4113
    %5351 = vmatprep.subr.bf16.mxu0 0
    %5352 = vmatpush1.bf16.msra.mxu0 %v4114
    %5353 = vmatprep.subr.bf16.mxu0 0
    %5354 = vmatpush1.bf16.msra.mxu0 %v4115
    %5355 = vmatprep.subr.bf16.mxu0 0
    %5356 = vmatpush1.bf16.msra.mxu0 %v4116
    %5357 = vmatprep.mubr.bf16.mxu0 %v1284
    %5358 = vmatmul.mubr.bf16.gmra.mrb[0].mxu0 %v1282
    %v5359 = vpop.f32.mrb[0].mxu0
    %v5360 = vadd.f32 %v5320, %v5359
    %v5361 = vpop.f32.mrb[0].mxu0
    %v5362 = vpop.f32.mrb[0].mxu0
    %v5363 = vpop.f32.mrb[0].mxu0
    %5364 = vdwg.mxu0
    %5365 = vmatprep.subr.bf16.mxu0 0
    %5366 = vmatpush1.bf16.msra.mxu0 %v4117
    %5367 = vmatprep.subr.bf16.mxu0 0
    %5368 = vmatpush1.bf16.msra.mxu0 %v4118
    %5369 = vmatprep.subr.bf16.mxu0 0
    %5370 = vmatpush1.bf16.msra.mxu0 %v4119
    %5371 = vmatprep.subr.bf16.mxu0 0
    %5372 = vmatpush1.bf16.msra.mxu0 %v4120
    %5373 = vmatprep.subr.bf16.mxu0 0
    %5374 = vmatpush1.bf16.msra.mxu0 %v4121
    %5375 = vmatprep.subr.bf16.mxu0 0
    %5376 = vmatpush1.bf16.msra.mxu0 %v4122
    %5377 = vmatprep.subr.bf16.mxu0 0
    %5378 = vmatpush1.bf16.msra.mxu0 %v4123
    %5379 = vmatprep.subr.bf16.mxu0 0
    %5380 = vmatpush1.bf16.msra.mxu0 %v4124
    %5381 = vmatprep.subr.bf16.mxu0 0
    %5382 = vmatpush1.bf16.msra.mxu0 %v4125
    %5383 = vmatprep.subr.bf16.mxu0 0
    %5384 = vmatpush1.bf16.msra.mxu0 %v4126
    %5385 = vmatprep.subr.bf16.mxu0 0
    %5386 = vmatpush1.bf16.msra.mxu0 %v4127
    %5387 = vmatprep.subr.bf16.mxu0 0
    %5388 = vmatpush1.bf16.msra.mxu0 %v4128
    %5389 = vmatprep.subr.bf16.mxu0 0
    %5390 = vmatpush1.bf16.msra.mxu0 %v4129
    %5391 = vmatprep.subr.bf16.mxu0 0
    %5392 = vmatpush1.bf16.msra.mxu0 %v4130
    %5393 = vmatprep.subr.bf16.mxu0 0
    %5394 = vmatpush1.bf16.msra.mxu0 %v4131
    %5395 = vmatprep.subr.bf16.mxu0 0
    %5396 = vmatpush1.bf16.msra.mxu0 %v4132
    %5397 = vmatprep.mubr.bf16.mxu0 %v1322
    %5398 = vmatmul.mubr.bf16.gmra.mrb[0].mxu0 %v1308
    %v5399 = vpop.f32.mrb[0].mxu0
    %v5400 = vadd.f32 %v5360, %v5399
    %v5401 = vpop.f32.mrb[0].mxu0
    %v5402 = vpop.f32.mrb[0].mxu0
    %v5403 = vpop.f32.mrb[0].mxu0
    %5404 = vdwg.mxu0
    %5405 = vmatprep.subr.bf16.mxu0 0
    %5406 = vmatpush1.bf16.msra.mxu0 %v4133
    %5407 = vmatprep.subr.bf16.mxu0 0
    %5408 = vmatpush1.bf16.msra.mxu0 %v4134
    %5409 = vmatprep.subr.bf16.mxu0 0
    %5410 = vmatpush1.bf16.msra.mxu0 %v4135
    %5411 = vmatprep.subr.bf16.mxu0 0
    %5412 = vmatpush1.bf16.msra.mxu0 %v4136
    %5413 = vmatprep.subr.bf16.mxu0 0
    %5414 = vmatpush1.bf16.msra.mxu0 %v4137
    %5415 = vmatprep.subr.bf16.mxu0 0
    %5416 = vmatpush1.bf16.msra.mxu0 %v4138
    %5417 = vmatprep.subr.bf16.mxu0 0
    %5418 = vmatpush1.bf16.msra.mxu0 %v4139
    %5419 = vmatprep.subr.bf16.mxu0 0
    %5420 = vmatpush1.bf16.msra.mxu0 %v4140
    %5421 = vmatprep.subr.bf16.mxu0 0
    %5422 = vmatpush1.bf16.msra.mxu0 %v4141
    %5423 = vmatprep.subr.bf16.mxu0 0
    %5424 = vmatpush1.bf16.msra.mxu0 %v4142
    %5425 = vmatprep.subr.bf16.mxu0 0
    %5426 = vmatpush1.bf16.msra.mxu0 %v4143
    %5427 = vmatprep.subr.bf16.mxu0 0
    %5428 = vmatpush1.bf16.msra.mxu0 %v4144
    %5429 = vmatprep.subr.bf16.mxu0 0
    %5430 = vmatpush1.bf16.msra.mxu0 %v4145
    %5431 = vmatprep.subr.bf16.mxu0 0
    %5432 = vmatpush1.bf16.msra.mxu0 %v4146
    %5433 = vmatprep.subr.bf16.mxu0 0
    %5434 = vmatpush1.bf16.msra.mxu0 %v4147
    %5435 = vmatprep.subr.bf16.mxu0 0
    %5436 = vmatpush1.bf16.msra.mxu0 %v4148
    %5437 = vmatprep.mubr.bf16.mxu0 %v1332
    %5438 = vmatmul.mubr.bf16.gmra.mrb[0].mxu0 %v1330
    %v5439 = vpop.f32.mrb[0].mxu0
    %v5440 = vadd.f32 %v5400, %v5439
    %v5441 = vpop.f32.mrb[0].mxu0
    %v5442 = vpop.f32.mrb[0].mxu0
    %v5443 = vpop.f32.mrb[0].mxu0
    %5444 = vdwg.mxu0
    %5445 = vmatprep.subr.bf16.mxu0 0
    %5446 = vmatpush1.bf16.msra.mxu0 %v4149
    %5447 = vmatprep.subr.bf16.mxu0 0
    %5448 = vmatpush1.bf16.msra.mxu0 %v4150
    %5449 = vmatprep.subr.bf16.mxu0 0
    %5450 = vmatpush1.bf16.msra.mxu0 %v4151
    %5451 = vmatprep.subr.bf16.mxu0 0
    %5452 = vmatpush1.bf16.msra.mxu0 %v4152
    %5453 = vmatprep.subr.bf16.mxu0 0
    %5454 = vmatpush1.bf16.msra.mxu0 %v4153
    %5455 = vmatprep.subr.bf16.mxu0 0
    %5456 = vmatpush1.bf16.msra.mxu0 %v4154
    %5457 = vmatprep.subr.bf16.mxu0 0
    %5458 = vmatpush1.bf16.msra.mxu0 %v4155
    %5459 = vmatprep.subr.bf16.mxu0 0
    %5460 = vmatpush1.bf16.msra.mxu0 %v4156
    %5461 = vmatprep.subr.bf16.mxu0 0
    %5462 = vmatpush1.bf16.msra.mxu0 %v4157
    %5463 = vmatprep.subr.bf16.mxu0 0
    %5464 = vmatpush1.bf16.msra.mxu0 %v4158
    %5465 = vmatprep.subr.bf16.mxu0 0
    %5466 = vmatpush1.bf16.msra.mxu0 %v4159
    %5467 = vmatprep.subr.bf16.mxu0 0
    %5468 = vmatpush1.bf16.msra.mxu0 %v4160
    %5469 = vmatprep.subr.bf16.mxu0 0
    %5470 = vmatpush1.bf16.msra.mxu0 %v4161
    %5471 = vmatprep.subr.bf16.mxu0 0
    %5472 = vmatpush1.bf16.msra.mxu0 %v4162
    %5473 = vmatprep.subr.bf16.mxu0 0
    %5474 = vmatpush1.bf16.msra.mxu0 %v4163
    %5475 = vmatprep.subr.bf16.mxu0 0
    %5476 = vmatpush1.bf16.msra.mxu0 %v4164
    %5477 = vmatprep.mubr.bf16.mxu0 %v1329
    %5478 = vmatmul.mubr.bf16.gmra.mrb[0].mxu0 %v1315
    %v5479 = vpop.f32.mrb[0].mxu0
    %v5480 = vadd.f32 %v5440, %v5479
    %v5481 = vpop.f32.mrb[0].mxu0
    %v5482 = vpop.f32.mrb[0].mxu0
    %v5483 = vpop.f32.mrb[0].mxu0
    %5484 = vdwg.mxu0
    %5485 = vmatprep.subr.bf16.mxu0 0
    %5486 = vmatpush1.bf16.msra.mxu0 %v4165
    %5487 = vmatprep.subr.bf16.mxu0 0
    %5488 = vmatpush1.bf16.msra.mxu0 %v4166
    %5489 = vmatprep.subr.bf16.mxu0 0
    %5490 = vmatpush1.bf16.msra.mxu0 %v4167
    %5491 = vmatprep.subr.bf16.mxu0 0
    %5492 = vmatpush1.bf16.msra.mxu0 %v4168
    %5493 = vmatprep.subr.bf16.mxu0 0
    %5494 = vmatpush1.bf16.msra.mxu0 %v4169
    %5495 = vmatprep.subr.bf16.mxu0 0
    %5496 = vmatpush1.bf16.msra.mxu0 %v4170
    %5497 = vmatprep.subr.bf16.mxu0 0
    %5498 = vmatpush1.bf16.msra.mxu0 %v4171
    %5499 = vmatprep.subr.bf16.mxu0 0
    %5500 = vmatpush1.bf16.msra.mxu0 %v4172
    %5501 = vmatprep.subr.bf16.mxu0 0
    %5502 = vmatpush1.bf16.msra.mxu0 %v4173
    %5503 = vmatprep.subr.bf16.mxu0 0
    %5504 = vmatpush1.bf16.msra.mxu0 %v4174
    %5505 = vmatprep.subr.bf16.mxu0 0
    %5506 = vmatpush1.bf16.msra.mxu0 %v4175
    %5507 = vmatprep.subr.bf16.mxu0 0
    %5508 = vmatpush1.bf16.msra.mxu0 %v4176
    %5509 = vmatprep.subr.bf16.mxu0 0
    %5510 = vmatpush1.bf16.msra.mxu0 %v4177
    %5511 = vmatprep.subr.bf16.mxu0 0
    %5512 = vmatpush1.bf16.msra.mxu0 %v4178
    %5513 = vmatprep.subr.bf16.mxu0 0
    %5514 = vmatpush1.bf16.msra.mxu0 %v4179
    %5515 = vmatprep.subr.bf16.mxu0 0
    %5516 = vmatpush1.bf16.msra.mxu0 %v4180
    %5517 = vmatprep.mubr.bf16.mxu0 %v1333
    %5518 = vmatmul.mubr.bf16.gmra.mrb[0].mxu0 %v1331
    %v5519 = vpop.f32.mrb[0].mxu0
    %v5520 = vadd.f32 %v5480, %v5519
    %v5521 = vpop.f32.mrb[0].mxu0
    %v5522 = vpop.f32.mrb[0].mxu0
    %v5523 = vpop.f32.mrb[0].mxu0
    %5524 = vdwg.mxu0
    %5525 = vmatprep.subr.bf16.mxu0 0
    %5526 = vmatpush1.bf16.msra.mxu0 %v4181
    %5527 = vmatprep.subr.bf16.mxu0 0
    %5528 = vmatpush1.bf16.msra.mxu0 %v4182
    %5529 = vmatprep.subr.bf16.mxu0 0
    %5530 = vmatpush1.bf16.msra.mxu0 %v4183
    %5531 = vmatprep.subr.bf16.mxu0 0
    %5532 = vmatpush1.bf16.msra.mxu0 %v4184
    %5533 = vmatprep.subr.bf16.mxu0 0
    %5534 = vmatpush1.bf16.msra.mxu0 %v4185
    %5535 = vmatprep.subr.bf16.mxu0 0
    %5536 = vmatpush1.bf16.msra.mxu0 %v4186
    %5537 = vmatprep.subr.bf16.mxu0 0
    %5538 = vmatpush1.bf16.msra.mxu0 %v4187
    %5539 = vmatprep.subr.bf16.mxu0 0
    %5540 = vmatpush1.bf16.msra.mxu0 %v4188
    %5541 = vmatprep.subr.bf16.mxu0 0
    %5542 = vmatpush1.bf16.msra.mxu0 %v4189
    %5543 = vmatprep.subr.bf16.mxu0 0
    %5544 = vmatpush1.bf16.msra.mxu0 %v4190
    %5545 = vmatprep.subr.bf16.mxu0 0
    %5546 = vmatpush1.bf16.msra.mxu0 %v4191
    %5547 = vmatprep.subr.bf16.mxu0 0
    %5548 = vmatpush1.bf16.msra.mxu0 %v4192
    %5549 = vmatprep.subr.bf16.mxu0 0
    %5550 = vmatpush1.bf16.msra.mxu0 %v4193
    %5551 = vmatprep.subr.bf16.mxu0 0
    %5552 = vmatpush1.bf16.msra.mxu0 %v4194
    %5553 = vmatprep.subr.bf16.mxu0 0
    %5554 = vmatpush1.bf16.msra.mxu0 %v4195
    %5555 = vmatprep.subr.bf16.mxu0 0
    %5556 = vmatpush1.bf16.msra.mxu0 %v4196
    %5557 = vmatprep.mubr.bf16.mxu0 %v1371
    %5558 = vmatmul.mubr.bf16.gmra.mrb[0].mxu0 %v1357
    %v5559 = vpop.f32.mrb[0].mxu0
    %v5560 = vadd.f32 %v5520, %v5559
    %v5561 = vpop.f32.mrb[0].mxu0
    %v5562 = vpop.f32.mrb[0].mxu0
    %v5563 = vpop.f32.mrb[0].mxu0
    %5564 = vdwg.mxu0
    %5565 = vmatprep.subr.bf16.mxu0 0
    %5566 = vmatpush1.bf16.msra.mxu0 %v4197
    %5567 = vmatprep.subr.bf16.mxu0 0
    %5568 = vmatpush1.bf16.msra.mxu0 %v4198
    %5569 = vmatprep.subr.bf16.mxu0 0
    %5570 = vmatpush1.bf16.msra.mxu0 %v4199
    %5571 = vmatprep.subr.bf16.mxu0 0
    %5572 = vmatpush1.bf16.msra.mxu0 %v4200
    %5573 = vmatprep.subr.bf16.mxu0 0
    %5574 = vmatpush1.bf16.msra.mxu0 %v4201
    %5575 = vmatprep.subr.bf16.mxu0 0
    %5576 = vmatpush1.bf16.msra.mxu0 %v4202
    %5577 = vmatprep.subr.bf16.mxu0 0
    %5578 = vmatpush1.bf16.msra.mxu0 %v4203
    %5579 = vmatprep.subr.bf16.mxu0 0
    %5580 = vmatpush1.bf16.msra.mxu0 %v4204
    %5581 = vmatprep.subr.bf16.mxu0 0
    %5582 = vmatpush1.bf16.msra.mxu0 %v4205
    %5583 = vmatprep.subr.bf16.mxu0 0
    %5584 = vmatpush1.bf16.msra.mxu0 %v4206
    %5585 = vmatprep.subr.bf16.mxu0 0
    %5586 = vmatpush1.bf16.msra.mxu0 %v4207
    %5587 = vmatprep.subr.bf16.mxu0 0
    %5588 = vmatpush1.bf16.msra.mxu0 %v4208
    %5589 = vmatprep.subr.bf16.mxu0 0
    %5590 = vmatpush1.bf16.msra.mxu0 %v4209
    %5591 = vmatprep.subr.bf16.mxu0 0
    %5592 = vmatpush1.bf16.msra.mxu0 %v4210
    %5593 = vmatprep.subr.bf16.mxu0 0
    %5594 = vmatpush1.bf16.msra.mxu0 %v4211
    %5595 = vmatprep.subr.bf16.mxu0 0
    %5596 = vmatpush1.bf16.msra.mxu0 %v4212
    %5597 = vmatprep.mubr.bf16.mxu0 %v1381
    %5598 = vmatmul.mubr.bf16.gmra.mrb[0].mxu0 %v1379
    %v5599 = vpop.f32.mrb[0].mxu0
    %v5600 = vadd.f32 %v5560, %v5599
    %v5601 = vpop.f32.mrb[0].mxu0
    %v5602 = vpop.f32.mrb[0].mxu0
    %v5603 = vpop.f32.mrb[0].mxu0
    %5604 = vdwg.mxu0
    %5605 = vmatprep.subr.bf16.mxu0 0
    %5606 = vmatpush1.bf16.msra.mxu0 %v4213
    %5607 = vmatprep.subr.bf16.mxu0 0
    %5608 = vmatpush1.bf16.msra.mxu0 %v4214
    %5609 = vmatprep.subr.bf16.mxu0 0
    %5610 = vmatpush1.bf16.msra.mxu0 %v4215
    %5611 = vmatprep.subr.bf16.mxu0 0
    %5612 = vmatpush1.bf16.msra.mxu0 %v4216
    %5613 = vmatprep.subr.bf16.mxu0 0
    %5614 = vmatpush1.bf16.msra.mxu0 %v4217
    %5615 = vmatprep.subr.bf16.mxu0 0
    %5616 = vmatpush1.bf16.msra.mxu0 %v4218
    %5617 = vmatprep.subr.bf16.mxu0 0
    %5618 = vmatpush1.bf16.msra.mxu0 %v4219
    %5619 = vmatprep.subr.bf16.mxu0 0
    %5620 = vmatpush1.bf16.msra.mxu0 %v4220
    %5621 = vmatprep.subr.bf16.mxu0 0
    %5622 = vmatpush1.bf16.msra.mxu0 %v4221
    %5623 = vmatprep.subr.bf16.mxu0 0
    %5624 = vmatpush1.bf16.msra.mxu0 %v4222
    %5625 = vmatprep.subr.bf16.mxu0 0
    %5626 = vmatpush1.bf16.msra.mxu0 %v4223
    %5627 = vmatprep.subr.bf16.mxu0 0
    %5628 = vmatpush1.bf16.msra.mxu0 %v4224
    %5629 = vmatprep.subr.bf16.mxu0 0
    %5630 = vmatpush1.bf16.msra.mxu0 %v4225
    %5631 = vmatprep.subr.bf16.mxu0 0
    %5632 = vmatpush1.bf16.msra.mxu0 %v4226
    %5633 = vmatprep.subr.bf16.mxu0 0
    %5634 = vmatpush1.bf16.msra.mxu0 %v4227
    %5635 = vmatprep.subr.bf16.mxu0 0
    %5636 = vmatpush1.bf16.msra.mxu0 %v4228
    %5637 = vmatprep.mubr.bf16.mxu0 %v1378
    %5638 = vmatmul.mubr.bf16.gmra.mrb[0].mxu0 %v1364
    %v5639 = vpop.f32.mrb[0].mxu0
    %v5640 = vadd.f32 %v5600, %v5639
    %v5641 = vpop.f32.mrb[0].mxu0
    %v5642 = vpop.f32.mrb[0].mxu0
    %v5643 = vpop.f32.mrb[0].mxu0
    %5644 = vdwg.mxu0
    %5645 = vmatprep.subr.bf16.mxu0 0
    %5646 = vmatpush1.bf16.msra.mxu0 %v4229
    %5647 = vmatprep.subr.bf16.mxu0 0
    %5648 = vmatpush1.bf16.msra.mxu0 %v4230
    %5649 = vmatprep.subr.bf16.mxu0 0
    %5650 = vmatpush1.bf16.msra.mxu0 %v4231
    %5651 = vmatprep.subr.bf16.mxu0 0
    %5652 = vmatpush1.bf16.msra.mxu0 %v4232
    %5653 = vmatprep.subr.bf16.mxu0 0
    %5654 = vmatpush1.bf16.msra.mxu0 %v4233
    %5655 = vmatprep.subr.bf16.mxu0 0
    %5656 = vmatpush1.bf16.msra.mxu0 %v4234
    %5657 = vmatprep.subr.bf16.mxu0 0
    %5658 = vmatpush1.bf16.msra.mxu0 %v4235
    %5659 = vmatprep.subr.bf16.mxu0 0
    %5660 = vmatpush1.bf16.msra.mxu0 %v4236
    %5661 = vmatprep.subr.bf16.mxu0 0
    %5662 = vmatpush1.bf16.msra.mxu0 %v4237
    %5663 = vmatprep.subr.bf16.mxu0 0
    %5664 = vmatpush1.bf16.msra.mxu0 %v4238
    %5665 = vmatprep.subr.bf16.mxu0 0
    %5666 = vmatpush1.bf16.msra.mxu0 %v4239
    %5667 = vmatprep.subr.bf16.mxu0 0
    %5668 = vmatpush1.bf16.msra.mxu0 %v4240
    %5669 = vmatprep.subr.bf16.mxu0 0
    %5670 = vmatpush1.bf16.msra.mxu0 %v4241
    %5671 = vmatprep.subr.bf16.mxu0 0
    %5672 = vmatpush1.bf16.msra.mxu0 %v4242
    %5673 = vmatprep.subr.bf16.mxu0 0
    %5674 = vmatpush1.bf16.msra.mxu0 %v4243
    %5675 = vmatprep.subr.bf16.mxu0 0
    %5676 = vmatpush1.bf16.msra.mxu0 %v4244
    %5677 = vmatprep.mubr.bf16.mxu0 %v1382
    %5678 = vmatmul.mubr.bf16.gmra.mrb[0].mxu0 %v1380
    %v5679 = vpop.f32.mrb[0].mxu0
    %v5680 = vadd.f32 %v5640, %v5679
    %v5681 = vpop.f32.mrb[0].mxu0
    %v5682 = vpop.f32.mrb[0].mxu0
    %v5683 = vpop.f32.mrb[0].mxu0
    %5684 = vdwg.mxu0
    %5685 = vmatprep.subr.bf16.mxu0 0
    %5686 = vmatpush1.bf16.msra.mxu0 %v4245
    %5687 = vmatprep.subr.bf16.mxu0 0
    %5688 = vmatpush1.bf16.msra.mxu0 %v4246
    %5689 = vmatprep.subr.bf16.mxu0 0
    %5690 = vmatpush1.bf16.msra.mxu0 %v4247
    %5691 = vmatprep.subr.bf16.mxu0 0
    %5692 = vmatpush1.bf16.msra.mxu0 %v4248
    %5693 = vmatprep.subr.bf16.mxu0 0
    %5694 = vmatpush1.bf16.msra.mxu0 %v4249
    %5695 = vmatprep.subr.bf16.mxu0 0
    %5696 = vmatpush1.bf16.msra.mxu0 %v4250
    %5697 = vmatprep.subr.bf16.mxu0 0
    %5698 = vmatpush1.bf16.msra.mxu0 %v4251
    %5699 = vmatprep.subr.bf16.mxu0 0
    %5700 = vmatpush1.bf16.msra.mxu0 %v4252
    %5701 = vmatprep.subr.bf16.mxu0 0
    %5702 = vmatpush1.bf16.msra.mxu0 %v4253
    %5703 = vmatprep.subr.bf16.mxu0 0
    %5704 = vmatpush1.bf16.msra.mxu0 %v4254
    %5705 = vmatprep.subr.bf16.mxu0 0
    %5706 = vmatpush1.bf16.msra.mxu0 %v4255
    %5707 = vmatprep.subr.bf16.mxu0 0
    %5708 = vmatpush1.bf16.msra.mxu0 %v4256
    %5709 = vmatprep.subr.bf16.mxu0 0
    %5710 = vmatpush1.bf16.msra.mxu0 %v4257
    %5711 = vmatprep.subr.bf16.mxu0 0
    %5712 = vmatpush1.bf16.msra.mxu0 %v4258
    %5713 = vmatprep.subr.bf16.mxu0 0
    %5714 = vmatpush1.bf16.msra.mxu0 %v4259
    %5715 = vmatprep.subr.bf16.mxu0 0
    %5716 = vmatpush1.bf16.msra.mxu0 %v4260
    %5717 = vmatprep.mubr.bf16.mxu0 %v1420
    %5718 = vmatmul.mubr.bf16.gmra.mrb[0].mxu0 %v1406
    %v5719 = vpop.f32.mrb[0].mxu0
    %v5720 = vadd.f32 %v5680, %v5719
    %v5721 = vpop.f32.mrb[0].mxu0
    %v5722 = vpop.f32.mrb[0].mxu0
    %v5723 = vpop.f32.mrb[0].mxu0
    %5724 = vdwg.mxu0
    %5725 = vmatprep.subr.bf16.mxu0 0
    %5726 = vmatpush1.bf16.msra.mxu0 %v4261
    %5727 = vmatprep.subr.bf16.mxu0 0
    %5728 = vmatpush1.bf16.msra.mxu0 %v4262
    %5729 = vmatprep.subr.bf16.mxu0 0
    %5730 = vmatpush1.bf16.msra.mxu0 %v4263
    %5731 = vmatprep.subr.bf16.mxu0 0
    %5732 = vmatpush1.bf16.msra.mxu0 %v4264
    %5733 = vmatprep.subr.bf16.mxu0 0
    %5734 = vmatpush1.bf16.msra.mxu0 %v4265
    %5735 = vmatprep.subr.bf16.mxu0 0
    %5736 = vmatpush1.bf16.msra.mxu0 %v4266
    %5737 = vmatprep.subr.bf16.mxu0 0
    %5738 = vmatpush1.bf16.msra.mxu0 %v4267
    %5739 = vmatprep.subr.bf16.mxu0 0
    %5740 = vmatpush1.bf16.msra.mxu0 %v4268
    %5741 = vmatprep.subr.bf16.mxu0 0
    %5742 = vmatpush1.bf16.msra.mxu0 %v4269
    %5743 = vmatprep.subr.bf16.mxu0 0
    %5744 = vmatpush1.bf16.msra.mxu0 %v4270
    %5745 = vmatprep.subr.bf16.mxu0 0
    %5746 = vmatpush1.bf16.msra.mxu0 %v4271
    %5747 = vmatprep.subr.bf16.mxu0 0
    %5748 = vmatpush1.bf16.msra.mxu0 %v4272
    %5749 = vmatprep.subr.bf16.mxu0 0
    %5750 = vmatpush1.bf16.msra.mxu0 %v4273
    %5751 = vmatprep.subr.bf16.mxu0 0
    %5752 = vmatpush1.bf16.msra.mxu0 %v4274
    %5753 = vmatprep.subr.bf16.mxu0 0
    %5754 = vmatpush1.bf16.msra.mxu0 %v4275
    %5755 = vmatprep.subr.bf16.mxu0 0
    %5756 = vmatpush1.bf16.msra.mxu0 %v4276
    %5757 = vmatprep.mubr.bf16.mxu0 %v1430
    %5758 = vmatmul.mubr.bf16.gmra.mrb[0].mxu0 %v1428
    %v5759 = vpop.f32.mrb[0].mxu0
    %v5760 = vadd.f32 %v5720, %v5759
    %v5761 = vpop.f32.mrb[0].mxu0
    %v5762 = vpop.f32.mrb[0].mxu0
    %v5763 = vpop.f32.mrb[0].mxu0
    %5764 = vdwg.mxu0
    %5765 = vmatprep.subr.bf16.mxu0 0
    %5766 = vmatpush1.bf16.msra.mxu0 %v4277
    %5767 = vmatprep.subr.bf16.mxu0 0
    %5768 = vmatpush1.bf16.msra.mxu0 %v4278
    %5769 = vmatprep.subr.bf16.mxu0 0
    %5770 = vmatpush1.bf16.msra.mxu0 %v4279
    %5771 = vmatprep.subr.bf16.mxu0 0
    %5772 = vmatpush1.bf16.msra.mxu0 %v4280
    %5773 = vmatprep.subr.bf16.mxu0 0
    %5774 = vmatpush1.bf16.msra.mxu0 %v4281
    %5775 = vmatprep.subr.bf16.mxu0 0
    %5776 = vmatpush1.bf16.msra.mxu0 %v4282
    %5777 = vmatprep.subr.bf16.mxu0 0
    %5778 = vmatpush1.bf16.msra.mxu0 %v4283
    %5779 = vmatprep.subr.bf16.mxu0 0
    %5780 = vmatpush1.bf16.msra.mxu0 %v4284
    %5781 = vmatprep.subr.bf16.mxu0 0
    %5782 = vmatpush1.bf16.msra.mxu0 %v4285
    %5783 = vmatprep.subr.bf16.mxu0 0
    %5784 = vmatpush1.bf16.msra.mxu0 %v4286
    %5785 = vmatprep.subr.bf16.mxu0 0
    %5786 = vmatpush1.bf16.msra.mxu0 %v4287
    %5787 = vmatprep.subr.bf16.mxu0 0
    %5788 = vmatpush1.bf16.msra.mxu0 %v4288
    %5789 = vmatprep.subr.bf16.mxu0 0
    %5790 = vmatpush1.bf16.msra.mxu0 %v4289
    %5791 = vmatprep.subr.bf16.mxu0 0
    %5792 = vmatpush1.bf16.msra.mxu0 %v4290
    %5793 = vmatprep.subr.bf16.mxu0 0
    %5794 = vmatpush1.bf16.msra.mxu0 %v4291
    %5795 = vmatprep.subr.bf16.mxu0 0
    %5796 = vmatpush1.bf16.msra.mxu0 %v4292
    %5797 = vmatprep.mubr.bf16.mxu0 %v1427
    %5798 = vmatmul.mubr.bf16.gmra.mrb[0].mxu0 %v1413
    %v5799 = vpop.f32.mrb[0].mxu0
    %v5800 = vadd.f32 %v5760, %v5799
    %v5801 = vpop.f32.mrb[0].mxu0
    %v5802 = vpop.f32.mrb[0].mxu0
    %v5803 = vpop.f32.mrb[0].mxu0
    %5804 = vdwg.mxu0
    %5805 = vmatprep.subr.bf16.mxu0 0
    %5806 = vmatpush1.bf16.msra.mxu0 %v4293
    %5807 = vmatprep.subr.bf16.mxu0 0
    %5808 = vmatpush1.bf16.msra.mxu0 %v4294
    %5809 = vmatprep.subr.bf16.mxu0 0
    %5810 = vmatpush1.bf16.msra.mxu0 %v4295
    %5811 = vmatprep.subr.bf16.mxu0 0
    %5812 = vmatpush1.bf16.msra.mxu0 %v4296
    %5813 = vmatprep.subr.bf16.mxu0 0
    %5814 = vmatpush1.bf16.msra.mxu0 %v4297
    %5815 = vmatprep.subr.bf16.mxu0 0
    %5816 = vmatpush1.bf16.msra.mxu0 %v4298
    %5817 = vmatprep.subr.bf16.mxu0 0
    %5818 = vmatpush1.bf16.msra.mxu0 %v4299
    %5819 = vmatprep.subr.bf16.mxu0 0
    %5820 = vmatpush1.bf16.msra.mxu0 %v4300
    %5821 = vmatprep.subr.bf16.mxu0 0
    %5822 = vmatpush1.bf16.msra.mxu0 %v4301
    %5823 = vmatprep.subr.bf16.mxu0 0
    %5824 = vmatpush1.bf16.msra.mxu0 %v4302
    %5825 = vmatprep.subr.bf16.mxu0 0
    %5826 = vmatpush1.bf16.msra.mxu0 %v4303
    %5827 = vmatprep.subr.bf16.mxu0 0
    %5828 = vmatpush1.bf16.msra.mxu0 %v4304
    %5829 = vmatprep.subr.bf16.mxu0 0
    %5830 = vmatpush1.bf16.msra.mxu0 %v4305
    %5831 = vmatprep.subr.bf16.mxu0 0
    %5832 = vmatpush1.bf16.msra.mxu0 %v4306
    %5833 = vmatprep.subr.bf16.mxu0 0
    %5834 = vmatpush1.bf16.msra.mxu0 %v4307
    %5835 = vmatprep.subr.bf16.mxu0 0
    %5836 = vmatpush1.bf16.msra.mxu0 %v4308
    %5837 = vmatprep.mubr.bf16.mxu0 %v1431
    %5838 = vmatmul.mubr.bf16.gmra.mrb[0].mxu0 %v1429
    %v5839 = vpop.f32.mrb[0].mxu0
    %v5840 = vadd.f32 %v5800, %v5839
    %v5841 = vpop.f32.mrb[0].mxu0
    %v5842 = vpop.f32.mrb[0].mxu0
    %v5843 = vpop.f32.mrb[0].mxu0
    %5844 = vdwg.mxu0
    %5845 = vmatprep.subr.bf16.mxu0 0
    %5846 = vmatpush1.bf16.msra.mxu0 %v4309
    %5847 = vmatprep.subr.bf16.mxu0 0
    %5848 = vmatpush1.bf16.msra.mxu0 %v4310
    %5849 = vmatprep.subr.bf16.mxu0 0
    %5850 = vmatpush1.bf16.msra.mxu0 %v4311
    %5851 = vmatprep.subr.bf16.mxu0 0
    %5852 = vmatpush1.bf16.msra.mxu0 %v4312
    %5853 = vmatprep.subr.bf16.mxu0 0
    %5854 = vmatpush1.bf16.msra.mxu0 %v4313
    %5855 = vmatprep.subr.bf16.mxu0 0
    %5856 = vmatpush1.bf16.msra.mxu0 %v4314
    %5857 = vmatprep.subr.bf16.mxu0 0
    %5858 = vmatpush1.bf16.msra.mxu0 %v4315
    %5859 = vmatprep.subr.bf16.mxu0 0
    %5860 = vmatpush1.bf16.msra.mxu0 %v4316
    %5861 = vmatprep.subr.bf16.mxu0 0
    %5862 = vmatpush1.bf16.msra.mxu0 %v4317
    %5863 = vmatprep.subr.bf16.mxu0 0
    %5864 = vmatpush1.bf16.msra.mxu0 %v4318
    %5865 = vmatprep.subr.bf16.mxu0 0
    %5866 = vmatpush1.bf16.msra.mxu0 %v4319
    %5867 = vmatprep.subr.bf16.mxu0 0
    %5868 = vmatpush1.bf16.msra.mxu0 %v4320
    %5869 = vmatprep.subr.bf16.mxu0 0
    %5870 = vmatpush1.bf16.msra.mxu0 %v4321
    %5871 = vmatprep.subr.bf16.mxu0 0
    %5872 = vmatpush1.bf16.msra.mxu0 %v4322
    %5873 = vmatprep.subr.bf16.mxu0 0
    %5874 = vmatpush1.bf16.msra.mxu0 %v4323
    %5875 = vmatprep.subr.bf16.mxu0 0
    %5876 = vmatpush1.bf16.msra.mxu0 %v4324
    %5877 = vmatprep.mubr.bf16.mxu0 %v1469
    %5878 = vmatmul.mubr.bf16.gmra.mrb[0].mxu0 %v1455
    %v5879 = vpop.f32.mrb[0].mxu0
    %v5880 = vadd.f32 %v5840, %v5879
    %v5881 = vpop.f32.mrb[0].mxu0
    %v5882 = vpop.f32.mrb[0].mxu0
    %v5883 = vpop.f32.mrb[0].mxu0
    %5884 = vdwg.mxu0
    %5885 = vmatprep.subr.bf16.mxu0 0
    %5886 = vmatpush1.bf16.msra.mxu0 %v4325
    %5887 = vmatprep.subr.bf16.mxu0 0
    %5888 = vmatpush1.bf16.msra.mxu0 %v4326
    %5889 = vmatprep.subr.bf16.mxu0 0
    %5890 = vmatpush1.bf16.msra.mxu0 %v4327
    %5891 = vmatprep.subr.bf16.mxu0 0
    %5892 = vmatpush1.bf16.msra.mxu0 %v4328
    %5893 = vmatprep.subr.bf16.mxu0 0
    %5894 = vmatpush1.bf16.msra.mxu0 %v4329
    %5895 = vmatprep.subr.bf16.mxu0 0
    %5896 = vmatpush1.bf16.msra.mxu0 %v4330
    %5897 = vmatprep.subr.bf16.mxu0 0
    %5898 = vmatpush1.bf16.msra.mxu0 %v4331
    %5899 = vmatprep.subr.bf16.mxu0 0
    %5900 = vmatpush1.bf16.msra.mxu0 %v4332
    %5901 = vmatprep.subr.bf16.mxu0 0
    %5902 = vmatpush1.bf16.msra.mxu0 %v4333
    %5903 = vmatprep.subr.bf16.mxu0 0
    %5904 = vmatpush1.bf16.msra.mxu0 %v4334
    %5905 = vmatprep.subr.bf16.mxu0 0
    %5906 = vmatpush1.bf16.msra.mxu0 %v4335
    %5907 = vmatprep.subr.bf16.mxu0 0
    %5908 = vmatpush1.bf16.msra.mxu0 %v4336
    %5909 = vmatprep.subr.bf16.mxu0 0
    %5910 = vmatpush1.bf16.msra.mxu0 %v4337
    %5911 = vmatprep.subr.bf16.mxu0 0
    %5912 = vmatpush1.bf16.msra.mxu0 %v4338
    %5913 = vmatprep.subr.bf16.mxu0 0
    %5914 = vmatpush1.bf16.msra.mxu0 %v4339
    %5915 = vmatprep.subr.bf16.mxu0 0
    %5916 = vmatpush1.bf16.msra.mxu0 %v4340
    %5917 = vmatprep.mubr.bf16.mxu0 %v1479
    %5918 = vmatmul.mubr.bf16.gmra.mrb[0].mxu0 %v1477
    %v5919 = vpop.f32.mrb[0].mxu0
    %v5920 = vadd.f32 %v5880, %v5919
    %v5921 = vpop.f32.mrb[0].mxu0
    %v5922 = vpop.f32.mrb[0].mxu0
    %v5923 = vpop.f32.mrb[0].mxu0
    %5924 = vdwg.mxu0
    %5925 = vmatprep.subr.bf16.mxu0 0
    %5926 = vmatpush1.bf16.msra.mxu0 %v4341
    %5927 = vmatprep.subr.bf16.mxu0 0
    %5928 = vmatpush1.bf16.msra.mxu0 %v4342
    %5929 = vmatprep.subr.bf16.mxu0 0
    %5930 = vmatpush1.bf16.msra.mxu0 %v4343
    %5931 = vmatprep.subr.bf16.mxu0 0
    %5932 = vmatpush1.bf16.msra.mxu0 %v4344
    %5933 = vmatprep.subr.bf16.mxu0 0
    %5934 = vmatpush1.bf16.msra.mxu0 %v4345
    %5935 = vmatprep.subr.bf16.mxu0 0
    %5936 = vmatpush1.bf16.msra.mxu0 %v4346
    %5937 = vmatprep.subr.bf16.mxu0 0
    %5938 = vmatpush1.bf16.msra.mxu0 %v4347
    %5939 = vmatprep.subr.bf16.mxu0 0
    %5940 = vmatpush1.bf16.msra.mxu0 %v4348
    %5941 = vmatprep.subr.bf16.mxu0 0
    %5942 = vmatpush1.bf16.msra.mxu0 %v4349
    %5943 = vmatprep.subr.bf16.mxu0 0
    %5944 = vmatpush1.bf16.msra.mxu0 %v4350
    %5945 = vmatprep.subr.bf16.mxu0 0
    %5946 = vmatpush1.bf16.msra.mxu0 %v4351
    %5947 = vmatprep.subr.bf16.mxu0 0
    %5948 = vmatpush1.bf16.msra.mxu0 %v4352
    %5949 = vmatprep.subr.bf16.mxu0 0
    %5950 = vmatpush1.bf16.msra.mxu0 %v4353
    %5951 = vmatprep.subr.bf16.mxu0 0
    %5952 = vmatpush1.bf16.msra.mxu0 %v4354
    %5953 = vmatprep.subr.bf16.mxu0 0
    %5954 = vmatpush1.bf16.msra.mxu0 %v4355
    %5955 = vmatprep.subr.bf16.mxu0 0
    %5956 = vmatpush1.bf16.msra.mxu0 %v4356
    %5957 = vmatprep.mubr.bf16.mxu0 %v1476
    %5958 = vmatmul.mubr.bf16.gmra.mrb[0].mxu0 %v1462
    %v5959 = vpop.f32.mrb[0].mxu0
    %v5960 = vadd.f32 %v5920, %v5959
    %v5961 = vpop.f32.mrb[0].mxu0
    %v5962 = vpop.f32.mrb[0].mxu0
    %v5963 = vpop.f32.mrb[0].mxu0
    %5964 = vdwg.mxu0
    %5965 = vmatprep.subr.bf16.mxu0 0
    %5966 = vmatpush1.bf16.msra.mxu0 %v4357
    %5967 = vmatprep.subr.bf16.mxu0 0
    %5968 = vmatpush1.bf16.msra.mxu0 %v4358
    %5969 = vmatprep.subr.bf16.mxu0 0
    %5970 = vmatpush1.bf16.msra.mxu0 %v4359
    %5971 = vmatprep.subr.bf16.mxu0 0
    %5972 = vmatpush1.bf16.msra.mxu0 %v4360
    %5973 = vmatprep.subr.bf16.mxu0 0
    %5974 = vmatpush1.bf16.msra.mxu0 %v4361
    %5975 = vmatprep.subr.bf16.mxu0 0
    %5976 = vmatpush1.bf16.msra.mxu0 %v4362
    %5977 = vmatprep.subr.bf16.mxu0 0
    %5978 = vmatpush1.bf16.msra.mxu0 %v4363
    %5979 = vmatprep.subr.bf16.mxu0 0
    %5980 = vmatpush1.bf16.msra.mxu0 %v4364
    %5981 = vmatprep.subr.bf16.mxu0 0
    %5982 = vmatpush1.bf16.msra.mxu0 %v4365
    %5983 = vmatprep.subr.bf16.mxu0 0
    %5984 = vmatpush1.bf16.msra.mxu0 %v4366
    %5985 = vmatprep.subr.bf16.mxu0 0
    %5986 = vmatpush1.bf16.msra.mxu0 %v4367
    %5987 = vmatprep.subr.bf16.mxu0 0
    %5988 = vmatpush1.bf16.msra.mxu0 %v4368
    %5989 = vmatprep.subr.bf16.mxu0 0
    %5990 = vmatpush1.bf16.msra.mxu0 %v4369
    %5991 = vmatprep.subr.bf16.mxu0 0
    %5992 = vmatpush1.bf16.msra.mxu0 %v4370
    %5993 = vmatprep.subr.bf16.mxu0 0
    %5994 = vmatpush1.bf16.msra.mxu0 %v4371
    %5995 = vmatprep.subr.bf16.mxu0 0
    %5996 = vmatpush1.bf16.msra.mxu0 %v4372
    %5997 = vmatprep.mubr.bf16.mxu0 %v1480
    %5998 = vmatmul.mubr.bf16.gmra.mrb[0].mxu0 %v1478
    %v5999 = vpop.f32.mrb[0].mxu0
    %v6000 = vadd.f32 %v5960, %v5999
    %v6001 = vpop.f32.mrb[0].mxu0
    %v6002 = vpop.f32.mrb[0].mxu0
    %v6003 = vpop.f32.mrb[0].mxu0
    %6004 = vdwg.mxu0
    %6005 = vmatprep.subr.bf16.mxu0 0
    %6006 = vmatpush1.bf16.msra.mxu0 %v4373
    %6007 = vmatprep.subr.bf16.mxu0 0
    %6008 = vmatpush1.bf16.msra.mxu0 %v4374
    %6009 = vmatprep.subr.bf16.mxu0 0
    %6010 = vmatpush1.bf16.msra.mxu0 %v4375
    %6011 = vmatprep.subr.bf16.mxu0 0
    %6012 = vmatpush1.bf16.msra.mxu0 %v4376
    %6013 = vmatprep.subr.bf16.mxu0 0
    %6014 = vmatpush1.bf16.msra.mxu0 %v4377
    %6015 = vmatprep.subr.bf16.mxu0 0
    %6016 = vmatpush1.bf16.msra.mxu0 %v4378
    %6017 = vmatprep.subr.bf16.mxu0 0
    %6018 = vmatpush1.bf16.msra.mxu0 %v4379
    %6019 = vmatprep.subr.bf16.mxu0 0
    %6020 = vmatpush1.bf16.msra.mxu0 %v4380
    %6021 = vmatprep.subr.bf16.mxu0 0
    %6022 = vmatpush1.bf16.msra.mxu0 %v4381
    %6023 = vmatprep.subr.bf16.mxu0 0
    %6024 = vmatpush1.bf16.msra.mxu0 %v4382
    %6025 = vmatprep.subr.bf16.mxu0 0
    %6026 = vmatpush1.bf16.msra.mxu0 %v4383
    %6027 = vmatprep.subr.bf16.mxu0 0
    %6028 = vmatpush1.bf16.msra.mxu0 %v4384
    %6029 = vmatprep.subr.bf16.mxu0 0
    %6030 = vmatpush1.bf16.msra.mxu0 %v4385
    %6031 = vmatprep.subr.bf16.mxu0 0
    %6032 = vmatpush1.bf16.msra.mxu0 %v4386
    %6033 = vmatprep.subr.bf16.mxu0 0
    %6034 = vmatpush1.bf16.msra.mxu0 %v4387
    %6035 = vmatprep.subr.bf16.mxu0 0
    %6036 = vmatpush1.bf16.msra.mxu0 %v4388
    %6037 = vmatprep.mubr.bf16.mxu0 %v1518
    %6038 = vmatmul.mubr.bf16.gmra.mrb[0].mxu0 %v1504
    %v6039 = vpop.f32.mrb[0].mxu0
    %v6040 = vadd.f32 %v6000, %v6039
    %v6041 = vpop.f32.mrb[0].mxu0
    %v6042 = vpop.f32.mrb[0].mxu0
    %v6043 = vpop.f32.mrb[0].mxu0
    %6044 = vdwg.mxu0
    %6045 = vmatprep.subr.bf16.mxu0 0
    %6046 = vmatpush1.bf16.msra.mxu0 %v4389
    %6047 = vmatprep.subr.bf16.mxu0 0
    %6048 = vmatpush1.bf16.msra.mxu0 %v4390
    %6049 = vmatprep.subr.bf16.mxu0 0
    %6050 = vmatpush1.bf16.msra.mxu0 %v4391
    %6051 = vmatprep.subr.bf16.mxu0 0
    %6052 = vmatpush1.bf16.msra.mxu0 %v4392
    %6053 = vmatprep.subr.bf16.mxu0 0
    %6054 = vmatpush1.bf16.msra.mxu0 %v4393
    %6055 = vmatprep.subr.bf16.mxu0 0
    %6056 = vmatpush1.bf16.msra.mxu0 %v4394
    %6057 = vmatprep.subr.bf16.mxu0 0
    %6058 = vmatpush1.bf16.msra.mxu0 %v4395
    %6059 = vmatprep.subr.bf16.mxu0 0
    %6060 = vmatpush1.bf16.msra.mxu0 %v4396
    %6061 = vmatprep.subr.bf16.mxu0 0
    %6062 = vmatpush1.bf16.msra.mxu0 %v4397
    %6063 = vmatprep.subr.bf16.mxu0 0
    %6064 = vmatpush1.bf16.msra.mxu0 %v4398
    %6065 = vmatprep.subr.bf16.mxu0 0
    %6066 = vmatpush1.bf16.msra.mxu0 %v4399
    %6067 = vmatprep.subr.bf16.mxu0 0
    %6068 = vmatpush1.bf16.msra.mxu0 %v4400
    %6069 = vmatprep.subr.bf16.mxu0 0
    %6070 = vmatpush1.bf16.msra.mxu0 %v4401
    %6071 = vmatprep.subr.bf16.mxu0 0
    %6072 = vmatpush1.bf16.msra.mxu0 %v4402
    %6073 = vmatprep.subr.bf16.mxu0 0
    %6074 = vmatpush1.bf16.msra.mxu0 %v4403
    %6075 = vmatprep.subr.bf16.mxu0 0
    %6076 = vmatpush1.bf16.msra.mxu0 %v4404
    %6077 = vmatprep.mubr.bf16.mxu0 %v1528
    %6078 = vmatmul.mubr.bf16.gmra.mrb[0].mxu0 %v1526
    %v6079 = vpop.f32.mrb[0].mxu0
    %v6080 = vadd.f32 %v6040, %v6079
    %v6081 = vpop.f32.mrb[0].mxu0
    %v6082 = vpop.f32.mrb[0].mxu0
    %v6083 = vpop.f32.mrb[0].mxu0
    %6084 = vdwg.mxu0
    %6085 = vmatprep.subr.bf16.mxu0 0
    %6086 = vmatpush1.bf16.msra.mxu0 %v4405
    %6087 = vmatprep.subr.bf16.mxu0 0
    %6088 = vmatpush1.bf16.msra.mxu0 %v4406
    %6089 = vmatprep.subr.bf16.mxu0 0
    %6090 = vmatpush1.bf16.msra.mxu0 %v4407
    %6091 = vmatprep.subr.bf16.mxu0 0
    %6092 = vmatpush1.bf16.msra.mxu0 %v4408
    %6093 = vmatprep.subr.bf16.mxu0 0
    %6094 = vmatpush1.bf16.msra.mxu0 %v4409
    %6095 = vmatprep.subr.bf16.mxu0 0
    %6096 = vmatpush1.bf16.msra.mxu0 %v4410
    %6097 = vmatprep.subr.bf16.mxu0 0
    %6098 = vmatpush1.bf16.msra.mxu0 %v4411
    %6099 = vmatprep.subr.bf16.mxu0 0
    %6100 = vmatpush1.bf16.msra.mxu0 %v4412
    %6101 = vmatprep.subr.bf16.mxu0 0
    %6102 = vmatpush1.bf16.msra.mxu0 %v4413
    %6103 = vmatprep.subr.bf16.mxu0 0
    %6104 = vmatpush1.bf16.msra.mxu0 %v4414
    %6105 = vmatprep.subr.bf16.mxu0 0
    %6106 = vmatpush1.bf16.msra.mxu0 %v4415
    %6107 = vmatprep.subr.bf16.mxu0 0
    %6108 = vmatpush1.bf16.msra.mxu0 %v4416
    %6109 = vmatprep.subr.bf16.mxu0 0
    %6110 = vmatpush1.bf16.msra.mxu0 %v4417
    %6111 = vmatprep.subr.bf16.mxu0 0
    %6112 = vmatpush1.bf16.msra.mxu0 %v4418
    %6113 = vmatprep.subr.bf16.mxu0 0
    %6114 = vmatpush1.bf16.msra.mxu0 %v4419
    %6115 = vmatprep.subr.bf16.mxu0 0
    %6116 = vmatpush1.bf16.msra.mxu0 %v4420
    %6117 = vmatprep.mubr.bf16.mxu0 %v1525
    %6118 = vmatmul.mubr.bf16.gmra.mrb[0].mxu0 %v1511
    %v6119 = vpop.f32.mrb[0].mxu0
    %v6120 = vadd.f32 %v6080, %v6119
    %v6121 = vpop.f32.mrb[0].mxu0
    %v6122 = vpop.f32.mrb[0].mxu0
    %v6123 = vpop.f32.mrb[0].mxu0
    %6124 = vdwg.mxu0
    %6125 = vmatprep.subr.bf16.mxu0 0
    %6126 = vmatpush1.bf16.msra.mxu0 %v4421
    %6127 = vmatprep.subr.bf16.mxu0 0
    %6128 = vmatpush1.bf16.msra.mxu0 %v4422
    %6129 = vmatprep.subr.bf16.mxu0 0
    %6130 = vmatpush1.bf16.msra.mxu0 %v4423
    %6131 = vmatprep.subr.bf16.mxu0 0
    %6132 = vmatpush1.bf16.msra.mxu0 %v4424
    %6133 = vmatprep.subr.bf16.mxu0 0
    %6134 = vmatpush1.bf16.msra.mxu0 %v4425
    %6135 = vmatprep.subr.bf16.mxu0 0
    %6136 = vmatpush1.bf16.msra.mxu0 %v4426
    %6137 = vmatprep.subr.bf16.mxu0 0
    %6138 = vmatpush1.bf16.msra.mxu0 %v4427
    %6139 = vmatprep.subr.bf16.mxu0 0
    %6140 = vmatpush1.bf16.msra.mxu0 %v4428
    %6141 = vmatprep.subr.bf16.mxu0 0
    %6142 = vmatpush1.bf16.msra.mxu0 %v4429
    %6143 = vmatprep.subr.bf16.mxu0 0
    %6144 = vmatpush1.bf16.msra.mxu0 %v4430
    %6145 = vmatprep.subr.bf16.mxu0 0
    %6146 = vmatpush1.bf16.msra.mxu0 %v4431
    %6147 = vmatprep.subr.bf16.mxu0 0
    %6148 = vmatpush1.bf16.msra.mxu0 %v4432
    %6149 = vmatprep.subr.bf16.mxu0 0
    %6150 = vmatpush1.bf16.msra.mxu0 %v4433
    %6151 = vmatprep.subr.bf16.mxu0 0
    %6152 = vmatpush1.bf16.msra.mxu0 %v4434
    %6153 = vmatprep.subr.bf16.mxu0 0
    %6154 = vmatpush1.bf16.msra.mxu0 %v4435
    %6155 = vmatprep.subr.bf16.mxu0 0
    %6156 = vmatpush1.bf16.msra.mxu0 %v4436
    %6157 = vmatprep.mubr.bf16.mxu0 %v1529
    %6158 = vmatmul.mubr.bf16.gmra.mrb[0].mxu0 %v1527
    %v6159 = vpop.f32.mrb[0].mxu0
    %v6160 = vadd.f32 %v6120, %v6159
    %v6161 = vpop.f32.mrb[0].mxu0
    %v6162 = vpop.f32.mrb[0].mxu0
    %v6163 = vpop.f32.mrb[0].mxu0
    %6164 = vdwg.mxu0
    %6165 = vmatprep.subr.bf16.mxu0 0
    %6166 = vmatpush1.bf16.msra.mxu0 %v4437
    %6167 = vmatprep.subr.bf16.mxu0 0
    %6168 = vmatpush1.bf16.msra.mxu0 %v4438
    %6169 = vmatprep.subr.bf16.mxu0 0
    %6170 = vmatpush1.bf16.msra.mxu0 %v4439
    %6171 = vmatprep.subr.bf16.mxu0 0
    %6172 = vmatpush1.bf16.msra.mxu0 %v4440
    %6173 = vmatprep.subr.bf16.mxu0 0
    %6174 = vmatpush1.bf16.msra.mxu0 %v4441
    %6175 = vmatprep.subr.bf16.mxu0 0
    %6176 = vmatpush1.bf16.msra.mxu0 %v4442
    %6177 = vmatprep.subr.bf16.mxu0 0
    %6178 = vmatpush1.bf16.msra.mxu0 %v4443
    %6179 = vmatprep.subr.bf16.mxu0 0
    %6180 = vmatpush1.bf16.msra.mxu0 %v4444
    %6181 = vmatprep.subr.bf16.mxu0 0
    %6182 = vmatpush1.bf16.msra.mxu0 %v4445
    %6183 = vmatprep.subr.bf16.mxu0 0
    %6184 = vmatpush1.bf16.msra.mxu0 %v4446
    %6185 = vmatprep.subr.bf16.mxu0 0
    %6186 = vmatpush1.bf16.msra.mxu0 %v4447
    %6187 = vmatprep.subr.bf16.mxu0 0
    %6188 = vmatpush1.bf16.msra.mxu0 %v4448
    %6189 = vmatprep.subr.bf16.mxu0 0
    %6190 = vmatpush1.bf16.msra.mxu0 %v4449
    %6191 = vmatprep.subr.bf16.mxu0 0
    %6192 = vmatpush1.bf16.msra.mxu0 %v4450
    %6193 = vmatprep.subr.bf16.mxu0 0
    %6194 = vmatpush1.bf16.msra.mxu0 %v4451
    %6195 = vmatprep.subr.bf16.mxu0 0
    %6196 = vmatpush1.bf16.msra.mxu0 %v4452
    %6197 = vmatprep.mubr.bf16.mxu0 %v1567
    %6198 = vmatmul.mubr.bf16.gmra.mrb[0].mxu0 %v1553
    %v6199 = vpop.f32.mrb[0].mxu0
    %v6200 = vadd.f32 %v6160, %v6199
    %v6201 = vpop.f32.mrb[0].mxu0
    %v6202 = vpop.f32.mrb[0].mxu0
    %v6203 = vpop.f32.mrb[0].mxu0
    %6204 = vdwg.mxu0
    %6205 = vmatprep.subr.bf16.mxu0 0
    %6206 = vmatpush1.bf16.msra.mxu0 %v4453
    %6207 = vmatprep.subr.bf16.mxu0 0
    %6208 = vmatpush1.bf16.msra.mxu0 %v4454
    %6209 = vmatprep.subr.bf16.mxu0 0
    %6210 = vmatpush1.bf16.msra.mxu0 %v4455
    %6211 = vmatprep.subr.bf16.mxu0 0
    %6212 = vmatpush1.bf16.msra.mxu0 %v4456
    %6213 = vmatprep.subr.bf16.mxu0 0
    %6214 = vmatpush1.bf16.msra.mxu0 %v4457
    %6215 = vmatprep.subr.bf16.mxu0 0
    %6216 = vmatpush1.bf16.msra.mxu0 %v4458
    %6217 = vmatprep.subr.bf16.mxu0 0
    %6218 = vmatpush1.bf16.msra.mxu0 %v4459
    %6219 = vmatprep.subr.bf16.mxu0 0
    %6220 = vmatpush1.bf16.msra.mxu0 %v4460
    %6221 = vmatprep.subr.bf16.mxu0 0
    %6222 = vmatpush1.bf16.msra.mxu0 %v4461
    %6223 = vmatprep.subr.bf16.mxu0 0
    %6224 = vmatpush1.bf16.msra.mxu0 %v4462
    %6225 = vmatprep.subr.bf16.mxu0 0
    %6226 = vmatpush1.bf16.msra.mxu0 %v4463
    %6227 = vmatprep.subr.bf16.mxu0 0
    %6228 = vmatpush1.bf16.msra.mxu0 %v4464
    %6229 = vmatprep.subr.bf16.mxu0 0
    %6230 = vmatpush1.bf16.msra.mxu0 %v4465
    %6231 = vmatprep.subr.bf16.mxu0 0
    %6232 = vmatpush1.bf16.msra.mxu0 %v4466
    %6233 = vmatprep.subr.bf16.mxu0 0
    %6234 = vmatpush1.bf16.msra.mxu0 %v4467
    %6235 = vmatprep.subr.bf16.mxu0 0
    %6236 = vmatpush1.bf16.msra.mxu0 %v4468
    %6237 = vmatprep.mubr.bf16.mxu0 %v1577
    %6238 = vmatmul.mubr.bf16.gmra.mrb[0].mxu0 %v1575
    %v6239 = vpop.f32.mrb[0].mxu0
    %v6240 = vadd.f32 %v6200, %v6239
    %v6241 = vpop.f32.mrb[0].mxu0
    %v6242 = vpop.f32.mrb[0].mxu0
    %v6243 = vpop.f32.mrb[0].mxu0
    %6244 = vdwg.mxu0
    %6245 = vmatprep.subr.bf16.mxu0 0
    %6246 = vmatpush1.bf16.msra.mxu0 %v4469
    %6247 = vmatprep.subr.bf16.mxu0 0
    %6248 = vmatpush1.bf16.msra.mxu0 %v4470
    %6249 = vmatprep.subr.bf16.mxu0 0
    %6250 = vmatpush1.bf16.msra.mxu0 %v4471
    %6251 = vmatprep.subr.bf16.mxu0 0
    %6252 = vmatpush1.bf16.msra.mxu0 %v4472
    %6253 = vmatprep.subr.bf16.mxu0 0
    %6254 = vmatpush1.bf16.msra.mxu0 %v4473
    %6255 = vmatprep.subr.bf16.mxu0 0
    %6256 = vmatpush1.bf16.msra.mxu0 %v4474
    %6257 = vmatprep.subr.bf16.mxu0 0
    %6258 = vmatpush1.bf16.msra.mxu0 %v4475
    %6259 = vmatprep.subr.bf16.mxu0 0
    %6260 = vmatpush1.bf16.msra.mxu0 %v4476
    %6261 = vmatprep.subr.bf16.mxu0 0
    %6262 = vmatpush1.bf16.msra.mxu0 %v4477
    %6263 = vmatprep.subr.bf16.mxu0 0
    %6264 = vmatpush1.bf16.msra.mxu0 %v4478
    %6265 = vmatprep.subr.bf16.mxu0 0
    %6266 = vmatpush1.bf16.msra.mxu0 %v4479
    %6267 = vmatprep.subr.bf16.mxu0 0
    %6268 = vmatpush1.bf16.msra.mxu0 %v4480
    %6269 = vmatprep.subr.bf16.mxu0 0
    %6270 = vmatpush1.bf16.msra.mxu0 %v4481
    %6271 = vmatprep.subr.bf16.mxu0 0
    %6272 = vmatpush1.bf16.msra.mxu0 %v4482
    %6273 = vmatprep.subr.bf16.mxu0 0
    %6274 = vmatpush1.bf16.msra.mxu0 %v4483
    %6275 = vmatprep.subr.bf16.mxu0 0
    %6276 = vmatpush1.bf16.msra.mxu0 %v4484
    %6277 = vmatprep.mubr.bf16.mxu0 %v1574
    %6278 = vmatmul.mubr.bf16.gmra.mrb[0].mxu0 %v1560
    %v6279 = vpop.f32.mrb[0].mxu0
    %v6280 = vadd.f32 %v6240, %v6279
    %v6281 = vpop.f32.mrb[0].mxu0
    %v6282 = vpop.f32.mrb[0].mxu0
    %v6283 = vpop.f32.mrb[0].mxu0
    %6284 = vdwg.mxu0
    %6285 = vmatprep.subr.bf16.mxu0 0
    %6286 = vmatpush1.bf16.msra.mxu0 %v4485
    %6287 = vmatprep.subr.bf16.mxu0 0
    %6288 = vmatpush1.bf16.msra.mxu0 %v4486
    %6289 = vmatprep.subr.bf16.mxu0 0
    %6290 = vmatpush1.bf16.msra.mxu0 %v4487
    %6291 = vmatprep.subr.bf16.mxu0 0
    %6292 = vmatpush1.bf16.msra.mxu0 %v4488
    %6293 = vmatprep.subr.bf16.mxu0 0
    %6294 = vmatpush1.bf16.msra.mxu0 %v4489
    %6295 = vmatprep.subr.bf16.mxu0 0
    %6296 = vmatpush1.bf16.msra.mxu0 %v4490
    %6297 = vmatprep.subr.bf16.mxu0 0
    %6298 = vmatpush1.bf16.msra.mxu0 %v4491
    %6299 = vmatprep.subr.bf16.mxu0 0
    %6300 = vmatpush1.bf16.msra.mxu0 %v4492
    %6301 = vmatprep.subr.bf16.mxu0 0
    %6302 = vmatpush1.bf16.msra.mxu0 %v4493
    %6303 = vmatprep.subr.bf16.mxu0 0
    %6304 = vmatpush1.bf16.msra.mxu0 %v4494
    %6305 = vmatprep.subr.bf16.mxu0 0
    %6306 = vmatpush1.bf16.msra.mxu0 %v4495
    %6307 = vmatprep.subr.bf16.mxu0 0
    %6308 = vmatpush1.bf16.msra.mxu0 %v4496
    %6309 = vmatprep.subr.bf16.mxu0 0
    %6310 = vmatpush1.bf16.msra.mxu0 %v4497
    %6311 = vmatprep.subr.bf16.mxu0 0
    %6312 = vmatpush1.bf16.msra.mxu0 %v4498
    %6313 = vmatprep.subr.bf16.mxu0 0
    %6314 = vmatpush1.bf16.msra.mxu0 %v4499
    %6315 = vmatprep.subr.bf16.mxu0 0
    %6316 = vmatpush1.bf16.msra.mxu0 %v4500
    %6317 = vmatprep.mubr.bf16.mxu0 %v1578
    %6318 = vmatmul.mubr.bf16.gmra.mrb[0].mxu0 %v1576
    %v6319 = vpop.f32.mrb[0].mxu0
    %v6320 = vadd.f32 %v6280, %v6319
    %v6321 = vpop.f32.mrb[0].mxu0
    %v6322 = vpop.f32.mrb[0].mxu0
    %v6323 = vpop.f32.mrb[0].mxu0
    %6324 = vdwg.mxu0
    %6325 = vmatprep.subr.bf16.mxu0 0
    %6326 = vmatpush1.bf16.msra.mxu0 %v4501
    %6327 = vmatprep.subr.bf16.mxu0 0
    %6328 = vmatpush1.bf16.msra.mxu0 %v4502
    %6329 = vmatprep.subr.bf16.mxu0 0
    %6330 = vmatpush1.bf16.msra.mxu0 %v4503
    %6331 = vmatprep.subr.bf16.mxu0 0
    %6332 = vmatpush1.bf16.msra.mxu0 %v4504
    %6333 = vmatprep.subr.bf16.mxu0 0
    %6334 = vmatpush1.bf16.msra.mxu0 %v4505
    %6335 = vmatprep.subr.bf16.mxu0 0
    %6336 = vmatpush1.bf16.msra.mxu0 %v4506
    %6337 = vmatprep.subr.bf16.mxu0 0
    %6338 = vmatpush1.bf16.msra.mxu0 %v4507
    %6339 = vmatprep.subr.bf16.mxu0 0
    %6340 = vmatpush1.bf16.msra.mxu0 %v4508
    %6341 = vmatprep.subr.bf16.mxu0 0
    %6342 = vmatpush1.bf16.msra.mxu0 %v4509
    %6343 = vmatprep.subr.bf16.mxu0 0
    %6344 = vmatpush1.bf16.msra.mxu0 %v4510
    %6345 = vmatprep.subr.bf16.mxu0 0
    %6346 = vmatpush1.bf16.msra.mxu0 %v4511
    %6347 = vmatprep.subr.bf16.mxu0 0
    %6348 = vmatpush1.bf16.msra.mxu0 %v4512
    %6349 = vmatprep.subr.bf16.mxu0 0
    %6350 = vmatpush1.bf16.msra.mxu0 %v4513
    %6351 = vmatprep.subr.bf16.mxu0 0
    %6352 = vmatpush1.bf16.msra.mxu0 %v4514
    %6353 = vmatprep.subr.bf16.mxu0 0
    %6354 = vmatpush1.bf16.msra.mxu0 %v4515
    %6355 = vmatprep.subr.bf16.mxu0 0
    %6356 = vmatpush1.bf16.msra.mxu0 %v4516
    %6357 = vmatprep.mubr.bf16.mxu0 %v1616
    %6358 = vmatmul.mubr.bf16.gmra.mrb[0].mxu0 %v1602
    %v6359 = vpop.f32.mrb[0].mxu0
    %v6360 = vadd.f32 %v6320, %v6359
    %v6361 = vpop.f32.mrb[0].mxu0
    %v6362 = vpop.f32.mrb[0].mxu0
    %v6363 = vpop.f32.mrb[0].mxu0
    %6364 = vdwg.mxu0
    %6365 = vmatprep.subr.bf16.mxu0 0
    %6366 = vmatpush1.bf16.msra.mxu0 %v4517
    %6367 = vmatprep.subr.bf16.mxu0 0
    %6368 = vmatpush1.bf16.msra.mxu0 %v4518
    %6369 = vmatprep.subr.bf16.mxu0 0
    %6370 = vmatpush1.bf16.msra.mxu0 %v4519
    %6371 = vmatprep.subr.bf16.mxu0 0
    %6372 = vmatpush1.bf16.msra.mxu0 %v4520
    %6373 = vmatprep.subr.bf16.mxu0 0
    %6374 = vmatpush1.bf16.msra.mxu0 %v4521
    %6375 = vmatprep.subr.bf16.mxu0 0
    %6376 = vmatpush1.bf16.msra.mxu0 %v4522
    %6377 = vmatprep.subr.bf16.mxu0 0
    %6378 = vmatpush1.bf16.msra.mxu0 %v4523
    %6379 = vmatprep.subr.bf16.mxu0 0
    %6380 = vmatpush1.bf16.msra.mxu0 %v4524
    %6381 = vmatprep.subr.bf16.mxu0 0
    %6382 = vmatpush1.bf16.msra.mxu0 %v4525
    %6383 = vmatprep.subr.bf16.mxu0 0
    %6384 = vmatpush1.bf16.msra.mxu0 %v4526
    %6385 = vmatprep.subr.bf16.mxu0 0
    %6386 = vmatpush1.bf16.msra.mxu0 %v4527
    %6387 = vmatprep.subr.bf16.mxu0 0
    %6388 = vmatpush1.bf16.msra.mxu0 %v4528
    %6389 = vmatprep.subr.bf16.mxu0 0
    %6390 = vmatpush1.bf16.msra.mxu0 %v4529
    %6391 = vmatprep.subr.bf16.mxu0 0
    %6392 = vmatpush1.bf16.msra.mxu0 %v4530
    %6393 = vmatprep.subr.bf16.mxu0 0
    %6394 = vmatpush1.bf16.msra.mxu0 %v4531
    %6395 = vmatprep.subr.bf16.mxu0 0
    %6396 = vmatpush1.bf16.msra.mxu0 %v4532
    %6397 = vmatprep.mubr.bf16.mxu0 %v1626
    %6398 = vmatmul.mubr.bf16.gmra.mrb[0].mxu0 %v1624
    %v6399 = vpop.f32.mrb[0].mxu0
    %v6400 = vadd.f32 %v6360, %v6399
    %v6401 = vpop.f32.mrb[0].mxu0
    %v6402 = vpop.f32.mrb[0].mxu0
    %v6403 = vpop.f32.mrb[0].mxu0
    %6404 = vdwg.mxu0
    %6405 = vmatprep.subr.bf16.mxu0 0
    %6406 = vmatpush1.bf16.msra.mxu0 %v4533
    %6407 = vmatprep.subr.bf16.mxu0 0
    %6408 = vmatpush1.bf16.msra.mxu0 %v4534
    %6409 = vmatprep.subr.bf16.mxu0 0
    %6410 = vmatpush1.bf16.msra.mxu0 %v4535
    %6411 = vmatprep.subr.bf16.mxu0 0
    %6412 = vmatpush1.bf16.msra.mxu0 %v4536
    %6413 = vmatprep.subr.bf16.mxu0 0
    %6414 = vmatpush1.bf16.msra.mxu0 %v4537
    %6415 = vmatprep.subr.bf16.mxu0 0
    %6416 = vmatpush1.bf16.msra.mxu0 %v4538
    %6417 = vmatprep.subr.bf16.mxu0 0
    %6418 = vmatpush1.bf16.msra.mxu0 %v4539
    %6419 = vmatprep.subr.bf16.mxu0 0
    %6420 = vmatpush1.bf16.msra.mxu0 %v4540
    %6421 = vmatprep.subr.bf16.mxu0 0
    %6422 = vmatpush1.bf16.msra.mxu0 %v4541
    %6423 = vmatprep.subr.bf16.mxu0 0
    %6424 = vmatpush1.bf16.msra.mxu0 %v4542
    %6425 = vmatprep.subr.bf16.mxu0 0
    %6426 = vmatpush1.bf16.msra.mxu0 %v4543
    %6427 = vmatprep.subr.bf16.mxu0 0
    %6428 = vmatpush1.bf16.msra.mxu0 %v4544
    %6429 = vmatprep.subr.bf16.mxu0 0
    %6430 = vmatpush1.bf16.msra.mxu0 %v4545
    %6431 = vmatprep.subr.bf16.mxu0 0
    %6432 = vmatpush1.bf16.msra.mxu0 %v4546
    %6433 = vmatprep.subr.bf16.mxu0 0
    %6434 = vmatpush1.bf16.msra.mxu0 %v4547
    %6435 = vmatprep.subr.bf16.mxu0 0
    %6436 = vmatpush1.bf16.msra.mxu0 %v4548
    %6437 = vmatprep.mubr.bf16.mxu0 %v1623
    %6438 = vmatmul.mubr.bf16.gmra.mrb[0].mxu0 %v1609
    %v6439 = vpop.f32.mrb[0].mxu0
    %v6440 = vadd.f32 %v6400, %v6439
    %v6441 = vpop.f32.mrb[0].mxu0
    %v6442 = vpop.f32.mrb[0].mxu0
    %v6443 = vpop.f32.mrb[0].mxu0
    %6444 = vdwg.mxu0
    %6445 = vmatprep.subr.bf16.mxu0 0
    %6446 = vmatpush1.bf16.msra.mxu0 %v4549
    %6447 = vmatprep.subr.bf16.mxu0 0
    %6448 = vmatpush1.bf16.msra.mxu0 %v4550
    %6449 = vmatprep.subr.bf16.mxu0 0
    %6450 = vmatpush1.bf16.msra.mxu0 %v4551
    %6451 = vmatprep.subr.bf16.mxu0 0
    %6452 = vmatpush1.bf16.msra.mxu0 %v4552
    %6453 = vmatprep.subr.bf16.mxu0 0
    %6454 = vmatpush1.bf16.msra.mxu0 %v4553
    %6455 = vmatprep.subr.bf16.mxu0 0
    %6456 = vmatpush1.bf16.msra.mxu0 %v4554
    %6457 = vmatprep.subr.bf16.mxu0 0
    %6458 = vmatpush1.bf16.msra.mxu0 %v4555
    %6459 = vmatprep.subr.bf16.mxu0 0
    %6460 = vmatpush1.bf16.msra.mxu0 %v4556
    %6461 = vmatprep.subr.bf16.mxu0 0
    %6462 = vmatpush1.bf16.msra.mxu0 %v4557
    %6463 = vmatprep.subr.bf16.mxu0 0
    %6464 = vmatpush1.bf16.msra.mxu0 %v4558
    %6465 = vmatprep.subr.bf16.mxu0 0
    %6466 = vmatpush1.bf16.msra.mxu0 %v4559
    %6467 = vmatprep.subr.bf16.mxu0 0
    %6468 = vmatpush1.bf16.msra.mxu0 %v4560
    %6469 = vmatprep.subr.bf16.mxu0 0
    %6470 = vmatpush1.bf16.msra.mxu0 %v4561
    %6471 = vmatprep.subr.bf16.mxu0 0
    %6472 = vmatpush1.bf16.msra.mxu0 %v4562
    %6473 = vmatprep.subr.bf16.mxu0 0
    %6474 = vmatpush1.bf16.msra.mxu0 %v4563
    %6475 = vmatprep.subr.bf16.mxu0 0
    %6476 = vmatpush1.bf16.msra.mxu0 %v4564
    %6477 = vmatprep.mubr.bf16.mxu0 %v1627
    %6478 = vmatmul.mubr.bf16.gmra.mrb[0].mxu0 %v1625
    %v6479 = vpop.f32.mrb[0].mxu0
    %v6480 = vadd.f32 %v6440, %v6479
    %v6481 = vpop.f32.mrb[0].mxu0
    %v6482 = vpop.f32.mrb[0].mxu0
    %v6483 = vpop.f32.mrb[0].mxu0
    %6484 = vdwg.mxu0
    %6485 = vmatprep.subr.bf16.mxu0 0
    %6486 = vmatpush1.bf16.msra.mxu0 %v4565
    %6487 = vmatprep.subr.bf16.mxu0 0
    %6488 = vmatpush1.bf16.msra.mxu0 %v4566
    %6489 = vmatprep.subr.bf16.mxu0 0
    %6490 = vmatpush1.bf16.msra.mxu0 %v4567
    %6491 = vmatprep.subr.bf16.mxu0 0
    %6492 = vmatpush1.bf16.msra.mxu0 %v4568
    %6493 = vmatprep.subr.bf16.mxu0 0
    %6494 = vmatpush1.bf16.msra.mxu0 %v4569
    %6495 = vmatprep.subr.bf16.mxu0 0
    %6496 = vmatpush1.bf16.msra.mxu0 %v4570
    %6497 = vmatprep.subr.bf16.mxu0 0
    %6498 = vmatpush1.bf16.msra.mxu0 %v4571
    %6499 = vmatprep.subr.bf16.mxu0 0
    %6500 = vmatpush1.bf16.msra.mxu0 %v4572
    %6501 = vmatprep.subr.bf16.mxu0 0
    %6502 = vmatpush1.bf16.msra.mxu0 %v4573
    %6503 = vmatprep.subr.bf16.mxu0 0
    %6504 = vmatpush1.bf16.msra.mxu0 %v4574
    %6505 = vmatprep.subr.bf16.mxu0 0
    %6506 = vmatpush1.bf16.msra.mxu0 %v4575
    %6507 = vmatprep.subr.bf16.mxu0 0
    %6508 = vmatpush1.bf16.msra.mxu0 %v4576
    %6509 = vmatprep.subr.bf16.mxu0 0
    %6510 = vmatpush1.bf16.msra.mxu0 %v4577
    %6511 = vmatprep.subr.bf16.mxu0 0
    %6512 = vmatpush1.bf16.msra.mxu0 %v4578
    %6513 = vmatprep.subr.bf16.mxu0 0
    %6514 = vmatpush1.bf16.msra.mxu0 %v4579
    %6515 = vmatprep.subr.bf16.mxu0 0
    %6516 = vmatpush1.bf16.msra.mxu0 %v4580
    %6517 = vmatprep.mubr.bf16.mxu0 %v1665
    %6518 = vmatmul.mubr.bf16.gmra.mrb[0].mxu0 %v1651
    %v6519 = vpop.f32.mrb[0].mxu0
    %v6520 = vadd.f32 %v6480, %v6519
    %v6521 = vpop.f32.mrb[0].mxu0
    %v6522 = vpop.f32.mrb[0].mxu0
    %v6523 = vpop.f32.mrb[0].mxu0
    %6524 = vdwg.mxu0
    %6525 = vmatprep.subr.bf16.mxu0 0
    %6526 = vmatpush1.bf16.msra.mxu0 %v4581
    %6527 = vmatprep.subr.bf16.mxu0 0
    %6528 = vmatpush1.bf16.msra.mxu0 %v4582
    %6529 = vmatprep.subr.bf16.mxu0 0
    %6530 = vmatpush1.bf16.msra.mxu0 %v4583
    %6531 = vmatprep.subr.bf16.mxu0 0
    %6532 = vmatpush1.bf16.msra.mxu0 %v4584
    %6533 = vmatprep.subr.bf16.mxu0 0
    %6534 = vmatpush1.bf16.msra.mxu0 %v4585
    %6535 = vmatprep.subr.bf16.mxu0 0
    %6536 = vmatpush1.bf16.msra.mxu0 %v4586
    %6537 = vmatprep.subr.bf16.mxu0 0
    %6538 = vmatpush1.bf16.msra.mxu0 %v4587
    %6539 = vmatprep.subr.bf16.mxu0 0
    %6540 = vmatpush1.bf16.msra.mxu0 %v4588
    %6541 = vmatprep.subr.bf16.mxu0 0
    %6542 = vmatpush1.bf16.msra.mxu0 %v4589
    %6543 = vmatprep.subr.bf16.mxu0 0
    %6544 = vmatpush1.bf16.msra.mxu0 %v4590
    %6545 = vmatprep.subr.bf16.mxu0 0
    %6546 = vmatpush1.bf16.msra.mxu0 %v4591
    %6547 = vmatprep.subr.bf16.mxu0 0
    %6548 = vmatpush1.bf16.msra.mxu0 %v4592
    %6549 = vmatprep.subr.bf16.mxu0 0
    %6550 = vmatpush1.bf16.msra.mxu0 %v4593
    %6551 = vmatprep.subr.bf16.mxu0 0
    %6552 = vmatpush1.bf16.msra.mxu0 %v4594
    %6553 = vmatprep.subr.bf16.mxu0 0
    %6554 = vmatpush1.bf16.msra.mxu0 %v4595
    %6555 = vmatprep.subr.bf16.mxu0 0
    %6556 = vmatpush1.bf16.msra.mxu0 %v4596
    %6557 = vmatprep.mubr.bf16.mxu0 %v1675
    %6558 = vmatmul.mubr.bf16.gmra.mrb[0].mxu0 %v1673
    %v6559 = vpop.f32.mrb[0].mxu0
    %v6560 = vadd.f32 %v6520, %v6559
    %v6561 = vpop.f32.mrb[0].mxu0
    %v6562 = vpop.f32.mrb[0].mxu0
    %v6563 = vpop.f32.mrb[0].mxu0
    %6564 = vdwg.mxu0
    %6565 = vmatprep.subr.bf16.mxu0 0
    %6566 = vmatpush1.bf16.msra.mxu0 %v4597
    %6567 = vmatprep.subr.bf16.mxu0 0
    %6568 = vmatpush1.bf16.msra.mxu0 %v4598
    %6569 = vmatprep.subr.bf16.mxu0 0
    %6570 = vmatpush1.bf16.msra.mxu0 %v4599
    %6571 = vmatprep.subr.bf16.mxu0 0
    %6572 = vmatpush1.bf16.msra.mxu0 %v4600
    %6573 = vmatprep.subr.bf16.mxu0 0
    %6574 = vmatpush1.bf16.msra.mxu0 %v4601
    %6575 = vmatprep.subr.bf16.mxu0 0
    %6576 = vmatpush1.bf16.msra.mxu0 %v4602
    %6577 = vmatprep.subr.bf16.mxu0 0
    %6578 = vmatpush1.bf16.msra.mxu0 %v4603
    %6579 = vmatprep.subr.bf16.mxu0 0
    %6580 = vmatpush1.bf16.msra.mxu0 %v4604
    %6581 = vmatprep.subr.bf16.mxu0 0
    %6582 = vmatpush1.bf16.msra.mxu0 %v4605
    %6583 = vmatprep.subr.bf16.mxu0 0
    %6584 = vmatpush1.bf16.msra.mxu0 %v4606
    %6585 = vmatprep.subr.bf16.mxu0 0
    %6586 = vmatpush1.bf16.msra.mxu0 %v4607
    %6587 = vmatprep.subr.bf16.mxu0 0
    %6588 = vmatpush1.bf16.msra.mxu0 %v4608
    %6589 = vmatprep.subr.bf16.mxu0 0
    %6590 = vmatpush1.bf16.msra.mxu0 %v4609
    %6591 = vmatprep.subr.bf16.mxu0 0
    %6592 = vmatpush1.bf16.msra.mxu0 %v4610
    %6593 = vmatprep.subr.bf16.mxu0 0
    %6594 = vmatpush1.bf16.msra.mxu0 %v4611
    %6595 = vmatprep.subr.bf16.mxu0 0
    %6596 = vmatpush1.bf16.msra.mxu0 %v4612
    %6597 = vmatprep.mubr.bf16.mxu0 %v1672
    %6598 = vmatmul.mubr.bf16.gmra.mrb[0].mxu0 %v1658
    %v6599 = vpop.f32.mrb[0].mxu0
    %v6600 = vadd.f32 %v6560, %v6599
    %v6601 = vpop.f32.mrb[0].mxu0
    %v6602 = vpop.f32.mrb[0].mxu0
    %v6603 = vpop.f32.mrb[0].mxu0
    %6604 = vdwg.mxu0
    %6605 = vmatprep.subr.bf16.mxu0 0
    %6606 = vmatpush1.bf16.msra.mxu0 %v4613
    %6607 = vmatprep.subr.bf16.mxu0 0
    %6608 = vmatpush1.bf16.msra.mxu0 %v4614
    %6609 = vmatprep.subr.bf16.mxu0 0
    %6610 = vmatpush1.bf16.msra.mxu0 %v4615
    %6611 = vmatprep.subr.bf16.mxu0 0
    %6612 = vmatpush1.bf16.msra.mxu0 %v4616
    %6613 = vmatprep.subr.bf16.mxu0 0
    %6614 = vmatpush1.bf16.msra.mxu0 %v4617
    %6615 = vmatprep.subr.bf16.mxu0 0
    %6616 = vmatpush1.bf16.msra.mxu0 %v4618
    %6617 = vmatprep.subr.bf16.mxu0 0
    %6618 = vmatpush1.bf16.msra.mxu0 %v4619
    %6619 = vmatprep.subr.bf16.mxu0 0
    %6620 = vmatpush1.bf16.msra.mxu0 %v4620
    %6621 = vmatprep.subr.bf16.mxu0 0
    %6622 = vmatpush1.bf16.msra.mxu0 %v4621
    %6623 = vmatprep.subr.bf16.mxu0 0
    %6624 = vmatpush1.bf16.msra.mxu0 %v4622
    %6625 = vmatprep.subr.bf16.mxu0 0
    %6626 = vmatpush1.bf16.msra.mxu0 %v4623
    %6627 = vmatprep.subr.bf16.mxu0 0
    %6628 = vmatpush1.bf16.msra.mxu0 %v4624
    %6629 = vmatprep.subr.bf16.mxu0 0
    %6630 = vmatpush1.bf16.msra.mxu0 %v4625
    %6631 = vmatprep.subr.bf16.mxu0 0
    %6632 = vmatpush1.bf16.msra.mxu0 %v4626
    %6633 = vmatprep.subr.bf16.mxu0 0
    %6634 = vmatpush1.bf16.msra.mxu0 %v4627
    %6635 = vmatprep.subr.bf16.mxu0 0
    %6636 = vmatpush1.bf16.msra.mxu0 %v4628
    %6637 = vmatprep.mubr.bf16.mxu0 %v1676
    %6638 = vmatmul.mubr.bf16.gmra.mrb[0].mxu0 %v1674
    %v6639 = vpop.f32.mrb[0].mxu0
    %v6640 = vadd.f32 %v6600, %v6639
    %v6641 = vpop.f32.mrb[0].mxu0
    %v6642 = vpop.f32.mrb[0].mxu0
    %v6643 = vpop.f32.mrb[0].mxu0
    %6644 = vdwg.mxu0
    %v6645 = vmax.f32 %v6640, 0.0
    %v6646 = vpack.c.bf16 %v6645, %v6645
    %v6647 = vld [vmem:[%s3] sm:$0xf]
    %v6648 = vld [vmem:[%s3 + $0x4] sm:$0xf]
    %v6649 = vld [vmem:[%s3 + $0x8] sm:$0xf]
    %v6650 = vld [vmem:[%s3 + $0xc] sm:$0xf]
    %v6651 = vld [vmem:[%s3 + $0x10] sm:$0xf]
    %v6652 = vld [vmem:[%s3 + $0x14] sm:$0xf]
    %v6653 = vld [vmem:[%s3 + $0x18] sm:$0xf]
    %v6654 = vld [vmem:[%s3 + $0x1c] sm:$0xf]
    %v6655 = vld [vmem:[%s3 + $0x20] sm:$0xf]
    %v6656 = vld [vmem:[%s3 + $0x24] sm:$0xf]
    %v6657 = vld [vmem:[%s3 + $0x28] sm:$0xf]
    %v6658 = vld [vmem:[%s3 + $0x2c] sm:$0xf]
    %v6659 = vld [vmem:[%s3 + $0x30] sm:$0xf]
    %v6660 = vld [vmem:[%s3 + $0x34] sm:$0xf]
    %v6661 = vld [vmem:[%s3 + $0x38] sm:$0xf]
    %v6662 = vld [vmem:[%s3 + $0x3c] sm:$0xf]
    %v6663 = vld [vmem:[#allocation7] sm:$0x1]
    %v6665 = vlaneseq
    %v6666 = vshrl.u32 %v6665, 7
    %v6667 = vsub.s32 0, %v6666
    %v6668 = vrot.slane %v6663, %v6667
    %v6686 = vunpack.c.l.b16 %v6647
    %v6687 = vunpack.c.l.b16 %v6648
    %v6688 = vunpack.c.l.b16 %v6649
    %v6689 = vunpack.c.l.b16 %v6650
    %v6690 = vunpack.c.l.b16 %v6651
    %v6691 = vunpack.c.l.b16 %v6652
    %v6692 = vunpack.c.l.b16 %v6653
    %v6693 = vunpack.c.l.b16 %v6654
    %v6694 = vunpack.c.l.b16 %v6655
    %v6695 = vunpack.c.l.b16 %v6656
    %v6696 = vunpack.c.l.b16 %v6657
    %v6697 = vunpack.c.l.b16 %v6658
    %v6698 = vunpack.c.l.b16 %v6659
    %v6699 = vunpack.c.l.b16 %v6660
    %v6700 = vunpack.c.l.b16 %v6661
    %v6701 = vunpack.c.l.b16 %v6662
    %v6702 = vpack.c.b16 %v6687, %v6686
    %v6703 = vpack.c.b16 %v6689, %v6688
    %v6704 = vpack.c.b16 %v6691, %v6690
    %v6705 = vpack.c.b16 %v6693, %v6692
    %v6706 = vpack.c.b16 %v6695, %v6694
    %v6707 = vpack.c.b16 %v6697, %v6696
    %v6708 = vpack.c.b16 %v6699, %v6698
    %v6709 = vpack.c.b16 %v6701, %v6700
    %6718 = vmatprep.subr.bf16.mxu0 0
    %6719 = vmatpush1.bf16.msra.mxu0 %v6702
    %6720 = vmatprep.subr.bf16.mxu0 0
    %6721 = vmatpush1.bf16.msra.mxu0 %v6703
    %6722 = vmatprep.subr.bf16.mxu0 0
    %6723 = vmatpush1.bf16.msra.mxu0 %v6704
    %6724 = vmatprep.subr.bf16.mxu0 0
    %6725 = vmatpush1.bf16.msra.mxu0 %v6705
    %6726 = vmatprep.subr.bf16.mxu0 0
    %6727 = vmatpush1.bf16.msra.mxu0 %v6706
    %6728 = vmatprep.subr.bf16.mxu0 0
    %6729 = vmatpush1.bf16.msra.mxu0 %v6707
    %6730 = vmatprep.subr.bf16.mxu0 0
    %6731 = vmatpush1.bf16.msra.mxu0 %v6708
    %6732 = vmatprep.subr.bf16.mxu0 0
    %6733 = vmatpush1.bf16.msra.mxu0 %v6709
    %6734 = vmatprep.subr.bf16.mxu0 0
    %6735 = vmatpush1.bf16.msra.mxu0 0
    %6736 = vmatprep.subr.bf16.mxu0 0
    %6737 = vmatpush1.bf16.msra.mxu0 0
    %6738 = vmatprep.subr.bf16.mxu0 0
    %6739 = vmatpush1.bf16.msra.mxu0 0
    %6740 = vmatprep.subr.bf16.mxu0 0
    %6741 = vmatpush1.bf16.msra.mxu0 0
    %6742 = vmatprep.subr.bf16.mxu0 0
    %6743 = vmatpush1.bf16.msra.mxu0 0
    %6744 = vmatprep.subr.bf16.mxu0 0
    %6745 = vmatpush1.bf16.msra.mxu0 0
    %6746 = vmatprep.subr.bf16.mxu0 0
    %6747 = vmatpush1.bf16.msra.mxu0 0
    %6748 = vmatprep.subr.bf16.mxu0 0
    %6749 = vmatpush1.bf16.msra.mxu0 0
    %6750 = vmatprep.mubr.bf16.mxu0 0
    %6751 = vmatmul.mubr.bf16.gmra.mrb[0].mxu0 %v6646
    %v6752 = vpop.f32.mrb[0].mxu0
    %v6753 = vadd.f32 %v6668, %v6752
    %v6754 = vpop.f32.mrb[0].mxu0
    %v6755 = vpop.f32.mrb[0].mxu0
    %v6756 = vpop.f32.mrb[0].mxu0
    %6757 = vdwg.mxu0
    %vm6758 = vcmask 74752
    %v6759 = vsel %vm6758, %v6753, -inf
    %6760 = vmax.xlane.f32.xlu0 %v6759
    %v6761 = vpop.xlane.xlu0 %6760
    %v6762 = vsub.f32 %v6753, %v6761
    %v6763 = vmul.f32 %v6762, 1.442695
    %v6764 = vpow.pop %v6763
    %v6765 = vsel %vm6758, %v6764, 0.0
    %6766 = vadd.xlane.f32.xlu0 %v6765
    %v6767 = vpop.xlane.xlu0 %6766
    %v6768 = vlog2.pop %v6767
    %v6769 = vmul.f32 %v6768, 0.6931472
    %v6770 = vadd.f32 %v6761, %v6769
    %v6771 = vsub.f32 %v6753, %v6770
    %6772 = vst.msk [vmem:[#allocation8] sm:$0x3] %vm6758, %v6771
    // Predicated region
    $region34: #{cnn_forward.3} parent=1 // pred_check
      _
    $region35: #{cnn_forward.3} parent=1 // pred_check_branch
      %6774 = sbr.rel (0) target = $region37
    $region36: #{cnn_forward.3} parent=1 // pred_region
      %s6776 = ssub.s32 32, 32
      %6777 = vsyncadd [#allocation4], %s6776
      %s6779 = sshll.u32 [#allocation8], 4
      %s6780 = int_to_ptr.vmem [resolvable:$true] %s6779
      %6782 = dma.vmem_to_hbm [thread:$0]  %s6780, 32, %s5, [#allocation4]
    $region37: #{cnn_forward.3} parent=1 // pred_fallthru
      _
    // Predicated region
    $region38: #{cnn_forward.3} parent=1 // pred_check
      _
    $region39: #{cnn_forward.3} parent=1 // pred_check_branch
      %6784 = sbr.rel (0) target = $region41
    $region40: #{cnn_forward.3} parent=1 // pred_region
      %6785 = dma.done [#allocation4], 32
    $region41: #{cnn_forward.3} parent=1 // pred_fallthru
      _
    %6786 = vsyncpa [#allocation3], 1
    %6787 = vsyncpa [#allocation6], 1
    %6788 = vsyncpa [#allocation4], 1

</llo_original>
